<compile_context>
chip_gen: v7x
topology: tpu7x:2x2x1
jax: 0.10.0
libtpu: 0.0.40
codegen_flags: <defaults>
</compile_context>

<pallas_src>
import math
import numpy as np

import jax
import jax.numpy as jnp
from jax import lax
from jax.experimental import pallas as pl
from jax.experimental.pallas import tpu as pltpu

L = 9        # sequence length (== max_len of abs pos enc, == in-features of output_linear)
D = 22       # model depth / c_z
H = 2        # number of heads
NB = 19      # 2 * relpos_k + 1 bins
FF = 128     # ff_intermediary_depth
EPS = 1e-5   # LayerNorm eps
LD = L * D   # 198
LL = L * L   # 81


# ---------------------------------------------------------------------------
# Kernel: one batch tile [BT, 198] per grid step; everything is 2-D matmuls
# (bf16 operands, f32 accumulation), elementwise ops and last-axis reductions.
# ---------------------------------------------------------------------------
def _kernel(x_ref, qkv_ref, ow_ref, eq_ref, r_ref, se_ref, ep_ref, rh_ref,
            ln_ref, bias_ref, vec_ref, b1_ref, w1_ref, w2_ref, wfin_ref,
            bfin_ref, out_ref):
    f32 = jnp.float32
    bf16 = jnp.bfloat16

    # ---- absolute positional encoding (pe flattened to [1, 198]) ----------
    xp = x_ref[...] + vec_ref[0:1, :]                                  # [BT, 198] f32
    xpb = xp.astype(bf16)

    eq = eq_ref[...]      # [198, 1782] bf16  expand (i,e) -> (i,j,e)   (0/1, exact)
    r_mat = r_ref[...]    # [1782, 81]  bf16  sum over e per (i,j)
    se = se_ref[...]      # [81, 81]    bf16  sum over j per i (softmax denominator)
    ep_mat = ep_ref[...]  # [81, 1782]  bf16  expand (i,j) -> (i,j,e)
    rh = rh_ref[...]      # [1782, 198] bf16  sum over j per (i,e)

    # ---- fused Q/K/V projections: one wide bf16 matmul, 1/sqrt(D) folded in Q
    qkv = jnp.dot(xpb, qkv_ref[...], preferred_element_type=f32)      # [BT, 1188]

    # ---- two-head self-attention (segmented-matmul formulation) ------------
    ctxs = []
    for h in range(H):
        q = qkv[:, h * LD:(h + 1) * LD]                                # [BT, 198] f32
        k = qkv[:, (H + h) * LD:(H + h + 1) * LD]
        v = qkv[:, (2 * H + h) * LD:(2 * H + h + 1) * LD]

        # expand q over j via the 0/1 matrix; "expand" k over i = pure lane tile
        qe = jnp.dot(q.astype(bf16), eq, preferred_element_type=f32)  # [BT, 1782]
        kt = jnp.concatenate([k] * L, axis=-1)                        # [BT, 1782]
        # scores s[b, i*9+j] = sum_e q[b,i,e] * k[b,j,e]
        s = jnp.dot((qe * kt).astype(bf16), r_mat,
                    preferred_element_type=f32)                       # [BT, 81]
        s = s + bias_ref[h:h + 1, :]                                  # relpos bias
        # softmax over j: subtracting the per-row max is a valid shift; clamp
        # the segment denominator so an underflowed segment can't give Inf/NaN.
        s = s - jnp.max(s, axis=-1, keepdims=True)
        e = jnp.exp(s)
        den = jnp.dot(e.astype(bf16), se, preferred_element_type=f32)  # j-sum per i
        p = e * pl.reciprocal(jnp.maximum(den, 1e-20), approx=True)

        # context ctx[b, i*22+e] = sum_j p[b,i,j] * v[b,j,e]
        pexp = jnp.dot(p.astype(bf16), ep_mat, preferred_element_type=f32)
        vt = jnp.concatenate([v] * L, axis=-1)                        # [BT, 1782]
        ctx = jnp.dot((pexp * vt).astype(bf16), rh,
                      preferred_element_type=f32)                     # [BT, 198]
        ctxs.append(ctx)

    # fused two-head linear_o: [BT, 396] @ [396, 198]
    o = jnp.dot(jnp.concatenate(ctxs, axis=-1).astype(bf16), ow_ref[...],
                preferred_element_type=f32)                           # [BT, 198]

    ln_sum = ln_ref[...]   # kron(I9, ones(22,22)) bf16 (exact); /D applied in f32

    def layer_norm(z, g, b):
        mu = jnp.dot(z.astype(bf16), ln_sum, preferred_element_type=f32) * (1.0 / D)
        zc = z - mu
        var = jnp.dot((zc * zc).astype(bf16), ln_sum,
                      preferred_element_type=f32) * (1.0 / D)
        return zc * lax.rsqrt(var + EPS) * g + b

    # ---- residual + LayerNorm (attention) ----------------------------------
    x1 = layer_norm(xp + o, vec_ref[1:2, :], vec_ref[2:3, :])

    # ---- feed-forward MLP ---------------------------------------------------
    hdn = jnp.dot(x1.astype(bf16), w1_ref[...], preferred_element_type=f32) + b1_ref[...]
    hdn = jnp.maximum(hdn, 0.0)                                       # ReLU
    y2 = jnp.dot(hdn.astype(bf16), w2_ref[...], preferred_element_type=f32) + vec_ref[5:6, :]

    # ---- residual + LayerNorm (ff) ------------------------------------------
    x2 = layer_norm(x1 + y2, vec_ref[3:4, :], vec_ref[4:5, :])

    # ---- res_linear + output_linear (folded into one tiny f32 matmul) -------
    out_ref[...] = jnp.dot(x2, wfin_ref[...], preferred_element_type=f32) + bfin_ref[...]


# ---------------------------------------------------------------------------
# Host-side construction of the packed / block-diagonal kernel constants.
# ---------------------------------------------------------------------------
def prepare_constants(P):
    f32 = jnp.float32
    bf16 = jnp.bfloat16
    I9 = jnp.eye(L, dtype=f32)
    I22 = jnp.eye(D, dtype=f32)
    I81 = jnp.eye(LL, dtype=f32)

    def bd(m):  # [D, X] per-position matrix -> block diagonal [L*D, L*X]
        return jnp.kron(I9, m.astype(f32))

    inv_sqrt_d = 1.0 / math.sqrt(D)
    # fused Q/K/V block-diagonal weight, lane order [Q0 Q1 K0 K1 V0 V1]
    qkv_blocks = []
    for name, scale in (("wqT", inv_sqrt_d), ("wkT", 1.0), ("wvT", 1.0)):
        for h in range(H):
            qkv_blocks.append(bd(P[name][:, h * D:(h + 1) * D] * scale))
    w_qkv = jnp.concatenate(qkv_blocks, axis=1).astype(bf16)           # [198, 1188]

    # fused two-head output projection: [396, 198]
    w_o = jnp.concatenate([bd(P["woT"][h * D:(h + 1) * D, :]) for h in range(H)],
                          axis=0).astype(bf16)

    # segment expansion / reduction matrices (all 0/1, exact in bf16)
    eq = jnp.kron(I9, jnp.kron(jnp.ones((1, L), f32), I22)).astype(bf16)    # [198, 1782]
    r_mat = jnp.kron(I81, jnp.ones((D, 1), f32)).astype(bf16)               # [1782, 81]
    se = jnp.kron(I9, jnp.ones((L, L), f32)).astype(bf16)                   # [81, 81]
    ep = jnp.kron(I81, jnp.ones((1, D), f32)).astype(bf16)                  # [81, 1782]
    rh = jnp.kron(I9, jnp.kron(jnp.ones((L, 1), f32), I22)).astype(bf16)    # [1782, 198]
    ln_sum = jnp.kron(I9, jnp.ones((D, D), f32)).astype(bf16)               # [198, 198]

    # relative-position attention bias (batch independent): [H, 81], f32
    rel_table = P["wrelT"] + P["brel"]                                 # [19, 22]
    ptable = rel_table @ P["wpeT"] + P["bpe"]                          # [19, 2]
    idx = (jnp.arange(L)[:, None] - jnp.arange(L)[None, :]) + NB // 2  # [9, 9] in [1, 17]
    bias81 = jnp.transpose(ptable[idx], (2, 0, 1)).reshape(H, LL)      # [2, 81]

    # packed small row vectors, each [1, 198], f32
    vec6 = jnp.concatenate([
        P["pe"].reshape(1, LD),
        jnp.tile(P["g_att"], (1, L)),
        jnp.tile(P["b_att"], (1, L)),
        jnp.tile(P["g_ff"], (1, L)),
        jnp.tile(P["b_ff"], (1, L)),
        jnp.tile(P["b2"], (1, L)),
    ], axis=0)                                                         # [6, 198]

    b1t = jnp.tile(P["b1"], (1, L))                                    # [1, 1152] f32
    w1bd = jnp.kron(I9, P["w1T"]).astype(bf16)                         # [198, 1152]
    w2bd = jnp.kron(I9, P["w2T"]).astype(bf16)                         # [1152, 198]

    # res_linear folded into output_linear: [198, 2] + [1, 2] (tiny; kept f32)
    wfin = jnp.kron(P["woutT"], P["wresT"])                            # [198, 2]
    bfin = P["bout"] + P["bres"][0, 0] * jnp.sum(P["woutT"], axis=0, keepdims=True)

    return dict(w_qkv=w_qkv, w_o=w_o, eq=eq, r=r_mat, se=se, ep=ep, rh=rh,
                ln=ln_sum, bias=bias81, vec=vec6, b1=b1t, w1=w1bd, w2=w2bd,
                wfin=wfin, bfin=bfin)


def _pick_bt(batch, bt_max):
    """Largest batch tile <= bt_max, guaranteeing >= 2 grid steps once
    batch >= 16 so the 'parallel' grid axis can shard over both v7x cores."""
    if batch <= 8:
        return batch
    half = -(-batch // 2)            # cdiv(batch, 2)
    half = -(-half // 8) * 8         # round up to sublane multiple
    return max(8, min(bt_max, half))


def relabs_forward(x, P, consts=None, bt=256):
    """x: [B, L=9, D=22] float32  ->  [B, 2] float32."""
    B, l, d = x.shape
    assert (l, d) == (L, D)
    if consts is None:
        consts = prepare_constants(P)
    BT = _pick_bt(B, bt)
    x2 = x.reshape(B, LD)

    names = ("w_qkv", "w_o", "eq", "r", "se", "ep", "rh", "ln", "bias",
             "vec", "b1", "w1", "w2", "wfin", "bfin")
    const_list = [consts[k] for k in names]

    in_specs = [pl.BlockSpec((BT, LD), lambda b: (b, 0))]
    # Invariant constants: whole-array blocks with a constant index_map so they
    # are DMA'd once per buffer.  (pl.Buffered(1) would halve their VMEM but is
    # skipped for compile-portability; at bf16 they total only ~4.5 MiB.)
    in_specs += [pl.BlockSpec(c.shape, (lambda b, n=c.ndim: (0,) * n))
                 for c in const_list]

    # Advisory cost estimate so XLA schedules around the long custom call.
    macs_per_row = (LD * (3 * H * LD)
                    + H * (LD * (L * LD) + (L * LD) * LL + LL * LL
                           + LL * (L * LD) + (L * LD) * LD)
                    + (H * LD) * LD
                    + 4 * LD * LD
                    + LD * (L * FF) + (L * FF) * LD
                    + LD * 2)
    const_bytes = int(sum(int(c.size) * c.dtype.itemsize for c in const_list))
    cost = pl.CostEstimate(
        flops=2 * B * macs_per_row,
        transcendentals=B * (2 * H * LL + 2 * L),
        bytes_accessed=int(x2.size) * 4 + B * 2 * 4 + const_bytes)

    # 32 MiB fits the in-script tiles with wide margin; allow 40 MiB only for
    # very large tiles.  Either way >= 24 MiB of v7x's 64 MiB VMEM stays free.
    vmem_cap = (32 if BT <= 160 else 40) * 1024 * 1024

    out = pl.pallas_call(
        _kernel,
        out_shape=jax.ShapeDtypeStruct((B, 2), jnp.float32),
        grid_spec=pltpu.PrefetchScalarGridSpec(
            num_scalar_prefetch=0,
            grid=(pl.cdiv(B, BT),),
            in_specs=in_specs,
            out_specs=pl.BlockSpec((BT, 2), lambda b: (b, 0)),
        ),
        compiler_params=pltpu.CompilerParams(
            dimension_semantics=("parallel",),
            vmem_limit_bytes=vmem_cap,
        ),
        cost_estimate=cost,
    )(x2, *const_list)
    return out


# ---------------------------------------------------------------------------
# Deterministic parameter construction (PyTorch-default-style init).
# ---------------------------------------------------------------------------
def _positional_encoding(max_len, d_model):
    pe = np.zeros((max_len, d_model), np.float32)
    position = np.arange(max_len, dtype=np.float32)[:, None]
    div_term = np.exp(np.arange(0, d_model, 2, dtype=np.float32)
                      * (-np.log(10000.0) / d_model))
    pe[:, 0::2] = np.sin(position * div_term)
    pe[:, 1::2] = np.cos(position * div_term)
    return jnp.asarray(pe)


def init_params(key):
    def lin(k, fan_in, fan_out, bias=True):
        k1, k2 = jax.random.split(k)
        bd_ = 1.0 / float(np.sqrt(fan_in))
        w = jax.random.uniform(k1, (fan_out, fan_in), jnp.float32, -bd_, bd_)
        b = (jax.random.uniform(k2, (fan_out,), jnp.float32, -bd_, bd_)
             if bias else None)
        return w, b

    ks = jax.random.split(key, 10)
    P = {}
    P["pe"] = _positional_encoding(L, D)                              # [9, 22]
    wrel, brel = lin(ks[0], NB, D)                                    # Linear(19, 22)
    P["wrelT"], P["brel"] = wrel.T, brel.reshape(1, -1)
    wpe, bpe = lin(ks[1], D, H)                                       # pos_enc_linear(22, 2)
    P["wpeT"], P["bpe"] = wpe.T, bpe.reshape(1, -1)
    wq, _ = lin(ks[2], D, D * H, bias=False)
    wk, _ = lin(ks[3], D, D * H, bias=False)
    wv, _ = lin(ks[4], D, D * H, bias=False)
    wo, _ = lin(ks[5], D * H, D, bias=False)
    P["wqT"], P["wkT"], P["wvT"], P["woT"] = wq.T, wk.T, wv.T, wo.T
    P["g_att"] = jnp.ones((1, D), jnp.float32)
    P["b_att"] = jnp.zeros((1, D), jnp.float32)
    w1, b1 = lin(ks[6], D, FF)
    w2, b2 = lin(ks[7], FF, D)
    P["w1T"], P["b1"] = w1.T, b1.reshape(1, -1)
    P["w2T"], P["b2"] = w2.T, b2.reshape(1, -1)
    P["g_ff"] = jnp.ones((1, D), jnp.float32)
    P["b_ff"] = jnp.zeros((1, D), jnp.float32)
    wres, bres = lin(ks[8], D, 1)                                     # res_linear(22, 1)
    P["wresT"], P["bres"] = wres.T, bres.reshape(1, -1)
    wout, bout = lin(ks[9], L, 2)                                     # output_linear(9, 2)
    P["woutT"], P["bout"] = wout.T, bout.reshape(1, -1)
    return P


# ---------------------------------------------------------------------------
# Plain-JAX reference (mirrors the PyTorch forward) for a sanity check.
# ---------------------------------------------------------------------------
def reference(x, P):
    B = x.shape[0]
    xp = x + P["pe"][None]
    ri = jnp.arange(L, dtype=jnp.float32)
    dmat = ri[:, None] - ri[None, :]
    bins = jnp.arange(-(NB // 2), NB // 2 + 1, dtype=jnp.float32)
    idx = jnp.argmin(jnp.abs(dmat[..., None] - bins), axis=-1)
    oh = jax.nn.one_hot(idx, NB, dtype=jnp.float32)
    rel = oh @ P["wrelT"] + P["brel"]                       # [9, 9, 22]
    pbias = rel @ P["wpeT"] + P["bpe"]                      # [9, 9, 2]
    pbias = jnp.transpose(pbias, (2, 0, 1))                 # [2, 9, 9]

    q = (xp @ P["wqT"]).reshape(B, L, H, D).transpose(0, 2, 1, 3)
    k = (xp @ P["wkT"]).reshape(B, L, H, D).transpose(0, 2, 1, 3)
    v = (xp @ P["wvT"]).reshape(B, L, H, D).transpose(0, 2, 1, 3)
    a = jnp.einsum("bhqd,bhkd->bhqk", q, k) / jnp.sqrt(jnp.float32(D)) + pbias[None]
    a = jax.nn.softmax(a, axis=-1)
    heads = jnp.einsum("bhqk,bhkd->bhqd", a, v)
    cat = heads.transpose(0, 2, 1, 3).reshape(B, L, H * D)
    o = cat @ P["woT"]

    def ln(z, g, b):
        mu = z.mean(-1, keepdims=True)
        var = ((z - mu) ** 2).mean(-1, keepdims=True)
        return (z - mu) / jnp.sqrt(var + EPS) * g + b

    x1 = ln(xp + o, P["g_att"], P["b_att"])
    y2 = jax.nn.relu(x1 @ P["w1T"] + P["b1"]) @ P["w2T"] + P["b2"]
    x2 = ln(x1 + y2, P["g_ff"], P["b_ff"])
    pv = (x2 @ P["wresT"] + P["bres"])[..., 0]              # [B, 9]
    return pv @ P["woutT"] + P["bout"]                      # [B, 2]


if __name__ == "__main__":
    key = jax.random.PRNGKey(0)
    kx, kp = jax.random.split(key)
    params = init_params(kp)
    consts = prepare_constants(params)

    # small primary case + a larger case exercising a 2-step grid (balanced
    # 152+148 split so both v7x TensorCores get work) with a ragged last tile
    for B in (8, 300):
        seq_embd = jax.random.normal(jax.random.fold_in(kx, B), (B, L, D),
                                     jnp.float32)
        out = jax.block_until_ready(relabs_forward(seq_embd, params, consts))
        assert out.shape == (B, 2), out.shape
        ref = jax.block_until_ready(reference(seq_embd, params))
        # tolerance covers bf16 MXU operands + approx reciprocal
        np.testing.assert_allclose(np.asarray(out), np.asarray(ref),
                                   rtol=2e-2, atol=2e-2)

    print("KERNEL_OK")
</pallas_src>

<mosaic_0001>
module attributes {stable_mosaic.version = 11 : i64} {
  func.func @_kernel(%arg0: i32, %arg1: memref<8x198xf32, #tpu.memory_space<vmem>>, %arg2: memref<198x1188xbf16, #tpu.memory_space<vmem>>, %arg3: memref<396x198xbf16, #tpu.memory_space<vmem>>, %arg4: memref<198x1782xbf16, #tpu.memory_space<vmem>>, %arg5: memref<1782x81xbf16, #tpu.memory_space<vmem>>, %arg6: memref<81x81xbf16, #tpu.memory_space<vmem>>, %arg7: memref<81x1782xbf16, #tpu.memory_space<vmem>>, %arg8: memref<1782x198xbf16, #tpu.memory_space<vmem>>, %arg9: memref<198x198xbf16, #tpu.memory_space<vmem>>, %arg10: memref<2x81xf32, #tpu.memory_space<vmem>>, %arg11: memref<6x198xf32, #tpu.memory_space<vmem>>, %arg12: memref<1x1152xf32, #tpu.memory_space<vmem>>, %arg13: memref<198x1152xbf16, #tpu.memory_space<vmem>>, %arg14: memref<1152x198xbf16, #tpu.memory_space<vmem>>, %arg15: memref<198x2xf32, #tpu.memory_space<vmem>>, %arg16: memref<1x2xf32, #tpu.memory_space<vmem>>, %arg17: memref<8x2xf32, #tpu.memory_space<vmem>>) attributes {dimension_semantics = [#tpu.dimension_semantics<parallel>], iteration_bounds = array<i64: 1>, scalar_prefetch = 0 : i64, scratch_operands = 0 : i64, tpu.core_type = #tpu.core_type<tc>, window_params = [{transform_indices = @transform_0, window_bounds = array<i64: 8, 198>}, {pipeline_mode = #tpu.pipeline_mode<synchronous>, transform_indices = @transform_1, window_bounds = array<i64: 198, 1188>}, {pipeline_mode = #tpu.pipeline_mode<synchronous>, transform_indices = @transform_2, window_bounds = array<i64: 396, 198>}, {pipeline_mode = #tpu.pipeline_mode<synchronous>, transform_indices = @transform_3, window_bounds = array<i64: 198, 1782>}, {pipeline_mode = #tpu.pipeline_mode<synchronous>, transform_indices = @transform_4, window_bounds = array<i64: 1782, 81>}, {pipeline_mode = #tpu.pipeline_mode<synchronous>, transform_indices = @transform_5, window_bounds = array<i64: 81, 81>}, {pipeline_mode = #tpu.pipeline_mode<synchronous>, transform_indices = @transform_6, window_bounds = array<i64: 81, 1782>}, {pipeline_mode = #tpu.pipeline_mode<synchronous>, transform_indices = @transform_7, window_bounds = array<i64: 1782, 198>}, {pipeline_mode = #tpu.pipeline_mode<synchronous>, transform_indices = @transform_8, window_bounds = array<i64: 198, 198>}, {pipeline_mode = #tpu.pipeline_mode<synchronous>, transform_indices = @transform_9, window_bounds = array<i64: 2, 81>}, {pipeline_mode = #tpu.pipeline_mode<synchronous>, transform_indices = @transform_10, window_bounds = array<i64: 6, 198>}, {pipeline_mode = #tpu.pipeline_mode<synchronous>, transform_indices = @transform_11, window_bounds = array<i64: 1, 1152>}, {pipeline_mode = #tpu.pipeline_mode<synchronous>, transform_indices = @transform_12, window_bounds = array<i64: 198, 1152>}, {pipeline_mode = #tpu.pipeline_mode<synchronous>, transform_indices = @transform_13, window_bounds = array<i64: 1152, 198>}, {pipeline_mode = #tpu.pipeline_mode<synchronous>, transform_indices = @transform_14, window_bounds = array<i64: 198, 2>}, {pipeline_mode = #tpu.pipeline_mode<synchronous>, transform_indices = @transform_15, window_bounds = array<i64: 1, 2>}, {transform_indices = @transform_16, window_bounds = array<i64: 8, 2>}]} {
    %c0 = arith.constant 0 : index
    %c0_0 = arith.constant 0 : index
    %0 = vector.load %arg1[%c0, %c0_0] : memref<8x198xf32, #tpu.memory_space<vmem>>, vector<8x198xf32>
    %c0_1 = arith.constant 0 : index
    %c0_2 = arith.constant 0 : index
    %1 = vector.load %arg11[%c0_1, %c0_2] : memref<6x198xf32, #tpu.memory_space<vmem>>, vector<1x198xf32>
    %2 = vector.broadcast %1 : vector<1x198xf32> to vector<8x198xf32>
    %3 = arith.addf %0, %2 : vector<8x198xf32>
    %4 = arith.truncf %3 : vector<8x198xf32> to vector<8x198xbf16>
    %c0_3 = arith.constant 0 : index
    %c0_4 = arith.constant 0 : index
    %5 = vector.load %arg4[%c0_3, %c0_4] : memref<198x1782xbf16, #tpu.memory_space<vmem>>, vector<198x1782xbf16>
    %c0_5 = arith.constant 0 : index
    %c0_6 = arith.constant 0 : index
    %6 = vector.load %arg5[%c0_5, %c0_6] : memref<1782x81xbf16, #tpu.memory_space<vmem>>, vector<1782x81xbf16>
    %c0_7 = arith.constant 0 : index
    %c0_8 = arith.constant 0 : index
    %7 = vector.load %arg6[%c0_7, %c0_8] : memref<81x81xbf16, #tpu.memory_space<vmem>>, vector<81x81xbf16>
    %c0_9 = arith.constant 0 : index
    %c0_10 = arith.constant 0 : index
    %8 = vector.load %arg7[%c0_9, %c0_10] : memref<81x1782xbf16, #tpu.memory_space<vmem>>, vector<81x1782xbf16>
    %c0_11 = arith.constant 0 : index
    %c0_12 = arith.constant 0 : index
    %9 = vector.load %arg8[%c0_11, %c0_12] : memref<1782x198xbf16, #tpu.memory_space<vmem>>, vector<1782x198xbf16>
    %c0_13 = arith.constant 0 : index
    %c0_14 = arith.constant 0 : index
    %10 = vector.load %arg2[%c0_13, %c0_14] : memref<198x1188xbf16, #tpu.memory_space<vmem>>, vector<198x1188xbf16>
    %cst = arith.constant dense<0.000000e+00> : vector<8x1188xf32>
    %11 = tpu.matmul %4, %10, %cst {dimension_numbers = #tpu.dot_dimension_numbers<[1], [0], [0], [1], [0, 0, 1, 1], [], []>} : vector<8x198xbf16>, vector<198x1188xbf16>, vector<8x1188xf32> -> vector<8x1188xf32>
    %12 = vector.extract_strided_slice %11 {offsets = [0, 0], sizes = [8, 198], strides = [1, 1]} : vector<8x1188xf32> to vector<8x198xf32>
    %13 = vector.extract_strided_slice %11 {offsets = [0, 396], sizes = [8, 198], strides = [1, 1]} : vector<8x1188xf32> to vector<8x198xf32>
    %14 = vector.extract_strided_slice %11 {offsets = [0, 792], sizes = [8, 198], strides = [1, 1]} : vector<8x1188xf32> to vector<8x198xf32>
    %15 = arith.truncf %12 : vector<8x198xf32> to vector<8x198xbf16>
    %cst_15 = arith.constant dense<0.000000e+00> : vector<8x1782xf32>
    %16 = tpu.matmul %15, %5, %cst_15 {dimension_numbers = #tpu.dot_dimension_numbers<[1], [0], [0], [1], [0, 0, 1, 1], [], []>} : vector<8x198xbf16>, vector<198x1782xbf16>, vector<8x1782xf32> -> vector<8x1782xf32>
    %17 = tpu.concatenate %13, %13, %13, %13, %13, %13, %13, %13, %13 in 1 : vector<8x198xf32>, vector<8x198xf32>, vector<8x198xf32>, vector<8x198xf32>, vector<8x198xf32>, vector<8x198xf32>, vector<8x198xf32>, vector<8x198xf32>, vector<8x198xf32> -> vector<8x1782xf32>
    %18 = arith.mulf %16, %17 : vector<8x1782xf32>
    %19 = arith.truncf %18 : vector<8x1782xf32> to vector<8x1782xbf16>
    %cst_16 = arith.constant dense<0.000000e+00> : vector<8x81xf32>
    %20 = tpu.matmul %19, %6, %cst_16 {dimension_numbers = #tpu.dot_dimension_numbers<[1], [0], [0], [1], [0, 0, 1, 1], [], []>} : vector<8x1782xbf16>, vector<1782x81xbf16>, vector<8x81xf32> -> vector<8x81xf32>
    %c0_17 = arith.constant 0 : index
    %c0_18 = arith.constant 0 : index
    %21 = vector.load %arg10[%c0_17, %c0_18] : memref<2x81xf32, #tpu.memory_space<vmem>>, vector<1x81xf32>
    %22 = vector.broadcast %21 : vector<1x81xf32> to vector<8x81xf32>
    %23 = arith.addf %20, %22 : vector<8x81xf32>
    %cst_19 = arith.constant dense<0xFF800000> : vector<8xf32>
    %24 = vector.multi_reduction <maximumf>, %23, %cst_19 [1] : vector<8x81xf32> to vector<8xf32>
    %25 = vector.shape_cast %24 : vector<8xf32> to vector<8x1xf32>
    %26 = vector.broadcast %25 : vector<8x1xf32> to vector<8x81xf32>
    %27 = arith.subf %23, %26 : vector<8x81xf32>
    %28 = math.exp %27 : vector<8x81xf32>
    %29 = arith.truncf %28 : vector<8x81xf32> to vector<8x81xbf16>
    %cst_20 = arith.constant dense<0.000000e+00> : vector<8x81xf32>
    %30 = tpu.matmul %29, %7, %cst_20 {dimension_numbers = #tpu.dot_dimension_numbers<[1], [0], [0], [1], [0, 0, 1, 1], [], []>} : vector<8x81xbf16>, vector<81x81xbf16>, vector<8x81xf32> -> vector<8x81xf32>
    %cst_21 = arith.constant 9.99999968E-21 : f32
    %31 = vector.broadcast %cst_21 : f32 to vector<8x81xf32>
    %32 = arith.maximumf %30, %31 : vector<8x81xf32>
    %33 = tpu.reciprocal %32 {approx = true} : vector<8x81xf32> -> vector<8x81xf32>
    %34 = arith.mulf %28, %33 : vector<8x81xf32>
    %35 = arith.truncf %34 : vector<8x81xf32> to vector<8x81xbf16>
    %cst_22 = arith.constant dense<0.000000e+00> : vector<8x1782xf32>
    %36 = tpu.matmul %35, %8, %cst_22 {dimension_numbers = #tpu.dot_dimension_numbers<[1], [0], [0], [1], [0, 0, 1, 1], [], []>} : vector<8x81xbf16>, vector<81x1782xbf16>, vector<8x1782xf32> -> vector<8x1782xf32>
    %37 = tpu.concatenate %14, %14, %14, %14, %14, %14, %14, %14, %14 in 1 : vector<8x198xf32>, vector<8x198xf32>, vector<8x198xf32>, vector<8x198xf32>, vector<8x198xf32>, vector<8x198xf32>, vector<8x198xf32>, vector<8x198xf32>, vector<8x198xf32> -> vector<8x1782xf32>
    %38 = arith.mulf %36, %37 : vector<8x1782xf32>
    %39 = arith.truncf %38 : vector<8x1782xf32> to vector<8x1782xbf16>
    %cst_23 = arith.constant dense<0.000000e+00> : vector<8x198xf32>
    %40 = tpu.matmul %39, %9, %cst_23 {dimension_numbers = #tpu.dot_dimension_numbers<[1], [0], [0], [1], [0, 0, 1, 1], [], []>} : vector<8x1782xbf16>, vector<1782x198xbf16>, vector<8x198xf32> -> vector<8x198xf32>
    %41 = vector.extract_strided_slice %11 {offsets = [0, 198], sizes = [8, 198], strides = [1, 1]} : vector<8x1188xf32> to vector<8x198xf32>
    %42 = vector.extract_strided_slice %11 {offsets = [0, 594], sizes = [8, 198], strides = [1, 1]} : vector<8x1188xf32> to vector<8x198xf32>
    %43 = vector.extract_strided_slice %11 {offsets = [0, 990], sizes = [8, 198], strides = [1, 1]} : vector<8x1188xf32> to vector<8x198xf32>
    %44 = arith.truncf %41 : vector<8x198xf32> to vector<8x198xbf16>
    %cst_24 = arith.constant dense<0.000000e+00> : vector<8x1782xf32>
    %45 = tpu.matmul %44, %5, %cst_24 {dimension_numbers = #tpu.dot_dimension_numbers<[1], [0], [0], [1], [0, 0, 1, 1], [], []>} : vector<8x198xbf16>, vector<198x1782xbf16>, vector<8x1782xf32> -> vector<8x1782xf32>
    %46 = tpu.concatenate %42, %42, %42, %42, %42, %42, %42, %42, %42 in 1 : vector<8x198xf32>, vector<8x198xf32>, vector<8x198xf32>, vector<8x198xf32>, vector<8x198xf32>, vector<8x198xf32>, vector<8x198xf32>, vector<8x198xf32>, vector<8x198xf32> -> vector<8x1782xf32>
    %47 = arith.mulf %45, %46 : vector<8x1782xf32>
    %48 = arith.truncf %47 : vector<8x1782xf32> to vector<8x1782xbf16>
    %cst_25 = arith.constant dense<0.000000e+00> : vector<8x81xf32>
    %49 = tpu.matmul %48, %6, %cst_25 {dimension_numbers = #tpu.dot_dimension_numbers<[1], [0], [0], [1], [0, 0, 1, 1], [], []>} : vector<8x1782xbf16>, vector<1782x81xbf16>, vector<8x81xf32> -> vector<8x81xf32>
    %c1 = arith.constant 1 : index
    %c0_26 = arith.constant 0 : index
    %50 = vector.load %arg10[%c1, %c0_26] : memref<2x81xf32, #tpu.memory_space<vmem>>, vector<1x81xf32>
    %51 = vector.broadcast %50 : vector<1x81xf32> to vector<8x81xf32>
    %52 = arith.addf %49, %51 : vector<8x81xf32>
    %cst_27 = arith.constant dense<0xFF800000> : vector<8xf32>
    %53 = vector.multi_reduction <maximumf>, %52, %cst_27 [1] : vector<8x81xf32> to vector<8xf32>
    %54 = vector.shape_cast %53 : vector<8xf32> to vector<8x1xf32>
    %55 = vector.broadcast %54 : vector<8x1xf32> to vector<8x81xf32>
    %56 = arith.subf %52, %55 : vector<8x81xf32>
    %57 = math.exp %56 : vector<8x81xf32>
    %58 = arith.truncf %57 : vector<8x81xf32> to vector<8x81xbf16>
    %cst_28 = arith.constant dense<0.000000e+00> : vector<8x81xf32>
    %59 = tpu.matmul %58, %7, %cst_28 {dimension_numbers = #tpu.dot_dimension_numbers<[1], [0], [0], [1], [0, 0, 1, 1], [], []>} : vector<8x81xbf16>, vector<81x81xbf16>, vector<8x81xf32> -> vector<8x81xf32>
    %cst_29 = arith.constant 9.99999968E-21 : f32
    %60 = vector.broadcast %cst_29 : f32 to vector<8x81xf32>
    %61 = arith.maximumf %59, %60 : vector<8x81xf32>
    %62 = tpu.reciprocal %61 {approx = true} : vector<8x81xf32> -> vector<8x81xf32>
    %63 = arith.mulf %57, %62 : vector<8x81xf32>
    %64 = arith.truncf %63 : vector<8x81xf32> to vector<8x81xbf16>
    %cst_30 = arith.constant dense<0.000000e+00> : vector<8x1782xf32>
    %65 = tpu.matmul %64, %8, %cst_30 {dimension_numbers = #tpu.dot_dimension_numbers<[1], [0], [0], [1], [0, 0, 1, 1], [], []>} : vector<8x81xbf16>, vector<81x1782xbf16>, vector<8x1782xf32> -> vector<8x1782xf32>
    %66 = tpu.concatenate %43, %43, %43, %43, %43, %43, %43, %43, %43 in 1 : vector<8x198xf32>, vector<8x198xf32>, vector<8x198xf32>, vector<8x198xf32>, vector<8x198xf32>, vector<8x198xf32>, vector<8x198xf32>, vector<8x198xf32>, vector<8x198xf32> -> vector<8x1782xf32>
    %67 = arith.mulf %65, %66 : vector<8x1782xf32>
    %68 = arith.truncf %67 : vector<8x1782xf32> to vector<8x1782xbf16>
    %cst_31 = arith.constant dense<0.000000e+00> : vector<8x198xf32>
    %69 = tpu.matmul %68, %9, %cst_31 {dimension_numbers = #tpu.dot_dimension_numbers<[1], [0], [0], [1], [0, 0, 1, 1], [], []>} : vector<8x1782xbf16>, vector<1782x198xbf16>, vector<8x198xf32> -> vector<8x198xf32>
    %70 = tpu.concatenate %40, %69 in 1 : vector<8x198xf32>, vector<8x198xf32> -> vector<8x396xf32>
    %71 = arith.truncf %70 : vector<8x396xf32> to vector<8x396xbf16>
    %c0_32 = arith.constant 0 : index
    %c0_33 = arith.constant 0 : index
    %72 = vector.load %arg3[%c0_32, %c0_33] : memref<396x198xbf16, #tpu.memory_space<vmem>>, vector<396x198xbf16>
    %cst_34 = arith.constant dense<0.000000e+00> : vector<8x198xf32>
    %73 = tpu.matmul %71, %72, %cst_34 {dimension_numbers = #tpu.dot_dimension_numbers<[1], [0], [0], [1], [0, 0, 1, 1], [], []>} : vector<8x396xbf16>, vector<396x198xbf16>, vector<8x198xf32> -> vector<8x198xf32>
    %c0_35 = arith.constant 0 : index
    %c0_36 = arith.constant 0 : index
    %74 = vector.load %arg9[%c0_35, %c0_36] : memref<198x198xbf16, #tpu.memory_space<vmem>>, vector<198x198xbf16>
    %75 = arith.addf %3, %73 : vector<8x198xf32>
    %c1_37 = arith.constant 1 : index
    %c0_38 = arith.constant 0 : index
    %76 = vector.load %arg11[%c1_37, %c0_38] : memref<6x198xf32, #tpu.memory_space<vmem>>, vector<1x198xf32>
    %c2 = arith.constant 2 : index
    %c0_39 = arith.constant 0 : index
    %77 = vector.load %arg11[%c2, %c0_39] : memref<6x198xf32, #tpu.memory_space<vmem>>, vector<1x198xf32>
    %78 = arith.truncf %75 : vector<8x198xf32> to vector<8x198xbf16>
    %cst_40 = arith.constant dense<0.000000e+00> : vector<8x198xf32>
    %79 = tpu.matmul %78, %74, %cst_40 {dimension_numbers = #tpu.dot_dimension_numbers<[1], [0], [0], [1], [0, 0, 1, 1], [], []>} : vector<8x198xbf16>, vector<198x198xbf16>, vector<8x198xf32> -> vector<8x198xf32>
    %cst_41 = arith.constant 0.0454545468 : f32
    %80 = vector.broadcast %cst_41 : f32 to vector<8x198xf32>
    %81 = arith.mulf %79, %80 : vector<8x198xf32>
    %82 = arith.subf %75, %81 : vector<8x198xf32>
    %83 = arith.mulf %82, %82 : vector<8x198xf32>
    %84 = arith.truncf %83 : vector<8x198xf32> to vector<8x198xbf16>
    %cst_42 = arith.constant dense<0.000000e+00> : vector<8x198xf32>
    %85 = tpu.matmul %84, %74, %cst_42 {dimension_numbers = #tpu.dot_dimension_numbers<[1], [0], [0], [1], [0, 0, 1, 1], [], []>} : vector<8x198xbf16>, vector<198x198xbf16>, vector<8x198xf32> -> vector<8x198xf32>
    %cst_43 = arith.constant 0.0454545468 : f32
    %86 = vector.broadcast %cst_43 : f32 to vector<8x198xf32>
    %87 = arith.mulf %85, %86 : vector<8x198xf32>
    %cst_44 = arith.constant 9.99999974E-6 : f32
    %88 = vector.broadcast %cst_44 : f32 to vector<8x198xf32>
    %89 = arith.addf %87, %88 : vector<8x198xf32>
    %90 = math.rsqrt %89 : vector<8x198xf32>
    %91 = arith.mulf %82, %90 : vector<8x198xf32>
    %92 = vector.broadcast %76 : vector<1x198xf32> to vector<8x198xf32>
    %93 = arith.mulf %91, %92 : vector<8x198xf32>
    %94 = vector.broadcast %77 : vector<1x198xf32> to vector<8x198xf32>
    %95 = arith.addf %93, %94 : vector<8x198xf32>
    %96 = arith.truncf %95 : vector<8x198xf32> to vector<8x198xbf16>
    %c0_45 = arith.constant 0 : index
    %c0_46 = arith.constant 0 : index
    %97 = vector.load %arg13[%c0_45, %c0_46] : memref<198x1152xbf16, #tpu.memory_space<vmem>>, vector<198x1152xbf16>
    %cst_47 = arith.constant dense<0.000000e+00> : vector<8x1152xf32>
    %98 = tpu.matmul %96, %97, %cst_47 {dimension_numbers = #tpu.dot_dimension_numbers<[1], [0], [0], [1], [0, 0, 1, 1], [], []>} : vector<8x198xbf16>, vector<198x1152xbf16>, vector<8x1152xf32> -> vector<8x1152xf32>
    %c0_48 = arith.constant 0 : index
    %c0_49 = arith.constant 0 : index
    %99 = vector.load %arg12[%c0_48, %c0_49] : memref<1x1152xf32, #tpu.memory_space<vmem>>, vector<1x1152xf32>
    %100 = vector.broadcast %99 : vector<1x1152xf32> to vector<8x1152xf32>
    %101 = arith.addf %98, %100 : vector<8x1152xf32>
    %cst_50 = arith.constant 0.000000e+00 : f32
    %102 = vector.broadcast %cst_50 : f32 to vector<8x1152xf32>
    %103 = arith.maximumf %101, %102 : vector<8x1152xf32>
    %104 = arith.truncf %103 : vector<8x1152xf32> to vector<8x1152xbf16>
    %c0_51 = arith.constant 0 : index
    %c0_52 = arith.constant 0 : index
    %105 = vector.load %arg14[%c0_51, %c0_52] : memref<1152x198xbf16, #tpu.memory_space<vmem>>, vector<1152x198xbf16>
    %cst_53 = arith.constant dense<0.000000e+00> : vector<8x198xf32>
    %106 = tpu.matmul %104, %105, %cst_53 {dimension_numbers = #tpu.dot_dimension_numbers<[1], [0], [0], [1], [0, 0, 1, 1], [], []>} : vector<8x1152xbf16>, vector<1152x198xbf16>, vector<8x198xf32> -> vector<8x198xf32>
    %c5 = arith.constant 5 : index
    %c0_54 = arith.constant 0 : index
    %107 = vector.load %arg11[%c5, %c0_54] : memref<6x198xf32, #tpu.memory_space<vmem>>, vector<1x198xf32>
    %108 = vector.broadcast %107 : vector<1x198xf32> to vector<8x198xf32>
    %109 = arith.addf %106, %108 : vector<8x198xf32>
    %110 = arith.addf %95, %109 : vector<8x198xf32>
    %c3 = arith.constant 3 : index
    %c0_55 = arith.constant 0 : index
    %111 = vector.load %arg11[%c3, %c0_55] : memref<6x198xf32, #tpu.memory_space<vmem>>, vector<1x198xf32>
    %c4 = arith.constant 4 : index
    %c0_56 = arith.constant 0 : index
    %112 = vector.load %arg11[%c4, %c0_56] : memref<6x198xf32, #tpu.memory_space<vmem>>, vector<1x198xf32>
    %113 = arith.truncf %110 : vector<8x198xf32> to vector<8x198xbf16>
    %cst_57 = arith.constant dense<0.000000e+00> : vector<8x198xf32>
    %114 = tpu.matmul %113, %74, %cst_57 {dimension_numbers = #tpu.dot_dimension_numbers<[1], [0], [0], [1], [0, 0, 1, 1], [], []>} : vector<8x198xbf16>, vector<198x198xbf16>, vector<8x198xf32> -> vector<8x198xf32>
    %cst_58 = arith.constant 0.0454545468 : f32
    %115 = vector.broadcast %cst_58 : f32 to vector<8x198xf32>
    %116 = arith.mulf %114, %115 : vector<8x198xf32>
    %117 = arith.subf %110, %116 : vector<8x198xf32>
    %118 = arith.mulf %117, %117 : vector<8x198xf32>
    %119 = arith.truncf %118 : vector<8x198xf32> to vector<8x198xbf16>
    %cst_59 = arith.constant dense<0.000000e+00> : vector<8x198xf32>
    %120 = tpu.matmul %119, %74, %cst_59 {dimension_numbers = #tpu.dot_dimension_numbers<[1], [0], [0], [1], [0, 0, 1, 1], [], []>} : vector<8x198xbf16>, vector<198x198xbf16>, vector<8x198xf32> -> vector<8x198xf32>
    %cst_60 = arith.constant 0.0454545468 : f32
    %121 = vector.broadcast %cst_60 : f32 to vector<8x198xf32>
    %122 = arith.mulf %120, %121 : vector<8x198xf32>
    %cst_61 = arith.constant 9.99999974E-6 : f32
    %123 = vector.broadcast %cst_61 : f32 to vector<8x198xf32>
    %124 = arith.addf %122, %123 : vector<8x198xf32>
    %125 = math.rsqrt %124 : vector<8x198xf32>
    %126 = arith.mulf %117, %125 : vector<8x198xf32>
    %127 = vector.broadcast %111 : vector<1x198xf32> to vector<8x198xf32>
    %128 = arith.mulf %126, %127 : vector<8x198xf32>
    %129 = vector.broadcast %112 : vector<1x198xf32> to vector<8x198xf32>
    %130 = arith.addf %128, %129 : vector<8x198xf32>
    %c0_62 = arith.constant 0 : index
    %c0_63 = arith.constant 0 : index
    %131 = vector.load %arg15[%c0_62, %c0_63] : memref<198x2xf32, #tpu.memory_space<vmem>>, vector<198x2xf32>
    %cst_64 = arith.constant dense<0.000000e+00> : vector<8x2xf32>
    %132 = tpu.matmul %130, %131, %cst_64 {dimension_numbers = #tpu.dot_dimension_numbers<[1], [0], [0], [1], [0, 0, 1, 1], [], []>} : vector<8x198xf32>, vector<198x2xf32>, vector<8x2xf32> -> vector<8x2xf32>
    %c0_65 = arith.constant 0 : index
    %c0_66 = arith.constant 0 : index
    %133 = vector.load %arg16[%c0_65, %c0_66] : memref<1x2xf32, #tpu.memory_space<vmem>>, vector<1x2xf32>
    %134 = vector.broadcast %133 : vector<1x2xf32> to vector<8x2xf32>
    %135 = arith.addf %132, %134 : vector<8x2xf32>
    %c0_67 = arith.constant 0 : index
    %c0_68 = arith.constant 0 : index
    %136 = vector.load %arg17[%c0_67, %c0_68] : memref<8x2xf32, #tpu.memory_space<vmem>>, vector<8x2xf32>
    tpu.vector_store %arg17[%c0_67, %c0_68], %135 {strides = array<i32>} : memref<8x2xf32, #tpu.memory_space<vmem>>, vector<8x2xf32>,
    return
  }
  func.func @transform_0(%arg0: i32) -> (i32, i32) {
    %c0_i32 = arith.constant 0 : i32
    %c0_i32_0 = arith.constant 0 : i32
    return %arg0, %c0_i32 : i32, i32
  }
  func.func @transform_1(%arg0: i32) -> (i32, i32) {
    %c0_i32 = arith.constant 0 : i32
    %c0_i32_0 = arith.constant 0 : i32
    %c0_i32_1 = arith.constant 0 : i32
    return %c0_i32, %c0_i32_0 : i32, i32
  }
  func.func @transform_2(%arg0: i32) -> (i32, i32) {
    %c0_i32 = arith.constant 0 : i32
    %c0_i32_0 = arith.constant 0 : i32
    %c0_i32_1 = arith.constant 0 : i32
    return %c0_i32, %c0_i32_0 : i32, i32
  }
  func.func @transform_3(%arg0: i32) -> (i32, i32) {
    %c0_i32 = arith.constant 0 : i32
    %c0_i32_0 = arith.constant 0 : i32
    %c0_i32_1 = arith.constant 0 : i32
    return %c0_i32, %c0_i32_0 : i32, i32
  }
  func.func @transform_4(%arg0: i32) -> (i32, i32) {
    %c0_i32 = arith.constant 0 : i32
    %c0_i32_0 = arith.constant 0 : i32
    %c0_i32_1 = arith.constant 0 : i32
    return %c0_i32, %c0_i32_0 : i32, i32
  }
  func.func @transform_5(%arg0: i32) -> (i32, i32) {
    %c0_i32 = arith.constant 0 : i32
    %c0_i32_0 = arith.constant 0 : i32
    %c0_i32_1 = arith.constant 0 : i32
    return %c0_i32, %c0_i32_0 : i32, i32
  }
  func.func @transform_6(%arg0: i32) -> (i32, i32) {
    %c0_i32 = arith.constant 0 : i32
    %c0_i32_0 = arith.constant 0 : i32
    %c0_i32_1 = arith.constant 0 : i32
    return %c0_i32, %c0_i32_0 : i32, i32
  }
  func.func @transform_7(%arg0: i32) -> (i32, i32) {
    %c0_i32 = arith.constant 0 : i32
    %c0_i32_0 = arith.constant 0 : i32
    %c0_i32_1 = arith.constant 0 : i32
    return %c0_i32, %c0_i32_0 : i32, i32
  }
  func.func @transform_8(%arg0: i32) -> (i32, i32) {
    %c0_i32 = arith.constant 0 : i32
    %c0_i32_0 = arith.constant 0 : i32
    %c0_i32_1 = arith.constant 0 : i32
    return %c0_i32, %c0_i32_0 : i32, i32
  }
  func.func @transform_9(%arg0: i32) -> (i32, i32) {
    %c0_i32 = arith.constant 0 : i32
    %c0_i32_0 = arith.constant 0 : i32
    %c0_i32_1 = arith.constant 0 : i32
    return %c0_i32, %c0_i32_0 : i32, i32
  }
  func.func @transform_10(%arg0: i32) -> (i32, i32) {
    %c0_i32 = arith.constant 0 : i32
    %c0_i32_0 = arith.constant 0 : i32
    %c0_i32_1 = arith.constant 0 : i32
    return %c0_i32, %c0_i32_0 : i32, i32
  }
  func.func @transform_11(%arg0: i32) -> (i32, i32) {
    %c0_i32 = arith.constant 0 : i32
    %c0_i32_0 = arith.constant 0 : i32
    %c0_i32_1 = arith.constant 0 : i32
    return %c0_i32, %c0_i32_0 : i32, i32
  }
  func.func @transform_12(%arg0: i32) -> (i32, i32) {
    %c0_i32 = arith.constant 0 : i32
    %c0_i32_0 = arith.constant 0 : i32
    %c0_i32_1 = arith.constant 0 : i32
    return %c0_i32, %c0_i32_0 : i32, i32
  }
  func.func @transform_13(%arg0: i32) -> (i32, i32) {
    %c0_i32 = arith.constant 0 : i32
    %c0_i32_0 = arith.constant 0 : i32
    %c0_i32_1 = arith.constant 0 : i32
    return %c0_i32, %c0_i32_0 : i32, i32
  }
  func.func @transform_14(%arg0: i32) -> (i32, i32) {
    %c0_i32 = arith.constant 0 : i32
    %c0_i32_0 = arith.constant 0 : i32
    %c0_i32_1 = arith.constant 0 : i32
    return %c0_i32, %c0_i32_0 : i32, i32
  }
  func.func @transform_15(%arg0: i32) -> (i32, i32) {
    %c0_i32 = arith.constant 0 : i32
    %c0_i32_0 = arith.constant 0 : i32
    %c0_i32_1 = arith.constant 0 : i32
    return %c0_i32, %c0_i32_0 : i32, i32
  }
  func.func @transform_16(%arg0: i32) -> (i32, i32) {
    %c0_i32 = arith.constant 0 : i32
    %c0_i32_0 = arith.constant 0 : i32
    return %arg0, %c0_i32 : i32, i32
  }
}

</mosaic_0001>

<llo_original>
// kernel: tpu_custom_call.1
$region0: #{tpu_custom_call.1}
  #allocation0 [shape = 'u32[]', space=smem, size = 0x4, offset = 0x4, fixed_abs, tag = 'smem constant byte address 0x4 - core index']
  #allocation1 [shape = 'u32[144,128]{1,0:T(1,128)}', space=vmem, size = 0x12000, scoped, tag = 'internal scratch']
  %s0 = inlined_call_operand.vmem [shape: f32[8,198], index: 0, kind: input, shape index: {}]
  %s1 = inlined_call_operand.vmem [shape: bf16[198,1188], index: 1, kind: input, shape index: {}]
  %s2 = inlined_call_operand.vmem [shape: bf16[396,198], index: 2, kind: input, shape index: {}]
  %s3 = inlined_call_operand.vmem [shape: bf16[198,1782], index: 3, kind: input, shape index: {}]
  %s4 = inlined_call_operand.vmem [shape: bf16[1782,81], index: 4, kind: input, shape index: {}]
  %s5 = inlined_call_operand.vmem [shape: bf16[81,81], index: 5, kind: input, shape index: {}]
  %s6 = inlined_call_operand.vmem [shape: bf16[81,1782], index: 6, kind: input, shape index: {}]
  %s7 = inlined_call_operand.vmem [shape: bf16[1782,198], index: 7, kind: input, shape index: {}]
  %s8 = inlined_call_operand.vmem [shape: bf16[198,198], index: 8, kind: input, shape index: {}]
  %s9 = inlined_call_operand.vmem [shape: f32[2,81], index: 9, kind: input, shape index: {}]
  %s10 = inlined_call_operand.vmem [shape: f32[6,198], index: 10, kind: input, shape index: {}]
  %s11 = inlined_call_operand.vmem [shape: f32[1,1152], index: 11, kind: input, shape index: {}]
  %s12 = inlined_call_operand.vmem [shape: bf16[198,1152], index: 12, kind: input, shape index: {}]
  %s13 = inlined_call_operand.vmem [shape: bf16[1152,198], index: 13, kind: input, shape index: {}]
  %s14 = inlined_call_operand.vmem [shape: f32[198,2], index: 14, kind: input, shape index: {}]
  %s15 = inlined_call_operand.vmem [shape: f32[1,2], index: 15, kind: input, shape index: {}]
  %s16 = inlined_call_operand.vmem [shape: f32[8,2], index: 16, kind: output, shape index: {}]
  %s17 = sld [smem:[#allocation0]]
  $region74: #{tpu_custom_call.1} parent=0
    _
  %s19 = ssub.s32 1, %s17
  %s20 = scalar_select 0, %s19, %s17
  // Predicated region
  $region2: #{tpu_custom_call.1} parent=0 // pred_check
    _
  $region3: #{tpu_custom_call.1} parent=0 // pred_check_branch
    %22 = sbr.rel (0) target = $region5
  $region4: #{tpu_custom_call.1} parent=0 // pred_region
    _
  $region5: #{tpu_custom_call.1} parent=0 // pred_fallthru
    _
  // Predicated region
  $region6: #{tpu_custom_call.1} parent=0 // pred_check
    _
  $region7: #{tpu_custom_call.1} parent=0 // pred_check_branch
    %24 = sbr.rel (0) target = $region9
  $region8: #{tpu_custom_call.1} parent=0 // pred_region
    _
  $region9: #{tpu_custom_call.1} parent=0 // pred_fallthru
    _
  // Predicated region
  $region10: #{tpu_custom_call.1} parent=0 // pred_check
    _
  $region11: #{tpu_custom_call.1} parent=0 // pred_check_branch
    %26 = sbr.rel (0) target = $region13
  $region12: #{tpu_custom_call.1} parent=0 // pred_region
    _
  $region13: #{tpu_custom_call.1} parent=0 // pred_fallthru
    _
  // Predicated region
  $region14: #{tpu_custom_call.1} parent=0 // pred_check
    _
  $region15: #{tpu_custom_call.1} parent=0 // pred_check_branch
    %28 = sbr.rel (0) target = $region17
  $region16: #{tpu_custom_call.1} parent=0 // pred_region
    _
  $region17: #{tpu_custom_call.1} parent=0 // pred_fallthru
    _
  // Predicated region
  $region18: #{tpu_custom_call.1} parent=0 // pred_check
    _
  $region19: #{tpu_custom_call.1} parent=0 // pred_check_branch
    %30 = sbr.rel (0) target = $region21
  $region20: #{tpu_custom_call.1} parent=0 // pred_region
    _
  $region21: #{tpu_custom_call.1} parent=0 // pred_fallthru
    _
  // Predicated region
  $region22: #{tpu_custom_call.1} parent=0 // pred_check
    _
  $region23: #{tpu_custom_call.1} parent=0 // pred_check_branch
    %32 = sbr.rel (0) target = $region25
  $region24: #{tpu_custom_call.1} parent=0 // pred_region
    _
  $region25: #{tpu_custom_call.1} parent=0 // pred_fallthru
    _
  // Predicated region
  $region26: #{tpu_custom_call.1} parent=0 // pred_check
    _
  $region27: #{tpu_custom_call.1} parent=0 // pred_check_branch
    %34 = sbr.rel (0) target = $region29
  $region28: #{tpu_custom_call.1} parent=0 // pred_region
    _
  $region29: #{tpu_custom_call.1} parent=0 // pred_fallthru
    _
  // Predicated region
  $region30: #{tpu_custom_call.1} parent=0 // pred_check
    _
  $region31: #{tpu_custom_call.1} parent=0 // pred_check_branch
    %36 = sbr.rel (0) target = $region33
  $region32: #{tpu_custom_call.1} parent=0 // pred_region
    _
  $region33: #{tpu_custom_call.1} parent=0 // pred_fallthru
    _
  // Predicated region
  $region34: #{tpu_custom_call.1} parent=0 // pred_check
    _
  $region35: #{tpu_custom_call.1} parent=0 // pred_check_branch
    %38 = sbr.rel (0) target = $region37
  $region36: #{tpu_custom_call.1} parent=0 // pred_region
    _
  $region37: #{tpu_custom_call.1} parent=0 // pred_fallthru
    _
  // Predicated region
  $region38: #{tpu_custom_call.1} parent=0 // pred_check
    _
  $region39: #{tpu_custom_call.1} parent=0 // pred_check_branch
    %40 = sbr.rel (0) target = $region41
  $region40: #{tpu_custom_call.1} parent=0 // pred_region
    _
  $region41: #{tpu_custom_call.1} parent=0 // pred_fallthru
    _
  // Predicated region
  $region42: #{tpu_custom_call.1} parent=0 // pred_check
    _
  $region43: #{tpu_custom_call.1} parent=0 // pred_check_branch
    %42 = sbr.rel (0) target = $region45
  $region44: #{tpu_custom_call.1} parent=0 // pred_region
    _
  $region45: #{tpu_custom_call.1} parent=0 // pred_fallthru
    _
  // Predicated region
  $region46: #{tpu_custom_call.1} parent=0 // pred_check
    _
  $region47: #{tpu_custom_call.1} parent=0 // pred_check_branch
    %44 = sbr.rel (0) target = $region49
  $region48: #{tpu_custom_call.1} parent=0 // pred_region
    _
  $region49: #{tpu_custom_call.1} parent=0 // pred_fallthru
    _
  // Predicated region
  $region50: #{tpu_custom_call.1} parent=0 // pred_check
    _
  $region51: #{tpu_custom_call.1} parent=0 // pred_check_branch
    %46 = sbr.rel (0) target = $region53
  $region52: #{tpu_custom_call.1} parent=0 // pred_region
    _
  $region53: #{tpu_custom_call.1} parent=0 // pred_fallthru
    _
  // Predicated region
  $region54: #{tpu_custom_call.1} parent=0 // pred_check
    _
  $region55: #{tpu_custom_call.1} parent=0 // pred_check_branch
    %48 = sbr.rel (0) target = $region57
  $region56: #{tpu_custom_call.1} parent=0 // pred_region
    _
  $region57: #{tpu_custom_call.1} parent=0 // pred_fallthru
    _
  // Predicated region
  $region58: #{tpu_custom_call.1} parent=0 // pred_check
    _
  $region59: #{tpu_custom_call.1} parent=0 // pred_check_branch
    %50 = sbr.rel (0) target = $region61
  $region60: #{tpu_custom_call.1} parent=0 // pred_region
    _
  $region61: #{tpu_custom_call.1} parent=0 // pred_fallthru
    _
  // Predicated region
  $region62: #{tpu_custom_call.1} parent=0 // pred_check
    _
  $region63: #{tpu_custom_call.1} parent=0 // pred_check_branch
    %52 = sbr.rel (0) target = $region65
  $region64: #{tpu_custom_call.1} parent=0 // pred_region
    _
  $region65: #{tpu_custom_call.1} parent=0 // pred_fallthru
    _
  %v54 = vld [vmem:[%s0] sm:$0xff]
  %v55 = vld [vmem:[%s0 + $0x8] sm:$0xff]
  %v56 = vld [vmem:[%s10] ss:$8 sm:$0x3]
  %v58 = vlaneseq
  %v59 = vshrl.u32 %v58, 7
  %v60 = vsub.s32 0, %v59
  %v61 = vrot.slane %v56, %v60
  %v62 = vlaneseq
  %v63 = vshrl.u32 %v62, 7
  %v64 = vsub.s32 1, %v63
  %v65 = vrot.slane %v56, %v64
  %v68 = vadd.f32 %v54, %v61
  %v69 = vadd.f32 %v55, %v65
  %v70 = vpack.c.bf16 %v68, %v68
  %v71 = vpack.c.bf16 %v69, %v69
  %v72 = vld [vmem:[%s3] sm:$0xff]
  %v73 = vld [vmem:[%s3 + $0x8] sm:$0xff]
  %v74 = vld [vmem:[%s3 + $0x10] sm:$0xff]
  %v75 = vld [vmem:[%s3 + $0x18] sm:$0xff]
  %v76 = vld [vmem:[%s3 + $0x20] sm:$0xff]
  %v77 = vld [vmem:[%s3 + $0x28] sm:$0xff]
  %v78 = vld [vmem:[%s3 + $0x30] sm:$0xff]
  %v79 = vld [vmem:[%s3 + $0x38] sm:$0xff]
  %v80 = vld [vmem:[%s3 + $0x40] sm:$0xff]
  %v81 = vld [vmem:[%s3 + $0x48] sm:$0xff]
  %v82 = vld [vmem:[%s3 + $0x50] sm:$0xff]
  %v83 = vld [vmem:[%s3 + $0x58] sm:$0xff]
  %v84 = vld [vmem:[%s3 + $0x60] sm:$0xff]
  %v85 = vld [vmem:[%s3 + $0x68] sm:$0xff]
  %v86 = vld [vmem:[%s3 + $0x70] sm:$0xff]
  %v87 = vld [vmem:[%s3 + $0x78] sm:$0xff]
  %v88 = vld [vmem:[%s3 + $0x80] sm:$0xff]
  %v89 = vld [vmem:[%s3 + $0x88] sm:$0xff]
  %v90 = vld [vmem:[%s3 + $0x90] sm:$0xff]
  %v91 = vld [vmem:[%s3 + $0x98] sm:$0xff]
  %v92 = vld [vmem:[%s3 + $0xa0] sm:$0xff]
  %v93 = vld [vmem:[%s3 + $0xa8] sm:$0xff]
  %v94 = vld [vmem:[%s3 + $0xb0] sm:$0xff]
  %v95 = vld [vmem:[%s3 + $0xb8] sm:$0xff]
  %v96 = vld [vmem:[%s3 + $0xc0] sm:$0xff]
  %v97 = vld [vmem:[%s3 + $0xc8] sm:$0xff]
  %v98 = vld [vmem:[%s3 + $0xd0] sm:$0xff]
  %v99 = vld [vmem:[%s3 + $0xd8] sm:$0xff]
  %v100 = vld [vmem:[%s3 + $0xe0] sm:$0xff]
  %v101 = vld [vmem:[%s3 + $0xe8] sm:$0xff]
  %v102 = vld [vmem:[%s3 + $0xf0] sm:$0xff]
  %v103 = vld [vmem:[%s3 + $0xf8] sm:$0xff]
  %v104 = vld [vmem:[%s3 + $0x100] sm:$0xff]
  %v105 = vld [vmem:[%s3 + $0x108] sm:$0xff]
  %v106 = vld [vmem:[%s3 + $0x110] sm:$0xff]
  %v107 = vld [vmem:[%s3 + $0x118] sm:$0xff]
  %v108 = vld [vmem:[%s3 + $0x120] sm:$0xff]
  %v109 = vld [vmem:[%s3 + $0x128] sm:$0xff]
  %v110 = vld [vmem:[%s3 + $0x130] sm:$0xff]
  %v111 = vld [vmem:[%s3 + $0x138] sm:$0xff]
  %v112 = vld [vmem:[%s3 + $0x140] sm:$0xff]
  %v113 = vld [vmem:[%s3 + $0x148] sm:$0xff]
  %v114 = vld [vmem:[%s3 + $0x150] sm:$0xff]
  %v115 = vld [vmem:[%s3 + $0x158] sm:$0xff]
  %v116 = vld [vmem:[%s3 + $0x160] sm:$0xff]
  %v117 = vld [vmem:[%s3 + $0x168] sm:$0xff]
  %v118 = vld [vmem:[%s3 + $0x170] sm:$0xff]
  %v119 = vld [vmem:[%s3 + $0x178] sm:$0xff]
  %v120 = vld [vmem:[%s3 + $0x180] sm:$0xff]
  %v121 = vld [vmem:[%s3 + $0x188] sm:$0xff]
  %v122 = vld [vmem:[%s3 + $0x190] sm:$0xff]
  %v123 = vld [vmem:[%s3 + $0x198] sm:$0xff]
  %v124 = vld [vmem:[%s3 + $0x1a0] sm:$0xff]
  %v125 = vld [vmem:[%s3 + $0x1a8] sm:$0xff]
  %v126 = vld [vmem:[%s3 + $0x1b0] sm:$0xff]
  %v127 = vld [vmem:[%s3 + $0x1b8] sm:$0xff]
  %v128 = vld [vmem:[%s3 + $0x1c0] sm:$0xff]
  %v129 = vld [vmem:[%s3 + $0x1c8] sm:$0xff]
  %v130 = vld [vmem:[%s3 + $0x1d0] sm:$0xff]
  %v131 = vld [vmem:[%s3 + $0x1d8] sm:$0xff]
  %v132 = vld [vmem:[%s3 + $0x1e0] sm:$0xff]
  %v133 = vld [vmem:[%s3 + $0x1e8] sm:$0xff]
  %v134 = vld [vmem:[%s3 + $0x1f0] sm:$0xff]
  %v135 = vld [vmem:[%s3 + $0x1f8] sm:$0xff]
  %v136 = vld [vmem:[%s3 + $0x200] sm:$0xff]
  %v137 = vld [vmem:[%s3 + $0x208] sm:$0xff]
  %v138 = vld [vmem:[%s3 + $0x210] sm:$0xff]
  %v139 = vld [vmem:[%s3 + $0x218] sm:$0xff]
  %v140 = vld [vmem:[%s3 + $0x220] sm:$0xff]
  %v141 = vld [vmem:[%s3 + $0x228] sm:$0xff]
  %v142 = vld [vmem:[%s3 + $0x230] sm:$0xff]
  %v143 = vld [vmem:[%s3 + $0x238] sm:$0xff]
  %v144 = vld [vmem:[%s3 + $0x240] sm:$0xff]
  %v145 = vld [vmem:[%s3 + $0x248] sm:$0xff]
  %v146 = vld [vmem:[%s3 + $0x250] sm:$0xff]
  %v147 = vld [vmem:[%s3 + $0x258] sm:$0xff]
  %v148 = vld [vmem:[%s3 + $0x260] sm:$0xff]
  %v149 = vld [vmem:[%s3 + $0x268] sm:$0xff]
  %v150 = vld [vmem:[%s3 + $0x270] sm:$0xff]
  %v151 = vld [vmem:[%s3 + $0x278] sm:$0xff]
  %v152 = vld [vmem:[%s3 + $0x280] sm:$0xff]
  %v153 = vld [vmem:[%s3 + $0x288] sm:$0xff]
  %v154 = vld [vmem:[%s3 + $0x290] sm:$0xff]
  %v155 = vld [vmem:[%s3 + $0x298] sm:$0xff]
  %v156 = vld [vmem:[%s3 + $0x2a0] sm:$0xff]
  %v157 = vld [vmem:[%s3 + $0x2a8] sm:$0xff]
  %v158 = vld [vmem:[%s3 + $0x2b0] sm:$0xff]
  %v159 = vld [vmem:[%s3 + $0x2b8] sm:$0xff]
  %v160 = vld [vmem:[%s3 + $0x2c0] sm:$0xff]
  %v161 = vld [vmem:[%s3 + $0x2c8] sm:$0xff]
  %v162 = vld [vmem:[%s3 + $0x2d0] sm:$0xff]
  %v163 = vld [vmem:[%s3 + $0x2d8] sm:$0xff]
  %v164 = vld [vmem:[%s3 + $0x2e0] sm:$0xff]
  %v165 = vld [vmem:[%s3 + $0x2e8] sm:$0xff]
  %v166 = vld [vmem:[%s3 + $0x2f0] sm:$0xff]
  %v167 = vld [vmem:[%s3 + $0x2f8] sm:$0xff]
  %v168 = vld [vmem:[%s3 + $0x300] sm:$0xff]
  %v169 = vld [vmem:[%s3 + $0x308] sm:$0xff]
  %v170 = vld [vmem:[%s3 + $0x310] sm:$0xff]
  %v171 = vld [vmem:[%s3 + $0x318] sm:$0xff]
  %v172 = vld [vmem:[%s3 + $0x320] sm:$0xff]
  %v173 = vld [vmem:[%s3 + $0x328] sm:$0xff]
  %v174 = vld [vmem:[%s3 + $0x330] sm:$0xff]
  %v175 = vld [vmem:[%s3 + $0x338] sm:$0xff]
  %v176 = vld [vmem:[%s3 + $0x340] sm:$0xff]
  %v177 = vld [vmem:[%s3 + $0x348] sm:$0xff]
  %v178 = vld [vmem:[%s3 + $0x350] sm:$0xff]
  %v179 = vld [vmem:[%s3 + $0x358] sm:$0xff]
  %v180 = vld [vmem:[%s3 + $0x360] sm:$0xff]
  %v181 = vld [vmem:[%s3 + $0x368] sm:$0xff]
  %v182 = vld [vmem:[%s3 + $0x370] sm:$0xff]
  %v183 = vld [vmem:[%s3 + $0x378] sm:$0xff]
  %v184 = vld [vmem:[%s3 + $0x380] sm:$0xff]
  %v185 = vld [vmem:[%s3 + $0x388] sm:$0xff]
  %v186 = vld [vmem:[%s3 + $0x390] sm:$0xff]
  %v187 = vld [vmem:[%s3 + $0x398] sm:$0xff]
  %v188 = vld [vmem:[%s3 + $0x3a0] sm:$0xff]
  %v189 = vld [vmem:[%s3 + $0x3a8] sm:$0xff]
  %v190 = vld [vmem:[%s3 + $0x3b0] sm:$0xff]
  %v191 = vld [vmem:[%s3 + $0x3b8] sm:$0xff]
  %v192 = vld [vmem:[%s3 + $0x3c0] sm:$0xff]
  %v193 = vld [vmem:[%s3 + $0x3c8] sm:$0xff]
  %v194 = vld [vmem:[%s3 + $0x3d0] sm:$0xff]
  %v195 = vld [vmem:[%s3 + $0x3d8] sm:$0xff]
  %v196 = vld [vmem:[%s3 + $0x3e0] sm:$0xff]
  %v197 = vld [vmem:[%s3 + $0x3e8] sm:$0xff]
  %v198 = vld [vmem:[%s3 + $0x3f0] sm:$0xff]
  %v199 = vld [vmem:[%s3 + $0x3f8] sm:$0xff]
  %v200 = vld [vmem:[%s3 + $0x400] sm:$0xff]
  %v201 = vld [vmem:[%s3 + $0x408] sm:$0xff]
  %v202 = vld [vmem:[%s3 + $0x410] sm:$0xff]
  %v203 = vld [vmem:[%s3 + $0x418] sm:$0xff]
  %v204 = vld [vmem:[%s3 + $0x420] sm:$0xff]
  %v205 = vld [vmem:[%s3 + $0x428] sm:$0xff]
  %v206 = vld [vmem:[%s3 + $0x430] sm:$0xff]
  %v207 = vld [vmem:[%s3 + $0x438] sm:$0xff]
  %v208 = vld [vmem:[%s3 + $0x440] sm:$0xff]
  %v209 = vld [vmem:[%s3 + $0x448] sm:$0xff]
  %v210 = vld [vmem:[%s3 + $0x450] sm:$0xff]
  %v211 = vld [vmem:[%s3 + $0x458] sm:$0xff]
  %v212 = vld [vmem:[%s3 + $0x460] sm:$0xff]
  %v213 = vld [vmem:[%s3 + $0x468] sm:$0xff]
  %v214 = vld [vmem:[%s3 + $0x470] sm:$0xff]
  %v215 = vld [vmem:[%s3 + $0x478] sm:$0xff]
  %v216 = vld [vmem:[%s3 + $0x480] sm:$0xff]
  %v217 = vld [vmem:[%s3 + $0x488] sm:$0xff]
  %v218 = vld [vmem:[%s3 + $0x490] sm:$0xff]
  %v219 = vld [vmem:[%s3 + $0x498] sm:$0xff]
  %v220 = vld [vmem:[%s3 + $0x4a0] sm:$0xff]
  %v221 = vld [vmem:[%s3 + $0x4a8] sm:$0xff]
  %v222 = vld [vmem:[%s3 + $0x4b0] sm:$0xff]
  %v223 = vld [vmem:[%s3 + $0x4b8] sm:$0xff]
  %v224 = vld [vmem:[%s3 + $0x4c0] sm:$0xff]
  %v225 = vld [vmem:[%s3 + $0x4c8] sm:$0xff]
  %v226 = vld [vmem:[%s3 + $0x4d0] sm:$0xff]
  %v227 = vld [vmem:[%s3 + $0x4d8] sm:$0xff]
  %v228 = vld [vmem:[%s3 + $0x4e0] sm:$0xff]
  %v229 = vld [vmem:[%s3 + $0x4e8] sm:$0xff]
  %v230 = vld [vmem:[%s3 + $0x4f0] sm:$0xff]
  %v231 = vld [vmem:[%s3 + $0x4f8] sm:$0xff]
  %v232 = vld [vmem:[%s3 + $0x500] sm:$0xff]
  %v233 = vld [vmem:[%s3 + $0x508] sm:$0xff]
  %v234 = vld [vmem:[%s3 + $0x510] sm:$0xff]
  %v235 = vld [vmem:[%s3 + $0x518] sm:$0xff]
  %v236 = vld [vmem:[%s3 + $0x520] sm:$0xff]
  %v237 = vld [vmem:[%s3 + $0x528] sm:$0xff]
  %v238 = vld [vmem:[%s3 + $0x530] sm:$0xff]
  %v239 = vld [vmem:[%s3 + $0x538] sm:$0xff]
  %v240 = vld [vmem:[%s3 + $0x540] sm:$0x77]
  %v241 = vld [vmem:[%s3 + $0x548] sm:$0x77]
  %v242 = vld [vmem:[%s3 + $0x550] sm:$0x77]
  %v243 = vld [vmem:[%s3 + $0x558] sm:$0x77]
  %v244 = vld [vmem:[%s3 + $0x560] sm:$0x77]
  %v245 = vld [vmem:[%s3 + $0x568] sm:$0x77]
  %v246 = vld [vmem:[%s3 + $0x570] sm:$0x77]
  %v247 = vld [vmem:[%s4] sm:$0xf]
  %v248 = vld [vmem:[%s4 + $0x4] sm:$0xf]
  %v249 = vld [vmem:[%s4 + $0x8] sm:$0xf]
  %v250 = vld [vmem:[%s4 + $0xc] sm:$0xf]
  %v251 = vld [vmem:[%s4 + $0x10] sm:$0xf]
  %v252 = vld [vmem:[%s4 + $0x14] sm:$0xf]
  %v253 = vld [vmem:[%s4 + $0x18] sm:$0xf]
  %v254 = vld [vmem:[%s4 + $0x1c] sm:$0xf]
  %v255 = vld [vmem:[%s4 + $0x20] sm:$0xf]
  %v256 = vld [vmem:[%s4 + $0x24] sm:$0xf]
  %v257 = vld [vmem:[%s4 + $0x28] sm:$0xf]
  %v258 = vld [vmem:[%s4 + $0x2c] sm:$0xf]
  %v259 = vld [vmem:[%s4 + $0x30] sm:$0xf]
  %v260 = vld [vmem:[%s4 + $0x34] sm:$0xf]
  %v261 = vld [vmem:[%s4 + $0x38] sm:$0xf]
  %v262 = vld [vmem:[%s4 + $0x3c] sm:$0xf]
  %v263 = vld [vmem:[%s4 + $0x40] sm:$0xf]
  %v264 = vld [vmem:[%s4 + $0x44] sm:$0xf]
  %v265 = vld [vmem:[%s4 + $0x48] sm:$0xf]
  %v266 = vld [vmem:[%s4 + $0x4c] sm:$0xf]
  %v267 = vld [vmem:[%s4 + $0x50] sm:$0xf]
  %v268 = vld [vmem:[%s4 + $0x54] sm:$0xf]
  %v269 = vld [vmem:[%s4 + $0x58] sm:$0xf]
  %v270 = vld [vmem:[%s4 + $0x5c] sm:$0xf]
  %v271 = vld [vmem:[%s4 + $0x60] sm:$0xf]
  %v272 = vld [vmem:[%s4 + $0x64] sm:$0xf]
  %v273 = vld [vmem:[%s4 + $0x68] sm:$0xf]
  %v274 = vld [vmem:[%s4 + $0x6c] sm:$0xf]
  %v275 = vld [vmem:[%s4 + $0x70] sm:$0xf]
  %v276 = vld [vmem:[%s4 + $0x74] sm:$0xf]
  %v277 = vld [vmem:[%s4 + $0x78] sm:$0xf]
  %v278 = vld [vmem:[%s4 + $0x7c] sm:$0xf]
  %v279 = vld [vmem:[%s4 + $0x80] sm:$0xf]
  %v280 = vld [vmem:[%s4 + $0x84] sm:$0xf]
  %v281 = vld [vmem:[%s4 + $0x88] sm:$0xf]
  %v282 = vld [vmem:[%s4 + $0x8c] sm:$0xf]
  %v283 = vld [vmem:[%s4 + $0x90] sm:$0xf]
  %v284 = vld [vmem:[%s4 + $0x94] sm:$0xf]
  %v285 = vld [vmem:[%s4 + $0x98] sm:$0xf]
  %v286 = vld [vmem:[%s4 + $0x9c] sm:$0xf]
  %v287 = vld [vmem:[%s4 + $0xa0] sm:$0xf]
  %v288 = vld [vmem:[%s4 + $0xa4] sm:$0xf]
  %v289 = vld [vmem:[%s4 + $0xa8] sm:$0xf]
  %v290 = vld [vmem:[%s4 + $0xac] sm:$0xf]
  %v291 = vld [vmem:[%s4 + $0xb0] sm:$0xf]
  %v292 = vld [vmem:[%s4 + $0xb4] sm:$0xf]
  %v293 = vld [vmem:[%s4 + $0xb8] sm:$0xf]
  %v294 = vld [vmem:[%s4 + $0xbc] sm:$0xf]
  %v295 = vld [vmem:[%s4 + $0xc0] sm:$0xf]
  %v296 = vld [vmem:[%s4 + $0xc4] sm:$0xf]
  %v297 = vld [vmem:[%s4 + $0xc8] sm:$0xf]
  %v298 = vld [vmem:[%s4 + $0xcc] sm:$0xf]
  %v299 = vld [vmem:[%s4 + $0xd0] sm:$0xf]
  %v300 = vld [vmem:[%s4 + $0xd4] sm:$0xf]
  %v301 = vld [vmem:[%s4 + $0xd8] sm:$0xf]
  %v302 = vld [vmem:[%s4 + $0xdc] sm:$0xf]
  %v303 = vld [vmem:[%s4 + $0xe0] sm:$0xf]
  %v304 = vld [vmem:[%s4 + $0xe4] sm:$0xf]
  %v305 = vld [vmem:[%s4 + $0xe8] sm:$0xf]
  %v306 = vld [vmem:[%s4 + $0xec] sm:$0xf]
  %v307 = vld [vmem:[%s4 + $0xf0] sm:$0xf]
  %v308 = vld [vmem:[%s4 + $0xf4] sm:$0xf]
  %v309 = vld [vmem:[%s4 + $0xf8] sm:$0xf]
  %v310 = vld [vmem:[%s4 + $0xfc] sm:$0xf]
  %v311 = vld [vmem:[%s4 + $0x100] sm:$0xf]
  %v312 = vld [vmem:[%s4 + $0x104] sm:$0xf]
  %v313 = vld [vmem:[%s4 + $0x108] sm:$0xf]
  %v314 = vld [vmem:[%s4 + $0x10c] sm:$0xf]
  %v315 = vld [vmem:[%s4 + $0x110] sm:$0xf]
  %v316 = vld [vmem:[%s4 + $0x114] sm:$0xf]
  %v317 = vld [vmem:[%s4 + $0x118] sm:$0xf]
  %v318 = vld [vmem:[%s4 + $0x11c] sm:$0xf]
  %v319 = vld [vmem:[%s4 + $0x120] sm:$0xf]
  %v320 = vld [vmem:[%s4 + $0x124] sm:$0xf]
  %v321 = vld [vmem:[%s4 + $0x128] sm:$0xf]
  %v322 = vld [vmem:[%s4 + $0x12c] sm:$0xf]
  %v323 = vld [vmem:[%s4 + $0x130] sm:$0xf]
  %v324 = vld [vmem:[%s4 + $0x134] sm:$0xf]
  %v325 = vld [vmem:[%s4 + $0x138] sm:$0xf]
  %v326 = vld [vmem:[%s4 + $0x13c] sm:$0xf]
  %v327 = vld [vmem:[%s4 + $0x140] sm:$0xf]
  %v328 = vld [vmem:[%s4 + $0x144] sm:$0xf]
  %v329 = vld [vmem:[%s4 + $0x148] sm:$0xf]
  %v330 = vld [vmem:[%s4 + $0x14c] sm:$0xf]
  %v331 = vld [vmem:[%s4 + $0x150] sm:$0xf]
  %v332 = vld [vmem:[%s4 + $0x154] sm:$0xf]
  %v333 = vld [vmem:[%s4 + $0x158] sm:$0xf]
  %v334 = vld [vmem:[%s4 + $0x15c] sm:$0xf]
  %v335 = vld [vmem:[%s4 + $0x160] sm:$0xf]
  %v336 = vld [vmem:[%s4 + $0x164] sm:$0xf]
  %v337 = vld [vmem:[%s4 + $0x168] sm:$0xf]
  %v338 = vld [vmem:[%s4 + $0x16c] sm:$0xf]
  %v339 = vld [vmem:[%s4 + $0x170] sm:$0xf]
  %v340 = vld [vmem:[%s4 + $0x174] sm:$0xf]
  %v341 = vld [vmem:[%s4 + $0x178] sm:$0xf]
  %v342 = vld [vmem:[%s4 + $0x17c] sm:$0xf]
  %v343 = vld [vmem:[%s4 + $0x180] sm:$0xf]
  %v344 = vld [vmem:[%s4 + $0x184] sm:$0xf]
  %v345 = vld [vmem:[%s4 + $0x188] sm:$0xf]
  %v346 = vld [vmem:[%s4 + $0x18c] sm:$0xf]
  %v347 = vld [vmem:[%s4 + $0x190] sm:$0xf]
  %v348 = vld [vmem:[%s4 + $0x194] sm:$0xf]
  %v349 = vld [vmem:[%s4 + $0x198] sm:$0xf]
  %v350 = vld [vmem:[%s4 + $0x19c] sm:$0xf]
  %v351 = vld [vmem:[%s4 + $0x1a0] sm:$0xf]
  %v352 = vld [vmem:[%s4 + $0x1a4] sm:$0xf]
  %v353 = vld [vmem:[%s4 + $0x1a8] sm:$0xf]
  %v354 = vld [vmem:[%s4 + $0x1ac] sm:$0xf]
  %v355 = vld [vmem:[%s4 + $0x1b0] sm:$0xf]
  %v356 = vld [vmem:[%s4 + $0x1b4] sm:$0xf]
  %v357 = vld [vmem:[%s4 + $0x1b8] sm:$0xf]
  %v358 = vld [vmem:[%s4 + $0x1bc] sm:$0xf]
  %v359 = vld [vmem:[%s4 + $0x1c0] sm:$0xf]
  %v360 = vld [vmem:[%s4 + $0x1c4] sm:$0xf]
  %v361 = vld [vmem:[%s4 + $0x1c8] sm:$0xf]
  %v362 = vld [vmem:[%s4 + $0x1cc] sm:$0xf]
  %v363 = vld [vmem:[%s4 + $0x1d0] sm:$0xf]
  %v364 = vld [vmem:[%s4 + $0x1d4] sm:$0xf]
  %v365 = vld [vmem:[%s4 + $0x1d8] sm:$0xf]
  %v366 = vld [vmem:[%s4 + $0x1dc] sm:$0xf]
  %v367 = vld [vmem:[%s4 + $0x1e0] sm:$0xf]
  %v368 = vld [vmem:[%s4 + $0x1e4] sm:$0xf]
  %v369 = vld [vmem:[%s4 + $0x1e8] sm:$0xf]
  %v370 = vld [vmem:[%s4 + $0x1ec] sm:$0xf]
  %v371 = vld [vmem:[%s4 + $0x1f0] sm:$0xf]
  %v372 = vld [vmem:[%s4 + $0x1f4] sm:$0xf]
  %v373 = vld [vmem:[%s4 + $0x1f8] sm:$0xf]
  %v374 = vld [vmem:[%s4 + $0x1fc] sm:$0xf]
  %v375 = vld [vmem:[%s4 + $0x200] sm:$0xf]
  %v376 = vld [vmem:[%s4 + $0x204] sm:$0xf]
  %v377 = vld [vmem:[%s4 + $0x208] sm:$0xf]
  %v378 = vld [vmem:[%s4 + $0x20c] sm:$0xf]
  %v379 = vld [vmem:[%s4 + $0x210] sm:$0xf]
  %v380 = vld [vmem:[%s4 + $0x214] sm:$0xf]
  %v381 = vld [vmem:[%s4 + $0x218] sm:$0xf]
  %v382 = vld [vmem:[%s4 + $0x21c] sm:$0xf]
  %v383 = vld [vmem:[%s4 + $0x220] sm:$0xf]
  %v384 = vld [vmem:[%s4 + $0x224] sm:$0xf]
  %v385 = vld [vmem:[%s4 + $0x228] sm:$0xf]
  %v386 = vld [vmem:[%s4 + $0x22c] sm:$0xf]
  %v387 = vld [vmem:[%s4 + $0x230] sm:$0xf]
  %v388 = vld [vmem:[%s4 + $0x234] sm:$0xf]
  %v389 = vld [vmem:[%s4 + $0x238] sm:$0xf]
  %v390 = vld [vmem:[%s4 + $0x23c] sm:$0xf]
  %v391 = vld [vmem:[%s4 + $0x240] sm:$0xf]
  %v392 = vld [vmem:[%s4 + $0x244] sm:$0xf]
  %v393 = vld [vmem:[%s4 + $0x248] sm:$0xf]
  %v394 = vld [vmem:[%s4 + $0x24c] sm:$0xf]
  %v395 = vld [vmem:[%s4 + $0x250] sm:$0xf]
  %v396 = vld [vmem:[%s4 + $0x254] sm:$0xf]
  %v397 = vld [vmem:[%s4 + $0x258] sm:$0xf]
  %v398 = vld [vmem:[%s4 + $0x25c] sm:$0xf]
  %v399 = vld [vmem:[%s4 + $0x260] sm:$0xf]
  %v400 = vld [vmem:[%s4 + $0x264] sm:$0xf]
  %v401 = vld [vmem:[%s4 + $0x268] sm:$0xf]
  %v402 = vld [vmem:[%s4 + $0x26c] sm:$0xf]
  %v403 = vld [vmem:[%s4 + $0x270] sm:$0xf]
  %v404 = vld [vmem:[%s4 + $0x274] sm:$0xf]
  %v405 = vld [vmem:[%s4 + $0x278] sm:$0xf]
  %v406 = vld [vmem:[%s4 + $0x27c] sm:$0xf]
  %v407 = vld [vmem:[%s4 + $0x280] sm:$0xf]
  %v408 = vld [vmem:[%s4 + $0x284] sm:$0xf]
  %v409 = vld [vmem:[%s4 + $0x288] sm:$0xf]
  %v410 = vld [vmem:[%s4 + $0x28c] sm:$0xf]
  %v411 = vld [vmem:[%s4 + $0x290] sm:$0xf]
  %v412 = vld [vmem:[%s4 + $0x294] sm:$0xf]
  %v413 = vld [vmem:[%s4 + $0x298] sm:$0xf]
  %v414 = vld [vmem:[%s4 + $0x29c] sm:$0xf]
  %v415 = vld [vmem:[%s4 + $0x2a0] sm:$0xf]
  %v416 = vld [vmem:[%s4 + $0x2a4] sm:$0xf]
  %v417 = vld [vmem:[%s4 + $0x2a8] sm:$0xf]
  %v418 = vld [vmem:[%s4 + $0x2ac] sm:$0xf]
  %v419 = vld [vmem:[%s4 + $0x2b0] sm:$0xf]
  %v420 = vld [vmem:[%s4 + $0x2b4] sm:$0xf]
  %v421 = vld [vmem:[%s4 + $0x2b8] sm:$0xf]
  %v422 = vld [vmem:[%s4 + $0x2bc] sm:$0xf]
  %v423 = vld [vmem:[%s4 + $0x2c0] sm:$0xf]
  %v424 = vld [vmem:[%s4 + $0x2c4] sm:$0xf]
  %v425 = vld [vmem:[%s4 + $0x2c8] sm:$0xf]
  %v426 = vld [vmem:[%s4 + $0x2cc] sm:$0xf]
  %v427 = vld [vmem:[%s4 + $0x2d0] sm:$0xf]
  %v428 = vld [vmem:[%s4 + $0x2d4] sm:$0xf]
  %v429 = vld [vmem:[%s4 + $0x2d8] sm:$0xf]
  %v430 = vld [vmem:[%s4 + $0x2dc] sm:$0xf]
  %v431 = vld [vmem:[%s4 + $0x2e0] sm:$0xf]
  %v432 = vld [vmem:[%s4 + $0x2e4] sm:$0xf]
  %v433 = vld [vmem:[%s4 + $0x2e8] sm:$0xf]
  %v434 = vld [vmem:[%s4 + $0x2ec] sm:$0xf]
  %v435 = vld [vmem:[%s4 + $0x2f0] sm:$0xf]
  %v436 = vld [vmem:[%s4 + $0x2f4] sm:$0xf]
  %v437 = vld [vmem:[%s4 + $0x2f8] sm:$0xf]
  %v438 = vld [vmem:[%s4 + $0x2fc] sm:$0xf]
  %v439 = vld [vmem:[%s4 + $0x300] sm:$0xf]
  %v440 = vld [vmem:[%s4 + $0x304] sm:$0xf]
  %v441 = vld [vmem:[%s4 + $0x308] sm:$0xf]
  %v442 = vld [vmem:[%s4 + $0x30c] sm:$0xf]
  %v443 = vld [vmem:[%s4 + $0x310] sm:$0xf]
  %v444 = vld [vmem:[%s4 + $0x314] sm:$0xf]
  %v445 = vld [vmem:[%s4 + $0x318] sm:$0xf]
  %v446 = vld [vmem:[%s4 + $0x31c] sm:$0xf]
  %v447 = vld [vmem:[%s4 + $0x320] sm:$0xf]
  %v448 = vld [vmem:[%s4 + $0x324] sm:$0xf]
  %v449 = vld [vmem:[%s4 + $0x328] sm:$0xf]
  %v450 = vld [vmem:[%s4 + $0x32c] sm:$0xf]
  %v451 = vld [vmem:[%s4 + $0x330] sm:$0xf]
  %v452 = vld [vmem:[%s4 + $0x334] sm:$0xf]
  %v453 = vld [vmem:[%s4 + $0x338] sm:$0xf]
  %v454 = vld [vmem:[%s4 + $0x33c] sm:$0xf]
  %v455 = vld [vmem:[%s4 + $0x340] sm:$0xf]
  %v456 = vld [vmem:[%s4 + $0x344] sm:$0xf]
  %v457 = vld [vmem:[%s4 + $0x348] sm:$0xf]
  %v458 = vld [vmem:[%s4 + $0x34c] sm:$0xf]
  %v459 = vld [vmem:[%s4 + $0x350] sm:$0xf]
  %v460 = vld [vmem:[%s4 + $0x354] sm:$0xf]
  %v461 = vld [vmem:[%s4 + $0x358] sm:$0xf]
  %v462 = vld [vmem:[%s4 + $0x35c] sm:$0xf]
  %v463 = vld [vmem:[%s4 + $0x360] sm:$0xf]
  %v464 = vld [vmem:[%s4 + $0x364] sm:$0xf]
  %v465 = vld [vmem:[%s4 + $0x368] sm:$0xf]
  %v466 = vld [vmem:[%s4 + $0x36c] sm:$0xf]
  %v467 = vld [vmem:[%s4 + $0x370] sm:$0xf]
  %v468 = vld [vmem:[%s4 + $0x374] sm:$0xf]
  %v469 = vld [vmem:[%s4 + $0x378] sm:$0x7]
  %v470 = vld [vmem:[%s5] sm:$0xf]
  %v471 = vld [vmem:[%s5 + $0x4] sm:$0xf]
  %v472 = vld [vmem:[%s5 + $0x8] sm:$0xf]
  %v473 = vld [vmem:[%s5 + $0xc] sm:$0xf]
  %v474 = vld [vmem:[%s5 + $0x10] sm:$0xf]
  %v475 = vld [vmem:[%s5 + $0x14] sm:$0xf]
  %v476 = vld [vmem:[%s5 + $0x18] sm:$0xf]
  %v477 = vld [vmem:[%s5 + $0x1c] sm:$0xf]
  %v478 = vld [vmem:[%s5 + $0x20] sm:$0xf]
  %v479 = vld [vmem:[%s5 + $0x24] sm:$0xf]
  %v480 = vld [vmem:[%s5 + $0x28] sm:$0x1]
  %v481 = vld [vmem:[%s6] sm:$0xff]
  %v482 = vld [vmem:[%s6 + $0x8] sm:$0xff]
  %v483 = vld [vmem:[%s6 + $0x10] sm:$0xff]
  %v484 = vld [vmem:[%s6 + $0x18] sm:$0xff]
  %v485 = vld [vmem:[%s6 + $0x20] sm:$0xff]
  %v486 = vld [vmem:[%s6 + $0x28] sm:$0xff]
  %v487 = vld [vmem:[%s6 + $0x30] sm:$0xff]
  %v488 = vld [vmem:[%s6 + $0x38] sm:$0xff]
  %v489 = vld [vmem:[%s6 + $0x40] sm:$0xff]
  %v490 = vld [vmem:[%s6 + $0x48] sm:$0xff]
  %v491 = vld [vmem:[%s6 + $0x50] sm:$0xff]
  %v492 = vld [vmem:[%s6 + $0x58] sm:$0xff]
  %v493 = vld [vmem:[%s6 + $0x60] sm:$0xff]
  %v494 = vld [vmem:[%s6 + $0x68] sm:$0xff]
  %v495 = vld [vmem:[%s6 + $0x70] sm:$0xff]
  %v496 = vld [vmem:[%s6 + $0x78] sm:$0xff]
  %v497 = vld [vmem:[%s6 + $0x80] sm:$0xff]
  %v498 = vld [vmem:[%s6 + $0x88] sm:$0xff]
  %v499 = vld [vmem:[%s6 + $0x90] sm:$0xff]
  %v500 = vld [vmem:[%s6 + $0x98] sm:$0xff]
  %v501 = vld [vmem:[%s6 + $0xa0] sm:$0xff]
  %v502 = vld [vmem:[%s6 + $0xa8] sm:$0xff]
  %v503 = vld [vmem:[%s6 + $0xb0] sm:$0xff]
  %v504 = vld [vmem:[%s6 + $0xb8] sm:$0xff]
  %v505 = vld [vmem:[%s6 + $0xc0] sm:$0xff]
  %v506 = vld [vmem:[%s6 + $0xc8] sm:$0xff]
  %v507 = vld [vmem:[%s6 + $0xd0] sm:$0xff]
  %v508 = vld [vmem:[%s6 + $0xd8] sm:$0xff]
  %v509 = vld [vmem:[%s6 + $0xe0] sm:$0xff]
  %v510 = vld [vmem:[%s6 + $0xe8] sm:$0xff]
  %v511 = vld [vmem:[%s6 + $0xf0] sm:$0xff]
  %v512 = vld [vmem:[%s6 + $0xf8] sm:$0xff]
  %v513 = vld [vmem:[%s6 + $0x100] sm:$0xff]
  %v514 = vld [vmem:[%s6 + $0x108] sm:$0xff]
  %v515 = vld [vmem:[%s6 + $0x110] sm:$0xff]
  %v516 = vld [vmem:[%s6 + $0x118] sm:$0xff]
  %v517 = vld [vmem:[%s6 + $0x120] sm:$0xff]
  %v518 = vld [vmem:[%s6 + $0x128] sm:$0xff]
  %v519 = vld [vmem:[%s6 + $0x130] sm:$0xff]
  %v520 = vld [vmem:[%s6 + $0x138] sm:$0xff]
  %v521 = vld [vmem:[%s6 + $0x140] sm:$0xff]
  %v522 = vld [vmem:[%s6 + $0x148] sm:$0xff]
  %v523 = vld [vmem:[%s6 + $0x150] sm:$0xff]
  %v524 = vld [vmem:[%s6 + $0x158] sm:$0xff]
  %v525 = vld [vmem:[%s6 + $0x160] sm:$0xff]
  %v526 = vld [vmem:[%s6 + $0x168] sm:$0xff]
  %v527 = vld [vmem:[%s6 + $0x170] sm:$0xff]
  %v528 = vld [vmem:[%s6 + $0x178] sm:$0xff]
  %v529 = vld [vmem:[%s6 + $0x180] sm:$0xff]
  %v530 = vld [vmem:[%s6 + $0x188] sm:$0xff]
  %v531 = vld [vmem:[%s6 + $0x190] sm:$0xff]
  %v532 = vld [vmem:[%s6 + $0x198] sm:$0xff]
  %v533 = vld [vmem:[%s6 + $0x1a0] sm:$0xff]
  %v534 = vld [vmem:[%s6 + $0x1a8] sm:$0xff]
  %v535 = vld [vmem:[%s6 + $0x1b0] sm:$0xff]
  %v536 = vld [vmem:[%s6 + $0x1b8] sm:$0xff]
  %v537 = vld [vmem:[%s6 + $0x1c0] sm:$0xff]
  %v538 = vld [vmem:[%s6 + $0x1c8] sm:$0xff]
  %v539 = vld [vmem:[%s6 + $0x1d0] sm:$0xff]
  %v540 = vld [vmem:[%s6 + $0x1d8] sm:$0xff]
  %v541 = vld [vmem:[%s6 + $0x1e0] sm:$0xff]
  %v542 = vld [vmem:[%s6 + $0x1e8] sm:$0xff]
  %v543 = vld [vmem:[%s6 + $0x1f0] sm:$0xff]
  %v544 = vld [vmem:[%s6 + $0x1f8] sm:$0xff]
  %v545 = vld [vmem:[%s6 + $0x200] sm:$0xff]
  %v546 = vld [vmem:[%s6 + $0x208] sm:$0xff]
  %v547 = vld [vmem:[%s6 + $0x210] sm:$0xff]
  %v548 = vld [vmem:[%s6 + $0x218] sm:$0xff]
  %v549 = vld [vmem:[%s6 + $0x220] sm:$0xff]
  %v550 = vld [vmem:[%s6 + $0x228] sm:$0xff]
  %v551 = vld [vmem:[%s6 + $0x230] sm:$0x11]
  %v552 = vld [vmem:[%s6 + $0x238] sm:$0x11]
  %v553 = vld [vmem:[%s6 + $0x240] sm:$0x11]
  %v554 = vld [vmem:[%s6 + $0x248] sm:$0x11]
  %v555 = vld [vmem:[%s6 + $0x250] sm:$0x11]
  %v556 = vld [vmem:[%s6 + $0x258] sm:$0x11]
  %v557 = vld [vmem:[%s6 + $0x260] sm:$0x11]
  %v558 = vld [vmem:[%s7] sm:$0xff]
  %v559 = vld [vmem:[%s7 + $0x8] sm:$0xff]
  %v560 = vld [vmem:[%s7 + $0x10] sm:$0xff]
  %v561 = vld [vmem:[%s7 + $0x18] sm:$0xff]
  %v562 = vld [vmem:[%s7 + $0x20] sm:$0xff]
  %v563 = vld [vmem:[%s7 + $0x28] sm:$0xff]
  %v564 = vld [vmem:[%s7 + $0x30] sm:$0xff]
  %v565 = vld [vmem:[%s7 + $0x38] sm:$0xff]
  %v566 = vld [vmem:[%s7 + $0x40] sm:$0xff]
  %v567 = vld [vmem:[%s7 + $0x48] sm:$0xff]
  %v568 = vld [vmem:[%s7 + $0x50] sm:$0xff]
  %v569 = vld [vmem:[%s7 + $0x58] sm:$0xff]
  %v570 = vld [vmem:[%s7 + $0x60] sm:$0xff]
  %v571 = vld [vmem:[%s7 + $0x68] sm:$0xff]
  %v572 = vld [vmem:[%s7 + $0x70] sm:$0xff]
  %v573 = vld [vmem:[%s7 + $0x78] sm:$0xff]
  %v574 = vld [vmem:[%s7 + $0x80] sm:$0xff]
  %v575 = vld [vmem:[%s7 + $0x88] sm:$0xff]
  %v576 = vld [vmem:[%s7 + $0x90] sm:$0xff]
  %v577 = vld [vmem:[%s7 + $0x98] sm:$0xff]
  %v578 = vld [vmem:[%s7 + $0xa0] sm:$0xff]
  %v579 = vld [vmem:[%s7 + $0xa8] sm:$0xff]
  %v580 = vld [vmem:[%s7 + $0xb0] sm:$0xff]
  %v581 = vld [vmem:[%s7 + $0xb8] sm:$0xff]
  %v582 = vld [vmem:[%s7 + $0xc0] sm:$0xff]
  %v583 = vld [vmem:[%s7 + $0xc8] sm:$0xff]
  %v584 = vld [vmem:[%s7 + $0xd0] sm:$0xff]
  %v585 = vld [vmem:[%s7 + $0xd8] sm:$0xff]
  %v586 = vld [vmem:[%s7 + $0xe0] sm:$0xff]
  %v587 = vld [vmem:[%s7 + $0xe8] sm:$0xff]
  %v588 = vld [vmem:[%s7 + $0xf0] sm:$0xff]
  %v589 = vld [vmem:[%s7 + $0xf8] sm:$0xff]
  %v590 = vld [vmem:[%s7 + $0x100] sm:$0xff]
  %v591 = vld [vmem:[%s7 + $0x108] sm:$0xff]
  %v592 = vld [vmem:[%s7 + $0x110] sm:$0xff]
  %v593 = vld [vmem:[%s7 + $0x118] sm:$0xff]
  %v594 = vld [vmem:[%s7 + $0x120] sm:$0xff]
  %v595 = vld [vmem:[%s7 + $0x128] sm:$0xff]
  %v596 = vld [vmem:[%s7 + $0x130] sm:$0xff]
  %v597 = vld [vmem:[%s7 + $0x138] sm:$0xff]
  %v598 = vld [vmem:[%s7 + $0x140] sm:$0xff]
  %v599 = vld [vmem:[%s7 + $0x148] sm:$0xff]
  %v600 = vld [vmem:[%s7 + $0x150] sm:$0xff]
  %v601 = vld [vmem:[%s7 + $0x158] sm:$0xff]
  %v602 = vld [vmem:[%s7 + $0x160] sm:$0xff]
  %v603 = vld [vmem:[%s7 + $0x168] sm:$0xff]
  %v604 = vld [vmem:[%s7 + $0x170] sm:$0xff]
  %v605 = vld [vmem:[%s7 + $0x178] sm:$0xff]
  %v606 = vld [vmem:[%s7 + $0x180] sm:$0xff]
  %v607 = vld [vmem:[%s7 + $0x188] sm:$0xff]
  %v608 = vld [vmem:[%s7 + $0x190] sm:$0xff]
  %v609 = vld [vmem:[%s7 + $0x198] sm:$0xff]
  %v610 = vld [vmem:[%s7 + $0x1a0] sm:$0xff]
  %v611 = vld [vmem:[%s7 + $0x1a8] sm:$0xff]
  %v612 = vld [vmem:[%s7 + $0x1b0] sm:$0xff]
  %v613 = vld [vmem:[%s7 + $0x1b8] sm:$0xff]
  %v614 = vld [vmem:[%s7 + $0x1c0] sm:$0xff]
  %v615 = vld [vmem:[%s7 + $0x1c8] sm:$0xff]
  %v616 = vld [vmem:[%s7 + $0x1d0] sm:$0xff]
  %v617 = vld [vmem:[%s7 + $0x1d8] sm:$0xff]
  %v618 = vld [vmem:[%s7 + $0x1e0] sm:$0xff]
  %v619 = vld [vmem:[%s7 + $0x1e8] sm:$0xff]
  %v620 = vld [vmem:[%s7 + $0x1f0] sm:$0xff]
  %v621 = vld [vmem:[%s7 + $0x1f8] sm:$0xff]
  %v622 = vld [vmem:[%s7 + $0x200] sm:$0xff]
  %v623 = vld [vmem:[%s7 + $0x208] sm:$0xff]
  %v624 = vld [vmem:[%s7 + $0x210] sm:$0xff]
  %v625 = vld [vmem:[%s7 + $0x218] sm:$0xff]
  %v626 = vld [vmem:[%s7 + $0x220] sm:$0xff]
  %v627 = vld [vmem:[%s7 + $0x228] sm:$0xff]
  %v628 = vld [vmem:[%s7 + $0x230] sm:$0xff]
  %v629 = vld [vmem:[%s7 + $0x238] sm:$0xff]
  %v630 = vld [vmem:[%s7 + $0x240] sm:$0xff]
  %v631 = vld [vmem:[%s7 + $0x248] sm:$0xff]
  %v632 = vld [vmem:[%s7 + $0x250] sm:$0xff]
  %v633 = vld [vmem:[%s7 + $0x258] sm:$0xff]
  %v634 = vld [vmem:[%s7 + $0x260] sm:$0xff]
  %v635 = vld [vmem:[%s7 + $0x268] sm:$0xff]
  %v636 = vld [vmem:[%s7 + $0x270] sm:$0xff]
  %v637 = vld [vmem:[%s7 + $0x278] sm:$0xff]
  %v638 = vld [vmem:[%s7 + $0x280] sm:$0xff]
  %v639 = vld [vmem:[%s7 + $0x288] sm:$0xff]
  %v640 = vld [vmem:[%s7 + $0x290] sm:$0xff]
  %v641 = vld [vmem:[%s7 + $0x298] sm:$0xff]
  %v642 = vld [vmem:[%s7 + $0x2a0] sm:$0xff]
  %v643 = vld [vmem:[%s7 + $0x2a8] sm:$0xff]
  %v644 = vld [vmem:[%s7 + $0x2b0] sm:$0xff]
  %v645 = vld [vmem:[%s7 + $0x2b8] sm:$0xff]
  %v646 = vld [vmem:[%s7 + $0x2c0] sm:$0xff]
  %v647 = vld [vmem:[%s7 + $0x2c8] sm:$0xff]
  %v648 = vld [vmem:[%s7 + $0x2d0] sm:$0xff]
  %v649 = vld [vmem:[%s7 + $0x2d8] sm:$0xff]
  %v650 = vld [vmem:[%s7 + $0x2e0] sm:$0xff]
  %v651 = vld [vmem:[%s7 + $0x2e8] sm:$0xff]
  %v652 = vld [vmem:[%s7 + $0x2f0] sm:$0xff]
  %v653 = vld [vmem:[%s7 + $0x2f8] sm:$0xff]
  %v654 = vld [vmem:[%s7 + $0x300] sm:$0xff]
  %v655 = vld [vmem:[%s7 + $0x308] sm:$0xff]
  %v656 = vld [vmem:[%s7 + $0x310] sm:$0xff]
  %v657 = vld [vmem:[%s7 + $0x318] sm:$0xff]
  %v658 = vld [vmem:[%s7 + $0x320] sm:$0xff]
  %v659 = vld [vmem:[%s7 + $0x328] sm:$0xff]
  %v660 = vld [vmem:[%s7 + $0x330] sm:$0xff]
  %v661 = vld [vmem:[%s7 + $0x338] sm:$0xff]
  %v662 = vld [vmem:[%s7 + $0x340] sm:$0xff]
  %v663 = vld [vmem:[%s7 + $0x348] sm:$0xff]
  %v664 = vld [vmem:[%s7 + $0x350] sm:$0xff]
  %v665 = vld [vmem:[%s7 + $0x358] sm:$0xff]
  %v666 = vld [vmem:[%s7 + $0x360] sm:$0xff]
  %v667 = vld [vmem:[%s7 + $0x368] sm:$0xff]
  %v668 = vld [vmem:[%s7 + $0x370] sm:$0xff]
  %v669 = vld [vmem:[%s7 + $0x378] sm:$0xff]
  %v670 = vld [vmem:[%s7 + $0x380] sm:$0xff]
  %v671 = vld [vmem:[%s7 + $0x388] sm:$0xff]
  %v672 = vld [vmem:[%s7 + $0x390] sm:$0xff]
  %v673 = vld [vmem:[%s7 + $0x398] sm:$0xff]
  %v674 = vld [vmem:[%s7 + $0x3a0] sm:$0xff]
  %v675 = vld [vmem:[%s7 + $0x3a8] sm:$0xff]
  %v676 = vld [vmem:[%s7 + $0x3b0] sm:$0xff]
  %v677 = vld [vmem:[%s7 + $0x3b8] sm:$0xff]
  %v678 = vld [vmem:[%s7 + $0x3c0] sm:$0xff]
  %v679 = vld [vmem:[%s7 + $0x3c8] sm:$0xff]
  %v680 = vld [vmem:[%s7 + $0x3d0] sm:$0xff]
  %v681 = vld [vmem:[%s7 + $0x3d8] sm:$0xff]
  %v682 = vld [vmem:[%s7 + $0x3e0] sm:$0xff]
  %v683 = vld [vmem:[%s7 + $0x3e8] sm:$0xff]
  %v684 = vld [vmem:[%s7 + $0x3f0] sm:$0xff]
  %v685 = vld [vmem:[%s7 + $0x3f8] sm:$0xff]
  %v686 = vld [vmem:[%s7 + $0x400] sm:$0xff]
  %v687 = vld [vmem:[%s7 + $0x408] sm:$0xff]
  %v688 = vld [vmem:[%s7 + $0x410] sm:$0xff]
  %v689 = vld [vmem:[%s7 + $0x418] sm:$0xff]
  %v690 = vld [vmem:[%s7 + $0x420] sm:$0xff]
  %v691 = vld [vmem:[%s7 + $0x428] sm:$0xff]
  %v692 = vld [vmem:[%s7 + $0x430] sm:$0xff]
  %v693 = vld [vmem:[%s7 + $0x438] sm:$0xff]
  %v694 = vld [vmem:[%s7 + $0x440] sm:$0xff]
  %v695 = vld [vmem:[%s7 + $0x448] sm:$0xff]
  %v696 = vld [vmem:[%s7 + $0x450] sm:$0xff]
  %v697 = vld [vmem:[%s7 + $0x458] sm:$0xff]
  %v698 = vld [vmem:[%s7 + $0x460] sm:$0xff]
  %v699 = vld [vmem:[%s7 + $0x468] sm:$0xff]
  %v700 = vld [vmem:[%s7 + $0x470] sm:$0xff]
  %v701 = vld [vmem:[%s7 + $0x478] sm:$0xff]
  %v702 = vld [vmem:[%s7 + $0x480] sm:$0xff]
  %v703 = vld [vmem:[%s7 + $0x488] sm:$0xff]
  %v704 = vld [vmem:[%s7 + $0x490] sm:$0xff]
  %v705 = vld [vmem:[%s7 + $0x498] sm:$0xff]
  %v706 = vld [vmem:[%s7 + $0x4a0] sm:$0xff]
  %v707 = vld [vmem:[%s7 + $0x4a8] sm:$0xff]
  %v708 = vld [vmem:[%s7 + $0x4b0] sm:$0xff]
  %v709 = vld [vmem:[%s7 + $0x4b8] sm:$0xff]
  %v710 = vld [vmem:[%s7 + $0x4c0] sm:$0xff]
  %v711 = vld [vmem:[%s7 + $0x4c8] sm:$0xff]
  %v712 = vld [vmem:[%s7 + $0x4d0] sm:$0xff]
  %v713 = vld [vmem:[%s7 + $0x4d8] sm:$0xff]
  %v714 = vld [vmem:[%s7 + $0x4e0] sm:$0xff]
  %v715 = vld [vmem:[%s7 + $0x4e8] sm:$0xff]
  %v716 = vld [vmem:[%s7 + $0x4f0] sm:$0xff]
  %v717 = vld [vmem:[%s7 + $0x4f8] sm:$0xff]
  %v718 = vld [vmem:[%s7 + $0x500] sm:$0xff]
  %v719 = vld [vmem:[%s7 + $0x508] sm:$0xff]
  %v720 = vld [vmem:[%s7 + $0x510] sm:$0xff]
  %v721 = vld [vmem:[%s7 + $0x518] sm:$0xff]
  %v722 = vld [vmem:[%s7 + $0x520] sm:$0xff]
  %v723 = vld [vmem:[%s7 + $0x528] sm:$0xff]
  %v724 = vld [vmem:[%s7 + $0x530] sm:$0xff]
  %v725 = vld [vmem:[%s7 + $0x538] sm:$0xff]
  %v726 = vld [vmem:[%s7 + $0x540] sm:$0xff]
  %v727 = vld [vmem:[%s7 + $0x548] sm:$0xff]
  %v728 = vld [vmem:[%s7 + $0x550] sm:$0xff]
  %v729 = vld [vmem:[%s7 + $0x558] sm:$0xff]
  %v730 = vld [vmem:[%s7 + $0x560] sm:$0xff]
  %v731 = vld [vmem:[%s7 + $0x568] sm:$0xff]
  %v732 = vld [vmem:[%s7 + $0x570] sm:$0xff]
  %v733 = vld [vmem:[%s7 + $0x578] sm:$0xff]
  %v734 = vld [vmem:[%s7 + $0x580] sm:$0xff]
  %v735 = vld [vmem:[%s7 + $0x588] sm:$0xff]
  %v736 = vld [vmem:[%s7 + $0x590] sm:$0xff]
  %v737 = vld [vmem:[%s7 + $0x598] sm:$0xff]
  %v738 = vld [vmem:[%s7 + $0x5a0] sm:$0xff]
  %v739 = vld [vmem:[%s7 + $0x5a8] sm:$0xff]
  %v740 = vld [vmem:[%s7 + $0x5b0] sm:$0xff]
  %v741 = vld [vmem:[%s7 + $0x5b8] sm:$0xff]
  %v742 = vld [vmem:[%s7 + $0x5c0] sm:$0xff]
  %v743 = vld [vmem:[%s7 + $0x5c8] sm:$0xff]
  %v744 = vld [vmem:[%s7 + $0x5d0] sm:$0xff]
  %v745 = vld [vmem:[%s7 + $0x5d8] sm:$0xff]
  %v746 = vld [vmem:[%s7 + $0x5e0] sm:$0xff]
  %v747 = vld [vmem:[%s7 + $0x5e8] sm:$0xff]
  %v748 = vld [vmem:[%s7 + $0x5f0] sm:$0xff]
  %v749 = vld [vmem:[%s7 + $0x5f8] sm:$0xff]
  %v750 = vld [vmem:[%s7 + $0x600] sm:$0xff]
  %v751 = vld [vmem:[%s7 + $0x608] sm:$0xff]
  %v752 = vld [vmem:[%s7 + $0x610] sm:$0xff]
  %v753 = vld [vmem:[%s7 + $0x618] sm:$0xff]
  %v754 = vld [vmem:[%s7 + $0x620] sm:$0xff]
  %v755 = vld [vmem:[%s7 + $0x628] sm:$0xff]
  %v756 = vld [vmem:[%s7 + $0x630] sm:$0xff]
  %v757 = vld [vmem:[%s7 + $0x638] sm:$0xff]
  %v758 = vld [vmem:[%s7 + $0x640] sm:$0xff]
  %v759 = vld [vmem:[%s7 + $0x648] sm:$0xff]
  %v760 = vld [vmem:[%s7 + $0x650] sm:$0xff]
  %v761 = vld [vmem:[%s7 + $0x658] sm:$0xff]
  %v762 = vld [vmem:[%s7 + $0x660] sm:$0xff]
  %v763 = vld [vmem:[%s7 + $0x668] sm:$0xff]
  %v764 = vld [vmem:[%s7 + $0x670] sm:$0xff]
  %v765 = vld [vmem:[%s7 + $0x678] sm:$0xff]
  %v766 = vld [vmem:[%s7 + $0x680] sm:$0xff]
  %v767 = vld [vmem:[%s7 + $0x688] sm:$0xff]
  %v768 = vld [vmem:[%s7 + $0x690] sm:$0xff]
  %v769 = vld [vmem:[%s7 + $0x698] sm:$0xff]
  %v770 = vld [vmem:[%s7 + $0x6a0] sm:$0xff]
  %v771 = vld [vmem:[%s7 + $0x6a8] sm:$0xff]
  %v772 = vld [vmem:[%s7 + $0x6b0] sm:$0xff]
  %v773 = vld [vmem:[%s7 + $0x6b8] sm:$0xff]
  %v774 = vld [vmem:[%s7 + $0x6c0] sm:$0xff]
  %v775 = vld [vmem:[%s7 + $0x6c8] sm:$0xff]
  %v776 = vld [vmem:[%s7 + $0x6d0] sm:$0xff]
  %v777 = vld [vmem:[%s7 + $0x6d8] sm:$0xff]
  %v778 = vld [vmem:[%s7 + $0x6e0] sm:$0xff]
  %v779 = vld [vmem:[%s7 + $0x6e8] sm:$0xff]
  %v780 = vld [vmem:[%s7 + $0x6f0] sm:$0x77]
  %v781 = vld [vmem:[%s1] sm:$0xff]
  %v782 = vld [vmem:[%s1 + $0x8] sm:$0xff]
  %v783 = vld [vmem:[%s1 + $0x10] sm:$0xff]
  %v784 = vld [vmem:[%s1 + $0x18] sm:$0xff]
  %v785 = vld [vmem:[%s1 + $0x20] sm:$0xff]
  %v786 = vld [vmem:[%s1 + $0x28] sm:$0xff]
  %v787 = vld [vmem:[%s1 + $0x30] sm:$0xff]
  %v788 = vld [vmem:[%s1 + $0x38] sm:$0xff]
  %v789 = vld [vmem:[%s1 + $0x40] sm:$0xff]
  %v790 = vld [vmem:[%s1 + $0x48] sm:$0xff]
  %v791 = vld [vmem:[%s1 + $0x50] sm:$0xff]
  %v792 = vld [vmem:[%s1 + $0x58] sm:$0xff]
  %v793 = vld [vmem:[%s1 + $0x60] sm:$0xff]
  %v794 = vld [vmem:[%s1 + $0x68] sm:$0xff]
  %v795 = vld [vmem:[%s1 + $0x70] sm:$0xff]
  %v796 = vld [vmem:[%s1 + $0x78] sm:$0xff]
  %v797 = vld [vmem:[%s1 + $0x80] sm:$0xff]
  %v798 = vld [vmem:[%s1 + $0x88] sm:$0xff]
  %v799 = vld [vmem:[%s1 + $0x90] sm:$0xff]
  %v800 = vld [vmem:[%s1 + $0x98] sm:$0xff]
  %v801 = vld [vmem:[%s1 + $0xa0] sm:$0xff]
  %v802 = vld [vmem:[%s1 + $0xa8] sm:$0xff]
  %v803 = vld [vmem:[%s1 + $0xb0] sm:$0xff]
  %v804 = vld [vmem:[%s1 + $0xb8] sm:$0xff]
  %v805 = vld [vmem:[%s1 + $0xc0] sm:$0xff]
  %v806 = vld [vmem:[%s1 + $0xc8] sm:$0xff]
  %v807 = vld [vmem:[%s1 + $0xd0] sm:$0xff]
  %v808 = vld [vmem:[%s1 + $0xd8] sm:$0xff]
  %v809 = vld [vmem:[%s1 + $0xe0] sm:$0xff]
  %v810 = vld [vmem:[%s1 + $0xe8] sm:$0xff]
  %v811 = vld [vmem:[%s1 + $0xf0] sm:$0xff]
  %v812 = vld [vmem:[%s1 + $0xf8] sm:$0xff]
  %v813 = vld [vmem:[%s1 + $0x100] sm:$0xff]
  %v814 = vld [vmem:[%s1 + $0x108] sm:$0xff]
  %v815 = vld [vmem:[%s1 + $0x110] sm:$0xff]
  %v816 = vld [vmem:[%s1 + $0x118] sm:$0xff]
  %v817 = vld [vmem:[%s1 + $0x120] sm:$0xff]
  %v818 = vld [vmem:[%s1 + $0x128] sm:$0xff]
  %v819 = vld [vmem:[%s1 + $0x130] sm:$0xff]
  %v820 = vld [vmem:[%s1 + $0x138] sm:$0xff]
  %v821 = vld [vmem:[%s1 + $0x140] sm:$0xff]
  %v822 = vld [vmem:[%s1 + $0x148] sm:$0xff]
  %v823 = vld [vmem:[%s1 + $0x150] sm:$0xff]
  %v824 = vld [vmem:[%s1 + $0x158] sm:$0xff]
  %v825 = vld [vmem:[%s1 + $0x160] sm:$0xff]
  %v826 = vld [vmem:[%s1 + $0x168] sm:$0xff]
  %v827 = vld [vmem:[%s1 + $0x170] sm:$0xff]
  %v828 = vld [vmem:[%s1 + $0x178] sm:$0xff]
  %v829 = vld [vmem:[%s1 + $0x180] sm:$0xff]
  %v830 = vld [vmem:[%s1 + $0x188] sm:$0xff]
  %v831 = vld [vmem:[%s1 + $0x190] sm:$0xff]
  %v832 = vld [vmem:[%s1 + $0x198] sm:$0xff]
  %v833 = vld [vmem:[%s1 + $0x1a0] sm:$0xff]
  %v834 = vld [vmem:[%s1 + $0x1a8] sm:$0xff]
  %v835 = vld [vmem:[%s1 + $0x1b0] sm:$0xff]
  %v836 = vld [vmem:[%s1 + $0x1b8] sm:$0xff]
  %v837 = vld [vmem:[%s1 + $0x1c0] sm:$0xff]
  %v838 = vld [vmem:[%s1 + $0x1c8] sm:$0xff]
  %v839 = vld [vmem:[%s1 + $0x1d0] sm:$0xff]
  %v840 = vld [vmem:[%s1 + $0x1d8] sm:$0xff]
  %v841 = vld [vmem:[%s1 + $0x1e0] sm:$0xff]
  %v842 = vld [vmem:[%s1 + $0x1e8] sm:$0xff]
  %v843 = vld [vmem:[%s1 + $0x1f0] sm:$0xff]
  %v844 = vld [vmem:[%s1 + $0x1f8] sm:$0xff]
  %v845 = vld [vmem:[%s1 + $0x200] sm:$0xff]
  %v846 = vld [vmem:[%s1 + $0x208] sm:$0xff]
  %v847 = vld [vmem:[%s1 + $0x210] sm:$0xff]
  %v848 = vld [vmem:[%s1 + $0x218] sm:$0xff]
  %v849 = vld [vmem:[%s1 + $0x220] sm:$0xff]
  %v850 = vld [vmem:[%s1 + $0x228] sm:$0xff]
  %v851 = vld [vmem:[%s1 + $0x230] sm:$0xff]
  %v852 = vld [vmem:[%s1 + $0x238] sm:$0xff]
  %v853 = vld [vmem:[%s1 + $0x240] sm:$0xff]
  %v854 = vld [vmem:[%s1 + $0x248] sm:$0xff]
  %v855 = vld [vmem:[%s1 + $0x250] sm:$0xff]
  %v856 = vld [vmem:[%s1 + $0x258] sm:$0xff]
  %v857 = vld [vmem:[%s1 + $0x260] sm:$0xff]
  %v858 = vld [vmem:[%s1 + $0x268] sm:$0xff]
  %v859 = vld [vmem:[%s1 + $0x270] sm:$0xff]
  %v860 = vld [vmem:[%s1 + $0x278] sm:$0xff]
  %v861 = vld [vmem:[%s1 + $0x280] sm:$0xff]
  %v862 = vld [vmem:[%s1 + $0x288] sm:$0xff]
  %v863 = vld [vmem:[%s1 + $0x290] sm:$0xff]
  %v864 = vld [vmem:[%s1 + $0x298] sm:$0xff]
  %v865 = vld [vmem:[%s1 + $0x2a0] sm:$0xff]
  %v866 = vld [vmem:[%s1 + $0x2a8] sm:$0xff]
  %v867 = vld [vmem:[%s1 + $0x2b0] sm:$0xff]
  %v868 = vld [vmem:[%s1 + $0x2b8] sm:$0xff]
  %v869 = vld [vmem:[%s1 + $0x2c0] sm:$0xff]
  %v870 = vld [vmem:[%s1 + $0x2c8] sm:$0xff]
  %v871 = vld [vmem:[%s1 + $0x2d0] sm:$0xff]
  %v872 = vld [vmem:[%s1 + $0x2d8] sm:$0xff]
  %v873 = vld [vmem:[%s1 + $0x2e0] sm:$0xff]
  %v874 = vld [vmem:[%s1 + $0x2e8] sm:$0xff]
  %v875 = vld [vmem:[%s1 + $0x2f0] sm:$0xff]
  %v876 = vld [vmem:[%s1 + $0x2f8] sm:$0xff]
  %v877 = vld [vmem:[%s1 + $0x300] sm:$0xff]
  %v878 = vld [vmem:[%s1 + $0x308] sm:$0xff]
  %v879 = vld [vmem:[%s1 + $0x310] sm:$0xff]
  %v880 = vld [vmem:[%s1 + $0x318] sm:$0xff]
  %v881 = vld [vmem:[%s1 + $0x320] sm:$0xff]
  %v882 = vld [vmem:[%s1 + $0x328] sm:$0xff]
  %v883 = vld [vmem:[%s1 + $0x330] sm:$0xff]
  %v884 = vld [vmem:[%s1 + $0x338] sm:$0xff]
  %v885 = vld [vmem:[%s1 + $0x340] sm:$0xff]
  %v886 = vld [vmem:[%s1 + $0x348] sm:$0xff]
  %v887 = vld [vmem:[%s1 + $0x350] sm:$0xff]
  %v888 = vld [vmem:[%s1 + $0x358] sm:$0xff]
  %v889 = vld [vmem:[%s1 + $0x360] sm:$0xff]
  %v890 = vld [vmem:[%s1 + $0x368] sm:$0xff]
  %v891 = vld [vmem:[%s1 + $0x370] sm:$0xff]
  %v892 = vld [vmem:[%s1 + $0x378] sm:$0xff]
  %v893 = vld [vmem:[%s1 + $0x380] sm:$0xff]
  %v894 = vld [vmem:[%s1 + $0x388] sm:$0xff]
  %v895 = vld [vmem:[%s1 + $0x390] sm:$0xff]
  %v896 = vld [vmem:[%s1 + $0x398] sm:$0xff]
  %v897 = vld [vmem:[%s1 + $0x3a0] sm:$0xff]
  %v898 = vld [vmem:[%s1 + $0x3a8] sm:$0xff]
  %v899 = vld [vmem:[%s1 + $0x3b0] sm:$0xff]
  %v900 = vld [vmem:[%s1 + $0x3b8] sm:$0xff]
  %v901 = vld [vmem:[%s1 + $0x3c0] sm:$0x77]
  %v902 = vld [vmem:[%s1 + $0x3c8] sm:$0x77]
  %v903 = vld [vmem:[%s1 + $0x3d0] sm:$0x77]
  %v904 = vld [vmem:[%s1 + $0x3d8] sm:$0x77]
  %v905 = vld [vmem:[%s1 + $0x3e0] sm:$0x77]
  %v1031 = vunpack.c.l.b16 %v781
  %v1032 = vunpack.c.h.b16 %v781
  %v1033 = vunpack.c.l.b16 %v782
  %v1034 = vunpack.c.h.b16 %v782
  %v1035 = vunpack.c.l.b16 %v783
  %v1036 = vunpack.c.h.b16 %v783
  %v1037 = vunpack.c.l.b16 %v784
  %v1038 = vunpack.c.h.b16 %v784
  %v1039 = vunpack.c.l.b16 %v785
  %v1040 = vunpack.c.h.b16 %v785
  %v1041 = vunpack.c.l.b16 %v786
  %v1042 = vunpack.c.h.b16 %v786
  %v1043 = vunpack.c.l.b16 %v787
  %v1044 = vunpack.c.h.b16 %v787
  %v1045 = vunpack.c.l.b16 %v788
  %v1046 = vunpack.c.h.b16 %v788
  %v1047 = vunpack.c.l.b16 %v789
  %v1048 = vunpack.c.h.b16 %v789
  %v1049 = vunpack.c.l.b16 %v790
  %v1050 = vunpack.c.h.b16 %v790
  %v1051 = vunpack.c.l.b16 %v791
  %v1052 = vunpack.c.h.b16 %v791
  %v1053 = vunpack.c.l.b16 %v792
  %v1054 = vunpack.c.h.b16 %v792
  %v1055 = vunpack.c.l.b16 %v793
  %v1056 = vunpack.c.h.b16 %v793
  %v1057 = vunpack.c.l.b16 %v794
  %v1058 = vunpack.c.h.b16 %v794
  %v1059 = vunpack.c.l.b16 %v795
  %v1060 = vunpack.c.h.b16 %v795
  %v1061 = vunpack.c.l.b16 %v796
  %v1062 = vunpack.c.h.b16 %v796
  %v1063 = vunpack.c.l.b16 %v797
  %v1064 = vunpack.c.h.b16 %v797
  %v1065 = vunpack.c.l.b16 %v798
  %v1066 = vunpack.c.h.b16 %v798
  %v1067 = vunpack.c.l.b16 %v799
  %v1068 = vunpack.c.h.b16 %v799
  %v1069 = vunpack.c.l.b16 %v800
  %v1070 = vunpack.c.h.b16 %v800
  %v1071 = vunpack.c.l.b16 %v801
  %v1072 = vunpack.c.h.b16 %v801
  %v1073 = vunpack.c.l.b16 %v802
  %v1074 = vunpack.c.h.b16 %v802
  %v1075 = vunpack.c.l.b16 %v803
  %v1076 = vunpack.c.h.b16 %v803
  %v1077 = vunpack.c.l.b16 %v804
  %v1078 = vunpack.c.h.b16 %v804
  %v1079 = vunpack.c.l.b16 %v805
  %v1080 = vunpack.c.h.b16 %v805
  %v1081 = vunpack.c.l.b16 %v806
  %v1082 = vunpack.c.h.b16 %v806
  %v1083 = vunpack.c.l.b16 %v807
  %v1084 = vunpack.c.h.b16 %v807
  %v1085 = vunpack.c.l.b16 %v808
  %v1086 = vunpack.c.h.b16 %v808
  %v1087 = vunpack.c.l.b16 %v809
  %v1088 = vunpack.c.h.b16 %v809
  %v1089 = vunpack.c.l.b16 %v810
  %v1090 = vunpack.c.h.b16 %v810
  %v1091 = vunpack.c.l.b16 %v811
  %v1092 = vunpack.c.h.b16 %v811
  %v1093 = vunpack.c.l.b16 %v812
  %v1094 = vunpack.c.h.b16 %v812
  %v1095 = vunpack.c.l.b16 %v813
  %v1096 = vunpack.c.h.b16 %v813
  %v1097 = vunpack.c.l.b16 %v814
  %v1098 = vunpack.c.h.b16 %v814
  %v1099 = vunpack.c.l.b16 %v815
  %v1100 = vunpack.c.h.b16 %v815
  %v1101 = vunpack.c.l.b16 %v816
  %v1102 = vunpack.c.h.b16 %v816
  %v1103 = vunpack.c.l.b16 %v817
  %v1104 = vunpack.c.h.b16 %v817
  %v1105 = vunpack.c.l.b16 %v818
  %v1106 = vunpack.c.h.b16 %v818
  %v1107 = vunpack.c.l.b16 %v819
  %v1108 = vunpack.c.h.b16 %v819
  %v1109 = vunpack.c.l.b16 %v820
  %v1110 = vunpack.c.h.b16 %v820
  %v1111 = vunpack.c.l.b16 %v821
  %v1112 = vunpack.c.h.b16 %v821
  %v1113 = vunpack.c.l.b16 %v822
  %v1114 = vunpack.c.h.b16 %v822
  %v1115 = vunpack.c.l.b16 %v823
  %v1116 = vunpack.c.h.b16 %v823
  %v1117 = vunpack.c.l.b16 %v824
  %v1118 = vunpack.c.h.b16 %v824
  %v1119 = vunpack.c.l.b16 %v825
  %v1120 = vunpack.c.h.b16 %v825
  %v1121 = vunpack.c.l.b16 %v826
  %v1122 = vunpack.c.h.b16 %v826
  %v1123 = vunpack.c.l.b16 %v827
  %v1124 = vunpack.c.h.b16 %v827
  %v1125 = vunpack.c.l.b16 %v828
  %v1126 = vunpack.c.h.b16 %v828
  %v1127 = vunpack.c.l.b16 %v829
  %v1128 = vunpack.c.h.b16 %v829
  %v1129 = vunpack.c.l.b16 %v830
  %v1130 = vunpack.c.h.b16 %v830
  %v1131 = vunpack.c.l.b16 %v831
  %v1132 = vunpack.c.h.b16 %v831
  %v1133 = vunpack.c.l.b16 %v832
  %v1134 = vunpack.c.h.b16 %v832
  %v1135 = vunpack.c.l.b16 %v833
  %v1136 = vunpack.c.h.b16 %v833
  %v1137 = vunpack.c.l.b16 %v834
  %v1138 = vunpack.c.h.b16 %v834
  %v1139 = vunpack.c.l.b16 %v835
  %v1140 = vunpack.c.h.b16 %v835
  %v1141 = vunpack.c.l.b16 %v836
  %v1142 = vunpack.c.h.b16 %v836
  %v1143 = vunpack.c.l.b16 %v837
  %v1144 = vunpack.c.h.b16 %v837
  %v1145 = vunpack.c.l.b16 %v838
  %v1146 = vunpack.c.h.b16 %v838
  %v1147 = vunpack.c.l.b16 %v839
  %v1148 = vunpack.c.h.b16 %v839
  %v1149 = vunpack.c.l.b16 %v840
  %v1150 = vunpack.c.h.b16 %v840
  %v1151 = vunpack.c.l.b16 %v841
  %v1152 = vunpack.c.h.b16 %v841
  %v1153 = vunpack.c.l.b16 %v842
  %v1154 = vunpack.c.h.b16 %v842
  %v1155 = vunpack.c.l.b16 %v843
  %v1156 = vunpack.c.h.b16 %v843
  %v1157 = vunpack.c.l.b16 %v844
  %v1158 = vunpack.c.h.b16 %v844
  %v1159 = vunpack.c.l.b16 %v845
  %v1160 = vunpack.c.h.b16 %v845
  %v1161 = vunpack.c.l.b16 %v846
  %v1162 = vunpack.c.h.b16 %v846
  %v1163 = vunpack.c.l.b16 %v847
  %v1164 = vunpack.c.h.b16 %v847
  %v1165 = vunpack.c.l.b16 %v848
  %v1166 = vunpack.c.h.b16 %v848
  %v1167 = vunpack.c.l.b16 %v849
  %v1168 = vunpack.c.h.b16 %v849
  %v1169 = vunpack.c.l.b16 %v850
  %v1170 = vunpack.c.h.b16 %v850
  %v1171 = vunpack.c.l.b16 %v851
  %v1172 = vunpack.c.h.b16 %v851
  %v1173 = vunpack.c.l.b16 %v852
  %v1174 = vunpack.c.h.b16 %v852
  %v1175 = vunpack.c.l.b16 %v853
  %v1176 = vunpack.c.h.b16 %v853
  %v1177 = vunpack.c.l.b16 %v854
  %v1178 = vunpack.c.h.b16 %v854
  %v1179 = vunpack.c.l.b16 %v855
  %v1180 = vunpack.c.h.b16 %v855
  %v1181 = vunpack.c.l.b16 %v856
  %v1182 = vunpack.c.h.b16 %v856
  %v1183 = vunpack.c.l.b16 %v857
  %v1184 = vunpack.c.h.b16 %v857
  %v1185 = vunpack.c.l.b16 %v858
  %v1186 = vunpack.c.h.b16 %v858
  %v1187 = vunpack.c.l.b16 %v859
  %v1188 = vunpack.c.h.b16 %v859
  %v1189 = vunpack.c.l.b16 %v860
  %v1190 = vunpack.c.h.b16 %v860
  %v1191 = vunpack.c.l.b16 %v861
  %v1192 = vunpack.c.h.b16 %v861
  %v1193 = vunpack.c.l.b16 %v862
  %v1194 = vunpack.c.h.b16 %v862
  %v1195 = vunpack.c.l.b16 %v863
  %v1196 = vunpack.c.h.b16 %v863
  %v1197 = vunpack.c.l.b16 %v864
  %v1198 = vunpack.c.h.b16 %v864
  %v1199 = vunpack.c.l.b16 %v865
  %v1200 = vunpack.c.h.b16 %v865
  %v1201 = vunpack.c.l.b16 %v866
  %v1202 = vunpack.c.h.b16 %v866
  %v1203 = vunpack.c.l.b16 %v867
  %v1204 = vunpack.c.h.b16 %v867
  %v1205 = vunpack.c.l.b16 %v868
  %v1206 = vunpack.c.h.b16 %v868
  %v1207 = vunpack.c.l.b16 %v869
  %v1208 = vunpack.c.h.b16 %v869
  %v1209 = vunpack.c.l.b16 %v870
  %v1210 = vunpack.c.h.b16 %v870
  %v1211 = vunpack.c.l.b16 %v871
  %v1212 = vunpack.c.h.b16 %v871
  %v1213 = vunpack.c.l.b16 %v872
  %v1214 = vunpack.c.h.b16 %v872
  %v1215 = vunpack.c.l.b16 %v873
  %v1216 = vunpack.c.h.b16 %v873
  %v1217 = vunpack.c.l.b16 %v874
  %v1218 = vunpack.c.h.b16 %v874
  %v1219 = vunpack.c.l.b16 %v875
  %v1220 = vunpack.c.h.b16 %v875
  %v1221 = vunpack.c.l.b16 %v876
  %v1222 = vunpack.c.h.b16 %v876
  %v1223 = vunpack.c.l.b16 %v877
  %v1224 = vunpack.c.h.b16 %v877
  %v1225 = vunpack.c.l.b16 %v878
  %v1226 = vunpack.c.h.b16 %v878
  %v1227 = vunpack.c.l.b16 %v879
  %v1228 = vunpack.c.h.b16 %v879
  %v1229 = vunpack.c.l.b16 %v880
  %v1230 = vunpack.c.h.b16 %v880
  %v1231 = vunpack.c.l.b16 %v881
  %v1232 = vunpack.c.h.b16 %v881
  %v1233 = vunpack.c.l.b16 %v882
  %v1234 = vunpack.c.h.b16 %v882
  %v1235 = vunpack.c.l.b16 %v883
  %v1236 = vunpack.c.h.b16 %v883
  %v1237 = vunpack.c.l.b16 %v884
  %v1238 = vunpack.c.h.b16 %v884
  %v1239 = vunpack.c.l.b16 %v885
  %v1240 = vunpack.c.h.b16 %v885
  %v1241 = vunpack.c.l.b16 %v886
  %v1242 = vunpack.c.h.b16 %v886
  %v1243 = vunpack.c.l.b16 %v887
  %v1244 = vunpack.c.h.b16 %v887
  %v1245 = vunpack.c.l.b16 %v888
  %v1246 = vunpack.c.h.b16 %v888
  %v1247 = vunpack.c.l.b16 %v889
  %v1248 = vunpack.c.h.b16 %v889
  %v1249 = vunpack.c.l.b16 %v890
  %v1250 = vunpack.c.h.b16 %v890
  %v1251 = vunpack.c.l.b16 %v891
  %v1252 = vunpack.c.h.b16 %v891
  %v1253 = vunpack.c.l.b16 %v892
  %v1254 = vunpack.c.h.b16 %v892
  %v1255 = vunpack.c.l.b16 %v893
  %v1256 = vunpack.c.h.b16 %v893
  %v1257 = vunpack.c.l.b16 %v894
  %v1258 = vunpack.c.h.b16 %v894
  %v1259 = vunpack.c.l.b16 %v895
  %v1260 = vunpack.c.h.b16 %v895
  %v1261 = vunpack.c.l.b16 %v896
  %v1262 = vunpack.c.h.b16 %v896
  %v1263 = vunpack.c.l.b16 %v897
  %v1264 = vunpack.c.h.b16 %v897
  %v1265 = vunpack.c.l.b16 %v898
  %v1266 = vunpack.c.h.b16 %v898
  %v1267 = vunpack.c.l.b16 %v899
  %v1268 = vunpack.c.h.b16 %v899
  %v1269 = vunpack.c.l.b16 %v900
  %v1270 = vunpack.c.h.b16 %v900
  %v1271 = vunpack.c.l.b16 %v901
  %v1272 = vunpack.c.h.b16 %v901
  %v1273 = vunpack.c.l.b16 %v902
  %v1274 = vunpack.c.h.b16 %v902
  %v1275 = vunpack.c.l.b16 %v903
  %v1276 = vunpack.c.h.b16 %v903
  %v1277 = vunpack.c.l.b16 %v904
  %v1278 = vunpack.c.h.b16 %v904
  %v1279 = vunpack.c.l.b16 %v905
  %v1280 = vunpack.c.h.b16 %v905
  %v1281 = vpack.c.b16 %v1041, %v1031
  %v1282 = vpack.c.b16 %v1042, %v1032
  %v1283 = vpack.c.b16 %v1043, %v1033
  %v1284 = vpack.c.b16 %v1044, %v1034
  %v1285 = vpack.c.b16 %v1045, %v1035
  %v1286 = vpack.c.b16 %v1046, %v1036
  %v1287 = vpack.c.b16 %v1047, %v1037
  %v1288 = vpack.c.b16 %v1048, %v1038
  %v1289 = vpack.c.b16 %v1049, %v1039
  %v1290 = vpack.c.b16 %v1050, %v1040
  %v1291 = vpack.c.b16 %v1061, %v1051
  %v1292 = vpack.c.b16 %v1062, %v1052
  %v1293 = vpack.c.b16 %v1063, %v1053
  %v1294 = vpack.c.b16 %v1064, %v1054
  %v1295 = vpack.c.b16 %v1065, %v1055
  %v1296 = vpack.c.b16 %v1066, %v1056
  %v1297 = vpack.c.b16 %v1067, %v1057
  %v1298 = vpack.c.b16 %v1068, %v1058
  %v1299 = vpack.c.b16 %v1069, %v1059
  %v1300 = vpack.c.b16 %v1070, %v1060
  %v1301 = vpack.c.b16 %v1081, %v1071
  %v1302 = vpack.c.b16 %v1082, %v1072
  %v1303 = vpack.c.b16 %v1083, %v1073
  %v1304 = vpack.c.b16 %v1084, %v1074
  %v1305 = vpack.c.b16 %v1085, %v1075
  %v1306 = vpack.c.b16 %v1086, %v1076
  %v1307 = vpack.c.b16 %v1087, %v1077
  %v1308 = vpack.c.b16 %v1088, %v1078
  %v1309 = vpack.c.b16 %v1089, %v1079
  %v1310 = vpack.c.b16 %v1090, %v1080
  %v1311 = vpack.c.b16 %v1101, %v1091
  %v1312 = vpack.c.b16 %v1102, %v1092
  %v1313 = vpack.c.b16 %v1103, %v1093
  %v1314 = vpack.c.b16 %v1104, %v1094
  %v1315 = vpack.c.b16 %v1105, %v1095
  %v1316 = vpack.c.b16 %v1106, %v1096
  %v1317 = vpack.c.b16 %v1107, %v1097
  %v1318 = vpack.c.b16 %v1108, %v1098
  %v1319 = vpack.c.b16 %v1109, %v1099
  %v1320 = vpack.c.b16 %v1110, %v1100
  %v1321 = vpack.c.b16 %v1121, %v1111
  %v1322 = vpack.c.b16 %v1122, %v1112
  %v1323 = vpack.c.b16 %v1123, %v1113
  %v1324 = vpack.c.b16 %v1124, %v1114
  %v1325 = vpack.c.b16 %v1125, %v1115
  %v1326 = vpack.c.b16 %v1126, %v1116
  %v1327 = vpack.c.b16 %v1127, %v1117
  %v1328 = vpack.c.b16 %v1128, %v1118
  %v1329 = vpack.c.b16 %v1129, %v1119
  %v1330 = vpack.c.b16 %v1130, %v1120
  %v1331 = vpack.c.b16 %v1141, %v1131
  %v1332 = vpack.c.b16 %v1142, %v1132
  %v1333 = vpack.c.b16 %v1143, %v1133
  %v1334 = vpack.c.b16 %v1144, %v1134
  %v1335 = vpack.c.b16 %v1145, %v1135
  %v1336 = vpack.c.b16 %v1146, %v1136
  %v1337 = vpack.c.b16 %v1147, %v1137
  %v1338 = vpack.c.b16 %v1148, %v1138
  %v1339 = vpack.c.b16 %v1149, %v1139
  %v1340 = vpack.c.b16 %v1150, %v1140
  %v1341 = vpack.c.b16 %v1161, %v1151
  %v1342 = vpack.c.b16 %v1162, %v1152
  %v1343 = vpack.c.b16 %v1163, %v1153
  %v1344 = vpack.c.b16 %v1164, %v1154
  %v1345 = vpack.c.b16 %v1165, %v1155
  %v1346 = vpack.c.b16 %v1166, %v1156
  %v1347 = vpack.c.b16 %v1167, %v1157
  %v1348 = vpack.c.b16 %v1168, %v1158
  %v1349 = vpack.c.b16 %v1169, %v1159
  %v1350 = vpack.c.b16 %v1170, %v1160
  %v1351 = vpack.c.b16 %v1181, %v1171
  %v1352 = vpack.c.b16 %v1182, %v1172
  %v1353 = vpack.c.b16 %v1183, %v1173
  %v1354 = vpack.c.b16 %v1184, %v1174
  %v1355 = vpack.c.b16 %v1185, %v1175
  %v1356 = vpack.c.b16 %v1186, %v1176
  %v1357 = vpack.c.b16 %v1187, %v1177
  %v1358 = vpack.c.b16 %v1188, %v1178
  %v1359 = vpack.c.b16 %v1189, %v1179
  %v1360 = vpack.c.b16 %v1190, %v1180
  %v1361 = vpack.c.b16 %v1201, %v1191
  %v1362 = vpack.c.b16 %v1202, %v1192
  %v1363 = vpack.c.b16 %v1203, %v1193
  %v1364 = vpack.c.b16 %v1204, %v1194
  %v1365 = vpack.c.b16 %v1205, %v1195
  %v1366 = vpack.c.b16 %v1206, %v1196
  %v1367 = vpack.c.b16 %v1207, %v1197
  %v1368 = vpack.c.b16 %v1208, %v1198
  %v1369 = vpack.c.b16 %v1209, %v1199
  %v1370 = vpack.c.b16 %v1210, %v1200
  %v1371 = vpack.c.b16 %v1221, %v1211
  %v1372 = vpack.c.b16 %v1222, %v1212
  %v1373 = vpack.c.b16 %v1223, %v1213
  %v1374 = vpack.c.b16 %v1224, %v1214
  %v1375 = vpack.c.b16 %v1225, %v1215
  %v1376 = vpack.c.b16 %v1226, %v1216
  %v1377 = vpack.c.b16 %v1227, %v1217
  %v1378 = vpack.c.b16 %v1228, %v1218
  %v1379 = vpack.c.b16 %v1229, %v1219
  %v1380 = vpack.c.b16 %v1230, %v1220
  %v1381 = vpack.c.b16 %v1241, %v1231
  %v1382 = vpack.c.b16 %v1242, %v1232
  %v1383 = vpack.c.b16 %v1243, %v1233
  %v1384 = vpack.c.b16 %v1244, %v1234
  %v1385 = vpack.c.b16 %v1245, %v1235
  %v1386 = vpack.c.b16 %v1246, %v1236
  %v1387 = vpack.c.b16 %v1247, %v1237
  %v1388 = vpack.c.b16 %v1248, %v1238
  %v1389 = vpack.c.b16 %v1249, %v1239
  %v1390 = vpack.c.b16 %v1250, %v1240
  %v1391 = vpack.c.b16 %v1261, %v1251
  %v1392 = vpack.c.b16 %v1262, %v1252
  %v1393 = vpack.c.b16 %v1263, %v1253
  %v1394 = vpack.c.b16 %v1264, %v1254
  %v1395 = vpack.c.b16 %v1265, %v1255
  %v1396 = vpack.c.b16 %v1266, %v1256
  %v1397 = vpack.c.b16 %v1267, %v1257
  %v1398 = vpack.c.b16 %v1268, %v1258
  %v1399 = vpack.c.b16 %v1269, %v1259
  %v1400 = vpack.c.b16 %v1270, %v1260
  %v1401 = vpack.c.b16 %v1271, %v1271
  %v1402 = vpack.c.b16 %v1272, %v1272
  %v1403 = vpack.c.b16 %v1273, %v1273
  %v1404 = vpack.c.b16 %v1274, %v1274
  %v1405 = vpack.c.b16 %v1275, %v1275
  %v1406 = vpack.c.b16 %v1276, %v1276
  %v1407 = vpack.c.b16 %v1277, %v1277
  %v1408 = vpack.c.b16 %v1278, %v1278
  %v1409 = vpack.c.b16 %v1279, %v1279
  %v1410 = vpack.c.b16 %v1280, %v1280
  %vm1531 = vcmask 572416
  %v1533 = vsel %vm1531, %v71, 0
  %vm1535 = vcmask 1042432
  %v1537 = vsel %vm1535, %v1401, 0
  %v1540 = vsel %vm1535, %v1402, 0
  %v1543 = vsel %vm1535, %v1403, 0
  %v1546 = vsel %vm1535, %v1404, 0
  %v1549 = vsel %vm1535, %v1405, 0
  %v1552 = vsel %vm1535, %v1406, 0
  %v1555 = vsel %vm1535, %v1407, 0
  %v1558 = vsel %vm1535, %v1408, 0
  %v1561 = vsel %vm1535, %v1409, 0
  %v1564 = vsel %vm1535, %v1410, 0
  %1566 = vmatprep.subr.bf16.mxu0 %v1282
  %1567 = vmatpush1.bf16.msra.mxu0 %v1281
  %1568 = vmatprep.subr.bf16.mxu0 %v1292
  %1569 = vmatpush1.bf16.msra.mxu0 %v1291
  %1570 = vmatprep.subr.bf16.mxu0 %v1302
  %1571 = vmatpush1.bf16.msra.mxu0 %v1301
  %1572 = vmatprep.subr.bf16.mxu0 %v1312
  %1573 = vmatpush1.bf16.msra.mxu0 %v1311
  %1574 = vmatprep.subr.bf16.mxu0 %v1322
  %1575 = vmatpush1.bf16.msra.mxu0 %v1321
  %1576 = vmatprep.subr.bf16.mxu0 %v1332
  %1577 = vmatpush1.bf16.msra.mxu0 %v1331
  %1578 = vmatprep.subr.bf16.mxu0 %v1342
  %1579 = vmatpush1.bf16.msra.mxu0 %v1341
  %1580 = vmatprep.subr.bf16.mxu0 %v1352
  %1581 = vmatpush1.bf16.msra.mxu0 %v1351
  %1582 = vmatprep.subr.bf16.mxu0 %v1362
  %1583 = vmatpush1.bf16.msra.mxu0 %v1361
  %1584 = vmatprep.subr.bf16.mxu0 %v1372
  %1585 = vmatpush1.bf16.msra.mxu0 %v1371
  %1586 = vmatprep.subr.bf16.mxu0 %v1382
  %1587 = vmatpush1.bf16.msra.mxu0 %v1381
  %1588 = vmatprep.subr.bf16.mxu0 %v1392
  %1589 = vmatpush1.bf16.msra.mxu0 %v1391
  %1590 = vmatprep.subr.bf16.mxu0 %v1540
  %1591 = vmatpush1.bf16.msra.mxu0 %v1537
  %1592 = vmatprep.subr.bf16.mxu0 0
  %1593 = vmatpush1.bf16.msra.mxu0 0
  %1594 = vmatprep.subr.bf16.mxu0 0
  %1595 = vmatpush1.bf16.msra.mxu0 0
  %1596 = vmatprep.subr.bf16.mxu0 0
  %1597 = vmatpush1.bf16.msra.mxu0 0
  %1598 = vmatprep.mubr.bf16.mxu0 %v1533
  %1599 = vmatmul.mubr.bf16.gmra.mrb[0].mxu0 %v70
  %v1600 = vpop.f32.mrb[0].mxu0
  %v1601 = vadd.f32 0.0, %v1600
  %v1602 = vpop.f32.mrb[0].mxu0
  %v1603 = vadd.f32 0.0, %v1602
  %v1604 = vpop.f32.mrb[0].mxu0
  %v1605 = vpop.f32.mrb[0].mxu0
  %1606 = vdwg.mxu0
  %1607 = vmatprep.subr.bf16.mxu0 %v1284
  %1608 = vmatpush1.bf16.msra.mxu0 %v1283
  %1609 = vmatprep.subr.bf16.mxu0 %v1294
  %1610 = vmatpush1.bf16.msra.mxu0 %v1293
  %1611 = vmatprep.subr.bf16.mxu0 %v1304
  %1612 = vmatpush1.bf16.msra.mxu0 %v1303
  %1613 = vmatprep.subr.bf16.mxu0 %v1314
  %1614 = vmatpush1.bf16.msra.mxu0 %v1313
  %1615 = vmatprep.subr.bf16.mxu0 %v1324
  %1616 = vmatpush1.bf16.msra.mxu0 %v1323
  %1617 = vmatprep.subr.bf16.mxu0 %v1334
  %1618 = vmatpush1.bf16.msra.mxu0 %v1333
  %1619 = vmatprep.subr.bf16.mxu0 %v1344
  %1620 = vmatpush1.bf16.msra.mxu0 %v1343
  %1621 = vmatprep.subr.bf16.mxu0 %v1354
  %1622 = vmatpush1.bf16.msra.mxu0 %v1353
  %1623 = vmatprep.subr.bf16.mxu0 %v1364
  %1624 = vmatpush1.bf16.msra.mxu0 %v1363
  %1625 = vmatprep.subr.bf16.mxu0 %v1374
  %1626 = vmatpush1.bf16.msra.mxu0 %v1373
  %1627 = vmatprep.subr.bf16.mxu0 %v1384
  %1628 = vmatpush1.bf16.msra.mxu0 %v1383
  %1629 = vmatprep.subr.bf16.mxu0 %v1394
  %1630 = vmatpush1.bf16.msra.mxu0 %v1393
  %1631 = vmatprep.subr.bf16.mxu0 %v1546
  %1632 = vmatpush1.bf16.msra.mxu0 %v1543
  %1633 = vmatprep.subr.bf16.mxu0 0
  %1634 = vmatpush1.bf16.msra.mxu0 0
  %1635 = vmatprep.subr.bf16.mxu0 0
  %1636 = vmatpush1.bf16.msra.mxu0 0
  %1637 = vmatprep.subr.bf16.mxu0 0
  %1638 = vmatpush1.bf16.msra.mxu0 0
  %1639 = vmatprep.mubr.bf16.mxu0 %v1533
  %1640 = vmatmul.mubr.bf16.gmra.mrb[0].mxu0 %v70
  %v1641 = vpop.f32.mrb[0].mxu0
  %v1642 = vadd.f32 0.0, %v1641
  %v1643 = vpop.f32.mrb[0].mxu0
  %v1644 = vadd.f32 0.0, %v1643
  %v1645 = vpop.f32.mrb[0].mxu0
  %v1646 = vpop.f32.mrb[0].mxu0
  %1647 = vdwg.mxu0
  %1648 = vmatprep.subr.bf16.mxu0 %v1286
  %1649 = vmatpush1.bf16.msra.mxu0 %v1285
  %1650 = vmatprep.subr.bf16.mxu0 %v1296
  %1651 = vmatpush1.bf16.msra.mxu0 %v1295
  %1652 = vmatprep.subr.bf16.mxu0 %v1306
  %1653 = vmatpush1.bf16.msra.mxu0 %v1305
  %1654 = vmatprep.subr.bf16.mxu0 %v1316
  %1655 = vmatpush1.bf16.msra.mxu0 %v1315
  %1656 = vmatprep.subr.bf16.mxu0 %v1326
  %1657 = vmatpush1.bf16.msra.mxu0 %v1325
  %1658 = vmatprep.subr.bf16.mxu0 %v1336
  %1659 = vmatpush1.bf16.msra.mxu0 %v1335
  %1660 = vmatprep.subr.bf16.mxu0 %v1346
  %1661 = vmatpush1.bf16.msra.mxu0 %v1345
  %1662 = vmatprep.subr.bf16.mxu0 %v1356
  %1663 = vmatpush1.bf16.msra.mxu0 %v1355
  %1664 = vmatprep.subr.bf16.mxu0 %v1366
  %1665 = vmatpush1.bf16.msra.mxu0 %v1365
  %1666 = vmatprep.subr.bf16.mxu0 %v1376
  %1667 = vmatpush1.bf16.msra.mxu0 %v1375
  %1668 = vmatprep.subr.bf16.mxu0 %v1386
  %1669 = vmatpush1.bf16.msra.mxu0 %v1385
  %1670 = vmatprep.subr.bf16.mxu0 %v1396
  %1671 = vmatpush1.bf16.msra.mxu0 %v1395
  %1672 = vmatprep.subr.bf16.mxu0 %v1552
  %1673 = vmatpush1.bf16.msra.mxu0 %v1549
  %1674 = vmatprep.subr.bf16.mxu0 0
  %1675 = vmatpush1.bf16.msra.mxu0 0
  %1676 = vmatprep.subr.bf16.mxu0 0
  %1677 = vmatpush1.bf16.msra.mxu0 0
  %1678 = vmatprep.subr.bf16.mxu0 0
  %1679 = vmatpush1.bf16.msra.mxu0 0
  %1680 = vmatprep.mubr.bf16.mxu0 %v1533
  %1681 = vmatmul.mubr.bf16.gmra.mrb[0].mxu0 %v70
  %v1682 = vpop.f32.mrb[0].mxu0
  %v1683 = vadd.f32 0.0, %v1682
  %v1684 = vpop.f32.mrb[0].mxu0
  %v1685 = vadd.f32 0.0, %v1684
  %v1686 = vpop.f32.mrb[0].mxu0
  %v1687 = vpop.f32.mrb[0].mxu0
  %1688 = vdwg.mxu0
  %1689 = vmatprep.subr.bf16.mxu0 %v1288
  %1690 = vmatpush1.bf16.msra.mxu0 %v1287
  %1691 = vmatprep.subr.bf16.mxu0 %v1298
  %1692 = vmatpush1.bf16.msra.mxu0 %v1297
  %1693 = vmatprep.subr.bf16.mxu0 %v1308
  %1694 = vmatpush1.bf16.msra.mxu0 %v1307
  %1695 = vmatprep.subr.bf16.mxu0 %v1318
  %1696 = vmatpush1.bf16.msra.mxu0 %v1317
  %1697 = vmatprep.subr.bf16.mxu0 %v1328
  %1698 = vmatpush1.bf16.msra.mxu0 %v1327
  %1699 = vmatprep.subr.bf16.mxu0 %v1338
  %1700 = vmatpush1.bf16.msra.mxu0 %v1337
  %1701 = vmatprep.subr.bf16.mxu0 %v1348
  %1702 = vmatpush1.bf16.msra.mxu0 %v1347
  %1703 = vmatprep.subr.bf16.mxu0 %v1358
  %1704 = vmatpush1.bf16.msra.mxu0 %v1357
  %1705 = vmatprep.subr.bf16.mxu0 %v1368
  %1706 = vmatpush1.bf16.msra.mxu0 %v1367
  %1707 = vmatprep.subr.bf16.mxu0 %v1378
  %1708 = vmatpush1.bf16.msra.mxu0 %v1377
  %1709 = vmatprep.subr.bf16.mxu0 %v1388
  %1710 = vmatpush1.bf16.msra.mxu0 %v1387
  %1711 = vmatprep.subr.bf16.mxu0 %v1398
  %1712 = vmatpush1.bf16.msra.mxu0 %v1397
  %1713 = vmatprep.subr.bf16.mxu0 %v1558
  %1714 = vmatpush1.bf16.msra.mxu0 %v1555
  %1715 = vmatprep.subr.bf16.mxu0 0
  %1716 = vmatpush1.bf16.msra.mxu0 0
  %1717 = vmatprep.subr.bf16.mxu0 0
  %1718 = vmatpush1.bf16.msra.mxu0 0
  %1719 = vmatprep.subr.bf16.mxu0 0
  %1720 = vmatpush1.bf16.msra.mxu0 0
  %1721 = vmatprep.mubr.bf16.mxu0 %v1533
  %1722 = vmatmul.mubr.bf16.gmra.mrb[0].mxu0 %v70
  %v1723 = vpop.f32.mrb[0].mxu0
  %v1724 = vadd.f32 0.0, %v1723
  %v1725 = vpop.f32.mrb[0].mxu0
  %v1726 = vadd.f32 0.0, %v1725
  %v1727 = vpop.f32.mrb[0].mxu0
  %v1728 = vpop.f32.mrb[0].mxu0
  %1729 = vdwg.mxu0
  %1730 = vmatprep.subr.bf16.mxu0 %v1290
  %1731 = vmatpush1.bf16.msra.mxu0 %v1289
  %1732 = vmatprep.subr.bf16.mxu0 %v1300
  %1733 = vmatpush1.bf16.msra.mxu0 %v1299
  %1734 = vmatprep.subr.bf16.mxu0 %v1310
  %1735 = vmatpush1.bf16.msra.mxu0 %v1309
  %1736 = vmatprep.subr.bf16.mxu0 %v1320
  %1737 = vmatpush1.bf16.msra.mxu0 %v1319
  %1738 = vmatprep.subr.bf16.mxu0 %v1330
  %1739 = vmatpush1.bf16.msra.mxu0 %v1329
  %1740 = vmatprep.subr.bf16.mxu0 %v1340
  %1741 = vmatpush1.bf16.msra.mxu0 %v1339
  %1742 = vmatprep.subr.bf16.mxu0 %v1350
  %1743 = vmatpush1.bf16.msra.mxu0 %v1349
  %1744 = vmatprep.subr.bf16.mxu0 %v1360
  %1745 = vmatpush1.bf16.msra.mxu0 %v1359
  %1746 = vmatprep.subr.bf16.mxu0 %v1370
  %1747 = vmatpush1.bf16.msra.mxu0 %v1369
  %1748 = vmatprep.subr.bf16.mxu0 %v1380
  %1749 = vmatpush1.bf16.msra.mxu0 %v1379
  %1750 = vmatprep.subr.bf16.mxu0 %v1390
  %1751 = vmatpush1.bf16.msra.mxu0 %v1389
  %1752 = vmatprep.subr.bf16.mxu0 %v1400
  %1753 = vmatpush1.bf16.msra.mxu0 %v1399
  %1754 = vmatprep.subr.bf16.mxu0 %v1564
  %1755 = vmatpush1.bf16.msra.mxu0 %v1561
  %1756 = vmatprep.subr.bf16.mxu0 0
  %1757 = vmatpush1.bf16.msra.mxu0 0
  %1758 = vmatprep.subr.bf16.mxu0 0
  %1759 = vmatpush1.bf16.msra.mxu0 0
  %1760 = vmatprep.subr.bf16.mxu0 0
  %1761 = vmatpush1.bf16.msra.mxu0 0
  %1762 = vmatprep.mubr.bf16.mxu0 %v1533
  %1763 = vmatmul.mubr.bf16.gmra.mrb[0].mxu0 %v70
  %v1764 = vpop.f32.mrb[0].mxu0
  %v1765 = vadd.f32 0.0, %v1764
  %v1766 = vpop.f32.mrb[0].mxu0
  %v1767 = vadd.f32 0.0, %v1766
  %v1768 = vpop.f32.mrb[0].mxu0
  %v1769 = vpop.f32.mrb[0].mxu0
  %1770 = vdwg.mxu0
  %v1771 = vpack.c.bf16 %v1601, %v1601
  %v1772 = vpack.c.bf16 %v1603, %v1603
  %v1948 = vunpack.c.l.b16 %v72
  %v1949 = vunpack.c.h.b16 %v72
  %v1950 = vunpack.c.l.b16 %v73
  %v1951 = vunpack.c.h.b16 %v73
  %v1952 = vunpack.c.l.b16 %v74
  %v1953 = vunpack.c.h.b16 %v74
  %v1954 = vunpack.c.l.b16 %v75
  %v1955 = vunpack.c.h.b16 %v75
  %v1956 = vunpack.c.l.b16 %v76
  %v1957 = vunpack.c.h.b16 %v76
  %v1958 = vunpack.c.l.b16 %v77
  %v1959 = vunpack.c.h.b16 %v77
  %v1960 = vunpack.c.l.b16 %v78
  %v1961 = vunpack.c.h.b16 %v78
  %v1962 = vunpack.c.l.b16 %v79
  %v1963 = vunpack.c.h.b16 %v79
  %v1964 = vunpack.c.l.b16 %v80
  %v1965 = vunpack.c.h.b16 %v80
  %v1966 = vunpack.c.l.b16 %v81
  %v1967 = vunpack.c.h.b16 %v81
  %v1968 = vunpack.c.l.b16 %v82
  %v1969 = vunpack.c.h.b16 %v82
  %v1970 = vunpack.c.l.b16 %v83
  %v1971 = vunpack.c.h.b16 %v83
  %v1972 = vunpack.c.l.b16 %v84
  %v1973 = vunpack.c.h.b16 %v84
  %v1974 = vunpack.c.l.b16 %v85
  %v1975 = vunpack.c.h.b16 %v85
  %v1976 = vunpack.c.l.b16 %v86
  %v1977 = vunpack.c.h.b16 %v86
  %v1978 = vunpack.c.l.b16 %v87
  %v1979 = vunpack.c.h.b16 %v87
  %v1980 = vunpack.c.l.b16 %v88
  %v1981 = vunpack.c.h.b16 %v88
  %v1982 = vunpack.c.l.b16 %v89
  %v1983 = vunpack.c.h.b16 %v89
  %v1984 = vunpack.c.l.b16 %v90
  %v1985 = vunpack.c.h.b16 %v90
  %v1986 = vunpack.c.l.b16 %v91
  %v1987 = vunpack.c.h.b16 %v91
  %v1988 = vunpack.c.l.b16 %v92
  %v1989 = vunpack.c.h.b16 %v92
  %v1990 = vunpack.c.l.b16 %v93
  %v1991 = vunpack.c.h.b16 %v93
  %v1992 = vunpack.c.l.b16 %v94
  %v1993 = vunpack.c.h.b16 %v94
  %v1994 = vunpack.c.l.b16 %v95
  %v1995 = vunpack.c.h.b16 %v95
  %v1996 = vunpack.c.l.b16 %v96
  %v1997 = vunpack.c.h.b16 %v96
  %v1998 = vunpack.c.l.b16 %v97
  %v1999 = vunpack.c.h.b16 %v97
  %v2000 = vunpack.c.l.b16 %v98
  %v2001 = vunpack.c.h.b16 %v98
  %v2002 = vunpack.c.l.b16 %v99
  %v2003 = vunpack.c.h.b16 %v99
  %v2004 = vunpack.c.l.b16 %v100
  %v2005 = vunpack.c.h.b16 %v100
  %v2006 = vunpack.c.l.b16 %v101
  %v2007 = vunpack.c.h.b16 %v101
  %v2008 = vunpack.c.l.b16 %v102
  %v2009 = vunpack.c.h.b16 %v102
  %v2010 = vunpack.c.l.b16 %v103
  %v2011 = vunpack.c.h.b16 %v103
  %v2012 = vunpack.c.l.b16 %v104
  %v2013 = vunpack.c.h.b16 %v104
  %v2014 = vunpack.c.l.b16 %v105
  %v2015 = vunpack.c.h.b16 %v105
  %v2016 = vunpack.c.l.b16 %v106
  %v2017 = vunpack.c.h.b16 %v106
  %v2018 = vunpack.c.l.b16 %v107
  %v2019 = vunpack.c.h.b16 %v107
  %v2020 = vunpack.c.l.b16 %v108
  %v2021 = vunpack.c.h.b16 %v108
  %v2022 = vunpack.c.l.b16 %v109
  %v2023 = vunpack.c.h.b16 %v109
  %v2024 = vunpack.c.l.b16 %v110
  %v2025 = vunpack.c.h.b16 %v110
  %v2026 = vunpack.c.l.b16 %v111
  %v2027 = vunpack.c.h.b16 %v111
  %v2028 = vunpack.c.l.b16 %v112
  %v2029 = vunpack.c.h.b16 %v112
  %v2030 = vunpack.c.l.b16 %v113
  %v2031 = vunpack.c.h.b16 %v113
  %v2032 = vunpack.c.l.b16 %v114
  %v2033 = vunpack.c.h.b16 %v114
  %v2034 = vunpack.c.l.b16 %v115
  %v2035 = vunpack.c.h.b16 %v115
  %v2036 = vunpack.c.l.b16 %v116
  %v2037 = vunpack.c.h.b16 %v116
  %v2038 = vunpack.c.l.b16 %v117
  %v2039 = vunpack.c.h.b16 %v117
  %v2040 = vunpack.c.l.b16 %v118
  %v2041 = vunpack.c.h.b16 %v118
  %v2042 = vunpack.c.l.b16 %v119
  %v2043 = vunpack.c.h.b16 %v119
  %v2044 = vunpack.c.l.b16 %v120
  %v2045 = vunpack.c.h.b16 %v120
  %v2046 = vunpack.c.l.b16 %v121
  %v2047 = vunpack.c.h.b16 %v121
  %v2048 = vunpack.c.l.b16 %v122
  %v2049 = vunpack.c.h.b16 %v122
  %v2050 = vunpack.c.l.b16 %v123
  %v2051 = vunpack.c.h.b16 %v123
  %v2052 = vunpack.c.l.b16 %v124
  %v2053 = vunpack.c.h.b16 %v124
  %v2054 = vunpack.c.l.b16 %v125
  %v2055 = vunpack.c.h.b16 %v125
  %v2056 = vunpack.c.l.b16 %v126
  %v2057 = vunpack.c.h.b16 %v126
  %v2058 = vunpack.c.l.b16 %v127
  %v2059 = vunpack.c.h.b16 %v127
  %v2060 = vunpack.c.l.b16 %v128
  %v2061 = vunpack.c.h.b16 %v128
  %v2062 = vunpack.c.l.b16 %v129
  %v2063 = vunpack.c.h.b16 %v129
  %v2064 = vunpack.c.l.b16 %v130
  %v2065 = vunpack.c.h.b16 %v130
  %v2066 = vunpack.c.l.b16 %v131
  %v2067 = vunpack.c.h.b16 %v131
  %v2068 = vunpack.c.l.b16 %v132
  %v2069 = vunpack.c.h.b16 %v132
  %v2070 = vunpack.c.l.b16 %v133
  %v2071 = vunpack.c.h.b16 %v133
  %v2072 = vunpack.c.l.b16 %v134
  %v2073 = vunpack.c.h.b16 %v134
  %v2074 = vunpack.c.l.b16 %v135
  %v2075 = vunpack.c.h.b16 %v135
  %v2076 = vunpack.c.l.b16 %v136
  %v2077 = vunpack.c.h.b16 %v136
  %v2078 = vunpack.c.l.b16 %v137
  %v2079 = vunpack.c.h.b16 %v137
  %v2080 = vunpack.c.l.b16 %v138
  %v2081 = vunpack.c.h.b16 %v138
  %v2082 = vunpack.c.l.b16 %v139
  %v2083 = vunpack.c.h.b16 %v139
  %v2084 = vunpack.c.l.b16 %v140
  %v2085 = vunpack.c.h.b16 %v140
  %v2086 = vunpack.c.l.b16 %v141
  %v2087 = vunpack.c.h.b16 %v141
  %v2088 = vunpack.c.l.b16 %v142
  %v2089 = vunpack.c.h.b16 %v142
  %v2090 = vunpack.c.l.b16 %v143
  %v2091 = vunpack.c.h.b16 %v143
  %v2092 = vunpack.c.l.b16 %v144
  %v2093 = vunpack.c.h.b16 %v144
  %v2094 = vunpack.c.l.b16 %v145
  %v2095 = vunpack.c.h.b16 %v145
  %v2096 = vunpack.c.l.b16 %v146
  %v2097 = vunpack.c.h.b16 %v146
  %v2098 = vunpack.c.l.b16 %v147
  %v2099 = vunpack.c.h.b16 %v147
  %v2100 = vunpack.c.l.b16 %v148
  %v2101 = vunpack.c.h.b16 %v148
  %v2102 = vunpack.c.l.b16 %v149
  %v2103 = vunpack.c.h.b16 %v149
  %v2104 = vunpack.c.l.b16 %v150
  %v2105 = vunpack.c.h.b16 %v150
  %v2106 = vunpack.c.l.b16 %v151
  %v2107 = vunpack.c.h.b16 %v151
  %v2108 = vunpack.c.l.b16 %v152
  %v2109 = vunpack.c.h.b16 %v152
  %v2110 = vunpack.c.l.b16 %v153
  %v2111 = vunpack.c.h.b16 %v153
  %v2112 = vunpack.c.l.b16 %v154
  %v2113 = vunpack.c.h.b16 %v154
  %v2114 = vunpack.c.l.b16 %v155
  %v2115 = vunpack.c.h.b16 %v155
  %v2116 = vunpack.c.l.b16 %v156
  %v2117 = vunpack.c.h.b16 %v156
  %v2118 = vunpack.c.l.b16 %v157
  %v2119 = vunpack.c.h.b16 %v157
  %v2120 = vunpack.c.l.b16 %v158
  %v2121 = vunpack.c.h.b16 %v158
  %v2122 = vunpack.c.l.b16 %v159
  %v2123 = vunpack.c.h.b16 %v159
  %v2124 = vunpack.c.l.b16 %v160
  %v2125 = vunpack.c.h.b16 %v160
  %v2126 = vunpack.c.l.b16 %v161
  %v2127 = vunpack.c.h.b16 %v161
  %v2128 = vunpack.c.l.b16 %v162
  %v2129 = vunpack.c.h.b16 %v162
  %v2130 = vunpack.c.l.b16 %v163
  %v2131 = vunpack.c.h.b16 %v163
  %v2132 = vunpack.c.l.b16 %v164
  %v2133 = vunpack.c.h.b16 %v164
  %v2134 = vunpack.c.l.b16 %v165
  %v2135 = vunpack.c.h.b16 %v165
  %v2136 = vunpack.c.l.b16 %v166
  %v2137 = vunpack.c.h.b16 %v166
  %v2138 = vunpack.c.l.b16 %v167
  %v2139 = vunpack.c.h.b16 %v167
  %v2140 = vunpack.c.l.b16 %v168
  %v2141 = vunpack.c.h.b16 %v168
  %v2142 = vunpack.c.l.b16 %v169
  %v2143 = vunpack.c.h.b16 %v169
  %v2144 = vunpack.c.l.b16 %v170
  %v2145 = vunpack.c.h.b16 %v170
  %v2146 = vunpack.c.l.b16 %v171
  %v2147 = vunpack.c.h.b16 %v171
  %v2148 = vunpack.c.l.b16 %v172
  %v2149 = vunpack.c.h.b16 %v172
  %v2150 = vunpack.c.l.b16 %v173
  %v2151 = vunpack.c.h.b16 %v173
  %v2152 = vunpack.c.l.b16 %v174
  %v2153 = vunpack.c.h.b16 %v174
  %v2154 = vunpack.c.l.b16 %v175
  %v2155 = vunpack.c.h.b16 %v175
  %v2156 = vunpack.c.l.b16 %v176
  %v2157 = vunpack.c.h.b16 %v176
  %v2158 = vunpack.c.l.b16 %v177
  %v2159 = vunpack.c.h.b16 %v177
  %v2160 = vunpack.c.l.b16 %v178
  %v2161 = vunpack.c.h.b16 %v178
  %v2162 = vunpack.c.l.b16 %v179
  %v2163 = vunpack.c.h.b16 %v179
  %v2164 = vunpack.c.l.b16 %v180
  %v2165 = vunpack.c.h.b16 %v180
  %v2166 = vunpack.c.l.b16 %v181
  %v2167 = vunpack.c.h.b16 %v181
  %v2168 = vunpack.c.l.b16 %v182
  %v2169 = vunpack.c.h.b16 %v182
  %v2170 = vunpack.c.l.b16 %v183
  %v2171 = vunpack.c.h.b16 %v183
  %v2172 = vunpack.c.l.b16 %v184
  %v2173 = vunpack.c.h.b16 %v184
  %v2174 = vunpack.c.l.b16 %v185
  %v2175 = vunpack.c.h.b16 %v185
  %v2176 = vunpack.c.l.b16 %v186
  %v2177 = vunpack.c.h.b16 %v186
  %v2178 = vunpack.c.l.b16 %v187
  %v2179 = vunpack.c.h.b16 %v187
  %v2180 = vunpack.c.l.b16 %v188
  %v2181 = vunpack.c.h.b16 %v188
  %v2182 = vunpack.c.l.b16 %v189
  %v2183 = vunpack.c.h.b16 %v189
  %v2184 = vunpack.c.l.b16 %v190
  %v2185 = vunpack.c.h.b16 %v190
  %v2186 = vunpack.c.l.b16 %v191
  %v2187 = vunpack.c.h.b16 %v191
  %v2188 = vunpack.c.l.b16 %v192
  %v2189 = vunpack.c.h.b16 %v192
  %v2190 = vunpack.c.l.b16 %v193
  %v2191 = vunpack.c.h.b16 %v193
  %v2192 = vunpack.c.l.b16 %v194
  %v2193 = vunpack.c.h.b16 %v194
  %v2194 = vunpack.c.l.b16 %v195
  %v2195 = vunpack.c.h.b16 %v195
  %v2196 = vunpack.c.l.b16 %v196
  %v2197 = vunpack.c.h.b16 %v196
  %v2198 = vunpack.c.l.b16 %v197
  %v2199 = vunpack.c.h.b16 %v197
  %v2200 = vunpack.c.l.b16 %v198
  %v2201 = vunpack.c.h.b16 %v198
  %v2202 = vunpack.c.l.b16 %v199
  %v2203 = vunpack.c.h.b16 %v199
  %v2204 = vunpack.c.l.b16 %v200
  %v2205 = vunpack.c.h.b16 %v200
  %v2206 = vunpack.c.l.b16 %v201
  %v2207 = vunpack.c.h.b16 %v201
  %v2208 = vunpack.c.l.b16 %v202
  %v2209 = vunpack.c.h.b16 %v202
  %v2210 = vunpack.c.l.b16 %v203
  %v2211 = vunpack.c.h.b16 %v203
  %v2212 = vunpack.c.l.b16 %v204
  %v2213 = vunpack.c.h.b16 %v204
  %v2214 = vunpack.c.l.b16 %v205
  %v2215 = vunpack.c.h.b16 %v205
  %v2216 = vunpack.c.l.b16 %v206
  %v2217 = vunpack.c.h.b16 %v206
  %v2218 = vunpack.c.l.b16 %v207
  %v2219 = vunpack.c.h.b16 %v207
  %v2220 = vunpack.c.l.b16 %v208
  %v2221 = vunpack.c.h.b16 %v208
  %v2222 = vunpack.c.l.b16 %v209
  %v2223 = vunpack.c.h.b16 %v209
  %v2224 = vunpack.c.l.b16 %v210
  %v2225 = vunpack.c.h.b16 %v210
  %v2226 = vunpack.c.l.b16 %v211
  %v2227 = vunpack.c.h.b16 %v211
  %v2228 = vunpack.c.l.b16 %v212
  %v2229 = vunpack.c.h.b16 %v212
  %v2230 = vunpack.c.l.b16 %v213
  %v2231 = vunpack.c.h.b16 %v213
  %v2232 = vunpack.c.l.b16 %v214
  %v2233 = vunpack.c.h.b16 %v214
  %v2234 = vunpack.c.l.b16 %v215
  %v2235 = vunpack.c.h.b16 %v215
  %v2236 = vunpack.c.l.b16 %v216
  %v2237 = vunpack.c.h.b16 %v216
  %v2238 = vunpack.c.l.b16 %v217
  %v2239 = vunpack.c.h.b16 %v217
  %v2240 = vunpack.c.l.b16 %v218
  %v2241 = vunpack.c.h.b16 %v218
  %v2242 = vunpack.c.l.b16 %v219
  %v2243 = vunpack.c.h.b16 %v219
  %v2244 = vunpack.c.l.b16 %v220
  %v2245 = vunpack.c.h.b16 %v220
  %v2246 = vunpack.c.l.b16 %v221
  %v2247 = vunpack.c.h.b16 %v221
  %v2248 = vunpack.c.l.b16 %v222
  %v2249 = vunpack.c.h.b16 %v222
  %v2250 = vunpack.c.l.b16 %v223
  %v2251 = vunpack.c.h.b16 %v223
  %v2252 = vunpack.c.l.b16 %v224
  %v2253 = vunpack.c.h.b16 %v224
  %v2254 = vunpack.c.l.b16 %v225
  %v2255 = vunpack.c.h.b16 %v225
  %v2256 = vunpack.c.l.b16 %v226
  %v2257 = vunpack.c.h.b16 %v226
  %v2258 = vunpack.c.l.b16 %v227
  %v2259 = vunpack.c.h.b16 %v227
  %v2260 = vunpack.c.l.b16 %v228
  %v2261 = vunpack.c.h.b16 %v228
  %v2262 = vunpack.c.l.b16 %v229
  %v2263 = vunpack.c.h.b16 %v229
  %v2264 = vunpack.c.l.b16 %v230
  %v2265 = vunpack.c.h.b16 %v230
  %v2266 = vunpack.c.l.b16 %v231
  %v2267 = vunpack.c.h.b16 %v231
  %v2268 = vunpack.c.l.b16 %v232
  %v2269 = vunpack.c.h.b16 %v232
  %v2270 = vunpack.c.l.b16 %v233
  %v2271 = vunpack.c.h.b16 %v233
  %v2272 = vunpack.c.l.b16 %v234
  %v2273 = vunpack.c.h.b16 %v234
  %v2274 = vunpack.c.l.b16 %v235
  %v2275 = vunpack.c.h.b16 %v235
  %v2276 = vunpack.c.l.b16 %v236
  %v2277 = vunpack.c.h.b16 %v236
  %v2278 = vunpack.c.l.b16 %v237
  %v2279 = vunpack.c.h.b16 %v237
  %v2280 = vunpack.c.l.b16 %v238
  %v2281 = vunpack.c.h.b16 %v238
  %v2282 = vunpack.c.l.b16 %v239
  %v2283 = vunpack.c.h.b16 %v239
  %v2284 = vunpack.c.l.b16 %v240
  %v2285 = vunpack.c.h.b16 %v240
  %v2286 = vunpack.c.l.b16 %v241
  %v2287 = vunpack.c.h.b16 %v241
  %v2288 = vunpack.c.l.b16 %v242
  %v2289 = vunpack.c.h.b16 %v242
  %v2290 = vunpack.c.l.b16 %v243
  %v2291 = vunpack.c.h.b16 %v243
  %v2292 = vunpack.c.l.b16 %v244
  %v2293 = vunpack.c.h.b16 %v244
  %v2294 = vunpack.c.l.b16 %v245
  %v2295 = vunpack.c.h.b16 %v245
  %v2296 = vunpack.c.l.b16 %v246
  %v2297 = vunpack.c.h.b16 %v246
  %v2298 = vpack.c.b16 %v1962, %v1948
  %v2299 = vpack.c.b16 %v1963, %v1949
  %v2300 = vpack.c.b16 %v1964, %v1950
  %v2301 = vpack.c.b16 %v1965, %v1951
  %v2302 = vpack.c.b16 %v1966, %v1952
  %v2303 = vpack.c.b16 %v1967, %v1953
  %v2304 = vpack.c.b16 %v1968, %v1954
  %v2305 = vpack.c.b16 %v1969, %v1955
  %v2306 = vpack.c.b16 %v1970, %v1956
  %v2307 = vpack.c.b16 %v1971, %v1957
  %v2308 = vpack.c.b16 %v1972, %v1958
  %v2309 = vpack.c.b16 %v1973, %v1959
  %v2310 = vpack.c.b16 %v1974, %v1960
  %v2311 = vpack.c.b16 %v1975, %v1961
  %v2312 = vpack.c.b16 %v1990, %v1976
  %v2313 = vpack.c.b16 %v1991, %v1977
  %v2314 = vpack.c.b16 %v1992, %v1978
  %v2315 = vpack.c.b16 %v1993, %v1979
  %v2316 = vpack.c.b16 %v1994, %v1980
  %v2317 = vpack.c.b16 %v1995, %v1981
  %v2318 = vpack.c.b16 %v1996, %v1982
  %v2319 = vpack.c.b16 %v1997, %v1983
  %v2320 = vpack.c.b16 %v1998, %v1984
  %v2321 = vpack.c.b16 %v1999, %v1985
  %v2322 = vpack.c.b16 %v2000, %v1986
  %v2323 = vpack.c.b16 %v2001, %v1987
  %v2324 = vpack.c.b16 %v2002, %v1988
  %v2325 = vpack.c.b16 %v2003, %v1989
  %v2326 = vpack.c.b16 %v2018, %v2004
  %v2327 = vpack.c.b16 %v2019, %v2005
  %v2328 = vpack.c.b16 %v2020, %v2006
  %v2329 = vpack.c.b16 %v2021, %v2007
  %v2330 = vpack.c.b16 %v2022, %v2008
  %v2331 = vpack.c.b16 %v2023, %v2009
  %v2332 = vpack.c.b16 %v2024, %v2010
  %v2333 = vpack.c.b16 %v2025, %v2011
  %v2334 = vpack.c.b16 %v2026, %v2012
  %v2335 = vpack.c.b16 %v2027, %v2013
  %v2336 = vpack.c.b16 %v2028, %v2014
  %v2337 = vpack.c.b16 %v2029, %v2015
  %v2338 = vpack.c.b16 %v2030, %v2016
  %v2339 = vpack.c.b16 %v2031, %v2017
  %v2340 = vpack.c.b16 %v2046, %v2032
  %v2341 = vpack.c.b16 %v2047, %v2033
  %v2342 = vpack.c.b16 %v2048, %v2034
  %v2343 = vpack.c.b16 %v2049, %v2035
  %v2344 = vpack.c.b16 %v2050, %v2036
  %v2345 = vpack.c.b16 %v2051, %v2037
  %v2346 = vpack.c.b16 %v2052, %v2038
  %v2347 = vpack.c.b16 %v2053, %v2039
  %v2348 = vpack.c.b16 %v2054, %v2040
  %v2349 = vpack.c.b16 %v2055, %v2041
  %v2350 = vpack.c.b16 %v2056, %v2042
  %v2351 = vpack.c.b16 %v2057, %v2043
  %v2352 = vpack.c.b16 %v2058, %v2044
  %v2353 = vpack.c.b16 %v2059, %v2045
  %v2354 = vpack.c.b16 %v2074, %v2060
  %v2355 = vpack.c.b16 %v2075, %v2061
  %v2356 = vpack.c.b16 %v2076, %v2062
  %v2357 = vpack.c.b16 %v2077, %v2063
  %v2358 = vpack.c.b16 %v2078, %v2064
  %v2359 = vpack.c.b16 %v2079, %v2065
  %v2360 = vpack.c.b16 %v2080, %v2066
  %v2361 = vpack.c.b16 %v2081, %v2067
  %v2362 = vpack.c.b16 %v2082, %v2068
  %v2363 = vpack.c.b16 %v2083, %v2069
  %v2364 = vpack.c.b16 %v2084, %v2070
  %v2365 = vpack.c.b16 %v2085, %v2071
  %v2366 = vpack.c.b16 %v2086, %v2072
  %v2367 = vpack.c.b16 %v2087, %v2073
  %v2368 = vpack.c.b16 %v2102, %v2088
  %v2369 = vpack.c.b16 %v2103, %v2089
  %v2370 = vpack.c.b16 %v2104, %v2090
  %v2371 = vpack.c.b16 %v2105, %v2091
  %v2372 = vpack.c.b16 %v2106, %v2092
  %v2373 = vpack.c.b16 %v2107, %v2093
  %v2374 = vpack.c.b16 %v2108, %v2094
  %v2375 = vpack.c.b16 %v2109, %v2095
  %v2376 = vpack.c.b16 %v2110, %v2096
  %v2377 = vpack.c.b16 %v2111, %v2097
  %v2378 = vpack.c.b16 %v2112, %v2098
  %v2379 = vpack.c.b16 %v2113, %v2099
  %v2380 = vpack.c.b16 %v2114, %v2100
  %v2381 = vpack.c.b16 %v2115, %v2101
  %v2382 = vpack.c.b16 %v2130, %v2116
  %v2383 = vpack.c.b16 %v2131, %v2117
  %v2384 = vpack.c.b16 %v2132, %v2118
  %v2385 = vpack.c.b16 %v2133, %v2119
  %v2386 = vpack.c.b16 %v2134, %v2120
  %v2387 = vpack.c.b16 %v2135, %v2121
  %v2388 = vpack.c.b16 %v2136, %v2122
  %v2389 = vpack.c.b16 %v2137, %v2123
  %v2390 = vpack.c.b16 %v2138, %v2124
  %v2391 = vpack.c.b16 %v2139, %v2125
  %v2392 = vpack.c.b16 %v2140, %v2126
  %v2393 = vpack.c.b16 %v2141, %v2127
  %v2394 = vpack.c.b16 %v2142, %v2128
  %v2395 = vpack.c.b16 %v2143, %v2129
  %v2396 = vpack.c.b16 %v2158, %v2144
  %v2397 = vpack.c.b16 %v2159, %v2145
  %v2398 = vpack.c.b16 %v2160, %v2146
  %v2399 = vpack.c.b16 %v2161, %v2147
  %v2400 = vpack.c.b16 %v2162, %v2148
  %v2401 = vpack.c.b16 %v2163, %v2149
  %v2402 = vpack.c.b16 %v2164, %v2150
  %v2403 = vpack.c.b16 %v2165, %v2151
  %v2404 = vpack.c.b16 %v2166, %v2152
  %v2405 = vpack.c.b16 %v2167, %v2153
  %v2406 = vpack.c.b16 %v2168, %v2154
  %v2407 = vpack.c.b16 %v2169, %v2155
  %v2408 = vpack.c.b16 %v2170, %v2156
  %v2409 = vpack.c.b16 %v2171, %v2157
  %v2410 = vpack.c.b16 %v2186, %v2172
  %v2411 = vpack.c.b16 %v2187, %v2173
  %v2412 = vpack.c.b16 %v2188, %v2174
  %v2413 = vpack.c.b16 %v2189, %v2175
  %v2414 = vpack.c.b16 %v2190, %v2176
  %v2415 = vpack.c.b16 %v2191, %v2177
  %v2416 = vpack.c.b16 %v2192, %v2178
  %v2417 = vpack.c.b16 %v2193, %v2179
  %v2418 = vpack.c.b16 %v2194, %v2180
  %v2419 = vpack.c.b16 %v2195, %v2181
  %v2420 = vpack.c.b16 %v2196, %v2182
  %v2421 = vpack.c.b16 %v2197, %v2183
  %v2422 = vpack.c.b16 %v2198, %v2184
  %v2423 = vpack.c.b16 %v2199, %v2185
  %v2424 = vpack.c.b16 %v2214, %v2200
  %v2425 = vpack.c.b16 %v2215, %v2201
  %v2426 = vpack.c.b16 %v2216, %v2202
  %v2427 = vpack.c.b16 %v2217, %v2203
  %v2428 = vpack.c.b16 %v2218, %v2204
  %v2429 = vpack.c.b16 %v2219, %v2205
  %v2430 = vpack.c.b16 %v2220, %v2206
  %v2431 = vpack.c.b16 %v2221, %v2207
  %v2432 = vpack.c.b16 %v2222, %v2208
  %v2433 = vpack.c.b16 %v2223, %v2209
  %v2434 = vpack.c.b16 %v2224, %v2210
  %v2435 = vpack.c.b16 %v2225, %v2211
  %v2436 = vpack.c.b16 %v2226, %v2212
  %v2437 = vpack.c.b16 %v2227, %v2213
  %v2438 = vpack.c.b16 %v2242, %v2228
  %v2439 = vpack.c.b16 %v2243, %v2229
  %v2440 = vpack.c.b16 %v2244, %v2230
  %v2441 = vpack.c.b16 %v2245, %v2231
  %v2442 = vpack.c.b16 %v2246, %v2232
  %v2443 = vpack.c.b16 %v2247, %v2233
  %v2444 = vpack.c.b16 %v2248, %v2234
  %v2445 = vpack.c.b16 %v2249, %v2235
  %v2446 = vpack.c.b16 %v2250, %v2236
  %v2447 = vpack.c.b16 %v2251, %v2237
  %v2448 = vpack.c.b16 %v2252, %v2238
  %v2449 = vpack.c.b16 %v2253, %v2239
  %v2450 = vpack.c.b16 %v2254, %v2240
  %v2451 = vpack.c.b16 %v2255, %v2241
  %v2452 = vpack.c.b16 %v2270, %v2256
  %v2453 = vpack.c.b16 %v2271, %v2257
  %v2454 = vpack.c.b16 %v2272, %v2258
  %v2455 = vpack.c.b16 %v2273, %v2259
  %v2456 = vpack.c.b16 %v2274, %v2260
  %v2457 = vpack.c.b16 %v2275, %v2261
  %v2458 = vpack.c.b16 %v2276, %v2262
  %v2459 = vpack.c.b16 %v2277, %v2263
  %v2460 = vpack.c.b16 %v2278, %v2264
  %v2461 = vpack.c.b16 %v2279, %v2265
  %v2462 = vpack.c.b16 %v2280, %v2266
  %v2463 = vpack.c.b16 %v2281, %v2267
  %v2464 = vpack.c.b16 %v2282, %v2268
  %v2465 = vpack.c.b16 %v2283, %v2269
  %v2466 = vpack.c.b16 %v2284, %v2284
  %v2467 = vpack.c.b16 %v2285, %v2285
  %v2468 = vpack.c.b16 %v2286, %v2286
  %v2469 = vpack.c.b16 %v2287, %v2287
  %v2470 = vpack.c.b16 %v2288, %v2288
  %v2471 = vpack.c.b16 %v2289, %v2289
  %v2472 = vpack.c.b16 %v2290, %v2290
  %v2473 = vpack.c.b16 %v2291, %v2291
  %v2474 = vpack.c.b16 %v2292, %v2292
  %v2475 = vpack.c.b16 %v2293, %v2293
  %v2476 = vpack.c.b16 %v2294, %v2294
  %v2477 = vpack.c.b16 %v2295, %v2295
  %v2478 = vpack.c.b16 %v2296, %v2296
  %v2479 = vpack.c.b16 %v2297, %v2297
  %v2649 = vsel %vm1531, %v1772, 0
  %v2652 = vsel %vm1535, %v2466, 0
  %v2655 = vsel %vm1535, %v2467, 0
  %v2658 = vsel %vm1535, %v2468, 0
  %v2661 = vsel %vm1535, %v2469, 0
  %v2664 = vsel %vm1535, %v2470, 0
  %v2667 = vsel %vm1535, %v2471, 0
  %v2670 = vsel %vm1535, %v2472, 0
  %v2673 = vsel %vm1535, %v2473, 0
  %v2676 = vsel %vm1535, %v2474, 0
  %v2679 = vsel %vm1535, %v2475, 0
  %v2682 = vsel %vm1535, %v2476, 0
  %v2685 = vsel %vm1535, %v2477, 0
  %v2688 = vsel %vm1535, %v2478, 0
  %v2691 = vsel %vm1535, %v2479, 0
  %2693 = vmatprep.subr.bf16.mxu0 %v2299
  %2694 = vmatpush1.bf16.msra.mxu0 %v2298
  %2695 = vmatprep.subr.bf16.mxu0 %v2313
  %2696 = vmatpush1.bf16.msra.mxu0 %v2312
  %2697 = vmatprep.subr.bf16.mxu0 %v2327
  %2698 = vmatpush1.bf16.msra.mxu0 %v2326
  %2699 = vmatprep.subr.bf16.mxu0 %v2341
  %2700 = vmatpush1.bf16.msra.mxu0 %v2340
  %2701 = vmatprep.subr.bf16.mxu0 %v2355
  %2702 = vmatpush1.bf16.msra.mxu0 %v2354
  %2703 = vmatprep.subr.bf16.mxu0 %v2369
  %2704 = vmatpush1.bf16.msra.mxu0 %v2368
  %2705 = vmatprep.subr.bf16.mxu0 %v2383
  %2706 = vmatpush1.bf16.msra.mxu0 %v2382
  %2707 = vmatprep.subr.bf16.mxu0 %v2397
  %2708 = vmatpush1.bf16.msra.mxu0 %v2396
  %2709 = vmatprep.subr.bf16.mxu0 %v2411
  %2710 = vmatpush1.bf16.msra.mxu0 %v2410
  %2711 = vmatprep.subr.bf16.mxu0 %v2425
  %2712 = vmatpush1.bf16.msra.mxu0 %v2424
  %2713 = vmatprep.subr.bf16.mxu0 %v2439
  %2714 = vmatpush1.bf16.msra.mxu0 %v2438
  %2715 = vmatprep.subr.bf16.mxu0 %v2453
  %2716 = vmatpush1.bf16.msra.mxu0 %v2452
  %2717 = vmatprep.subr.bf16.mxu0 %v2655
  %2718 = vmatpush1.bf16.msra.mxu0 %v2652
  %2719 = vmatprep.subr.bf16.mxu0 0
  %2720 = vmatpush1.bf16.msra.mxu0 0
  %2721 = vmatprep.subr.bf16.mxu0 0
  %2722 = vmatpush1.bf16.msra.mxu0 0
  %2723 = vmatprep.subr.bf16.mxu0 0
  %2724 = vmatpush1.bf16.msra.mxu0 0
  %2725 = vmatprep.mubr.bf16.mxu0 %v2649
  %2726 = vmatmul.mubr.bf16.gmra.mrb[0].mxu0 %v1771
  %v2727 = vpop.f32.mrb[0].mxu0
  %v2728 = vadd.f32 0.0, %v2727
  %v2729 = vpop.f32.mrb[0].mxu0
  %v2730 = vadd.f32 0.0, %v2729
  %v2731 = vpop.f32.mrb[0].mxu0
  %v2732 = vpop.f32.mrb[0].mxu0
  %2733 = vdwg.mxu0
  %2734 = vmatprep.subr.bf16.mxu0 %v2301
  %2735 = vmatpush1.bf16.msra.mxu0 %v2300
  %2736 = vmatprep.subr.bf16.mxu0 %v2315
  %2737 = vmatpush1.bf16.msra.mxu0 %v2314
  %2738 = vmatprep.subr.bf16.mxu0 %v2329
  %2739 = vmatpush1.bf16.msra.mxu0 %v2328
  %2740 = vmatprep.subr.bf16.mxu0 %v2343
  %2741 = vmatpush1.bf16.msra.mxu0 %v2342
  %2742 = vmatprep.subr.bf16.mxu0 %v2357
  %2743 = vmatpush1.bf16.msra.mxu0 %v2356
  %2744 = vmatprep.subr.bf16.mxu0 %v2371
  %2745 = vmatpush1.bf16.msra.mxu0 %v2370
  %2746 = vmatprep.subr.bf16.mxu0 %v2385
  %2747 = vmatpush1.bf16.msra.mxu0 %v2384
  %2748 = vmatprep.subr.bf16.mxu0 %v2399
  %2749 = vmatpush1.bf16.msra.mxu0 %v2398
  %2750 = vmatprep.subr.bf16.mxu0 %v2413
  %2751 = vmatpush1.bf16.msra.mxu0 %v2412
  %2752 = vmatprep.subr.bf16.mxu0 %v2427
  %2753 = vmatpush1.bf16.msra.mxu0 %v2426
  %2754 = vmatprep.subr.bf16.mxu0 %v2441
  %2755 = vmatpush1.bf16.msra.mxu0 %v2440
  %2756 = vmatprep.subr.bf16.mxu0 %v2455
  %2757 = vmatpush1.bf16.msra.mxu0 %v2454
  %2758 = vmatprep.subr.bf16.mxu0 %v2661
  %2759 = vmatpush1.bf16.msra.mxu0 %v2658
  %2760 = vmatprep.subr.bf16.mxu0 0
  %2761 = vmatpush1.bf16.msra.mxu0 0
  %2762 = vmatprep.subr.bf16.mxu0 0
  %2763 = vmatpush1.bf16.msra.mxu0 0
  %2764 = vmatprep.subr.bf16.mxu0 0
  %2765 = vmatpush1.bf16.msra.mxu0 0
  %2766 = vmatprep.mubr.bf16.mxu0 %v2649
  %2767 = vmatmul.mubr.bf16.gmra.mrb[0].mxu0 %v1771
  %v2768 = vpop.f32.mrb[0].mxu0
  %v2769 = vadd.f32 0.0, %v2768
  %v2770 = vpop.f32.mrb[0].mxu0
  %v2771 = vadd.f32 0.0, %v2770
  %v2772 = vpop.f32.mrb[0].mxu0
  %v2773 = vpop.f32.mrb[0].mxu0
  %2774 = vdwg.mxu0
  %2775 = vmatprep.subr.bf16.mxu0 %v2303
  %2776 = vmatpush1.bf16.msra.mxu0 %v2302
  %2777 = vmatprep.subr.bf16.mxu0 %v2317
  %2778 = vmatpush1.bf16.msra.mxu0 %v2316
  %2779 = vmatprep.subr.bf16.mxu0 %v2331
  %2780 = vmatpush1.bf16.msra.mxu0 %v2330
  %2781 = vmatprep.subr.bf16.mxu0 %v2345
  %2782 = vmatpush1.bf16.msra.mxu0 %v2344
  %2783 = vmatprep.subr.bf16.mxu0 %v2359
  %2784 = vmatpush1.bf16.msra.mxu0 %v2358
  %2785 = vmatprep.subr.bf16.mxu0 %v2373
  %2786 = vmatpush1.bf16.msra.mxu0 %v2372
  %2787 = vmatprep.subr.bf16.mxu0 %v2387
  %2788 = vmatpush1.bf16.msra.mxu0 %v2386
  %2789 = vmatprep.subr.bf16.mxu0 %v2401
  %2790 = vmatpush1.bf16.msra.mxu0 %v2400
  %2791 = vmatprep.subr.bf16.mxu0 %v2415
  %2792 = vmatpush1.bf16.msra.mxu0 %v2414
  %2793 = vmatprep.subr.bf16.mxu0 %v2429
  %2794 = vmatpush1.bf16.msra.mxu0 %v2428
  %2795 = vmatprep.subr.bf16.mxu0 %v2443
  %2796 = vmatpush1.bf16.msra.mxu0 %v2442
  %2797 = vmatprep.subr.bf16.mxu0 %v2457
  %2798 = vmatpush1.bf16.msra.mxu0 %v2456
  %2799 = vmatprep.subr.bf16.mxu0 %v2667
  %2800 = vmatpush1.bf16.msra.mxu0 %v2664
  %2801 = vmatprep.subr.bf16.mxu0 0
  %2802 = vmatpush1.bf16.msra.mxu0 0
  %2803 = vmatprep.subr.bf16.mxu0 0
  %2804 = vmatpush1.bf16.msra.mxu0 0
  %2805 = vmatprep.subr.bf16.mxu0 0
  %2806 = vmatpush1.bf16.msra.mxu0 0
  %2807 = vmatprep.mubr.bf16.mxu0 %v2649
  %2808 = vmatmul.mubr.bf16.gmra.mrb[0].mxu0 %v1771
  %v2809 = vpop.f32.mrb[0].mxu0
  %v2810 = vadd.f32 0.0, %v2809
  %v2811 = vpop.f32.mrb[0].mxu0
  %v2812 = vadd.f32 0.0, %v2811
  %v2813 = vpop.f32.mrb[0].mxu0
  %v2814 = vpop.f32.mrb[0].mxu0
  %2815 = vdwg.mxu0
  %2816 = vmatprep.subr.bf16.mxu0 %v2305
  %2817 = vmatpush1.bf16.msra.mxu0 %v2304
  %2818 = vmatprep.subr.bf16.mxu0 %v2319
  %2819 = vmatpush1.bf16.msra.mxu0 %v2318
  %2820 = vmatprep.subr.bf16.mxu0 %v2333
  %2821 = vmatpush1.bf16.msra.mxu0 %v2332
  %2822 = vmatprep.subr.bf16.mxu0 %v2347
  %2823 = vmatpush1.bf16.msra.mxu0 %v2346
  %2824 = vmatprep.subr.bf16.mxu0 %v2361
  %2825 = vmatpush1.bf16.msra.mxu0 %v2360
  %2826 = vmatprep.subr.bf16.mxu0 %v2375
  %2827 = vmatpush1.bf16.msra.mxu0 %v2374
  %2828 = vmatprep.subr.bf16.mxu0 %v2389
  %2829 = vmatpush1.bf16.msra.mxu0 %v2388
  %2830 = vmatprep.subr.bf16.mxu0 %v2403
  %2831 = vmatpush1.bf16.msra.mxu0 %v2402
  %2832 = vmatprep.subr.bf16.mxu0 %v2417
  %2833 = vmatpush1.bf16.msra.mxu0 %v2416
  %2834 = vmatprep.subr.bf16.mxu0 %v2431
  %2835 = vmatpush1.bf16.msra.mxu0 %v2430
  %2836 = vmatprep.subr.bf16.mxu0 %v2445
  %2837 = vmatpush1.bf16.msra.mxu0 %v2444
  %2838 = vmatprep.subr.bf16.mxu0 %v2459
  %2839 = vmatpush1.bf16.msra.mxu0 %v2458
  %2840 = vmatprep.subr.bf16.mxu0 %v2673
  %2841 = vmatpush1.bf16.msra.mxu0 %v2670
  %2842 = vmatprep.subr.bf16.mxu0 0
  %2843 = vmatpush1.bf16.msra.mxu0 0
  %2844 = vmatprep.subr.bf16.mxu0 0
  %2845 = vmatpush1.bf16.msra.mxu0 0
  %2846 = vmatprep.subr.bf16.mxu0 0
  %2847 = vmatpush1.bf16.msra.mxu0 0
  %2848 = vmatprep.mubr.bf16.mxu0 %v2649
  %2849 = vmatmul.mubr.bf16.gmra.mrb[0].mxu0 %v1771
  %v2850 = vpop.f32.mrb[0].mxu0
  %v2851 = vadd.f32 0.0, %v2850
  %v2852 = vpop.f32.mrb[0].mxu0
  %v2853 = vadd.f32 0.0, %v2852
  %v2854 = vpop.f32.mrb[0].mxu0
  %v2855 = vpop.f32.mrb[0].mxu0
  %2856 = vdwg.mxu0
  %2857 = vmatprep.subr.bf16.mxu0 %v2307
  %2858 = vmatpush1.bf16.msra.mxu0 %v2306
  %2859 = vmatprep.subr.bf16.mxu0 %v2321
  %2860 = vmatpush1.bf16.msra.mxu0 %v2320
  %2861 = vmatprep.subr.bf16.mxu0 %v2335
  %2862 = vmatpush1.bf16.msra.mxu0 %v2334
  %2863 = vmatprep.subr.bf16.mxu0 %v2349
  %2864 = vmatpush1.bf16.msra.mxu0 %v2348
  %2865 = vmatprep.subr.bf16.mxu0 %v2363
  %2866 = vmatpush1.bf16.msra.mxu0 %v2362
  %2867 = vmatprep.subr.bf16.mxu0 %v2377
  %2868 = vmatpush1.bf16.msra.mxu0 %v2376
  %2869 = vmatprep.subr.bf16.mxu0 %v2391
  %2870 = vmatpush1.bf16.msra.mxu0 %v2390
  %2871 = vmatprep.subr.bf16.mxu0 %v2405
  %2872 = vmatpush1.bf16.msra.mxu0 %v2404
  %2873 = vmatprep.subr.bf16.mxu0 %v2419
  %2874 = vmatpush1.bf16.msra.mxu0 %v2418
  %2875 = vmatprep.subr.bf16.mxu0 %v2433
  %2876 = vmatpush1.bf16.msra.mxu0 %v2432
  %2877 = vmatprep.subr.bf16.mxu0 %v2447
  %2878 = vmatpush1.bf16.msra.mxu0 %v2446
  %2879 = vmatprep.subr.bf16.mxu0 %v2461
  %2880 = vmatpush1.bf16.msra.mxu0 %v2460
  %2881 = vmatprep.subr.bf16.mxu0 %v2679
  %2882 = vmatpush1.bf16.msra.mxu0 %v2676
  %2883 = vmatprep.subr.bf16.mxu0 0
  %2884 = vmatpush1.bf16.msra.mxu0 0
  %2885 = vmatprep.subr.bf16.mxu0 0
  %2886 = vmatpush1.bf16.msra.mxu0 0
  %2887 = vmatprep.subr.bf16.mxu0 0
  %2888 = vmatpush1.bf16.msra.mxu0 0
  %2889 = vmatprep.mubr.bf16.mxu0 %v2649
  %2890 = vmatmul.mubr.bf16.gmra.mrb[0].mxu0 %v1771
  %v2891 = vpop.f32.mrb[0].mxu0
  %v2892 = vadd.f32 0.0, %v2891
  %v2893 = vpop.f32.mrb[0].mxu0
  %v2894 = vadd.f32 0.0, %v2893
  %v2895 = vpop.f32.mrb[0].mxu0
  %v2896 = vpop.f32.mrb[0].mxu0
  %2897 = vdwg.mxu0
  %2898 = vmatprep.subr.bf16.mxu0 %v2309
  %2899 = vmatpush1.bf16.msra.mxu0 %v2308
  %2900 = vmatprep.subr.bf16.mxu0 %v2323
  %2901 = vmatpush1.bf16.msra.mxu0 %v2322
  %2902 = vmatprep.subr.bf16.mxu0 %v2337
  %2903 = vmatpush1.bf16.msra.mxu0 %v2336
  %2904 = vmatprep.subr.bf16.mxu0 %v2351
  %2905 = vmatpush1.bf16.msra.mxu0 %v2350
  %2906 = vmatprep.subr.bf16.mxu0 %v2365
  %2907 = vmatpush1.bf16.msra.mxu0 %v2364
  %2908 = vmatprep.subr.bf16.mxu0 %v2379
  %2909 = vmatpush1.bf16.msra.mxu0 %v2378
  %2910 = vmatprep.subr.bf16.mxu0 %v2393
  %2911 = vmatpush1.bf16.msra.mxu0 %v2392
  %2912 = vmatprep.subr.bf16.mxu0 %v2407
  %2913 = vmatpush1.bf16.msra.mxu0 %v2406
  %2914 = vmatprep.subr.bf16.mxu0 %v2421
  %2915 = vmatpush1.bf16.msra.mxu0 %v2420
  %2916 = vmatprep.subr.bf16.mxu0 %v2435
  %2917 = vmatpush1.bf16.msra.mxu0 %v2434
  %2918 = vmatprep.subr.bf16.mxu0 %v2449
  %2919 = vmatpush1.bf16.msra.mxu0 %v2448
  %2920 = vmatprep.subr.bf16.mxu0 %v2463
  %2921 = vmatpush1.bf16.msra.mxu0 %v2462
  %2922 = vmatprep.subr.bf16.mxu0 %v2685
  %2923 = vmatpush1.bf16.msra.mxu0 %v2682
  %2924 = vmatprep.subr.bf16.mxu0 0
  %2925 = vmatpush1.bf16.msra.mxu0 0
  %2926 = vmatprep.subr.bf16.mxu0 0
  %2927 = vmatpush1.bf16.msra.mxu0 0
  %2928 = vmatprep.subr.bf16.mxu0 0
  %2929 = vmatpush1.bf16.msra.mxu0 0
  %2930 = vmatprep.mubr.bf16.mxu0 %v2649
  %2931 = vmatmul.mubr.bf16.gmra.mrb[0].mxu0 %v1771
  %v2932 = vpop.f32.mrb[0].mxu0
  %v2933 = vadd.f32 0.0, %v2932
  %v2934 = vpop.f32.mrb[0].mxu0
  %v2935 = vadd.f32 0.0, %v2934
  %v2936 = vpop.f32.mrb[0].mxu0
  %v2937 = vpop.f32.mrb[0].mxu0
  %2938 = vdwg.mxu0
  %2939 = vmatprep.subr.bf16.mxu0 %v2311
  %2940 = vmatpush1.bf16.msra.mxu0 %v2310
  %2941 = vmatprep.subr.bf16.mxu0 %v2325
  %2942 = vmatpush1.bf16.msra.mxu0 %v2324
  %2943 = vmatprep.subr.bf16.mxu0 %v2339
  %2944 = vmatpush1.bf16.msra.mxu0 %v2338
  %2945 = vmatprep.subr.bf16.mxu0 %v2353
  %2946 = vmatpush1.bf16.msra.mxu0 %v2352
  %2947 = vmatprep.subr.bf16.mxu0 %v2367
  %2948 = vmatpush1.bf16.msra.mxu0 %v2366
  %2949 = vmatprep.subr.bf16.mxu0 %v2381
  %2950 = vmatpush1.bf16.msra.mxu0 %v2380
  %2951 = vmatprep.subr.bf16.mxu0 %v2395
  %2952 = vmatpush1.bf16.msra.mxu0 %v2394
  %2953 = vmatprep.subr.bf16.mxu0 %v2409
  %2954 = vmatpush1.bf16.msra.mxu0 %v2408
  %2955 = vmatprep.subr.bf16.mxu0 %v2423
  %2956 = vmatpush1.bf16.msra.mxu0 %v2422
  %2957 = vmatprep.subr.bf16.mxu0 %v2437
  %2958 = vmatpush1.bf16.msra.mxu0 %v2436
  %2959 = vmatprep.subr.bf16.mxu0 %v2451
  %2960 = vmatpush1.bf16.msra.mxu0 %v2450
  %2961 = vmatprep.subr.bf16.mxu0 %v2465
  %2962 = vmatpush1.bf16.msra.mxu0 %v2464
  %2963 = vmatprep.subr.bf16.mxu0 %v2691
  %2964 = vmatpush1.bf16.msra.mxu0 %v2688
  %2965 = vmatprep.subr.bf16.mxu0 0
  %2966 = vmatpush1.bf16.msra.mxu0 0
  %2967 = vmatprep.subr.bf16.mxu0 0
  %2968 = vmatpush1.bf16.msra.mxu0 0
  %2969 = vmatprep.subr.bf16.mxu0 0
  %2970 = vmatpush1.bf16.msra.mxu0 0
  %2971 = vmatprep.mubr.bf16.mxu0 %v2649
  %2972 = vmatmul.mubr.bf16.gmra.mrb[0].mxu0 %v1771
  %v2973 = vpop.f32.mrb[0].mxu0
  %v2974 = vadd.f32 0.0, %v2973
  %v2975 = vpop.f32.mrb[0].mxu0
  %v2976 = vadd.f32 0.0, %v2975
  %v2977 = vpop.f32.mrb[0].mxu0
  %v2978 = vpop.f32.mrb[0].mxu0
  %2979 = vdwg.mxu0
  %2982 = vrot.lane.b32.xlu0 %v1644, 116
  %v2983 = vpop.permute.xlu0 %2982
  %2984 = vrot.lane.b32.xlu0 %v1683, 116
  %v2985 = vpop.permute.xlu0 %2984
  %vm2986 = vcmask 949248
  %v2987 = vsel %vm2986, %v2983, %v2985
  %2990 = vrot.lane.b32.xlu0 %v1644, 58
  %v2991 = vpop.permute.xlu0 %2990
  %2992 = vrot.lane.b32.xlu0 %v1683, 58
  %v2993 = vpop.permute.xlu0 %2992
  %vm2994 = vcmask 474112
  %v2995 = vsel %vm2994, %v2991, %v2993
  %2999 = vrot.lane.b32.xlu0 %v1644, 70
  %v3000 = vpop.permute.xlu0 %2999
  %3001 = vrot.lane.b32.xlu0 %v1683, 70
  %v3002 = vpop.permute.xlu0 %3001
  %v3003 = vsel %vm1531, %v3000, %v3002
  %3007 = vrot.lane.b32.xlu0 %v1644, 12
  %v3008 = vpop.permute.xlu0 %3007
  %3009 = vrot.lane.b32.xlu0 %v1683, 12
  %v3010 = vpop.permute.xlu0 %3009
  %vm3011 = vcmask 97280
  %v3012 = vsel %vm3011, %v3008, %v3010
  %3015 = vrot.lane.b32.xlu0 %v1644, 82
  %v3016 = vpop.permute.xlu0 %3015
  %3017 = vrot.lane.b32.xlu0 %v1683, 82
  %v3018 = vpop.permute.xlu0 %3017
  %vm3019 = vcmask 670720
  %v3020 = vsel %vm3019, %v3016, %v3018
  %3024 = vrot.lane.b32.xlu0 %v1644, 24
  %v3025 = vpop.permute.xlu0 %3024
  %3026 = vrot.lane.b32.xlu0 %v1683, 24
  %v3027 = vpop.permute.xlu0 %3026
  %vm3028 = vcmask 195584
  %v3029 = vsel %vm3028, %v3025, %v3027
  %3032 = vrot.lane.b32.xlu0 %v1644, 94
  %v3033 = vpop.permute.xlu0 %3032
  %3034 = vrot.lane.b32.xlu0 %v1683, 94
  %v3035 = vpop.permute.xlu0 %3034
  %vm3036 = vcmask 769024
  %v3037 = vsel %vm3036, %v3033, %v3035
  %3041 = vrot.lane.b32.xlu0 %v1644, 36
  %v3042 = vpop.permute.xlu0 %3041
  %3043 = vrot.lane.b32.xlu0 %v1683, 36
  %v3044 = vpop.permute.xlu0 %3043
  %vm3045 = vcmask 293888
  %v3046 = vsel %vm3045, %v3042, %v3044
  %v3049 = vsel %vm1531, %v2985, %v2991
  %v3050 = vsel %vm3011, %v2993, %v1644
  %v3051 = vsel %vm3019, %v1683, %v3000
  %v3052 = vsel %vm3028, %v3002, %v3008
  %v3053 = vsel %vm3036, %v3012, %v3016
  %v3054 = vsel %vm3045, %v3018, %v3025
  %vm3055 = vcmask 867328
  %v3056 = vsel %vm3055, %v3029, %v3033
  %vm3057 = vcmask 392192
  %v3058 = vsel %vm3057, %v3035, %v3042
  %v3059 = vmul.f32 %v2728, %v2987
  %v3060 = vmul.f32 %v2730, %v3049
  %v3061 = vmul.f32 %v2769, %v2995
  %v3062 = vmul.f32 %v2771, %v3050
  %v3063 = vmul.f32 %v2810, %v3051
  %v3064 = vmul.f32 %v2812, %v3003
  %v3065 = vmul.f32 %v2851, %v3052
  %v3066 = vmul.f32 %v2853, %v3053
  %v3067 = vmul.f32 %v2892, %v3020
  %v3068 = vmul.f32 %v2894, %v3054
  %v3069 = vmul.f32 %v2933, %v3056
  %v3070 = vmul.f32 %v2935, %v3037
  %v3071 = vmul.f32 %v2974, %v3058
  %v3072 = vmul.f32 %v2976, %v3046
  %v3073 = vpack.c.bf16 %v3059, %v3059
  %v3074 = vpack.c.bf16 %v3060, %v3060
  %v3075 = vpack.c.bf16 %v3061, %v3061
  %v3076 = vpack.c.bf16 %v3062, %v3062
  %v3077 = vpack.c.bf16 %v3063, %v3063
  %v3078 = vpack.c.bf16 %v3064, %v3064
  %v3079 = vpack.c.bf16 %v3065, %v3065
  %v3080 = vpack.c.bf16 %v3066, %v3066
  %v3081 = vpack.c.bf16 %v3067, %v3067
  %v3082 = vpack.c.bf16 %v3068, %v3068
  %v3083 = vpack.c.bf16 %v3069, %v3069
  %v3084 = vpack.c.bf16 %v3070, %v3070
  %v3085 = vpack.c.bf16 %v3071, %v3071
  %v3086 = vpack.c.bf16 %v3072, %v3072
  %v3087 = vld [vmem:[%s9] sm:$0x1]
  %v3088 = vlaneseq
  %v3089 = vshrl.u32 %v3088, 7
  %v3090 = vsub.s32 0, %v3089
  %v3091 = vrot.slane %v3087, %v3090
  %v3315 = vunpack.c.l.b16 %v247
  %v3316 = vunpack.c.l.b16 %v248
  %v3317 = vunpack.c.l.b16 %v249
  %v3318 = vunpack.c.l.b16 %v250
  %v3319 = vunpack.c.l.b16 %v251
  %v3320 = vunpack.c.l.b16 %v252
  %v3321 = vunpack.c.l.b16 %v253
  %v3322 = vunpack.c.l.b16 %v254
  %v3323 = vunpack.c.l.b16 %v255
  %v3324 = vunpack.c.l.b16 %v256
  %v3325 = vunpack.c.l.b16 %v257
  %v3326 = vunpack.c.l.b16 %v258
  %v3327 = vunpack.c.l.b16 %v259
  %v3328 = vunpack.c.l.b16 %v260
  %v3329 = vunpack.c.l.b16 %v261
  %v3330 = vunpack.c.l.b16 %v262
  %v3331 = vunpack.c.l.b16 %v263
  %v3332 = vunpack.c.l.b16 %v264
  %v3333 = vunpack.c.l.b16 %v265
  %v3334 = vunpack.c.l.b16 %v266
  %v3335 = vunpack.c.l.b16 %v267
  %v3336 = vunpack.c.l.b16 %v268
  %v3337 = vunpack.c.l.b16 %v269
  %v3338 = vunpack.c.l.b16 %v270
  %v3339 = vunpack.c.l.b16 %v271
  %v3340 = vunpack.c.l.b16 %v272
  %v3341 = vunpack.c.l.b16 %v273
  %v3342 = vunpack.c.l.b16 %v274
  %v3343 = vunpack.c.l.b16 %v275
  %v3344 = vunpack.c.l.b16 %v276
  %v3345 = vunpack.c.l.b16 %v277
  %v3346 = vunpack.c.l.b16 %v278
  %v3347 = vunpack.c.l.b16 %v279
  %v3348 = vunpack.c.l.b16 %v280
  %v3349 = vunpack.c.l.b16 %v281
  %v3350 = vunpack.c.l.b16 %v282
  %v3351 = vunpack.c.l.b16 %v283
  %v3352 = vunpack.c.l.b16 %v284
  %v3353 = vunpack.c.l.b16 %v285
  %v3354 = vunpack.c.l.b16 %v286
  %v3355 = vunpack.c.l.b16 %v287
  %v3356 = vunpack.c.l.b16 %v288
  %v3357 = vunpack.c.l.b16 %v289
  %v3358 = vunpack.c.l.b16 %v290
  %v3359 = vunpack.c.l.b16 %v291
  %v3360 = vunpack.c.l.b16 %v292
  %v3361 = vunpack.c.l.b16 %v293
  %v3362 = vunpack.c.l.b16 %v294
  %v3363 = vunpack.c.l.b16 %v295
  %v3364 = vunpack.c.l.b16 %v296
  %v3365 = vunpack.c.l.b16 %v297
  %v3366 = vunpack.c.l.b16 %v298
  %v3367 = vunpack.c.l.b16 %v299
  %v3368 = vunpack.c.l.b16 %v300
  %v3369 = vunpack.c.l.b16 %v301
  %v3370 = vunpack.c.l.b16 %v302
  %v3371 = vunpack.c.l.b16 %v303
  %v3372 = vunpack.c.l.b16 %v304
  %v3373 = vunpack.c.l.b16 %v305
  %v3374 = vunpack.c.l.b16 %v306
  %v3375 = vunpack.c.l.b16 %v307
  %v3376 = vunpack.c.l.b16 %v308
  %v3377 = vunpack.c.l.b16 %v309
  %v3378 = vunpack.c.l.b16 %v310
  %v3379 = vunpack.c.l.b16 %v311
  %v3380 = vunpack.c.l.b16 %v312
  %v3381 = vunpack.c.l.b16 %v313
  %v3382 = vunpack.c.l.b16 %v314
  %v3383 = vunpack.c.l.b16 %v315
  %v3384 = vunpack.c.l.b16 %v316
  %v3385 = vunpack.c.l.b16 %v317
  %v3386 = vunpack.c.l.b16 %v318
  %v3387 = vunpack.c.l.b16 %v319
  %v3388 = vunpack.c.l.b16 %v320
  %v3389 = vunpack.c.l.b16 %v321
  %v3390 = vunpack.c.l.b16 %v322
  %v3391 = vunpack.c.l.b16 %v323
  %v3392 = vunpack.c.l.b16 %v324
  %v3393 = vunpack.c.l.b16 %v325
  %v3394 = vunpack.c.l.b16 %v326
  %v3395 = vunpack.c.l.b16 %v327
  %v3396 = vunpack.c.l.b16 %v328
  %v3397 = vunpack.c.l.b16 %v329
  %v3398 = vunpack.c.l.b16 %v330
  %v3399 = vunpack.c.l.b16 %v331
  %v3400 = vunpack.c.l.b16 %v332
  %v3401 = vunpack.c.l.b16 %v333
  %v3402 = vunpack.c.l.b16 %v334
  %v3403 = vunpack.c.l.b16 %v335
  %v3404 = vunpack.c.l.b16 %v336
  %v3405 = vunpack.c.l.b16 %v337
  %v3406 = vunpack.c.l.b16 %v338
  %v3407 = vunpack.c.l.b16 %v339
  %v3408 = vunpack.c.l.b16 %v340
  %v3409 = vunpack.c.l.b16 %v341
  %v3410 = vunpack.c.l.b16 %v342
  %v3411 = vunpack.c.l.b16 %v343
  %v3412 = vunpack.c.l.b16 %v344
  %v3413 = vunpack.c.l.b16 %v345
  %v3414 = vunpack.c.l.b16 %v346
  %v3415 = vunpack.c.l.b16 %v347
  %v3416 = vunpack.c.l.b16 %v348
  %v3417 = vunpack.c.l.b16 %v349
  %v3418 = vunpack.c.l.b16 %v350
  %v3419 = vunpack.c.l.b16 %v351
  %v3420 = vunpack.c.l.b16 %v352
  %v3421 = vunpack.c.l.b16 %v353
  %v3422 = vunpack.c.l.b16 %v354
  %v3423 = vunpack.c.l.b16 %v355
  %v3424 = vunpack.c.l.b16 %v356
  %v3425 = vunpack.c.l.b16 %v357
  %v3426 = vunpack.c.l.b16 %v358
  %v3427 = vunpack.c.l.b16 %v359
  %v3428 = vunpack.c.l.b16 %v360
  %v3429 = vunpack.c.l.b16 %v361
  %v3430 = vunpack.c.l.b16 %v362
  %v3431 = vunpack.c.l.b16 %v363
  %v3432 = vunpack.c.l.b16 %v364
  %v3433 = vunpack.c.l.b16 %v365
  %v3434 = vunpack.c.l.b16 %v366
  %v3435 = vunpack.c.l.b16 %v367
  %v3436 = vunpack.c.l.b16 %v368
  %v3437 = vunpack.c.l.b16 %v369
  %v3438 = vunpack.c.l.b16 %v370
  %v3439 = vunpack.c.l.b16 %v371
  %v3440 = vunpack.c.l.b16 %v372
  %v3441 = vunpack.c.l.b16 %v373
  %v3442 = vunpack.c.l.b16 %v374
  %v3443 = vunpack.c.l.b16 %v375
  %v3444 = vunpack.c.l.b16 %v376
  %v3445 = vunpack.c.l.b16 %v377
  %v3446 = vunpack.c.l.b16 %v378
  %v3447 = vunpack.c.l.b16 %v379
  %v3448 = vunpack.c.l.b16 %v380
  %v3449 = vunpack.c.l.b16 %v381
  %v3450 = vunpack.c.l.b16 %v382
  %v3451 = vunpack.c.l.b16 %v383
  %v3452 = vunpack.c.l.b16 %v384
  %v3453 = vunpack.c.l.b16 %v385
  %v3454 = vunpack.c.l.b16 %v386
  %v3455 = vunpack.c.l.b16 %v387
  %v3456 = vunpack.c.l.b16 %v388
  %v3457 = vunpack.c.l.b16 %v389
  %v3458 = vunpack.c.l.b16 %v390
  %v3459 = vunpack.c.l.b16 %v391
  %v3460 = vunpack.c.l.b16 %v392
  %v3461 = vunpack.c.l.b16 %v393
  %v3462 = vunpack.c.l.b16 %v394
  %v3463 = vunpack.c.l.b16 %v395
  %v3464 = vunpack.c.l.b16 %v396
  %v3465 = vunpack.c.l.b16 %v397
  %v3466 = vunpack.c.l.b16 %v398
  %v3467 = vunpack.c.l.b16 %v399
  %v3468 = vunpack.c.l.b16 %v400
  %v3469 = vunpack.c.l.b16 %v401
  %v3470 = vunpack.c.l.b16 %v402
  %v3471 = vunpack.c.l.b16 %v403
  %v3472 = vunpack.c.l.b16 %v404
  %v3473 = vunpack.c.l.b16 %v405
  %v3474 = vunpack.c.l.b16 %v406
  %v3475 = vunpack.c.l.b16 %v407
  %v3476 = vunpack.c.l.b16 %v408
  %v3477 = vunpack.c.l.b16 %v409
  %v3478 = vunpack.c.l.b16 %v410
  %v3479 = vunpack.c.l.b16 %v411
  %v3480 = vunpack.c.l.b16 %v412
  %v3481 = vunpack.c.l.b16 %v413
  %v3482 = vunpack.c.l.b16 %v414
  %v3483 = vunpack.c.l.b16 %v415
  %v3484 = vunpack.c.l.b16 %v416
  %v3485 = vunpack.c.l.b16 %v417
  %v3486 = vunpack.c.l.b16 %v418
  %v3487 = vunpack.c.l.b16 %v419
  %v3488 = vunpack.c.l.b16 %v420
  %v3489 = vunpack.c.l.b16 %v421
  %v3490 = vunpack.c.l.b16 %v422
  %v3491 = vunpack.c.l.b16 %v423
  %v3492 = vunpack.c.l.b16 %v424
  %v3493 = vunpack.c.l.b16 %v425
  %v3494 = vunpack.c.l.b16 %v426
  %v3495 = vunpack.c.l.b16 %v427
  %v3496 = vunpack.c.l.b16 %v428
  %v3497 = vunpack.c.l.b16 %v429
  %v3498 = vunpack.c.l.b16 %v430
  %v3499 = vunpack.c.l.b16 %v431
  %v3500 = vunpack.c.l.b16 %v432
  %v3501 = vunpack.c.l.b16 %v433
  %v3502 = vunpack.c.l.b16 %v434
  %v3503 = vunpack.c.l.b16 %v435
  %v3504 = vunpack.c.l.b16 %v436
  %v3505 = vunpack.c.l.b16 %v437
  %v3506 = vunpack.c.l.b16 %v438
  %v3507 = vunpack.c.l.b16 %v439
  %v3508 = vunpack.c.l.b16 %v440
  %v3509 = vunpack.c.l.b16 %v441
  %v3510 = vunpack.c.l.b16 %v442
  %v3511 = vunpack.c.l.b16 %v443
  %v3512 = vunpack.c.l.b16 %v444
  %v3513 = vunpack.c.l.b16 %v445
  %v3514 = vunpack.c.l.b16 %v446
  %v3515 = vunpack.c.l.b16 %v447
  %v3516 = vunpack.c.l.b16 %v448
  %v3517 = vunpack.c.l.b16 %v449
  %v3518 = vunpack.c.l.b16 %v450
  %v3519 = vunpack.c.l.b16 %v451
  %v3520 = vunpack.c.l.b16 %v452
  %v3521 = vunpack.c.l.b16 %v453
  %v3522 = vunpack.c.l.b16 %v454
  %v3523 = vunpack.c.l.b16 %v455
  %v3524 = vunpack.c.l.b16 %v456
  %v3525 = vunpack.c.l.b16 %v457
  %v3526 = vunpack.c.l.b16 %v458
  %v3527 = vunpack.c.l.b16 %v459
  %v3528 = vunpack.c.l.b16 %v460
  %v3529 = vunpack.c.l.b16 %v461
  %v3530 = vunpack.c.l.b16 %v462
  %v3531 = vunpack.c.l.b16 %v463
  %v3532 = vunpack.c.l.b16 %v464
  %v3533 = vunpack.c.l.b16 %v465
  %v3534 = vunpack.c.l.b16 %v466
  %v3535 = vunpack.c.l.b16 %v467
  %v3536 = vunpack.c.l.b16 %v468
  %v3537 = vunpack.c.l.b16 %v469
  %v3538 = vpack.c.b16 %v3316, %v3315
  %v3539 = vpack.c.b16 %v3318, %v3317
  %v3540 = vpack.c.b16 %v3320, %v3319
  %v3541 = vpack.c.b16 %v3322, %v3321
  %v3542 = vpack.c.b16 %v3324, %v3323
  %v3543 = vpack.c.b16 %v3326, %v3325
  %v3544 = vpack.c.b16 %v3328, %v3327
  %v3545 = vpack.c.b16 %v3330, %v3329
  %v3546 = vpack.c.b16 %v3332, %v3331
  %v3547 = vpack.c.b16 %v3334, %v3333
  %v3548 = vpack.c.b16 %v3336, %v3335
  %v3549 = vpack.c.b16 %v3338, %v3337
  %v3550 = vpack.c.b16 %v3340, %v3339
  %v3551 = vpack.c.b16 %v3342, %v3341
  %v3552 = vpack.c.b16 %v3344, %v3343
  %v3553 = vpack.c.b16 %v3346, %v3345
  %v3554 = vpack.c.b16 %v3348, %v3347
  %v3555 = vpack.c.b16 %v3350, %v3349
  %v3556 = vpack.c.b16 %v3352, %v3351
  %v3557 = vpack.c.b16 %v3354, %v3353
  %v3558 = vpack.c.b16 %v3356, %v3355
  %v3559 = vpack.c.b16 %v3358, %v3357
  %v3560 = vpack.c.b16 %v3360, %v3359
  %v3561 = vpack.c.b16 %v3362, %v3361
  %v3562 = vpack.c.b16 %v3364, %v3363
  %v3563 = vpack.c.b16 %v3366, %v3365
  %v3564 = vpack.c.b16 %v3368, %v3367
  %v3565 = vpack.c.b16 %v3370, %v3369
  %v3566 = vpack.c.b16 %v3372, %v3371
  %v3567 = vpack.c.b16 %v3374, %v3373
  %v3568 = vpack.c.b16 %v3376, %v3375
  %v3569 = vpack.c.b16 %v3378, %v3377
  %v3570 = vpack.c.b16 %v3380, %v3379
  %v3571 = vpack.c.b16 %v3382, %v3381
  %v3572 = vpack.c.b16 %v3384, %v3383
  %v3573 = vpack.c.b16 %v3386, %v3385
  %v3574 = vpack.c.b16 %v3388, %v3387
  %v3575 = vpack.c.b16 %v3390, %v3389
  %v3576 = vpack.c.b16 %v3392, %v3391
  %v3577 = vpack.c.b16 %v3394, %v3393
  %v3578 = vpack.c.b16 %v3396, %v3395
  %v3579 = vpack.c.b16 %v3398, %v3397
  %v3580 = vpack.c.b16 %v3400, %v3399
  %v3581 = vpack.c.b16 %v3402, %v3401
  %v3582 = vpack.c.b16 %v3404, %v3403
  %v3583 = vpack.c.b16 %v3406, %v3405
  %v3584 = vpack.c.b16 %v3408, %v3407
  %v3585 = vpack.c.b16 %v3410, %v3409
  %v3586 = vpack.c.b16 %v3412, %v3411
  %v3587 = vpack.c.b16 %v3414, %v3413
  %v3588 = vpack.c.b16 %v3416, %v3415
  %v3589 = vpack.c.b16 %v3418, %v3417
  %v3590 = vpack.c.b16 %v3420, %v3419
  %v3591 = vpack.c.b16 %v3422, %v3421
  %v3592 = vpack.c.b16 %v3424, %v3423
  %v3593 = vpack.c.b16 %v3426, %v3425
  %v3594 = vpack.c.b16 %v3428, %v3427
  %v3595 = vpack.c.b16 %v3430, %v3429
  %v3596 = vpack.c.b16 %v3432, %v3431
  %v3597 = vpack.c.b16 %v3434, %v3433
  %v3598 = vpack.c.b16 %v3436, %v3435
  %v3599 = vpack.c.b16 %v3438, %v3437
  %v3600 = vpack.c.b16 %v3440, %v3439
  %v3601 = vpack.c.b16 %v3442, %v3441
  %v3602 = vpack.c.b16 %v3444, %v3443
  %v3603 = vpack.c.b16 %v3446, %v3445
  %v3604 = vpack.c.b16 %v3448, %v3447
  %v3605 = vpack.c.b16 %v3450, %v3449
  %v3606 = vpack.c.b16 %v3452, %v3451
  %v3607 = vpack.c.b16 %v3454, %v3453
  %v3608 = vpack.c.b16 %v3456, %v3455
  %v3609 = vpack.c.b16 %v3458, %v3457
  %v3610 = vpack.c.b16 %v3460, %v3459
  %v3611 = vpack.c.b16 %v3462, %v3461
  %v3612 = vpack.c.b16 %v3464, %v3463
  %v3613 = vpack.c.b16 %v3466, %v3465
  %v3614 = vpack.c.b16 %v3468, %v3467
  %v3615 = vpack.c.b16 %v3470, %v3469
  %v3616 = vpack.c.b16 %v3472, %v3471
  %v3617 = vpack.c.b16 %v3474, %v3473
  %v3618 = vpack.c.b16 %v3476, %v3475
  %v3619 = vpack.c.b16 %v3478, %v3477
  %v3620 = vpack.c.b16 %v3480, %v3479
  %v3621 = vpack.c.b16 %v3482, %v3481
  %v3622 = vpack.c.b16 %v3484, %v3483
  %v3623 = vpack.c.b16 %v3486, %v3485
  %v3624 = vpack.c.b16 %v3488, %v3487
  %v3625 = vpack.c.b16 %v3490, %v3489
  %v3626 = vpack.c.b16 %v3492, %v3491
  %v3627 = vpack.c.b16 %v3494, %v3493
  %v3628 = vpack.c.b16 %v3496, %v3495
  %v3629 = vpack.c.b16 %v3498, %v3497
  %v3630 = vpack.c.b16 %v3500, %v3499
  %v3631 = vpack.c.b16 %v3502, %v3501
  %v3632 = vpack.c.b16 %v3504, %v3503
  %v3633 = vpack.c.b16 %v3506, %v3505
  %v3634 = vpack.c.b16 %v3508, %v3507
  %v3635 = vpack.c.b16 %v3510, %v3509
  %v3636 = vpack.c.b16 %v3512, %v3511
  %v3637 = vpack.c.b16 %v3514, %v3513
  %v3638 = vpack.c.b16 %v3516, %v3515
  %v3639 = vpack.c.b16 %v3518, %v3517
  %v3640 = vpack.c.b16 %v3520, %v3519
  %v3641 = vpack.c.b16 %v3522, %v3521
  %v3642 = vpack.c.b16 %v3524, %v3523
  %v3643 = vpack.c.b16 %v3526, %v3525
  %v3644 = vpack.c.b16 %v3528, %v3527
  %v3645 = vpack.c.b16 %v3530, %v3529
  %v3646 = vpack.c.b16 %v3532, %v3531
  %v3647 = vpack.c.b16 %v3534, %v3533
  %v3648 = vpack.c.b16 %v3536, %v3535
  %v3649 = vpack.c.b16 %v3537, %v3537
  %vm3761 = vcmask 965632
  %v3763 = vsel %vm3761, %v3086, 0
  %v3766 = vsel %vm1535, %v3649, 0
  %3768 = vmatprep.subr.bf16.mxu0 0
  %3769 = vmatpush1.bf16.msra.mxu0 %v3538
  %3770 = vmatprep.subr.bf16.mxu0 0
  %3771 = vmatpush1.bf16.msra.mxu0 %v3539
  %3772 = vmatprep.subr.bf16.mxu0 0
  %3773 = vmatpush1.bf16.msra.mxu0 %v3540
  %3774 = vmatprep.subr.bf16.mxu0 0
  %3775 = vmatpush1.bf16.msra.mxu0 %v3541
  %3776 = vmatprep.subr.bf16.mxu0 0
  %3777 = vmatpush1.bf16.msra.mxu0 %v3542
  %3778 = vmatprep.subr.bf16.mxu0 0
  %3779 = vmatpush1.bf16.msra.mxu0 %v3543
  %3780 = vmatprep.subr.bf16.mxu0 0
  %3781 = vmatpush1.bf16.msra.mxu0 %v3544
  %3782 = vmatprep.subr.bf16.mxu0 0
  %3783 = vmatpush1.bf16.msra.mxu0 %v3545
  %3784 = vmatprep.subr.bf16.mxu0 0
  %3785 = vmatpush1.bf16.msra.mxu0 %v3546
  %3786 = vmatprep.subr.bf16.mxu0 0
  %3787 = vmatpush1.bf16.msra.mxu0 %v3547
  %3788 = vmatprep.subr.bf16.mxu0 0
  %3789 = vmatpush1.bf16.msra.mxu0 %v3548
  %3790 = vmatprep.subr.bf16.mxu0 0
  %3791 = vmatpush1.bf16.msra.mxu0 %v3549
  %3792 = vmatprep.subr.bf16.mxu0 0
  %3793 = vmatpush1.bf16.msra.mxu0 %v3550
  %3794 = vmatprep.subr.bf16.mxu0 0
  %3795 = vmatpush1.bf16.msra.mxu0 %v3551
  %3796 = vmatprep.subr.bf16.mxu0 0
  %3797 = vmatpush1.bf16.msra.mxu0 %v3552
  %3798 = vmatprep.subr.bf16.mxu0 0
  %3799 = vmatpush1.bf16.msra.mxu0 %v3553
  %3800 = vmatprep.mubr.bf16.mxu0 %v3074
  %3801 = vmatmul.mubr.bf16.gmra.mrb[0].mxu0 %v3073
  %v3802 = vpop.f32.mrb[0].mxu0
  %v3803 = vadd.f32 %v3091, %v3802
  %v3804 = vpop.f32.mrb[0].mxu0
  %v3805 = vpop.f32.mrb[0].mxu0
  %v3806 = vpop.f32.mrb[0].mxu0
  %3807 = vdwg.mxu0
  %3808 = vmatprep.subr.bf16.mxu0 0
  %3809 = vmatpush1.bf16.msra.mxu0 %v3554
  %3810 = vmatprep.subr.bf16.mxu0 0
  %3811 = vmatpush1.bf16.msra.mxu0 %v3555
  %3812 = vmatprep.subr.bf16.mxu0 0
  %3813 = vmatpush1.bf16.msra.mxu0 %v3556
  %3814 = vmatprep.subr.bf16.mxu0 0
  %3815 = vmatpush1.bf16.msra.mxu0 %v3557
  %3816 = vmatprep.subr.bf16.mxu0 0
  %3817 = vmatpush1.bf16.msra.mxu0 %v3558
  %3818 = vmatprep.subr.bf16.mxu0 0
  %3819 = vmatpush1.bf16.msra.mxu0 %v3559
  %3820 = vmatprep.subr.bf16.mxu0 0
  %3821 = vmatpush1.bf16.msra.mxu0 %v3560
  %3822 = vmatprep.subr.bf16.mxu0 0
  %3823 = vmatpush1.bf16.msra.mxu0 %v3561
  %3824 = vmatprep.subr.bf16.mxu0 0
  %3825 = vmatpush1.bf16.msra.mxu0 %v3562
  %3826 = vmatprep.subr.bf16.mxu0 0
  %3827 = vmatpush1.bf16.msra.mxu0 %v3563
  %3828 = vmatprep.subr.bf16.mxu0 0
  %3829 = vmatpush1.bf16.msra.mxu0 %v3564
  %3830 = vmatprep.subr.bf16.mxu0 0
  %3831 = vmatpush1.bf16.msra.mxu0 %v3565
  %3832 = vmatprep.subr.bf16.mxu0 0
  %3833 = vmatpush1.bf16.msra.mxu0 %v3566
  %3834 = vmatprep.subr.bf16.mxu0 0
  %3835 = vmatpush1.bf16.msra.mxu0 %v3567
  %3836 = vmatprep.subr.bf16.mxu0 0
  %3837 = vmatpush1.bf16.msra.mxu0 %v3568
  %3838 = vmatprep.subr.bf16.mxu0 0
  %3839 = vmatpush1.bf16.msra.mxu0 %v3569
  %3840 = vmatprep.mubr.bf16.mxu0 %v3076
  %3841 = vmatmul.mubr.bf16.gmra.mrb[0].mxu0 %v3075
  %v3842 = vpop.f32.mrb[0].mxu0
  %v3843 = vadd.f32 %v3803, %v3842
  %v3844 = vpop.f32.mrb[0].mxu0
  %v3845 = vpop.f32.mrb[0].mxu0
  %v3846 = vpop.f32.mrb[0].mxu0
  %3847 = vdwg.mxu0
  %3848 = vmatprep.subr.bf16.mxu0 0
  %3849 = vmatpush1.bf16.msra.mxu0 %v3570
  %3850 = vmatprep.subr.bf16.mxu0 0
  %3851 = vmatpush1.bf16.msra.mxu0 %v3571
  %3852 = vmatprep.subr.bf16.mxu0 0
  %3853 = vmatpush1.bf16.msra.mxu0 %v3572
  %3854 = vmatprep.subr.bf16.mxu0 0
  %3855 = vmatpush1.bf16.msra.mxu0 %v3573
  %3856 = vmatprep.subr.bf16.mxu0 0
  %3857 = vmatpush1.bf16.msra.mxu0 %v3574
  %3858 = vmatprep.subr.bf16.mxu0 0
  %3859 = vmatpush1.bf16.msra.mxu0 %v3575
  %3860 = vmatprep.subr.bf16.mxu0 0
  %3861 = vmatpush1.bf16.msra.mxu0 %v3576
  %3862 = vmatprep.subr.bf16.mxu0 0
  %3863 = vmatpush1.bf16.msra.mxu0 %v3577
  %3864 = vmatprep.subr.bf16.mxu0 0
  %3865 = vmatpush1.bf16.msra.mxu0 %v3578
  %3866 = vmatprep.subr.bf16.mxu0 0
  %3867 = vmatpush1.bf16.msra.mxu0 %v3579
  %3868 = vmatprep.subr.bf16.mxu0 0
  %3869 = vmatpush1.bf16.msra.mxu0 %v3580
  %3870 = vmatprep.subr.bf16.mxu0 0
  %3871 = vmatpush1.bf16.msra.mxu0 %v3581
  %3872 = vmatprep.subr.bf16.mxu0 0
  %3873 = vmatpush1.bf16.msra.mxu0 %v3582
  %3874 = vmatprep.subr.bf16.mxu0 0
  %3875 = vmatpush1.bf16.msra.mxu0 %v3583
  %3876 = vmatprep.subr.bf16.mxu0 0
  %3877 = vmatpush1.bf16.msra.mxu0 %v3584
  %3878 = vmatprep.subr.bf16.mxu0 0
  %3879 = vmatpush1.bf16.msra.mxu0 %v3585
  %3880 = vmatprep.mubr.bf16.mxu0 %v3078
  %3881 = vmatmul.mubr.bf16.gmra.mrb[0].mxu0 %v3077
  %v3882 = vpop.f32.mrb[0].mxu0
  %v3883 = vadd.f32 %v3843, %v3882
  %v3884 = vpop.f32.mrb[0].mxu0
  %v3885 = vpop.f32.mrb[0].mxu0
  %v3886 = vpop.f32.mrb[0].mxu0
  %3887 = vdwg.mxu0
  %3888 = vmatprep.subr.bf16.mxu0 0
  %3889 = vmatpush1.bf16.msra.mxu0 %v3586
  %3890 = vmatprep.subr.bf16.mxu0 0
  %3891 = vmatpush1.bf16.msra.mxu0 %v3587
  %3892 = vmatprep.subr.bf16.mxu0 0
  %3893 = vmatpush1.bf16.msra.mxu0 %v3588
  %3894 = vmatprep.subr.bf16.mxu0 0
  %3895 = vmatpush1.bf16.msra.mxu0 %v3589
  %3896 = vmatprep.subr.bf16.mxu0 0
  %3897 = vmatpush1.bf16.msra.mxu0 %v3590
  %3898 = vmatprep.subr.bf16.mxu0 0
  %3899 = vmatpush1.bf16.msra.mxu0 %v3591
  %3900 = vmatprep.subr.bf16.mxu0 0
  %3901 = vmatpush1.bf16.msra.mxu0 %v3592
  %3902 = vmatprep.subr.bf16.mxu0 0
  %3903 = vmatpush1.bf16.msra.mxu0 %v3593
  %3904 = vmatprep.subr.bf16.mxu0 0
  %3905 = vmatpush1.bf16.msra.mxu0 %v3594
  %3906 = vmatprep.subr.bf16.mxu0 0
  %3907 = vmatpush1.bf16.msra.mxu0 %v3595
  %3908 = vmatprep.subr.bf16.mxu0 0
  %3909 = vmatpush1.bf16.msra.mxu0 %v3596
  %3910 = vmatprep.subr.bf16.mxu0 0
  %3911 = vmatpush1.bf16.msra.mxu0 %v3597
  %3912 = vmatprep.subr.bf16.mxu0 0
  %3913 = vmatpush1.bf16.msra.mxu0 %v3598
  %3914 = vmatprep.subr.bf16.mxu0 0
  %3915 = vmatpush1.bf16.msra.mxu0 %v3599
  %3916 = vmatprep.subr.bf16.mxu0 0
  %3917 = vmatpush1.bf16.msra.mxu0 %v3600
  %3918 = vmatprep.subr.bf16.mxu0 0
  %3919 = vmatpush1.bf16.msra.mxu0 %v3601
  %3920 = vmatprep.mubr.bf16.mxu0 %v3080
  %3921 = vmatmul.mubr.bf16.gmra.mrb[0].mxu0 %v3079
  %v3922 = vpop.f32.mrb[0].mxu0
  %v3923 = vadd.f32 %v3883, %v3922
  %v3924 = vpop.f32.mrb[0].mxu0
  %v3925 = vpop.f32.mrb[0].mxu0
  %v3926 = vpop.f32.mrb[0].mxu0
  %3927 = vdwg.mxu0
  %3928 = vmatprep.subr.bf16.mxu0 0
  %3929 = vmatpush1.bf16.msra.mxu0 %v3602
  %3930 = vmatprep.subr.bf16.mxu0 0
  %3931 = vmatpush1.bf16.msra.mxu0 %v3603
  %3932 = vmatprep.subr.bf16.mxu0 0
  %3933 = vmatpush1.bf16.msra.mxu0 %v3604
  %3934 = vmatprep.subr.bf16.mxu0 0
  %3935 = vmatpush1.bf16.msra.mxu0 %v3605
  %3936 = vmatprep.subr.bf16.mxu0 0
  %3937 = vmatpush1.bf16.msra.mxu0 %v3606
  %3938 = vmatprep.subr.bf16.mxu0 0
  %3939 = vmatpush1.bf16.msra.mxu0 %v3607
  %3940 = vmatprep.subr.bf16.mxu0 0
  %3941 = vmatpush1.bf16.msra.mxu0 %v3608
  %3942 = vmatprep.subr.bf16.mxu0 0
  %3943 = vmatpush1.bf16.msra.mxu0 %v3609
  %3944 = vmatprep.subr.bf16.mxu0 0
  %3945 = vmatpush1.bf16.msra.mxu0 %v3610
  %3946 = vmatprep.subr.bf16.mxu0 0
  %3947 = vmatpush1.bf16.msra.mxu0 %v3611
  %3948 = vmatprep.subr.bf16.mxu0 0
  %3949 = vmatpush1.bf16.msra.mxu0 %v3612
  %3950 = vmatprep.subr.bf16.mxu0 0
  %3951 = vmatpush1.bf16.msra.mxu0 %v3613
  %3952 = vmatprep.subr.bf16.mxu0 0
  %3953 = vmatpush1.bf16.msra.mxu0 %v3614
  %3954 = vmatprep.subr.bf16.mxu0 0
  %3955 = vmatpush1.bf16.msra.mxu0 %v3615
  %3956 = vmatprep.subr.bf16.mxu0 0
  %3957 = vmatpush1.bf16.msra.mxu0 %v3616
  %3958 = vmatprep.subr.bf16.mxu0 0
  %3959 = vmatpush1.bf16.msra.mxu0 %v3617
  %3960 = vmatprep.mubr.bf16.mxu0 %v3082
  %3961 = vmatmul.mubr.bf16.gmra.mrb[0].mxu0 %v3081
  %v3962 = vpop.f32.mrb[0].mxu0
  %v3963 = vadd.f32 %v3923, %v3962
  %v3964 = vpop.f32.mrb[0].mxu0
  %v3965 = vpop.f32.mrb[0].mxu0
  %v3966 = vpop.f32.mrb[0].mxu0
  %3967 = vdwg.mxu0
  %3968 = vmatprep.subr.bf16.mxu0 0
  %3969 = vmatpush1.bf16.msra.mxu0 %v3618
  %3970 = vmatprep.subr.bf16.mxu0 0
  %3971 = vmatpush1.bf16.msra.mxu0 %v3619
  %3972 = vmatprep.subr.bf16.mxu0 0
  %3973 = vmatpush1.bf16.msra.mxu0 %v3620
  %3974 = vmatprep.subr.bf16.mxu0 0
  %3975 = vmatpush1.bf16.msra.mxu0 %v3621
  %3976 = vmatprep.subr.bf16.mxu0 0
  %3977 = vmatpush1.bf16.msra.mxu0 %v3622
  %3978 = vmatprep.subr.bf16.mxu0 0
  %3979 = vmatpush1.bf16.msra.mxu0 %v3623
  %3980 = vmatprep.subr.bf16.mxu0 0
  %3981 = vmatpush1.bf16.msra.mxu0 %v3624
  %3982 = vmatprep.subr.bf16.mxu0 0
  %3983 = vmatpush1.bf16.msra.mxu0 %v3625
  %3984 = vmatprep.subr.bf16.mxu0 0
  %3985 = vmatpush1.bf16.msra.mxu0 %v3626
  %3986 = vmatprep.subr.bf16.mxu0 0
  %3987 = vmatpush1.bf16.msra.mxu0 %v3627
  %3988 = vmatprep.subr.bf16.mxu0 0
  %3989 = vmatpush1.bf16.msra.mxu0 %v3628
  %3990 = vmatprep.subr.bf16.mxu0 0
  %3991 = vmatpush1.bf16.msra.mxu0 %v3629
  %3992 = vmatprep.subr.bf16.mxu0 0
  %3993 = vmatpush1.bf16.msra.mxu0 %v3630
  %3994 = vmatprep.subr.bf16.mxu0 0
  %3995 = vmatpush1.bf16.msra.mxu0 %v3631
  %3996 = vmatprep.subr.bf16.mxu0 0
  %3997 = vmatpush1.bf16.msra.mxu0 %v3632
  %3998 = vmatprep.subr.bf16.mxu0 0
  %3999 = vmatpush1.bf16.msra.mxu0 %v3633
  %4000 = vmatprep.mubr.bf16.mxu0 %v3084
  %4001 = vmatmul.mubr.bf16.gmra.mrb[0].mxu0 %v3083
  %v4002 = vpop.f32.mrb[0].mxu0
  %v4003 = vadd.f32 %v3963, %v4002
  %v4004 = vpop.f32.mrb[0].mxu0
  %v4005 = vpop.f32.mrb[0].mxu0
  %v4006 = vpop.f32.mrb[0].mxu0
  %4007 = vdwg.mxu0
  %4008 = vmatprep.subr.bf16.mxu0 0
  %4009 = vmatpush1.bf16.msra.mxu0 %v3634
  %4010 = vmatprep.subr.bf16.mxu0 0
  %4011 = vmatpush1.bf16.msra.mxu0 %v3635
  %4012 = vmatprep.subr.bf16.mxu0 0
  %4013 = vmatpush1.bf16.msra.mxu0 %v3636
  %4014 = vmatprep.subr.bf16.mxu0 0
  %4015 = vmatpush1.bf16.msra.mxu0 %v3637
  %4016 = vmatprep.subr.bf16.mxu0 0
  %4017 = vmatpush1.bf16.msra.mxu0 %v3638
  %4018 = vmatprep.subr.bf16.mxu0 0
  %4019 = vmatpush1.bf16.msra.mxu0 %v3639
  %4020 = vmatprep.subr.bf16.mxu0 0
  %4021 = vmatpush1.bf16.msra.mxu0 %v3640
  %4022 = vmatprep.subr.bf16.mxu0 0
  %4023 = vmatpush1.bf16.msra.mxu0 %v3641
  %4024 = vmatprep.subr.bf16.mxu0 0
  %4025 = vmatpush1.bf16.msra.mxu0 %v3642
  %4026 = vmatprep.subr.bf16.mxu0 0
  %4027 = vmatpush1.bf16.msra.mxu0 %v3643
  %4028 = vmatprep.subr.bf16.mxu0 0
  %4029 = vmatpush1.bf16.msra.mxu0 %v3644
  %4030 = vmatprep.subr.bf16.mxu0 0
  %4031 = vmatpush1.bf16.msra.mxu0 %v3645
  %4032 = vmatprep.subr.bf16.mxu0 0
  %4033 = vmatpush1.bf16.msra.mxu0 %v3646
  %4034 = vmatprep.subr.bf16.mxu0 0
  %4035 = vmatpush1.bf16.msra.mxu0 %v3647
  %4036 = vmatprep.subr.bf16.mxu0 0
  %4037 = vmatpush1.bf16.msra.mxu0 %v3648
  %4038 = vmatprep.subr.bf16.mxu0 0
  %4039 = vmatpush1.bf16.msra.mxu0 %v3766
  %4040 = vmatprep.mubr.bf16.mxu0 %v3763
  %4041 = vmatmul.mubr.bf16.gmra.mrb[0].mxu0 %v3085
  %v4042 = vpop.f32.mrb[0].mxu0
  %v4043 = vadd.f32 %v4003, %v4042
  %v4044 = vpop.f32.mrb[0].mxu0
  %v4045 = vpop.f32.mrb[0].mxu0
  %v4046 = vpop.f32.mrb[0].mxu0
  %4047 = vdwg.mxu0
  %vm4048 = vcmask 662528
  %v4049 = vsel %vm4048, %v4043, -inf
  %4050 = vmax.xlane.f32.xlu0 %v4049
  %v4051 = vpop.xlane.xlu0 %4050
  %v4052 = vsub.f32 %v4043, %v4051
  %v4053 = vmul.f32 %v4052, 1.442695
  %v4054 = vpow.pop %v4053
  %v4055 = vpack.c.bf16 %v4054, %v4054
  %v4067 = vunpack.c.l.b16 %v470
  %v4068 = vunpack.c.l.b16 %v471
  %v4069 = vunpack.c.l.b16 %v472
  %v4070 = vunpack.c.l.b16 %v473
  %v4071 = vunpack.c.l.b16 %v474
  %v4072 = vunpack.c.l.b16 %v475
  %v4073 = vunpack.c.l.b16 %v476
  %v4074 = vunpack.c.l.b16 %v477
  %v4075 = vunpack.c.l.b16 %v478
  %v4076 = vunpack.c.l.b16 %v479
  %v4077 = vunpack.c.l.b16 %v480
  %v4078 = vpack.c.b16 %v4068, %v4067
  %v4079 = vpack.c.b16 %v4070, %v4069
  %v4080 = vpack.c.b16 %v4072, %v4071
  %v4081 = vpack.c.b16 %v4074, %v4073
  %v4082 = vpack.c.b16 %v4076, %v4075
  %v4083 = vpack.c.b16 %v4077, %v4077
  %v4090 = vsel %vm4048, %v4055, 0
  %vm4092 = vcmask 1040384
  %v4093 = vsel 0, 4294967295, 65535
  %v4094 = vsel %vm4092, %v4093, 0
  %v4096 = vand.u32 %v4083, %v4094
  %4098 = vmatprep.subr.bf16.mxu0 0
  %4099 = vmatpush1.bf16.msra.mxu0 %v4078
  %4100 = vmatprep.subr.bf16.mxu0 0
  %4101 = vmatpush1.bf16.msra.mxu0 %v4079
  %4102 = vmatprep.subr.bf16.mxu0 0
  %4103 = vmatpush1.bf16.msra.mxu0 %v4080
  %4104 = vmatprep.subr.bf16.mxu0 0
  %4105 = vmatpush1.bf16.msra.mxu0 %v4081
  %4106 = vmatprep.subr.bf16.mxu0 0
  %4107 = vmatpush1.bf16.msra.mxu0 %v4082
  %4108 = vmatprep.subr.bf16.mxu0 0
  %4109 = vmatpush1.bf16.msra.mxu0 %v4096
  %4110 = vmatprep.subr.bf16.mxu0 0
  %4111 = vmatpush1.bf16.msra.mxu0 0
  %4112 = vmatprep.subr.bf16.mxu0 0
  %4113 = vmatpush1.bf16.msra.mxu0 0
  %4114 = vmatprep.subr.bf16.mxu0 0
  %4115 = vmatpush1.bf16.msra.mxu0 0
  %4116 = vmatprep.subr.bf16.mxu0 0
  %4117 = vmatpush1.bf16.msra.mxu0 0
  %4118 = vmatprep.subr.bf16.mxu0 0
  %4119 = vmatpush1.bf16.msra.mxu0 0
  %4120 = vmatprep.subr.bf16.mxu0 0
  %4121 = vmatpush1.bf16.msra.mxu0 0
  %4122 = vmatprep.subr.bf16.mxu0 0
  %4123 = vmatpush1.bf16.msra.mxu0 0
  %4124 = vmatprep.subr.bf16.mxu0 0
  %4125 = vmatpush1.bf16.msra.mxu0 0
  %4126 = vmatprep.subr.bf16.mxu0 0
  %4127 = vmatpush1.bf16.msra.mxu0 0
  %4128 = vmatprep.subr.bf16.mxu0 0
  %4129 = vmatpush1.bf16.msra.mxu0 0
  %4130 = vmatprep.mubr.bf16.mxu0 0
  %4131 = vmatmul.mubr.bf16.gmra.mrb[0].mxu0 %v4090
  %v4132 = vpop.f32.mrb[0].mxu0
  %v4133 = vadd.f32 0.0, %v4132
  %v4134 = vpop.f32.mrb[0].mxu0
  %v4135 = vpop.f32.mrb[0].mxu0
  %v4136 = vpop.f32.mrb[0].mxu0
  %4137 = vdwg.mxu0
  %v4138 = vmax.f32 %v4133, 1e-20
  %v4139 = vrcp.pop %v4138
  %v4140 = vmul.f32 %v4054, %v4139
  %v4141 = vpack.c.bf16 %v4140, %v4140
  %v4219 = vunpack.c.l.b16 %v481
  %v4220 = vunpack.c.h.b16 %v481
  %v4221 = vunpack.c.l.b16 %v482
  %v4222 = vunpack.c.h.b16 %v482
  %v4223 = vunpack.c.l.b16 %v483
  %v4224 = vunpack.c.h.b16 %v483
  %v4225 = vunpack.c.l.b16 %v484
  %v4226 = vunpack.c.h.b16 %v484
  %v4227 = vunpack.c.l.b16 %v485
  %v4228 = vunpack.c.h.b16 %v485
  %v4229 = vunpack.c.l.b16 %v486
  %v4230 = vunpack.c.h.b16 %v486
  %v4231 = vunpack.c.l.b16 %v487
  %v4232 = vunpack.c.h.b16 %v487
  %v4233 = vunpack.c.l.b16 %v488
  %v4234 = vunpack.c.h.b16 %v488
  %v4235 = vunpack.c.l.b16 %v489
  %v4236 = vunpack.c.h.b16 %v489
  %v4237 = vunpack.c.l.b16 %v490
  %v4238 = vunpack.c.h.b16 %v490
  %v4239 = vunpack.c.l.b16 %v491
  %v4240 = vunpack.c.h.b16 %v491
  %v4241 = vunpack.c.l.b16 %v492
  %v4242 = vunpack.c.h.b16 %v492
  %v4243 = vunpack.c.l.b16 %v493
  %v4244 = vunpack.c.h.b16 %v493
  %v4245 = vunpack.c.l.b16 %v494
  %v4246 = vunpack.c.h.b16 %v494
  %v4247 = vunpack.c.l.b16 %v495
  %v4248 = vunpack.c.h.b16 %v495
  %v4249 = vunpack.c.l.b16 %v496
  %v4250 = vunpack.c.h.b16 %v496
  %v4251 = vunpack.c.l.b16 %v497
  %v4252 = vunpack.c.h.b16 %v497
  %v4253 = vunpack.c.l.b16 %v498
  %v4254 = vunpack.c.h.b16 %v498
  %v4255 = vunpack.c.l.b16 %v499
  %v4256 = vunpack.c.h.b16 %v499
  %v4257 = vunpack.c.l.b16 %v500
  %v4258 = vunpack.c.h.b16 %v500
  %v4259 = vunpack.c.l.b16 %v501
  %v4260 = vunpack.c.h.b16 %v501
  %v4261 = vunpack.c.l.b16 %v502
  %v4262 = vunpack.c.h.b16 %v502
  %v4263 = vunpack.c.l.b16 %v503
  %v4264 = vunpack.c.h.b16 %v503
  %v4265 = vunpack.c.l.b16 %v504
  %v4266 = vunpack.c.h.b16 %v504
  %v4267 = vunpack.c.l.b16 %v505
  %v4268 = vunpack.c.h.b16 %v505
  %v4269 = vunpack.c.l.b16 %v506
  %v4270 = vunpack.c.h.b16 %v506
  %v4271 = vunpack.c.l.b16 %v507
  %v4272 = vunpack.c.h.b16 %v507
  %v4273 = vunpack.c.l.b16 %v508
  %v4274 = vunpack.c.h.b16 %v508
  %v4275 = vunpack.c.l.b16 %v509
  %v4276 = vunpack.c.h.b16 %v509
  %v4277 = vunpack.c.l.b16 %v510
  %v4278 = vunpack.c.h.b16 %v510
  %v4279 = vunpack.c.l.b16 %v511
  %v4280 = vunpack.c.h.b16 %v511
  %v4281 = vunpack.c.l.b16 %v512
  %v4282 = vunpack.c.h.b16 %v512
  %v4283 = vunpack.c.l.b16 %v513
  %v4284 = vunpack.c.h.b16 %v513
  %v4285 = vunpack.c.l.b16 %v514
  %v4286 = vunpack.c.h.b16 %v514
  %v4287 = vunpack.c.l.b16 %v515
  %v4288 = vunpack.c.h.b16 %v515
  %v4289 = vunpack.c.l.b16 %v516
  %v4290 = vunpack.c.h.b16 %v516
  %v4291 = vunpack.c.l.b16 %v517
  %v4292 = vunpack.c.h.b16 %v517
  %v4293 = vunpack.c.l.b16 %v518
  %v4294 = vunpack.c.h.b16 %v518
  %v4295 = vunpack.c.l.b16 %v519
  %v4296 = vunpack.c.h.b16 %v519
  %v4297 = vunpack.c.l.b16 %v520
  %v4298 = vunpack.c.h.b16 %v520
  %v4299 = vunpack.c.l.b16 %v521
  %v4300 = vunpack.c.h.b16 %v521
  %v4301 = vunpack.c.l.b16 %v522
  %v4302 = vunpack.c.h.b16 %v522
  %v4303 = vunpack.c.l.b16 %v523
  %v4304 = vunpack.c.h.b16 %v523
  %v4305 = vunpack.c.l.b16 %v524
  %v4306 = vunpack.c.h.b16 %v524
  %v4307 = vunpack.c.l.b16 %v525
  %v4308 = vunpack.c.h.b16 %v525
  %v4309 = vunpack.c.l.b16 %v526
  %v4310 = vunpack.c.h.b16 %v526
  %v4311 = vunpack.c.l.b16 %v527
  %v4312 = vunpack.c.h.b16 %v527
  %v4313 = vunpack.c.l.b16 %v528
  %v4314 = vunpack.c.h.b16 %v528
  %v4315 = vunpack.c.l.b16 %v529
  %v4316 = vunpack.c.h.b16 %v529
  %v4317 = vunpack.c.l.b16 %v530
  %v4318 = vunpack.c.h.b16 %v530
  %v4319 = vunpack.c.l.b16 %v531
  %v4320 = vunpack.c.h.b16 %v531
  %v4321 = vunpack.c.l.b16 %v532
  %v4322 = vunpack.c.h.b16 %v532
  %v4323 = vunpack.c.l.b16 %v533
  %v4324 = vunpack.c.h.b16 %v533
  %v4325 = vunpack.c.l.b16 %v534
  %v4326 = vunpack.c.h.b16 %v534
  %v4327 = vunpack.c.l.b16 %v535
  %v4328 = vunpack.c.h.b16 %v535
  %v4329 = vunpack.c.l.b16 %v536
  %v4330 = vunpack.c.h.b16 %v536
  %v4331 = vunpack.c.l.b16 %v537
  %v4332 = vunpack.c.h.b16 %v537
  %v4333 = vunpack.c.l.b16 %v538
  %v4334 = vunpack.c.h.b16 %v538
  %v4335 = vunpack.c.l.b16 %v539
  %v4336 = vunpack.c.h.b16 %v539
  %v4337 = vunpack.c.l.b16 %v540
  %v4338 = vunpack.c.h.b16 %v540
  %v4339 = vunpack.c.l.b16 %v541
  %v4340 = vunpack.c.h.b16 %v541
  %v4341 = vunpack.c.l.b16 %v542
  %v4342 = vunpack.c.h.b16 %v542
  %v4343 = vunpack.c.l.b16 %v543
  %v4344 = vunpack.c.h.b16 %v543
  %v4345 = vunpack.c.l.b16 %v544
  %v4346 = vunpack.c.h.b16 %v544
  %v4347 = vunpack.c.l.b16 %v545
  %v4348 = vunpack.c.h.b16 %v545
  %v4349 = vunpack.c.l.b16 %v546
  %v4350 = vunpack.c.h.b16 %v546
  %v4351 = vunpack.c.l.b16 %v547
  %v4352 = vunpack.c.h.b16 %v547
  %v4353 = vunpack.c.l.b16 %v548
  %v4354 = vunpack.c.h.b16 %v548
  %v4355 = vunpack.c.l.b16 %v549
  %v4356 = vunpack.c.h.b16 %v549
  %v4357 = vunpack.c.l.b16 %v550
  %v4358 = vunpack.c.h.b16 %v550
  %v4359 = vunpack.c.l.b16 %v551
  %v4360 = vunpack.c.h.b16 %v551
  %v4361 = vunpack.c.l.b16 %v552
  %v4362 = vunpack.c.h.b16 %v552
  %v4363 = vunpack.c.l.b16 %v553
  %v4364 = vunpack.c.h.b16 %v553
  %v4365 = vunpack.c.l.b16 %v554
  %v4366 = vunpack.c.h.b16 %v554
  %v4367 = vunpack.c.l.b16 %v555
  %v4368 = vunpack.c.h.b16 %v555
  %v4369 = vunpack.c.l.b16 %v556
  %v4370 = vunpack.c.h.b16 %v556
  %v4371 = vunpack.c.l.b16 %v557
  %v4372 = vunpack.c.h.b16 %v557
  %v4373 = vpack.c.b16 %v4233, %v4219
  %v4374 = vpack.c.b16 %v4234, %v4220
  %v4375 = vpack.c.b16 %v4235, %v4221
  %v4376 = vpack.c.b16 %v4236, %v4222
  %v4377 = vpack.c.b16 %v4237, %v4223
  %v4378 = vpack.c.b16 %v4238, %v4224
  %v4379 = vpack.c.b16 %v4239, %v4225
  %v4380 = vpack.c.b16 %v4240, %v4226
  %v4381 = vpack.c.b16 %v4241, %v4227
  %v4382 = vpack.c.b16 %v4242, %v4228
  %v4383 = vpack.c.b16 %v4243, %v4229
  %v4384 = vpack.c.b16 %v4244, %v4230
  %v4385 = vpack.c.b16 %v4245, %v4231
  %v4386 = vpack.c.b16 %v4246, %v4232
  %v4387 = vpack.c.b16 %v4261, %v4247
  %v4388 = vpack.c.b16 %v4262, %v4248
  %v4389 = vpack.c.b16 %v4263, %v4249
  %v4390 = vpack.c.b16 %v4264, %v4250
  %v4391 = vpack.c.b16 %v4265, %v4251
  %v4392 = vpack.c.b16 %v4266, %v4252
  %v4393 = vpack.c.b16 %v4267, %v4253
  %v4394 = vpack.c.b16 %v4268, %v4254
  %v4395 = vpack.c.b16 %v4269, %v4255
  %v4396 = vpack.c.b16 %v4270, %v4256
  %v4397 = vpack.c.b16 %v4271, %v4257
  %v4398 = vpack.c.b16 %v4272, %v4258
  %v4399 = vpack.c.b16 %v4273, %v4259
  %v4400 = vpack.c.b16 %v4274, %v4260
  %v4401 = vpack.c.b16 %v4289, %v4275
  %v4402 = vpack.c.b16 %v4290, %v4276
  %v4403 = vpack.c.b16 %v4291, %v4277
  %v4404 = vpack.c.b16 %v4292, %v4278
  %v4405 = vpack.c.b16 %v4293, %v4279
  %v4406 = vpack.c.b16 %v4294, %v4280
  %v4407 = vpack.c.b16 %v4295, %v4281
  %v4408 = vpack.c.b16 %v4296, %v4282
  %v4409 = vpack.c.b16 %v4297, %v4283
  %v4410 = vpack.c.b16 %v4298, %v4284
  %v4411 = vpack.c.b16 %v4299, %v4285
  %v4412 = vpack.c.b16 %v4300, %v4286
  %v4413 = vpack.c.b16 %v4301, %v4287
  %v4414 = vpack.c.b16 %v4302, %v4288
  %v4415 = vpack.c.b16 %v4317, %v4303
  %v4416 = vpack.c.b16 %v4318, %v4304
  %v4417 = vpack.c.b16 %v4319, %v4305
  %v4418 = vpack.c.b16 %v4320, %v4306
  %v4419 = vpack.c.b16 %v4321, %v4307
  %v4420 = vpack.c.b16 %v4322, %v4308
  %v4421 = vpack.c.b16 %v4323, %v4309
  %v4422 = vpack.c.b16 %v4324, %v4310
  %v4423 = vpack.c.b16 %v4325, %v4311
  %v4424 = vpack.c.b16 %v4326, %v4312
  %v4425 = vpack.c.b16 %v4327, %v4313
  %v4426 = vpack.c.b16 %v4328, %v4314
  %v4427 = vpack.c.b16 %v4329, %v4315
  %v4428 = vpack.c.b16 %v4330, %v4316
  %v4429 = vpack.c.b16 %v4345, %v4331
  %v4430 = vpack.c.b16 %v4346, %v4332
  %v4431 = vpack.c.b16 %v4347, %v4333
  %v4432 = vpack.c.b16 %v4348, %v4334
  %v4433 = vpack.c.b16 %v4349, %v4335
  %v4434 = vpack.c.b16 %v4350, %v4336
  %v4435 = vpack.c.b16 %v4351, %v4337
  %v4436 = vpack.c.b16 %v4352, %v4338
  %v4437 = vpack.c.b16 %v4353, %v4339
  %v4438 = vpack.c.b16 %v4354, %v4340
  %v4439 = vpack.c.b16 %v4355, %v4341
  %v4440 = vpack.c.b16 %v4356, %v4342
  %v4441 = vpack.c.b16 %v4357, %v4343
  %v4442 = vpack.c.b16 %v4358, %v4344
  %v4443 = vpack.c.b16 %v4359, %v4359
  %v4444 = vpack.c.b16 %v4360, %v4360
  %v4445 = vpack.c.b16 %v4361, %v4361
  %v4446 = vpack.c.b16 %v4362, %v4362
  %v4447 = vpack.c.b16 %v4363, %v4363
  %v4448 = vpack.c.b16 %v4364, %v4364
  %v4449 = vpack.c.b16 %v4365, %v4365
  %v4450 = vpack.c.b16 %v4366, %v4366
  %v4451 = vpack.c.b16 %v4367, %v4367
  %v4452 = vpack.c.b16 %v4368, %v4368
  %v4453 = vpack.c.b16 %v4369, %v4369
  %v4454 = vpack.c.b16 %v4370, %v4370
  %v4455 = vpack.c.b16 %v4371, %v4371
  %v4456 = vpack.c.b16 %v4372, %v4372
  %v4528 = vsel %vm4048, %v4141, 0
  %v4531 = vand.u32 %v4443, %v4094
  %v4534 = vand.u32 %v4444, %v4094
  %v4537 = vand.u32 %v4445, %v4094
  %v4540 = vand.u32 %v4446, %v4094
  %v4543 = vand.u32 %v4447, %v4094
  %v4546 = vand.u32 %v4448, %v4094
  %v4549 = vand.u32 %v4449, %v4094
  %v4552 = vand.u32 %v4450, %v4094
  %v4555 = vand.u32 %v4451, %v4094
  %v4558 = vand.u32 %v4452, %v4094
  %v4561 = vand.u32 %v4453, %v4094
  %v4564 = vand.u32 %v4454, %v4094
  %v4567 = vand.u32 %v4455, %v4094
  %v4570 = vand.u32 %v4456, %v4094
  %4572 = vmatprep.subr.bf16.mxu0 %v4374
  %4573 = vmatpush1.bf16.msra.mxu0 %v4373
  %4574 = vmatprep.subr.bf16.mxu0 %v4388
  %4575 = vmatpush1.bf16.msra.mxu0 %v4387
  %4576 = vmatprep.subr.bf16.mxu0 %v4402
  %4577 = vmatpush1.bf16.msra.mxu0 %v4401
  %4578 = vmatprep.subr.bf16.mxu0 %v4416
  %4579 = vmatpush1.bf16.msra.mxu0 %v4415
  %4580 = vmatprep.subr.bf16.mxu0 %v4430
  %4581 = vmatpush1.bf16.msra.mxu0 %v4429
  %4582 = vmatprep.subr.bf16.mxu0 %v4534
  %4583 = vmatpush1.bf16.msra.mxu0 %v4531
  %4584 = vmatprep.subr.bf16.mxu0 0
  %4585 = vmatpush1.bf16.msra.mxu0 0
  %4586 = vmatprep.subr.bf16.mxu0 0
  %4587 = vmatpush1.bf16.msra.mxu0 0
  %4588 = vmatprep.subr.bf16.mxu0 0
  %4589 = vmatpush1.bf16.msra.mxu0 0
  %4590 = vmatprep.subr.bf16.mxu0 0
  %4591 = vmatpush1.bf16.msra.mxu0 0
  %4592 = vmatprep.subr.bf16.mxu0 0
  %4593 = vmatpush1.bf16.msra.mxu0 0
  %4594 = vmatprep.subr.bf16.mxu0 0
  %4595 = vmatpush1.bf16.msra.mxu0 0
  %4596 = vmatprep.subr.bf16.mxu0 0
  %4597 = vmatpush1.bf16.msra.mxu0 0
  %4598 = vmatprep.subr.bf16.mxu0 0
  %4599 = vmatpush1.bf16.msra.mxu0 0
  %4600 = vmatprep.subr.bf16.mxu0 0
  %4601 = vmatpush1.bf16.msra.mxu0 0
  %4602 = vmatprep.subr.bf16.mxu0 0
  %4603 = vmatpush1.bf16.msra.mxu0 0
  %4604 = vmatprep.mubr.bf16.mxu0 0
  %4605 = vmatmul.mubr.bf16.gmra.mrb[0].mxu0 %v4528
  %v4606 = vpop.f32.mrb[0].mxu0
  %v4607 = vadd.f32 0.0, %v4606
  %v4608 = vpop.f32.mrb[0].mxu0
  %v4609 = vadd.f32 0.0, %v4608
  %v4610 = vpop.f32.mrb[0].mxu0
  %v4611 = vpop.f32.mrb[0].mxu0
  %4612 = vdwg.mxu0
  %4613 = vmatprep.subr.bf16.mxu0 %v4376
  %4614 = vmatpush1.bf16.msra.mxu0 %v4375
  %4615 = vmatprep.subr.bf16.mxu0 %v4390
  %4616 = vmatpush1.bf16.msra.mxu0 %v4389
  %4617 = vmatprep.subr.bf16.mxu0 %v4404
  %4618 = vmatpush1.bf16.msra.mxu0 %v4403
  %4619 = vmatprep.subr.bf16.mxu0 %v4418
  %4620 = vmatpush1.bf16.msra.mxu0 %v4417
  %4621 = vmatprep.subr.bf16.mxu0 %v4432
  %4622 = vmatpush1.bf16.msra.mxu0 %v4431
  %4623 = vmatprep.subr.bf16.mxu0 %v4540
  %4624 = vmatpush1.bf16.msra.mxu0 %v4537
  %4625 = vmatprep.subr.bf16.mxu0 0
  %4626 = vmatpush1.bf16.msra.mxu0 0
  %4627 = vmatprep.subr.bf16.mxu0 0
  %4628 = vmatpush1.bf16.msra.mxu0 0
  %4629 = vmatprep.subr.bf16.mxu0 0
  %4630 = vmatpush1.bf16.msra.mxu0 0
  %4631 = vmatprep.subr.bf16.mxu0 0
  %4632 = vmatpush1.bf16.msra.mxu0 0
  %4633 = vmatprep.subr.bf16.mxu0 0
  %4634 = vmatpush1.bf16.msra.mxu0 0
  %4635 = vmatprep.subr.bf16.mxu0 0
  %4636 = vmatpush1.bf16.msra.mxu0 0
  %4637 = vmatprep.subr.bf16.mxu0 0
  %4638 = vmatpush1.bf16.msra.mxu0 0
  %4639 = vmatprep.subr.bf16.mxu0 0
  %4640 = vmatpush1.bf16.msra.mxu0 0
  %4641 = vmatprep.subr.bf16.mxu0 0
  %4642 = vmatpush1.bf16.msra.mxu0 0
  %4643 = vmatprep.subr.bf16.mxu0 0
  %4644 = vmatpush1.bf16.msra.mxu0 0
  %4645 = vmatprep.mubr.bf16.mxu0 0
  %4646 = vmatmul.mubr.bf16.gmra.mrb[0].mxu0 %v4528
  %v4647 = vpop.f32.mrb[0].mxu0
  %v4648 = vadd.f32 0.0, %v4647
  %v4649 = vpop.f32.mrb[0].mxu0
  %v4650 = vadd.f32 0.0, %v4649
  %v4651 = vpop.f32.mrb[0].mxu0
  %v4652 = vpop.f32.mrb[0].mxu0
  %4653 = vdwg.mxu0
  %4654 = vmatprep.subr.bf16.mxu0 %v4378
  %4655 = vmatpush1.bf16.msra.mxu0 %v4377
  %4656 = vmatprep.subr.bf16.mxu0 %v4392
  %4657 = vmatpush1.bf16.msra.mxu0 %v4391
  %4658 = vmatprep.subr.bf16.mxu0 %v4406
  %4659 = vmatpush1.bf16.msra.mxu0 %v4405
  %4660 = vmatprep.subr.bf16.mxu0 %v4420
  %4661 = vmatpush1.bf16.msra.mxu0 %v4419
  %4662 = vmatprep.subr.bf16.mxu0 %v4434
  %4663 = vmatpush1.bf16.msra.mxu0 %v4433
  %4664 = vmatprep.subr.bf16.mxu0 %v4546
  %4665 = vmatpush1.bf16.msra.mxu0 %v4543
  %4666 = vmatprep.subr.bf16.mxu0 0
  %4667 = vmatpush1.bf16.msra.mxu0 0
  %4668 = vmatprep.subr.bf16.mxu0 0
  %4669 = vmatpush1.bf16.msra.mxu0 0
  %4670 = vmatprep.subr.bf16.mxu0 0
  %4671 = vmatpush1.bf16.msra.mxu0 0
  %4672 = vmatprep.subr.bf16.mxu0 0
  %4673 = vmatpush1.bf16.msra.mxu0 0
  %4674 = vmatprep.subr.bf16.mxu0 0
  %4675 = vmatpush1.bf16.msra.mxu0 0
  %4676 = vmatprep.subr.bf16.mxu0 0
  %4677 = vmatpush1.bf16.msra.mxu0 0
  %4678 = vmatprep.subr.bf16.mxu0 0
  %4679 = vmatpush1.bf16.msra.mxu0 0
  %4680 = vmatprep.subr.bf16.mxu0 0
  %4681 = vmatpush1.bf16.msra.mxu0 0
  %4682 = vmatprep.subr.bf16.mxu0 0
  %4683 = vmatpush1.bf16.msra.mxu0 0
  %4684 = vmatprep.subr.bf16.mxu0 0
  %4685 = vmatpush1.bf16.msra.mxu0 0
  %4686 = vmatprep.mubr.bf16.mxu0 0
  %4687 = vmatmul.mubr.bf16.gmra.mrb[0].mxu0 %v4528
  %v4688 = vpop.f32.mrb[0].mxu0
  %v4689 = vadd.f32 0.0, %v4688
  %v4690 = vpop.f32.mrb[0].mxu0
  %v4691 = vadd.f32 0.0, %v4690
  %v4692 = vpop.f32.mrb[0].mxu0
  %v4693 = vpop.f32.mrb[0].mxu0
  %4694 = vdwg.mxu0
  %4695 = vmatprep.subr.bf16.mxu0 %v4380
  %4696 = vmatpush1.bf16.msra.mxu0 %v4379
  %4697 = vmatprep.subr.bf16.mxu0 %v4394
  %4698 = vmatpush1.bf16.msra.mxu0 %v4393
  %4699 = vmatprep.subr.bf16.mxu0 %v4408
  %4700 = vmatpush1.bf16.msra.mxu0 %v4407
  %4701 = vmatprep.subr.bf16.mxu0 %v4422
  %4702 = vmatpush1.bf16.msra.mxu0 %v4421
  %4703 = vmatprep.subr.bf16.mxu0 %v4436
  %4704 = vmatpush1.bf16.msra.mxu0 %v4435
  %4705 = vmatprep.subr.bf16.mxu0 %v4552
  %4706 = vmatpush1.bf16.msra.mxu0 %v4549
  %4707 = vmatprep.subr.bf16.mxu0 0
  %4708 = vmatpush1.bf16.msra.mxu0 0
  %4709 = vmatprep.subr.bf16.mxu0 0
  %4710 = vmatpush1.bf16.msra.mxu0 0
  %4711 = vmatprep.subr.bf16.mxu0 0
  %4712 = vmatpush1.bf16.msra.mxu0 0
  %4713 = vmatprep.subr.bf16.mxu0 0
  %4714 = vmatpush1.bf16.msra.mxu0 0
  %4715 = vmatprep.subr.bf16.mxu0 0
  %4716 = vmatpush1.bf16.msra.mxu0 0
  %4717 = vmatprep.subr.bf16.mxu0 0
  %4718 = vmatpush1.bf16.msra.mxu0 0
  %4719 = vmatprep.subr.bf16.mxu0 0
  %4720 = vmatpush1.bf16.msra.mxu0 0
  %4721 = vmatprep.subr.bf16.mxu0 0
  %4722 = vmatpush1.bf16.msra.mxu0 0
  %4723 = vmatprep.subr.bf16.mxu0 0
  %4724 = vmatpush1.bf16.msra.mxu0 0
  %4725 = vmatprep.subr.bf16.mxu0 0
  %4726 = vmatpush1.bf16.msra.mxu0 0
  %4727 = vmatprep.mubr.bf16.mxu0 0
  %4728 = vmatmul.mubr.bf16.gmra.mrb[0].mxu0 %v4528
  %v4729 = vpop.f32.mrb[0].mxu0
  %v4730 = vadd.f32 0.0, %v4729
  %v4731 = vpop.f32.mrb[0].mxu0
  %v4732 = vadd.f32 0.0, %v4731
  %v4733 = vpop.f32.mrb[0].mxu0
  %v4734 = vpop.f32.mrb[0].mxu0
  %4735 = vdwg.mxu0
  %4736 = vmatprep.subr.bf16.mxu0 %v4382
  %4737 = vmatpush1.bf16.msra.mxu0 %v4381
  %4738 = vmatprep.subr.bf16.mxu0 %v4396
  %4739 = vmatpush1.bf16.msra.mxu0 %v4395
  %4740 = vmatprep.subr.bf16.mxu0 %v4410
  %4741 = vmatpush1.bf16.msra.mxu0 %v4409
  %4742 = vmatprep.subr.bf16.mxu0 %v4424
  %4743 = vmatpush1.bf16.msra.mxu0 %v4423
  %4744 = vmatprep.subr.bf16.mxu0 %v4438
  %4745 = vmatpush1.bf16.msra.mxu0 %v4437
  %4746 = vmatprep.subr.bf16.mxu0 %v4558
  %4747 = vmatpush1.bf16.msra.mxu0 %v4555
  %4748 = vmatprep.subr.bf16.mxu0 0
  %4749 = vmatpush1.bf16.msra.mxu0 0
  %4750 = vmatprep.subr.bf16.mxu0 0
  %4751 = vmatpush1.bf16.msra.mxu0 0
  %4752 = vmatprep.subr.bf16.mxu0 0
  %4753 = vmatpush1.bf16.msra.mxu0 0
  %4754 = vmatprep.subr.bf16.mxu0 0
  %4755 = vmatpush1.bf16.msra.mxu0 0
  %4756 = vmatprep.subr.bf16.mxu0 0
  %4757 = vmatpush1.bf16.msra.mxu0 0
  %4758 = vmatprep.subr.bf16.mxu0 0
  %4759 = vmatpush1.bf16.msra.mxu0 0
  %4760 = vmatprep.subr.bf16.mxu0 0
  %4761 = vmatpush1.bf16.msra.mxu0 0
  %4762 = vmatprep.subr.bf16.mxu0 0
  %4763 = vmatpush1.bf16.msra.mxu0 0
  %4764 = vmatprep.subr.bf16.mxu0 0
  %4765 = vmatpush1.bf16.msra.mxu0 0
  %4766 = vmatprep.subr.bf16.mxu0 0
  %4767 = vmatpush1.bf16.msra.mxu0 0
  %4768 = vmatprep.mubr.bf16.mxu0 0
  %4769 = vmatmul.mubr.bf16.gmra.mrb[0].mxu0 %v4528
  %v4770 = vpop.f32.mrb[0].mxu0
  %v4771 = vadd.f32 0.0, %v4770
  %v4772 = vpop.f32.mrb[0].mxu0
  %v4773 = vadd.f32 0.0, %v4772
  %v4774 = vpop.f32.mrb[0].mxu0
  %v4775 = vpop.f32.mrb[0].mxu0
  %4776 = vdwg.mxu0
  %4777 = vmatprep.subr.bf16.mxu0 %v4384
  %4778 = vmatpush1.bf16.msra.mxu0 %v4383
  %4779 = vmatprep.subr.bf16.mxu0 %v4398
  %4780 = vmatpush1.bf16.msra.mxu0 %v4397
  %4781 = vmatprep.subr.bf16.mxu0 %v4412
  %4782 = vmatpush1.bf16.msra.mxu0 %v4411
  %4783 = vmatprep.subr.bf16.mxu0 %v4426
  %4784 = vmatpush1.bf16.msra.mxu0 %v4425
  %4785 = vmatprep.subr.bf16.mxu0 %v4440
  %4786 = vmatpush1.bf16.msra.mxu0 %v4439
  %4787 = vmatprep.subr.bf16.mxu0 %v4564
  %4788 = vmatpush1.bf16.msra.mxu0 %v4561
  %4789 = vmatprep.subr.bf16.mxu0 0
  %4790 = vmatpush1.bf16.msra.mxu0 0
  %4791 = vmatprep.subr.bf16.mxu0 0
  %4792 = vmatpush1.bf16.msra.mxu0 0
  %4793 = vmatprep.subr.bf16.mxu0 0
  %4794 = vmatpush1.bf16.msra.mxu0 0
  %4795 = vmatprep.subr.bf16.mxu0 0
  %4796 = vmatpush1.bf16.msra.mxu0 0
  %4797 = vmatprep.subr.bf16.mxu0 0
  %4798 = vmatpush1.bf16.msra.mxu0 0
  %4799 = vmatprep.subr.bf16.mxu0 0
  %4800 = vmatpush1.bf16.msra.mxu0 0
  %4801 = vmatprep.subr.bf16.mxu0 0
  %4802 = vmatpush1.bf16.msra.mxu0 0
  %4803 = vmatprep.subr.bf16.mxu0 0
  %4804 = vmatpush1.bf16.msra.mxu0 0
  %4805 = vmatprep.subr.bf16.mxu0 0
  %4806 = vmatpush1.bf16.msra.mxu0 0
  %4807 = vmatprep.subr.bf16.mxu0 0
  %4808 = vmatpush1.bf16.msra.mxu0 0
  %4809 = vmatprep.mubr.bf16.mxu0 0
  %4810 = vmatmul.mubr.bf16.gmra.mrb[0].mxu0 %v4528
  %v4811 = vpop.f32.mrb[0].mxu0
  %v4812 = vadd.f32 0.0, %v4811
  %v4813 = vpop.f32.mrb[0].mxu0
  %v4814 = vadd.f32 0.0, %v4813
  %v4815 = vpop.f32.mrb[0].mxu0
  %v4816 = vpop.f32.mrb[0].mxu0
  %4817 = vdwg.mxu0
  %4818 = vmatprep.subr.bf16.mxu0 %v4386
  %4819 = vmatpush1.bf16.msra.mxu0 %v4385
  %4820 = vmatprep.subr.bf16.mxu0 %v4400
  %4821 = vmatpush1.bf16.msra.mxu0 %v4399
  %4822 = vmatprep.subr.bf16.mxu0 %v4414
  %4823 = vmatpush1.bf16.msra.mxu0 %v4413
  %4824 = vmatprep.subr.bf16.mxu0 %v4428
  %4825 = vmatpush1.bf16.msra.mxu0 %v4427
  %4826 = vmatprep.subr.bf16.mxu0 %v4442
  %4827 = vmatpush1.bf16.msra.mxu0 %v4441
  %4828 = vmatprep.subr.bf16.mxu0 %v4570
  %4829 = vmatpush1.bf16.msra.mxu0 %v4567
  %4830 = vmatprep.subr.bf16.mxu0 0
  %4831 = vmatpush1.bf16.msra.mxu0 0
  %4832 = vmatprep.subr.bf16.mxu0 0
  %4833 = vmatpush1.bf16.msra.mxu0 0
  %4834 = vmatprep.subr.bf16.mxu0 0
  %4835 = vmatpush1.bf16.msra.mxu0 0
  %4836 = vmatprep.subr.bf16.mxu0 0
  %4837 = vmatpush1.bf16.msra.mxu0 0
  %4838 = vmatprep.subr.bf16.mxu0 0
  %4839 = vmatpush1.bf16.msra.mxu0 0
  %4840 = vmatprep.subr.bf16.mxu0 0
  %4841 = vmatpush1.bf16.msra.mxu0 0
  %4842 = vmatprep.subr.bf16.mxu0 0
  %4843 = vmatpush1.bf16.msra.mxu0 0
  %4844 = vmatprep.subr.bf16.mxu0 0
  %4845 = vmatpush1.bf16.msra.mxu0 0
  %4846 = vmatprep.subr.bf16.mxu0 0
  %4847 = vmatpush1.bf16.msra.mxu0 0
  %4848 = vmatprep.subr.bf16.mxu0 0
  %4849 = vmatpush1.bf16.msra.mxu0 0
  %4850 = vmatprep.mubr.bf16.mxu0 0
  %4851 = vmatmul.mubr.bf16.gmra.mrb[0].mxu0 %v4528
  %v4852 = vpop.f32.mrb[0].mxu0
  %v4853 = vadd.f32 0.0, %v4852
  %v4854 = vpop.f32.mrb[0].mxu0
  %v4855 = vadd.f32 0.0, %v4854
  %v4856 = vpop.f32.mrb[0].mxu0
  %v4857 = vpop.f32.mrb[0].mxu0
  %4858 = vdwg.mxu0
  %4861 = vrot.lane.b32.xlu0 %v1724, 104
  %v4862 = vpop.permute.xlu0 %4861
  %4863 = vrot.lane.b32.xlu0 %v1726, 104
  %v4864 = vpop.permute.xlu0 %4863
  %vm4865 = vcmask 850944
  %v4866 = vsel %vm4865, %v4862, %v4864
  %4869 = vrot.lane.b32.xlu0 %v1724, 46
  %v4870 = vpop.permute.xlu0 %4869
  %4871 = vrot.lane.b32.xlu0 %v1726, 46
  %v4872 = vpop.permute.xlu0 %4871
  %vm4873 = vcmask 375808
  %v4874 = vsel %vm4873, %v4870, %v4872
  %4878 = vrot.lane.b32.xlu0 %v1724, 116
  %v4879 = vpop.permute.xlu0 %4878
  %4880 = vrot.lane.b32.xlu0 %v1726, 116
  %v4881 = vpop.permute.xlu0 %4880
  %v4882 = vsel %vm2986, %v4879, %v4881
  %4885 = vrot.lane.b32.xlu0 %v1724, 58
  %v4886 = vpop.permute.xlu0 %4885
  %4887 = vrot.lane.b32.xlu0 %v1726, 58
  %v4888 = vpop.permute.xlu0 %4887
  %v4889 = vsel %vm2994, %v4886, %v4888
  %4893 = vrot.lane.b32.xlu0 %v1724, 70
  %v4894 = vpop.permute.xlu0 %4893
  %4895 = vrot.lane.b32.xlu0 %v1726, 70
  %v4896 = vpop.permute.xlu0 %4895
  %v4897 = vsel %vm1531, %v4894, %v4896
  %4901 = vrot.lane.b32.xlu0 %v1724, 12
  %v4902 = vpop.permute.xlu0 %4901
  %4903 = vrot.lane.b32.xlu0 %v1726, 12
  %v4904 = vpop.permute.xlu0 %4903
  %v4905 = vsel %vm3011, %v4902, %v4904
  %4908 = vrot.lane.b32.xlu0 %v1724, 82
  %v4909 = vpop.permute.xlu0 %4908
  %4910 = vrot.lane.b32.xlu0 %v1726, 82
  %v4911 = vpop.permute.xlu0 %4910
  %v4912 = vsel %vm3019, %v4909, %v4911
  %4916 = vrot.lane.b32.xlu0 %v1724, 24
  %v4917 = vpop.permute.xlu0 %4916
  %4918 = vrot.lane.b32.xlu0 %v1726, 24
  %v4919 = vpop.permute.xlu0 %4918
  %v4920 = vsel %vm3028, %v4917, %v4919
  %v4923 = vsel %vm1531, %v4864, %v4870
  %v4924 = vsel %vm3011, %v4872, %v4882
  %v4925 = vsel %vm3019, %v4881, %v4886
  %v4926 = vsel %vm3028, %v4888, %v1724
  %v4927 = vsel %vm3036, %v1726, %v4894
  %v4928 = vsel %vm3045, %v4896, %v4902
  %v4929 = vsel %vm3055, %v4905, %v4909
  %v4930 = vsel %vm3057, %v4911, %v4917
  %v4931 = vmul.f32 %v4607, %v4866
  %v4932 = vmul.f32 %v4609, %v4923
  %v4933 = vmul.f32 %v4648, %v4874
  %v4934 = vmul.f32 %v4650, %v4924
  %v4935 = vmul.f32 %v4689, %v4925
  %v4936 = vmul.f32 %v4691, %v4889
  %v4937 = vmul.f32 %v4730, %v4926
  %v4938 = vmul.f32 %v4732, %v4927
  %v4939 = vmul.f32 %v4771, %v4897
  %v4940 = vmul.f32 %v4773, %v4928
  %v4941 = vmul.f32 %v4812, %v4929
  %v4942 = vmul.f32 %v4814, %v4912
  %v4943 = vmul.f32 %v4853, %v4930
  %v4944 = vmul.f32 %v4855, %v4920
  %v4945 = vpack.c.bf16 %v4931, %v4931
  %v4946 = vpack.c.bf16 %v4932, %v4932
  %v4947 = vpack.c.bf16 %v4933, %v4933
  %v4948 = vpack.c.bf16 %v4934, %v4934
  %v4949 = vpack.c.bf16 %v4935, %v4935
  %v4950 = vpack.c.bf16 %v4936, %v4936
  %v4951 = vpack.c.bf16 %v4937, %v4937
  %v4952 = vpack.c.bf16 %v4938, %v4938
  %v4953 = vpack.c.bf16 %v4939, %v4939
  %v4954 = vpack.c.bf16 %v4940, %v4940
  %v4955 = vpack.c.bf16 %v4941, %v4941
  %v4956 = vpack.c.bf16 %v4942, %v4942
  %v4957 = vpack.c.bf16 %v4943, %v4943
  %v4958 = vpack.c.bf16 %v4944, %v4944
  %v5182 = vunpack.c.l.b16 %v558
  %v5183 = vunpack.c.h.b16 %v558
  %v5184 = vunpack.c.l.b16 %v559
  %v5185 = vunpack.c.h.b16 %v559
  %v5186 = vunpack.c.l.b16 %v560
  %v5187 = vunpack.c.h.b16 %v560
  %v5188 = vunpack.c.l.b16 %v561
  %v5189 = vunpack.c.h.b16 %v561
  %v5190 = vunpack.c.l.b16 %v562
  %v5191 = vunpack.c.h.b16 %v562
  %v5192 = vunpack.c.l.b16 %v563
  %v5193 = vunpack.c.h.b16 %v563
  %v5194 = vunpack.c.l.b16 %v564
  %v5195 = vunpack.c.h.b16 %v564
  %v5196 = vunpack.c.l.b16 %v565
  %v5197 = vunpack.c.h.b16 %v565
  %v5198 = vunpack.c.l.b16 %v566
  %v5199 = vunpack.c.h.b16 %v566
  %v5200 = vunpack.c.l.b16 %v567
  %v5201 = vunpack.c.h.b16 %v567
  %v5202 = vunpack.c.l.b16 %v568
  %v5203 = vunpack.c.h.b16 %v568
  %v5204 = vunpack.c.l.b16 %v569
  %v5205 = vunpack.c.h.b16 %v569
  %v5206 = vunpack.c.l.b16 %v570
  %v5207 = vunpack.c.h.b16 %v570
  %v5208 = vunpack.c.l.b16 %v571
  %v5209 = vunpack.c.h.b16 %v571
  %v5210 = vunpack.c.l.b16 %v572
  %v5211 = vunpack.c.h.b16 %v572
  %v5212 = vunpack.c.l.b16 %v573
  %v5213 = vunpack.c.h.b16 %v573
  %v5214 = vunpack.c.l.b16 %v574
  %v5215 = vunpack.c.h.b16 %v574
  %v5216 = vunpack.c.l.b16 %v575
  %v5217 = vunpack.c.h.b16 %v575
  %v5218 = vunpack.c.l.b16 %v576
  %v5219 = vunpack.c.h.b16 %v576
  %v5220 = vunpack.c.l.b16 %v577
  %v5221 = vunpack.c.h.b16 %v577
  %v5222 = vunpack.c.l.b16 %v578
  %v5223 = vunpack.c.h.b16 %v578
  %v5224 = vunpack.c.l.b16 %v579
  %v5225 = vunpack.c.h.b16 %v579
  %v5226 = vunpack.c.l.b16 %v580
  %v5227 = vunpack.c.h.b16 %v580
  %v5228 = vunpack.c.l.b16 %v581
  %v5229 = vunpack.c.h.b16 %v581
  %v5230 = vunpack.c.l.b16 %v582
  %v5231 = vunpack.c.h.b16 %v582
  %v5232 = vunpack.c.l.b16 %v583
  %v5233 = vunpack.c.h.b16 %v583
  %v5234 = vunpack.c.l.b16 %v584
  %v5235 = vunpack.c.h.b16 %v584
  %v5236 = vunpack.c.l.b16 %v585
  %v5237 = vunpack.c.h.b16 %v585
  %v5238 = vunpack.c.l.b16 %v586
  %v5239 = vunpack.c.h.b16 %v586
  %v5240 = vunpack.c.l.b16 %v587
  %v5241 = vunpack.c.h.b16 %v587
  %v5242 = vunpack.c.l.b16 %v588
  %v5243 = vunpack.c.h.b16 %v588
  %v5244 = vunpack.c.l.b16 %v589
  %v5245 = vunpack.c.h.b16 %v589
  %v5246 = vunpack.c.l.b16 %v590
  %v5247 = vunpack.c.h.b16 %v590
  %v5248 = vunpack.c.l.b16 %v591
  %v5249 = vunpack.c.h.b16 %v591
  %v5250 = vunpack.c.l.b16 %v592
  %v5251 = vunpack.c.h.b16 %v592
  %v5252 = vunpack.c.l.b16 %v593
  %v5253 = vunpack.c.h.b16 %v593
  %v5254 = vunpack.c.l.b16 %v594
  %v5255 = vunpack.c.h.b16 %v594
  %v5256 = vunpack.c.l.b16 %v595
  %v5257 = vunpack.c.h.b16 %v595
  %v5258 = vunpack.c.l.b16 %v596
  %v5259 = vunpack.c.h.b16 %v596
  %v5260 = vunpack.c.l.b16 %v597
  %v5261 = vunpack.c.h.b16 %v597
  %v5262 = vunpack.c.l.b16 %v598
  %v5263 = vunpack.c.h.b16 %v598
  %v5264 = vunpack.c.l.b16 %v599
  %v5265 = vunpack.c.h.b16 %v599
  %v5266 = vunpack.c.l.b16 %v600
  %v5267 = vunpack.c.h.b16 %v600
  %v5268 = vunpack.c.l.b16 %v601
  %v5269 = vunpack.c.h.b16 %v601
  %v5270 = vunpack.c.l.b16 %v602
  %v5271 = vunpack.c.h.b16 %v602
  %v5272 = vunpack.c.l.b16 %v603
  %v5273 = vunpack.c.h.b16 %v603
  %v5274 = vunpack.c.l.b16 %v604
  %v5275 = vunpack.c.h.b16 %v604
  %v5276 = vunpack.c.l.b16 %v605
  %v5277 = vunpack.c.h.b16 %v605
  %v5278 = vunpack.c.l.b16 %v606
  %v5279 = vunpack.c.h.b16 %v606
  %v5280 = vunpack.c.l.b16 %v607
  %v5281 = vunpack.c.h.b16 %v607
  %v5282 = vunpack.c.l.b16 %v608
  %v5283 = vunpack.c.h.b16 %v608
  %v5284 = vunpack.c.l.b16 %v609
  %v5285 = vunpack.c.h.b16 %v609
  %v5286 = vunpack.c.l.b16 %v610
  %v5287 = vunpack.c.h.b16 %v610
  %v5288 = vunpack.c.l.b16 %v611
  %v5289 = vunpack.c.h.b16 %v611
  %v5290 = vunpack.c.l.b16 %v612
  %v5291 = vunpack.c.h.b16 %v612
  %v5292 = vunpack.c.l.b16 %v613
  %v5293 = vunpack.c.h.b16 %v613
  %v5294 = vunpack.c.l.b16 %v614
  %v5295 = vunpack.c.h.b16 %v614
  %v5296 = vunpack.c.l.b16 %v615
  %v5297 = vunpack.c.h.b16 %v615
  %v5298 = vunpack.c.l.b16 %v616
  %v5299 = vunpack.c.h.b16 %v616
  %v5300 = vunpack.c.l.b16 %v617
  %v5301 = vunpack.c.h.b16 %v617
  %v5302 = vunpack.c.l.b16 %v618
  %v5303 = vunpack.c.h.b16 %v618
  %v5304 = vunpack.c.l.b16 %v619
  %v5305 = vunpack.c.h.b16 %v619
  %v5306 = vunpack.c.l.b16 %v620
  %v5307 = vunpack.c.h.b16 %v620
  %v5308 = vunpack.c.l.b16 %v621
  %v5309 = vunpack.c.h.b16 %v621
  %v5310 = vunpack.c.l.b16 %v622
  %v5311 = vunpack.c.h.b16 %v622
  %v5312 = vunpack.c.l.b16 %v623
  %v5313 = vunpack.c.h.b16 %v623
  %v5314 = vunpack.c.l.b16 %v624
  %v5315 = vunpack.c.h.b16 %v624
  %v5316 = vunpack.c.l.b16 %v625
  %v5317 = vunpack.c.h.b16 %v625
  %v5318 = vunpack.c.l.b16 %v626
  %v5319 = vunpack.c.h.b16 %v626
  %v5320 = vunpack.c.l.b16 %v627
  %v5321 = vunpack.c.h.b16 %v627
  %v5322 = vunpack.c.l.b16 %v628
  %v5323 = vunpack.c.h.b16 %v628
  %v5324 = vunpack.c.l.b16 %v629
  %v5325 = vunpack.c.h.b16 %v629
  %v5326 = vunpack.c.l.b16 %v630
  %v5327 = vunpack.c.h.b16 %v630
  %v5328 = vunpack.c.l.b16 %v631
  %v5329 = vunpack.c.h.b16 %v631
  %v5330 = vunpack.c.l.b16 %v632
  %v5331 = vunpack.c.h.b16 %v632
  %v5332 = vunpack.c.l.b16 %v633
  %v5333 = vunpack.c.h.b16 %v633
  %v5334 = vunpack.c.l.b16 %v634
  %v5335 = vunpack.c.h.b16 %v634
  %v5336 = vunpack.c.l.b16 %v635
  %v5337 = vunpack.c.h.b16 %v635
  %v5338 = vunpack.c.l.b16 %v636
  %v5339 = vunpack.c.h.b16 %v636
  %v5340 = vunpack.c.l.b16 %v637
  %v5341 = vunpack.c.h.b16 %v637
  %v5342 = vunpack.c.l.b16 %v638
  %v5343 = vunpack.c.h.b16 %v638
  %v5344 = vunpack.c.l.b16 %v639
  %v5345 = vunpack.c.h.b16 %v639
  %v5346 = vunpack.c.l.b16 %v640
  %v5347 = vunpack.c.h.b16 %v640
  %v5348 = vunpack.c.l.b16 %v641
  %v5349 = vunpack.c.h.b16 %v641
  %v5350 = vunpack.c.l.b16 %v642
  %v5351 = vunpack.c.h.b16 %v642
  %v5352 = vunpack.c.l.b16 %v643
  %v5353 = vunpack.c.h.b16 %v643
  %v5354 = vunpack.c.l.b16 %v644
  %v5355 = vunpack.c.h.b16 %v644
  %v5356 = vunpack.c.l.b16 %v645
  %v5357 = vunpack.c.h.b16 %v645
  %v5358 = vunpack.c.l.b16 %v646
  %v5359 = vunpack.c.h.b16 %v646
  %v5360 = vunpack.c.l.b16 %v647
  %v5361 = vunpack.c.h.b16 %v647
  %v5362 = vunpack.c.l.b16 %v648
  %v5363 = vunpack.c.h.b16 %v648
  %v5364 = vunpack.c.l.b16 %v649
  %v5365 = vunpack.c.h.b16 %v649
  %v5366 = vunpack.c.l.b16 %v650
  %v5367 = vunpack.c.h.b16 %v650
  %v5368 = vunpack.c.l.b16 %v651
  %v5369 = vunpack.c.h.b16 %v651
  %v5370 = vunpack.c.l.b16 %v652
  %v5371 = vunpack.c.h.b16 %v652
  %v5372 = vunpack.c.l.b16 %v653
  %v5373 = vunpack.c.h.b16 %v653
  %v5374 = vunpack.c.l.b16 %v654
  %v5375 = vunpack.c.h.b16 %v654
  %v5376 = vunpack.c.l.b16 %v655
  %v5377 = vunpack.c.h.b16 %v655
  %v5378 = vunpack.c.l.b16 %v656
  %v5379 = vunpack.c.h.b16 %v656
  %v5380 = vunpack.c.l.b16 %v657
  %v5381 = vunpack.c.h.b16 %v657
  %v5382 = vunpack.c.l.b16 %v658
  %v5383 = vunpack.c.h.b16 %v658
  %v5384 = vunpack.c.l.b16 %v659
  %v5385 = vunpack.c.h.b16 %v659
  %v5386 = vunpack.c.l.b16 %v660
  %v5387 = vunpack.c.h.b16 %v660
  %v5388 = vunpack.c.l.b16 %v661
  %v5389 = vunpack.c.h.b16 %v661
  %v5390 = vunpack.c.l.b16 %v662
  %v5391 = vunpack.c.h.b16 %v662
  %v5392 = vunpack.c.l.b16 %v663
  %v5393 = vunpack.c.h.b16 %v663
  %v5394 = vunpack.c.l.b16 %v664
  %v5395 = vunpack.c.h.b16 %v664
  %v5396 = vunpack.c.l.b16 %v665
  %v5397 = vunpack.c.h.b16 %v665
  %v5398 = vunpack.c.l.b16 %v666
  %v5399 = vunpack.c.h.b16 %v666
  %v5400 = vunpack.c.l.b16 %v667
  %v5401 = vunpack.c.h.b16 %v667
  %v5402 = vunpack.c.l.b16 %v668
  %v5403 = vunpack.c.h.b16 %v668
  %v5404 = vunpack.c.l.b16 %v669
  %v5405 = vunpack.c.h.b16 %v669
  %v5406 = vunpack.c.l.b16 %v670
  %v5407 = vunpack.c.h.b16 %v670
  %v5408 = vunpack.c.l.b16 %v671
  %v5409 = vunpack.c.h.b16 %v671
  %v5410 = vunpack.c.l.b16 %v672
  %v5411 = vunpack.c.h.b16 %v672
  %v5412 = vunpack.c.l.b16 %v673
  %v5413 = vunpack.c.h.b16 %v673
  %v5414 = vunpack.c.l.b16 %v674
  %v5415 = vunpack.c.h.b16 %v674
  %v5416 = vunpack.c.l.b16 %v675
  %v5417 = vunpack.c.h.b16 %v675
  %v5418 = vunpack.c.l.b16 %v676
  %v5419 = vunpack.c.h.b16 %v676
  %v5420 = vunpack.c.l.b16 %v677
  %v5421 = vunpack.c.h.b16 %v677
  %v5422 = vunpack.c.l.b16 %v678
  %v5423 = vunpack.c.h.b16 %v678
  %v5424 = vunpack.c.l.b16 %v679
  %v5425 = vunpack.c.h.b16 %v679
  %v5426 = vunpack.c.l.b16 %v680
  %v5427 = vunpack.c.h.b16 %v680
  %v5428 = vunpack.c.l.b16 %v681
  %v5429 = vunpack.c.h.b16 %v681
  %v5430 = vunpack.c.l.b16 %v682
  %v5431 = vunpack.c.h.b16 %v682
  %v5432 = vunpack.c.l.b16 %v683
  %v5433 = vunpack.c.h.b16 %v683
  %v5434 = vunpack.c.l.b16 %v684
  %v5435 = vunpack.c.h.b16 %v684
  %v5436 = vunpack.c.l.b16 %v685
  %v5437 = vunpack.c.h.b16 %v685
  %v5438 = vunpack.c.l.b16 %v686
  %v5439 = vunpack.c.h.b16 %v686
  %v5440 = vunpack.c.l.b16 %v687
  %v5441 = vunpack.c.h.b16 %v687
  %v5442 = vunpack.c.l.b16 %v688
  %v5443 = vunpack.c.h.b16 %v688
  %v5444 = vunpack.c.l.b16 %v689
  %v5445 = vunpack.c.h.b16 %v689
  %v5446 = vunpack.c.l.b16 %v690
  %v5447 = vunpack.c.h.b16 %v690
  %v5448 = vunpack.c.l.b16 %v691
  %v5449 = vunpack.c.h.b16 %v691
  %v5450 = vunpack.c.l.b16 %v692
  %v5451 = vunpack.c.h.b16 %v692
  %v5452 = vunpack.c.l.b16 %v693
  %v5453 = vunpack.c.h.b16 %v693
  %v5454 = vunpack.c.l.b16 %v694
  %v5455 = vunpack.c.h.b16 %v694
  %v5456 = vunpack.c.l.b16 %v695
  %v5457 = vunpack.c.h.b16 %v695
  %v5458 = vunpack.c.l.b16 %v696
  %v5459 = vunpack.c.h.b16 %v696
  %v5460 = vunpack.c.l.b16 %v697
  %v5461 = vunpack.c.h.b16 %v697
  %v5462 = vunpack.c.l.b16 %v698
  %v5463 = vunpack.c.h.b16 %v698
  %v5464 = vunpack.c.l.b16 %v699
  %v5465 = vunpack.c.h.b16 %v699
  %v5466 = vunpack.c.l.b16 %v700
  %v5467 = vunpack.c.h.b16 %v700
  %v5468 = vunpack.c.l.b16 %v701
  %v5469 = vunpack.c.h.b16 %v701
  %v5470 = vunpack.c.l.b16 %v702
  %v5471 = vunpack.c.h.b16 %v702
  %v5472 = vunpack.c.l.b16 %v703
  %v5473 = vunpack.c.h.b16 %v703
  %v5474 = vunpack.c.l.b16 %v704
  %v5475 = vunpack.c.h.b16 %v704
  %v5476 = vunpack.c.l.b16 %v705
  %v5477 = vunpack.c.h.b16 %v705
  %v5478 = vunpack.c.l.b16 %v706
  %v5479 = vunpack.c.h.b16 %v706
  %v5480 = vunpack.c.l.b16 %v707
  %v5481 = vunpack.c.h.b16 %v707
  %v5482 = vunpack.c.l.b16 %v708
  %v5483 = vunpack.c.h.b16 %v708
  %v5484 = vunpack.c.l.b16 %v709
  %v5485 = vunpack.c.h.b16 %v709
  %v5486 = vunpack.c.l.b16 %v710
  %v5487 = vunpack.c.h.b16 %v710
  %v5488 = vunpack.c.l.b16 %v711
  %v5489 = vunpack.c.h.b16 %v711
  %v5490 = vunpack.c.l.b16 %v712
  %v5491 = vunpack.c.h.b16 %v712
  %v5492 = vunpack.c.l.b16 %v713
  %v5493 = vunpack.c.h.b16 %v713
  %v5494 = vunpack.c.l.b16 %v714
  %v5495 = vunpack.c.h.b16 %v714
  %v5496 = vunpack.c.l.b16 %v715
  %v5497 = vunpack.c.h.b16 %v715
  %v5498 = vunpack.c.l.b16 %v716
  %v5499 = vunpack.c.h.b16 %v716
  %v5500 = vunpack.c.l.b16 %v717
  %v5501 = vunpack.c.h.b16 %v717
  %v5502 = vunpack.c.l.b16 %v718
  %v5503 = vunpack.c.h.b16 %v718
  %v5504 = vunpack.c.l.b16 %v719
  %v5505 = vunpack.c.h.b16 %v719
  %v5506 = vunpack.c.l.b16 %v720
  %v5507 = vunpack.c.h.b16 %v720
  %v5508 = vunpack.c.l.b16 %v721
  %v5509 = vunpack.c.h.b16 %v721
  %v5510 = vunpack.c.l.b16 %v722
  %v5511 = vunpack.c.h.b16 %v722
  %v5512 = vunpack.c.l.b16 %v723
  %v5513 = vunpack.c.h.b16 %v723
  %v5514 = vunpack.c.l.b16 %v724
  %v5515 = vunpack.c.h.b16 %v724
  %v5516 = vunpack.c.l.b16 %v725
  %v5517 = vunpack.c.h.b16 %v725
  %v5518 = vunpack.c.l.b16 %v726
  %v5519 = vunpack.c.h.b16 %v726
  %v5520 = vunpack.c.l.b16 %v727
  %v5521 = vunpack.c.h.b16 %v727
  %v5522 = vunpack.c.l.b16 %v728
  %v5523 = vunpack.c.h.b16 %v728
  %v5524 = vunpack.c.l.b16 %v729
  %v5525 = vunpack.c.h.b16 %v729
  %v5526 = vunpack.c.l.b16 %v730
  %v5527 = vunpack.c.h.b16 %v730
  %v5528 = vunpack.c.l.b16 %v731
  %v5529 = vunpack.c.h.b16 %v731
  %v5530 = vunpack.c.l.b16 %v732
  %v5531 = vunpack.c.h.b16 %v732
  %v5532 = vunpack.c.l.b16 %v733
  %v5533 = vunpack.c.h.b16 %v733
  %v5534 = vunpack.c.l.b16 %v734
  %v5535 = vunpack.c.h.b16 %v734
  %v5536 = vunpack.c.l.b16 %v735
  %v5537 = vunpack.c.h.b16 %v735
  %v5538 = vunpack.c.l.b16 %v736
  %v5539 = vunpack.c.h.b16 %v736
  %v5540 = vunpack.c.l.b16 %v737
  %v5541 = vunpack.c.h.b16 %v737
  %v5542 = vunpack.c.l.b16 %v738
  %v5543 = vunpack.c.h.b16 %v738
  %v5544 = vunpack.c.l.b16 %v739
  %v5545 = vunpack.c.h.b16 %v739
  %v5546 = vunpack.c.l.b16 %v740
  %v5547 = vunpack.c.h.b16 %v740
  %v5548 = vunpack.c.l.b16 %v741
  %v5549 = vunpack.c.h.b16 %v741
  %v5550 = vunpack.c.l.b16 %v742
  %v5551 = vunpack.c.h.b16 %v742
  %v5552 = vunpack.c.l.b16 %v743
  %v5553 = vunpack.c.h.b16 %v743
  %v5554 = vunpack.c.l.b16 %v744
  %v5555 = vunpack.c.h.b16 %v744
  %v5556 = vunpack.c.l.b16 %v745
  %v5557 = vunpack.c.h.b16 %v745
  %v5558 = vunpack.c.l.b16 %v746
  %v5559 = vunpack.c.h.b16 %v746
  %v5560 = vunpack.c.l.b16 %v747
  %v5561 = vunpack.c.h.b16 %v747
  %v5562 = vunpack.c.l.b16 %v748
  %v5563 = vunpack.c.h.b16 %v748
  %v5564 = vunpack.c.l.b16 %v749
  %v5565 = vunpack.c.h.b16 %v749
  %v5566 = vunpack.c.l.b16 %v750
  %v5567 = vunpack.c.h.b16 %v750
  %v5568 = vunpack.c.l.b16 %v751
  %v5569 = vunpack.c.h.b16 %v751
  %v5570 = vunpack.c.l.b16 %v752
  %v5571 = vunpack.c.h.b16 %v752
  %v5572 = vunpack.c.l.b16 %v753
  %v5573 = vunpack.c.h.b16 %v753
  %v5574 = vunpack.c.l.b16 %v754
  %v5575 = vunpack.c.h.b16 %v754
  %v5576 = vunpack.c.l.b16 %v755
  %v5577 = vunpack.c.h.b16 %v755
  %v5578 = vunpack.c.l.b16 %v756
  %v5579 = vunpack.c.h.b16 %v756
  %v5580 = vunpack.c.l.b16 %v757
  %v5581 = vunpack.c.h.b16 %v757
  %v5582 = vunpack.c.l.b16 %v758
  %v5583 = vunpack.c.h.b16 %v758
  %v5584 = vunpack.c.l.b16 %v759
  %v5585 = vunpack.c.h.b16 %v759
  %v5586 = vunpack.c.l.b16 %v760
  %v5587 = vunpack.c.h.b16 %v760
  %v5588 = vunpack.c.l.b16 %v761
  %v5589 = vunpack.c.h.b16 %v761
  %v5590 = vunpack.c.l.b16 %v762
  %v5591 = vunpack.c.h.b16 %v762
  %v5592 = vunpack.c.l.b16 %v763
  %v5593 = vunpack.c.h.b16 %v763
  %v5594 = vunpack.c.l.b16 %v764
  %v5595 = vunpack.c.h.b16 %v764
  %v5596 = vunpack.c.l.b16 %v765
  %v5597 = vunpack.c.h.b16 %v765
  %v5598 = vunpack.c.l.b16 %v766
  %v5599 = vunpack.c.h.b16 %v766
  %v5600 = vunpack.c.l.b16 %v767
  %v5601 = vunpack.c.h.b16 %v767
  %v5602 = vunpack.c.l.b16 %v768
  %v5603 = vunpack.c.h.b16 %v768
  %v5604 = vunpack.c.l.b16 %v769
  %v5605 = vunpack.c.h.b16 %v769
  %v5606 = vunpack.c.l.b16 %v770
  %v5607 = vunpack.c.h.b16 %v770
  %v5608 = vunpack.c.l.b16 %v771
  %v5609 = vunpack.c.h.b16 %v771
  %v5610 = vunpack.c.l.b16 %v772
  %v5611 = vunpack.c.h.b16 %v772
  %v5612 = vunpack.c.l.b16 %v773
  %v5613 = vunpack.c.h.b16 %v773
  %v5614 = vunpack.c.l.b16 %v774
  %v5615 = vunpack.c.h.b16 %v774
  %v5616 = vunpack.c.l.b16 %v775
  %v5617 = vunpack.c.h.b16 %v775
  %v5618 = vunpack.c.l.b16 %v776
  %v5619 = vunpack.c.h.b16 %v776
  %v5620 = vunpack.c.l.b16 %v777
  %v5621 = vunpack.c.h.b16 %v777
  %v5622 = vunpack.c.l.b16 %v778
  %v5623 = vunpack.c.h.b16 %v778
  %v5624 = vunpack.c.l.b16 %v779
  %v5625 = vunpack.c.h.b16 %v779
  %v5626 = vunpack.c.l.b16 %v780
  %v5627 = vunpack.c.h.b16 %v780
  %v5628 = vpack.c.b16 %v5184, %v5182
  %v5629 = vpack.c.b16 %v5185, %v5183
  %v5630 = vpack.c.b16 %v5188, %v5186
  %v5631 = vpack.c.b16 %v5189, %v5187
  %v5632 = vpack.c.b16 %v5192, %v5190
  %v5633 = vpack.c.b16 %v5193, %v5191
  %v5634 = vpack.c.b16 %v5196, %v5194
  %v5635 = vpack.c.b16 %v5197, %v5195
  %v5636 = vpack.c.b16 %v5200, %v5198
  %v5637 = vpack.c.b16 %v5201, %v5199
  %v5638 = vpack.c.b16 %v5204, %v5202
  %v5639 = vpack.c.b16 %v5205, %v5203
  %v5640 = vpack.c.b16 %v5208, %v5206
  %v5641 = vpack.c.b16 %v5209, %v5207
  %v5642 = vpack.c.b16 %v5212, %v5210
  %v5643 = vpack.c.b16 %v5213, %v5211
  %v5644 = vpack.c.b16 %v5216, %v5214
  %v5645 = vpack.c.b16 %v5217, %v5215
  %v5646 = vpack.c.b16 %v5220, %v5218
  %v5647 = vpack.c.b16 %v5221, %v5219
  %v5648 = vpack.c.b16 %v5224, %v5222
  %v5649 = vpack.c.b16 %v5225, %v5223
  %v5650 = vpack.c.b16 %v5228, %v5226
  %v5651 = vpack.c.b16 %v5229, %v5227
  %v5652 = vpack.c.b16 %v5232, %v5230
  %v5653 = vpack.c.b16 %v5233, %v5231
  %v5654 = vpack.c.b16 %v5236, %v5234
  %v5655 = vpack.c.b16 %v5237, %v5235
  %v5656 = vpack.c.b16 %v5240, %v5238
  %v5657 = vpack.c.b16 %v5241, %v5239
  %v5658 = vpack.c.b16 %v5244, %v5242
  %v5659 = vpack.c.b16 %v5245, %v5243
  %v5660 = vpack.c.b16 %v5248, %v5246
  %v5661 = vpack.c.b16 %v5249, %v5247
  %v5662 = vpack.c.b16 %v5252, %v5250
  %v5663 = vpack.c.b16 %v5253, %v5251
  %v5664 = vpack.c.b16 %v5256, %v5254
  %v5665 = vpack.c.b16 %v5257, %v5255
  %v5666 = vpack.c.b16 %v5260, %v5258
  %v5667 = vpack.c.b16 %v5261, %v5259
  %v5668 = vpack.c.b16 %v5264, %v5262
  %v5669 = vpack.c.b16 %v5265, %v5263
  %v5670 = vpack.c.b16 %v5268, %v5266
  %v5671 = vpack.c.b16 %v5269, %v5267
  %v5672 = vpack.c.b16 %v5272, %v5270
  %v5673 = vpack.c.b16 %v5273, %v5271
  %v5674 = vpack.c.b16 %v5276, %v5274
  %v5675 = vpack.c.b16 %v5277, %v5275
  %v5676 = vpack.c.b16 %v5280, %v5278
  %v5677 = vpack.c.b16 %v5281, %v5279
  %v5678 = vpack.c.b16 %v5284, %v5282
  %v5679 = vpack.c.b16 %v5285, %v5283
  %v5680 = vpack.c.b16 %v5288, %v5286
  %v5681 = vpack.c.b16 %v5289, %v5287
  %v5682 = vpack.c.b16 %v5292, %v5290
  %v5683 = vpack.c.b16 %v5293, %v5291
  %v5684 = vpack.c.b16 %v5296, %v5294
  %v5685 = vpack.c.b16 %v5297, %v5295
  %v5686 = vpack.c.b16 %v5300, %v5298
  %v5687 = vpack.c.b16 %v5301, %v5299
  %v5688 = vpack.c.b16 %v5304, %v5302
  %v5689 = vpack.c.b16 %v5305, %v5303
  %v5690 = vpack.c.b16 %v5308, %v5306
  %v5691 = vpack.c.b16 %v5309, %v5307
  %v5692 = vpack.c.b16 %v5312, %v5310
  %v5693 = vpack.c.b16 %v5313, %v5311
  %v5694 = vpack.c.b16 %v5316, %v5314
  %v5695 = vpack.c.b16 %v5317, %v5315
  %v5696 = vpack.c.b16 %v5320, %v5318
  %v5697 = vpack.c.b16 %v5321, %v5319
  %v5698 = vpack.c.b16 %v5324, %v5322
  %v5699 = vpack.c.b16 %v5325, %v5323
  %v5700 = vpack.c.b16 %v5328, %v5326
  %v5701 = vpack.c.b16 %v5329, %v5327
  %v5702 = vpack.c.b16 %v5332, %v5330
  %v5703 = vpack.c.b16 %v5333, %v5331
  %v5704 = vpack.c.b16 %v5336, %v5334
  %v5705 = vpack.c.b16 %v5337, %v5335
  %v5706 = vpack.c.b16 %v5340, %v5338
  %v5707 = vpack.c.b16 %v5341, %v5339
  %v5708 = vpack.c.b16 %v5344, %v5342
  %v5709 = vpack.c.b16 %v5345, %v5343
  %v5710 = vpack.c.b16 %v5348, %v5346
  %v5711 = vpack.c.b16 %v5349, %v5347
  %v5712 = vpack.c.b16 %v5352, %v5350
  %v5713 = vpack.c.b16 %v5353, %v5351
  %v5714 = vpack.c.b16 %v5356, %v5354
  %v5715 = vpack.c.b16 %v5357, %v5355
  %v5716 = vpack.c.b16 %v5360, %v5358
  %v5717 = vpack.c.b16 %v5361, %v5359
  %v5718 = vpack.c.b16 %v5364, %v5362
  %v5719 = vpack.c.b16 %v5365, %v5363
  %v5720 = vpack.c.b16 %v5368, %v5366
  %v5721 = vpack.c.b16 %v5369, %v5367
  %v5722 = vpack.c.b16 %v5372, %v5370
  %v5723 = vpack.c.b16 %v5373, %v5371
  %v5724 = vpack.c.b16 %v5376, %v5374
  %v5725 = vpack.c.b16 %v5377, %v5375
  %v5726 = vpack.c.b16 %v5380, %v5378
  %v5727 = vpack.c.b16 %v5381, %v5379
  %v5728 = vpack.c.b16 %v5384, %v5382
  %v5729 = vpack.c.b16 %v5385, %v5383
  %v5730 = vpack.c.b16 %v5388, %v5386
  %v5731 = vpack.c.b16 %v5389, %v5387
  %v5732 = vpack.c.b16 %v5392, %v5390
  %v5733 = vpack.c.b16 %v5393, %v5391
  %v5734 = vpack.c.b16 %v5396, %v5394
  %v5735 = vpack.c.b16 %v5397, %v5395
  %v5736 = vpack.c.b16 %v5400, %v5398
  %v5737 = vpack.c.b16 %v5401, %v5399
  %v5738 = vpack.c.b16 %v5404, %v5402
  %v5739 = vpack.c.b16 %v5405, %v5403
  %v5740 = vpack.c.b16 %v5408, %v5406
  %v5741 = vpack.c.b16 %v5409, %v5407
  %v5742 = vpack.c.b16 %v5412, %v5410
  %v5743 = vpack.c.b16 %v5413, %v5411
  %v5744 = vpack.c.b16 %v5416, %v5414
  %v5745 = vpack.c.b16 %v5417, %v5415
  %v5746 = vpack.c.b16 %v5420, %v5418
  %v5747 = vpack.c.b16 %v5421, %v5419
  %v5748 = vpack.c.b16 %v5424, %v5422
  %v5749 = vpack.c.b16 %v5425, %v5423
  %v5750 = vpack.c.b16 %v5428, %v5426
  %v5751 = vpack.c.b16 %v5429, %v5427
  %v5752 = vpack.c.b16 %v5432, %v5430
  %v5753 = vpack.c.b16 %v5433, %v5431
  %v5754 = vpack.c.b16 %v5436, %v5434
  %v5755 = vpack.c.b16 %v5437, %v5435
  %v5756 = vpack.c.b16 %v5440, %v5438
  %v5757 = vpack.c.b16 %v5441, %v5439
  %v5758 = vpack.c.b16 %v5444, %v5442
  %v5759 = vpack.c.b16 %v5445, %v5443
  %v5760 = vpack.c.b16 %v5448, %v5446
  %v5761 = vpack.c.b16 %v5449, %v5447
  %v5762 = vpack.c.b16 %v5452, %v5450
  %v5763 = vpack.c.b16 %v5453, %v5451
  %v5764 = vpack.c.b16 %v5456, %v5454
  %v5765 = vpack.c.b16 %v5457, %v5455
  %v5766 = vpack.c.b16 %v5460, %v5458
  %v5767 = vpack.c.b16 %v5461, %v5459
  %v5768 = vpack.c.b16 %v5464, %v5462
  %v5769 = vpack.c.b16 %v5465, %v5463
  %v5770 = vpack.c.b16 %v5468, %v5466
  %v5771 = vpack.c.b16 %v5469, %v5467
  %v5772 = vpack.c.b16 %v5472, %v5470
  %v5773 = vpack.c.b16 %v5473, %v5471
  %v5774 = vpack.c.b16 %v5476, %v5474
  %v5775 = vpack.c.b16 %v5477, %v5475
  %v5776 = vpack.c.b16 %v5480, %v5478
  %v5777 = vpack.c.b16 %v5481, %v5479
  %v5778 = vpack.c.b16 %v5484, %v5482
  %v5779 = vpack.c.b16 %v5485, %v5483
  %v5780 = vpack.c.b16 %v5488, %v5486
  %v5781 = vpack.c.b16 %v5489, %v5487
  %v5782 = vpack.c.b16 %v5492, %v5490
  %v5783 = vpack.c.b16 %v5493, %v5491
  %v5784 = vpack.c.b16 %v5496, %v5494
  %v5785 = vpack.c.b16 %v5497, %v5495
  %v5786 = vpack.c.b16 %v5500, %v5498
  %v5787 = vpack.c.b16 %v5501, %v5499
  %v5788 = vpack.c.b16 %v5504, %v5502
  %v5789 = vpack.c.b16 %v5505, %v5503
  %v5790 = vpack.c.b16 %v5508, %v5506
  %v5791 = vpack.c.b16 %v5509, %v5507
  %v5792 = vpack.c.b16 %v5512, %v5510
  %v5793 = vpack.c.b16 %v5513, %v5511
  %v5794 = vpack.c.b16 %v5516, %v5514
  %v5795 = vpack.c.b16 %v5517, %v5515
  %v5796 = vpack.c.b16 %v5520, %v5518
  %v5797 = vpack.c.b16 %v5521, %v5519
  %v5798 = vpack.c.b16 %v5524, %v5522
  %v5799 = vpack.c.b16 %v5525, %v5523
  %v5800 = vpack.c.b16 %v5528, %v5526
  %v5801 = vpack.c.b16 %v5529, %v5527
  %v5802 = vpack.c.b16 %v5532, %v5530
  %v5803 = vpack.c.b16 %v5533, %v5531
  %v5804 = vpack.c.b16 %v5536, %v5534
  %v5805 = vpack.c.b16 %v5537, %v5535
  %v5806 = vpack.c.b16 %v5540, %v5538
  %v5807 = vpack.c.b16 %v5541, %v5539
  %v5808 = vpack.c.b16 %v5544, %v5542
  %v5809 = vpack.c.b16 %v5545, %v5543
  %v5810 = vpack.c.b16 %v5548, %v5546
  %v5811 = vpack.c.b16 %v5549, %v5547
  %v5812 = vpack.c.b16 %v5552, %v5550
  %v5813 = vpack.c.b16 %v5553, %v5551
  %v5814 = vpack.c.b16 %v5556, %v5554
  %v5815 = vpack.c.b16 %v5557, %v5555
  %v5816 = vpack.c.b16 %v5560, %v5558
  %v5817 = vpack.c.b16 %v5561, %v5559
  %v5818 = vpack.c.b16 %v5564, %v5562
  %v5819 = vpack.c.b16 %v5565, %v5563
  %v5820 = vpack.c.b16 %v5568, %v5566
  %v5821 = vpack.c.b16 %v5569, %v5567
  %v5822 = vpack.c.b16 %v5572, %v5570
  %v5823 = vpack.c.b16 %v5573, %v5571
  %v5824 = vpack.c.b16 %v5576, %v5574
  %v5825 = vpack.c.b16 %v5577, %v5575
  %v5826 = vpack.c.b16 %v5580, %v5578
  %v5827 = vpack.c.b16 %v5581, %v5579
  %v5828 = vpack.c.b16 %v5584, %v5582
  %v5829 = vpack.c.b16 %v5585, %v5583
  %v5830 = vpack.c.b16 %v5588, %v5586
  %v5831 = vpack.c.b16 %v5589, %v5587
  %v5832 = vpack.c.b16 %v5592, %v5590
  %v5833 = vpack.c.b16 %v5593, %v5591
  %v5834 = vpack.c.b16 %v5596, %v5594
  %v5835 = vpack.c.b16 %v5597, %v5595
  %v5836 = vpack.c.b16 %v5600, %v5598
  %v5837 = vpack.c.b16 %v5601, %v5599
  %v5838 = vpack.c.b16 %v5604, %v5602
  %v5839 = vpack.c.b16 %v5605, %v5603
  %v5840 = vpack.c.b16 %v5608, %v5606
  %v5841 = vpack.c.b16 %v5609, %v5607
  %v5842 = vpack.c.b16 %v5612, %v5610
  %v5843 = vpack.c.b16 %v5613, %v5611
  %v5844 = vpack.c.b16 %v5616, %v5614
  %v5845 = vpack.c.b16 %v5617, %v5615
  %v5846 = vpack.c.b16 %v5620, %v5618
  %v5847 = vpack.c.b16 %v5621, %v5619
  %v5848 = vpack.c.b16 %v5624, %v5622
  %v5849 = vpack.c.b16 %v5625, %v5623
  %v5850 = vpack.c.b16 %v5626, %v5626
  %v5851 = vpack.c.b16 %v5627, %v5627
  %v6075 = vsel %vm3761, %v4958, 0
  %v6078 = vsel %vm1535, %v5850, 0
  %v6081 = vsel %vm1535, %v5851, 0
  %6083 = vmatprep.subr.bf16.mxu0 %v5629
  %6084 = vmatpush1.bf16.msra.mxu0 %v5628
  %6085 = vmatprep.subr.bf16.mxu0 %v5631
  %6086 = vmatpush1.bf16.msra.mxu0 %v5630
  %6087 = vmatprep.subr.bf16.mxu0 %v5633
  %6088 = vmatpush1.bf16.msra.mxu0 %v5632
  %6089 = vmatprep.subr.bf16.mxu0 %v5635
  %6090 = vmatpush1.bf16.msra.mxu0 %v5634
  %6091 = vmatprep.subr.bf16.mxu0 %v5637
  %6092 = vmatpush1.bf16.msra.mxu0 %v5636
  %6093 = vmatprep.subr.bf16.mxu0 %v5639
  %6094 = vmatpush1.bf16.msra.mxu0 %v5638
  %6095 = vmatprep.subr.bf16.mxu0 %v5641
  %6096 = vmatpush1.bf16.msra.mxu0 %v5640
  %6097 = vmatprep.subr.bf16.mxu0 %v5643
  %6098 = vmatpush1.bf16.msra.mxu0 %v5642
  %6099 = vmatprep.subr.bf16.mxu0 %v5645
  %6100 = vmatpush1.bf16.msra.mxu0 %v5644
  %6101 = vmatprep.subr.bf16.mxu0 %v5647
  %6102 = vmatpush1.bf16.msra.mxu0 %v5646
  %6103 = vmatprep.subr.bf16.mxu0 %v5649
  %6104 = vmatpush1.bf16.msra.mxu0 %v5648
  %6105 = vmatprep.subr.bf16.mxu0 %v5651
  %6106 = vmatpush1.bf16.msra.mxu0 %v5650
  %6107 = vmatprep.subr.bf16.mxu0 %v5653
  %6108 = vmatpush1.bf16.msra.mxu0 %v5652
  %6109 = vmatprep.subr.bf16.mxu0 %v5655
  %6110 = vmatpush1.bf16.msra.mxu0 %v5654
  %6111 = vmatprep.subr.bf16.mxu0 %v5657
  %6112 = vmatpush1.bf16.msra.mxu0 %v5656
  %6113 = vmatprep.subr.bf16.mxu0 %v5659
  %6114 = vmatpush1.bf16.msra.mxu0 %v5658
  %6115 = vmatprep.mubr.bf16.mxu0 %v4946
  %6116 = vmatmul.mubr.bf16.gmra.mrb[0].mxu0 %v4945
  %v6117 = vpop.f32.mrb[0].mxu0
  %v6118 = vadd.f32 0.0, %v6117
  %v6119 = vpop.f32.mrb[0].mxu0
  %v6120 = vadd.f32 0.0, %v6119
  %v6121 = vpop.f32.mrb[0].mxu0
  %v6122 = vpop.f32.mrb[0].mxu0
  %6123 = vdwg.mxu0
  %6124 = vmatprep.subr.bf16.mxu0 %v5661
  %6125 = vmatpush1.bf16.msra.mxu0 %v5660
  %6126 = vmatprep.subr.bf16.mxu0 %v5663
  %6127 = vmatpush1.bf16.msra.mxu0 %v5662
  %6128 = vmatprep.subr.bf16.mxu0 %v5665
  %6129 = vmatpush1.bf16.msra.mxu0 %v5664
  %6130 = vmatprep.subr.bf16.mxu0 %v5667
  %6131 = vmatpush1.bf16.msra.mxu0 %v5666
  %6132 = vmatprep.subr.bf16.mxu0 %v5669
  %6133 = vmatpush1.bf16.msra.mxu0 %v5668
  %6134 = vmatprep.subr.bf16.mxu0 %v5671
  %6135 = vmatpush1.bf16.msra.mxu0 %v5670
  %6136 = vmatprep.subr.bf16.mxu0 %v5673
  %6137 = vmatpush1.bf16.msra.mxu0 %v5672
  %6138 = vmatprep.subr.bf16.mxu0 %v5675
  %6139 = vmatpush1.bf16.msra.mxu0 %v5674
  %6140 = vmatprep.subr.bf16.mxu0 %v5677
  %6141 = vmatpush1.bf16.msra.mxu0 %v5676
  %6142 = vmatprep.subr.bf16.mxu0 %v5679
  %6143 = vmatpush1.bf16.msra.mxu0 %v5678
  %6144 = vmatprep.subr.bf16.mxu0 %v5681
  %6145 = vmatpush1.bf16.msra.mxu0 %v5680
  %6146 = vmatprep.subr.bf16.mxu0 %v5683
  %6147 = vmatpush1.bf16.msra.mxu0 %v5682
  %6148 = vmatprep.subr.bf16.mxu0 %v5685
  %6149 = vmatpush1.bf16.msra.mxu0 %v5684
  %6150 = vmatprep.subr.bf16.mxu0 %v5687
  %6151 = vmatpush1.bf16.msra.mxu0 %v5686
  %6152 = vmatprep.subr.bf16.mxu0 %v5689
  %6153 = vmatpush1.bf16.msra.mxu0 %v5688
  %6154 = vmatprep.subr.bf16.mxu0 %v5691
  %6155 = vmatpush1.bf16.msra.mxu0 %v5690
  %6156 = vmatprep.mubr.bf16.mxu0 %v4948
  %6157 = vmatmul.mubr.bf16.gmra.mrb[0].mxu0 %v4947
  %v6158 = vpop.f32.mrb[0].mxu0
  %v6159 = vadd.f32 %v6118, %v6158
  %v6160 = vpop.f32.mrb[0].mxu0
  %v6161 = vadd.f32 %v6120, %v6160
  %v6162 = vpop.f32.mrb[0].mxu0
  %v6163 = vpop.f32.mrb[0].mxu0
  %6164 = vdwg.mxu0
  %6165 = vmatprep.subr.bf16.mxu0 %v5693
  %6166 = vmatpush1.bf16.msra.mxu0 %v5692
  %6167 = vmatprep.subr.bf16.mxu0 %v5695
  %6168 = vmatpush1.bf16.msra.mxu0 %v5694
  %6169 = vmatprep.subr.bf16.mxu0 %v5697
  %6170 = vmatpush1.bf16.msra.mxu0 %v5696
  %6171 = vmatprep.subr.bf16.mxu0 %v5699
  %6172 = vmatpush1.bf16.msra.mxu0 %v5698
  %6173 = vmatprep.subr.bf16.mxu0 %v5701
  %6174 = vmatpush1.bf16.msra.mxu0 %v5700
  %6175 = vmatprep.subr.bf16.mxu0 %v5703
  %6176 = vmatpush1.bf16.msra.mxu0 %v5702
  %6177 = vmatprep.subr.bf16.mxu0 %v5705
  %6178 = vmatpush1.bf16.msra.mxu0 %v5704
  %6179 = vmatprep.subr.bf16.mxu0 %v5707
  %6180 = vmatpush1.bf16.msra.mxu0 %v5706
  %6181 = vmatprep.subr.bf16.mxu0 %v5709
  %6182 = vmatpush1.bf16.msra.mxu0 %v5708
  %6183 = vmatprep.subr.bf16.mxu0 %v5711
  %6184 = vmatpush1.bf16.msra.mxu0 %v5710
  %6185 = vmatprep.subr.bf16.mxu0 %v5713
  %6186 = vmatpush1.bf16.msra.mxu0 %v5712
  %6187 = vmatprep.subr.bf16.mxu0 %v5715
  %6188 = vmatpush1.bf16.msra.mxu0 %v5714
  %6189 = vmatprep.subr.bf16.mxu0 %v5717
  %6190 = vmatpush1.bf16.msra.mxu0 %v5716
  %6191 = vmatprep.subr.bf16.mxu0 %v5719
  %6192 = vmatpush1.bf16.msra.mxu0 %v5718
  %6193 = vmatprep.subr.bf16.mxu0 %v5721
  %6194 = vmatpush1.bf16.msra.mxu0 %v5720
  %6195 = vmatprep.subr.bf16.mxu0 %v5723
  %6196 = vmatpush1.bf16.msra.mxu0 %v5722
  %6197 = vmatprep.mubr.bf16.mxu0 %v4950
  %6198 = vmatmul.mubr.bf16.gmra.mrb[0].mxu0 %v4949
  %v6199 = vpop.f32.mrb[0].mxu0
  %v6200 = vadd.f32 %v6159, %v6199
  %v6201 = vpop.f32.mrb[0].mxu0
  %v6202 = vadd.f32 %v6161, %v6201
  %v6203 = vpop.f32.mrb[0].mxu0
  %v6204 = vpop.f32.mrb[0].mxu0
  %6205 = vdwg.mxu0
  %6206 = vmatprep.subr.bf16.mxu0 %v5725
  %6207 = vmatpush1.bf16.msra.mxu0 %v5724
  %6208 = vmatprep.subr.bf16.mxu0 %v5727
  %6209 = vmatpush1.bf16.msra.mxu0 %v5726
  %6210 = vmatprep.subr.bf16.mxu0 %v5729
  %6211 = vmatpush1.bf16.msra.mxu0 %v5728
  %6212 = vmatprep.subr.bf16.mxu0 %v5731
  %6213 = vmatpush1.bf16.msra.mxu0 %v5730
  %6214 = vmatprep.subr.bf16.mxu0 %v5733
  %6215 = vmatpush1.bf16.msra.mxu0 %v5732
  %6216 = vmatprep.subr.bf16.mxu0 %v5735
  %6217 = vmatpush1.bf16.msra.mxu0 %v5734
  %6218 = vmatprep.subr.bf16.mxu0 %v5737
  %6219 = vmatpush1.bf16.msra.mxu0 %v5736
  %6220 = vmatprep.subr.bf16.mxu0 %v5739
  %6221 = vmatpush1.bf16.msra.mxu0 %v5738
  %6222 = vmatprep.subr.bf16.mxu0 %v5741
  %6223 = vmatpush1.bf16.msra.mxu0 %v5740
  %6224 = vmatprep.subr.bf16.mxu0 %v5743
  %6225 = vmatpush1.bf16.msra.mxu0 %v5742
  %6226 = vmatprep.subr.bf16.mxu0 %v5745
  %6227 = vmatpush1.bf16.msra.mxu0 %v5744
  %6228 = vmatprep.subr.bf16.mxu0 %v5747
  %6229 = vmatpush1.bf16.msra.mxu0 %v5746
  %6230 = vmatprep.subr.bf16.mxu0 %v5749
  %6231 = vmatpush1.bf16.msra.mxu0 %v5748
  %6232 = vmatprep.subr.bf16.mxu0 %v5751
  %6233 = vmatpush1.bf16.msra.mxu0 %v5750
  %6234 = vmatprep.subr.bf16.mxu0 %v5753
  %6235 = vmatpush1.bf16.msra.mxu0 %v5752
  %6236 = vmatprep.subr.bf16.mxu0 %v5755
  %6237 = vmatpush1.bf16.msra.mxu0 %v5754
  %6238 = vmatprep.mubr.bf16.mxu0 %v4952
  %6239 = vmatmul.mubr.bf16.gmra.mrb[0].mxu0 %v4951
  %v6240 = vpop.f32.mrb[0].mxu0
  %v6241 = vadd.f32 %v6200, %v6240
  %v6242 = vpop.f32.mrb[0].mxu0
  %v6243 = vadd.f32 %v6202, %v6242
  %v6244 = vpop.f32.mrb[0].mxu0
  %v6245 = vpop.f32.mrb[0].mxu0
  %6246 = vdwg.mxu0
  %6247 = vmatprep.subr.bf16.mxu0 %v5757
  %6248 = vmatpush1.bf16.msra.mxu0 %v5756
  %6249 = vmatprep.subr.bf16.mxu0 %v5759
  %6250 = vmatpush1.bf16.msra.mxu0 %v5758
  %6251 = vmatprep.subr.bf16.mxu0 %v5761
  %6252 = vmatpush1.bf16.msra.mxu0 %v5760
  %6253 = vmatprep.subr.bf16.mxu0 %v5763
  %6254 = vmatpush1.bf16.msra.mxu0 %v5762
  %6255 = vmatprep.subr.bf16.mxu0 %v5765
  %6256 = vmatpush1.bf16.msra.mxu0 %v5764
  %6257 = vmatprep.subr.bf16.mxu0 %v5767
  %6258 = vmatpush1.bf16.msra.mxu0 %v5766
  %6259 = vmatprep.subr.bf16.mxu0 %v5769
  %6260 = vmatpush1.bf16.msra.mxu0 %v5768
  %6261 = vmatprep.subr.bf16.mxu0 %v5771
  %6262 = vmatpush1.bf16.msra.mxu0 %v5770
  %6263 = vmatprep.subr.bf16.mxu0 %v5773
  %6264 = vmatpush1.bf16.msra.mxu0 %v5772
  %6265 = vmatprep.subr.bf16.mxu0 %v5775
  %6266 = vmatpush1.bf16.msra.mxu0 %v5774
  %6267 = vmatprep.subr.bf16.mxu0 %v5777
  %6268 = vmatpush1.bf16.msra.mxu0 %v5776
  %6269 = vmatprep.subr.bf16.mxu0 %v5779
  %6270 = vmatpush1.bf16.msra.mxu0 %v5778
  %6271 = vmatprep.subr.bf16.mxu0 %v5781
  %6272 = vmatpush1.bf16.msra.mxu0 %v5780
  %6273 = vmatprep.subr.bf16.mxu0 %v5783
  %6274 = vmatpush1.bf16.msra.mxu0 %v5782
  %6275 = vmatprep.subr.bf16.mxu0 %v5785
  %6276 = vmatpush1.bf16.msra.mxu0 %v5784
  %6277 = vmatprep.subr.bf16.mxu0 %v5787
  %6278 = vmatpush1.bf16.msra.mxu0 %v5786
  %6279 = vmatprep.mubr.bf16.mxu0 %v4954
  %6280 = vmatmul.mubr.bf16.gmra.mrb[0].mxu0 %v4953
  %v6281 = vpop.f32.mrb[0].mxu0
  %v6282 = vadd.f32 %v6241, %v6281
  %v6283 = vpop.f32.mrb[0].mxu0
  %v6284 = vadd.f32 %v6243, %v6283
  %v6285 = vpop.f32.mrb[0].mxu0
  %v6286 = vpop.f32.mrb[0].mxu0
  %6287 = vdwg.mxu0
  %6288 = vmatprep.subr.bf16.mxu0 %v5789
  %6289 = vmatpush1.bf16.msra.mxu0 %v5788
  %6290 = vmatprep.subr.bf16.mxu0 %v5791
  %6291 = vmatpush1.bf16.msra.mxu0 %v5790
  %6292 = vmatprep.subr.bf16.mxu0 %v5793
  %6293 = vmatpush1.bf16.msra.mxu0 %v5792
  %6294 = vmatprep.subr.bf16.mxu0 %v5795
  %6295 = vmatpush1.bf16.msra.mxu0 %v5794
  %6296 = vmatprep.subr.bf16.mxu0 %v5797
  %6297 = vmatpush1.bf16.msra.mxu0 %v5796
  %6298 = vmatprep.subr.bf16.mxu0 %v5799
  %6299 = vmatpush1.bf16.msra.mxu0 %v5798
  %6300 = vmatprep.subr.bf16.mxu0 %v5801
  %6301 = vmatpush1.bf16.msra.mxu0 %v5800
  %6302 = vmatprep.subr.bf16.mxu0 %v5803
  %6303 = vmatpush1.bf16.msra.mxu0 %v5802
  %6304 = vmatprep.subr.bf16.mxu0 %v5805
  %6305 = vmatpush1.bf16.msra.mxu0 %v5804
  %6306 = vmatprep.subr.bf16.mxu0 %v5807
  %6307 = vmatpush1.bf16.msra.mxu0 %v5806
  %6308 = vmatprep.subr.bf16.mxu0 %v5809
  %6309 = vmatpush1.bf16.msra.mxu0 %v5808
  %6310 = vmatprep.subr.bf16.mxu0 %v5811
  %6311 = vmatpush1.bf16.msra.mxu0 %v5810
  %6312 = vmatprep.subr.bf16.mxu0 %v5813
  %6313 = vmatpush1.bf16.msra.mxu0 %v5812
  %6314 = vmatprep.subr.bf16.mxu0 %v5815
  %6315 = vmatpush1.bf16.msra.mxu0 %v5814
  %6316 = vmatprep.subr.bf16.mxu0 %v5817
  %6317 = vmatpush1.bf16.msra.mxu0 %v5816
  %6318 = vmatprep.subr.bf16.mxu0 %v5819
  %6319 = vmatpush1.bf16.msra.mxu0 %v5818
  %6320 = vmatprep.mubr.bf16.mxu0 %v4956
  %6321 = vmatmul.mubr.bf16.gmra.mrb[0].mxu0 %v4955
  %v6322 = vpop.f32.mrb[0].mxu0
  %v6323 = vadd.f32 %v6282, %v6322
  %v6324 = vpop.f32.mrb[0].mxu0
  %v6325 = vadd.f32 %v6284, %v6324
  %v6326 = vpop.f32.mrb[0].mxu0
  %v6327 = vpop.f32.mrb[0].mxu0
  %6328 = vdwg.mxu0
  %6329 = vmatprep.subr.bf16.mxu0 %v5821
  %6330 = vmatpush1.bf16.msra.mxu0 %v5820
  %6331 = vmatprep.subr.bf16.mxu0 %v5823
  %6332 = vmatpush1.bf16.msra.mxu0 %v5822
  %6333 = vmatprep.subr.bf16.mxu0 %v5825
  %6334 = vmatpush1.bf16.msra.mxu0 %v5824
  %6335 = vmatprep.subr.bf16.mxu0 %v5827
  %6336 = vmatpush1.bf16.msra.mxu0 %v5826
  %6337 = vmatprep.subr.bf16.mxu0 %v5829
  %6338 = vmatpush1.bf16.msra.mxu0 %v5828
  %6339 = vmatprep.subr.bf16.mxu0 %v5831
  %6340 = vmatpush1.bf16.msra.mxu0 %v5830
  %6341 = vmatprep.subr.bf16.mxu0 %v5833
  %6342 = vmatpush1.bf16.msra.mxu0 %v5832
  %6343 = vmatprep.subr.bf16.mxu0 %v5835
  %6344 = vmatpush1.bf16.msra.mxu0 %v5834
  %6345 = vmatprep.subr.bf16.mxu0 %v5837
  %6346 = vmatpush1.bf16.msra.mxu0 %v5836
  %6347 = vmatprep.subr.bf16.mxu0 %v5839
  %6348 = vmatpush1.bf16.msra.mxu0 %v5838
  %6349 = vmatprep.subr.bf16.mxu0 %v5841
  %6350 = vmatpush1.bf16.msra.mxu0 %v5840
  %6351 = vmatprep.subr.bf16.mxu0 %v5843
  %6352 = vmatpush1.bf16.msra.mxu0 %v5842
  %6353 = vmatprep.subr.bf16.mxu0 %v5845
  %6354 = vmatpush1.bf16.msra.mxu0 %v5844
  %6355 = vmatprep.subr.bf16.mxu0 %v5847
  %6356 = vmatpush1.bf16.msra.mxu0 %v5846
  %6357 = vmatprep.subr.bf16.mxu0 %v5849
  %6358 = vmatpush1.bf16.msra.mxu0 %v5848
  %6359 = vmatprep.subr.bf16.mxu0 %v6081
  %6360 = vmatpush1.bf16.msra.mxu0 %v6078
  %6361 = vmatprep.mubr.bf16.mxu0 %v6075
  %6362 = vmatmul.mubr.bf16.gmra.mrb[0].mxu0 %v4957
  %v6363 = vpop.f32.mrb[0].mxu0
  %v6364 = vadd.f32 %v6323, %v6363
  %v6365 = vpop.f32.mrb[0].mxu0
  %v6366 = vadd.f32 %v6325, %v6365
  %v6367 = vpop.f32.mrb[0].mxu0
  %v6368 = vpop.f32.mrb[0].mxu0
  %6369 = vdwg.mxu0
  %v6370 = vpack.c.bf16 %v1642, %v1642
  %v6371 = vpack.c.bf16 %v1644, %v1644
  %6375 = vrot.lane.b32.xlu0 %v1772, 58
  %v6376 = vpop.permute.xlu0 %6375
  %6377 = vrot.lane.b32.xlu0 %v6370, 58
  %v6378 = vpop.permute.xlu0 %6377
  %6379 = vrot.lane.b32.xlu0 %v6371, 58
  %v6380 = vpop.permute.xlu0 %6379
  %vm6381 = vcmask 474112
  %v6382 = vsel %vm6381, %v6376, %v6378
  %v6383 = vsel %vm6381, %v6378, %v6380
  %v6386 = vsel %vm1531, %v6383, 0
  %6388 = vmatprep.subr.bf16.mxu0 %v2299
  %6389 = vmatpush1.bf16.msra.mxu0 %v2298
  %6390 = vmatprep.subr.bf16.mxu0 %v2313
  %6391 = vmatpush1.bf16.msra.mxu0 %v2312
  %6392 = vmatprep.subr.bf16.mxu0 %v2327
  %6393 = vmatpush1.bf16.msra.mxu0 %v2326
  %6394 = vmatprep.subr.bf16.mxu0 %v2341
  %6395 = vmatpush1.bf16.msra.mxu0 %v2340
  %6396 = vmatprep.subr.bf16.mxu0 %v2355
  %6397 = vmatpush1.bf16.msra.mxu0 %v2354
  %6398 = vmatprep.subr.bf16.mxu0 %v2369
  %6399 = vmatpush1.bf16.msra.mxu0 %v2368
  %6400 = vmatprep.subr.bf16.mxu0 %v2383
  %6401 = vmatpush1.bf16.msra.mxu0 %v2382
  %6402 = vmatprep.subr.bf16.mxu0 %v2397
  %6403 = vmatpush1.bf16.msra.mxu0 %v2396
  %6404 = vmatprep.subr.bf16.mxu0 %v2411
  %6405 = vmatpush1.bf16.msra.mxu0 %v2410
  %6406 = vmatprep.subr.bf16.mxu0 %v2425
  %6407 = vmatpush1.bf16.msra.mxu0 %v2424
  %6408 = vmatprep.subr.bf16.mxu0 %v2439
  %6409 = vmatpush1.bf16.msra.mxu0 %v2438
  %6410 = vmatprep.subr.bf16.mxu0 %v2453
  %6411 = vmatpush1.bf16.msra.mxu0 %v2452
  %6412 = vmatprep.subr.bf16.mxu0 %v2655
  %6413 = vmatpush1.bf16.msra.mxu0 %v2652
  %6414 = vmatprep.subr.bf16.mxu0 0
  %6415 = vmatpush1.bf16.msra.mxu0 0
  %6416 = vmatprep.subr.bf16.mxu0 0
  %6417 = vmatpush1.bf16.msra.mxu0 0
  %6418 = vmatprep.subr.bf16.mxu0 0
  %6419 = vmatpush1.bf16.msra.mxu0 0
  %6420 = vmatprep.mubr.bf16.mxu0 %v6386
  %6421 = vmatmul.mubr.bf16.gmra.mrb[0].mxu0 %v6382
  %v6422 = vpop.f32.mrb[0].mxu0
  %v6423 = vadd.f32 0.0, %v6422
  %v6424 = vpop.f32.mrb[0].mxu0
  %v6425 = vadd.f32 0.0, %v6424
  %v6426 = vpop.f32.mrb[0].mxu0
  %v6427 = vpop.f32.mrb[0].mxu0
  %6428 = vdwg.mxu0
  %6429 = vmatprep.subr.bf16.mxu0 %v2301
  %6430 = vmatpush1.bf16.msra.mxu0 %v2300
  %6431 = vmatprep.subr.bf16.mxu0 %v2315
  %6432 = vmatpush1.bf16.msra.mxu0 %v2314
  %6433 = vmatprep.subr.bf16.mxu0 %v2329
  %6434 = vmatpush1.bf16.msra.mxu0 %v2328
  %6435 = vmatprep.subr.bf16.mxu0 %v2343
  %6436 = vmatpush1.bf16.msra.mxu0 %v2342
  %6437 = vmatprep.subr.bf16.mxu0 %v2357
  %6438 = vmatpush1.bf16.msra.mxu0 %v2356
  %6439 = vmatprep.subr.bf16.mxu0 %v2371
  %6440 = vmatpush1.bf16.msra.mxu0 %v2370
  %6441 = vmatprep.subr.bf16.mxu0 %v2385
  %6442 = vmatpush1.bf16.msra.mxu0 %v2384
  %6443 = vmatprep.subr.bf16.mxu0 %v2399
  %6444 = vmatpush1.bf16.msra.mxu0 %v2398
  %6445 = vmatprep.subr.bf16.mxu0 %v2413
  %6446 = vmatpush1.bf16.msra.mxu0 %v2412
  %6447 = vmatprep.subr.bf16.mxu0 %v2427
  %6448 = vmatpush1.bf16.msra.mxu0 %v2426
  %6449 = vmatprep.subr.bf16.mxu0 %v2441
  %6450 = vmatpush1.bf16.msra.mxu0 %v2440
  %6451 = vmatprep.subr.bf16.mxu0 %v2455
  %6452 = vmatpush1.bf16.msra.mxu0 %v2454
  %6453 = vmatprep.subr.bf16.mxu0 %v2661
  %6454 = vmatpush1.bf16.msra.mxu0 %v2658
  %6455 = vmatprep.subr.bf16.mxu0 0
  %6456 = vmatpush1.bf16.msra.mxu0 0
  %6457 = vmatprep.subr.bf16.mxu0 0
  %6458 = vmatpush1.bf16.msra.mxu0 0
  %6459 = vmatprep.subr.bf16.mxu0 0
  %6460 = vmatpush1.bf16.msra.mxu0 0
  %6461 = vmatprep.mubr.bf16.mxu0 %v6386
  %6462 = vmatmul.mubr.bf16.gmra.mrb[0].mxu0 %v6382
  %v6463 = vpop.f32.mrb[0].mxu0
  %v6464 = vadd.f32 0.0, %v6463
  %v6465 = vpop.f32.mrb[0].mxu0
  %v6466 = vadd.f32 0.0, %v6465
  %v6467 = vpop.f32.mrb[0].mxu0
  %v6468 = vpop.f32.mrb[0].mxu0
  %6469 = vdwg.mxu0
  %6470 = vmatprep.subr.bf16.mxu0 %v2303
  %6471 = vmatpush1.bf16.msra.mxu0 %v2302
  %6472 = vmatprep.subr.bf16.mxu0 %v2317
  %6473 = vmatpush1.bf16.msra.mxu0 %v2316
  %6474 = vmatprep.subr.bf16.mxu0 %v2331
  %6475 = vmatpush1.bf16.msra.mxu0 %v2330
  %6476 = vmatprep.subr.bf16.mxu0 %v2345
  %6477 = vmatpush1.bf16.msra.mxu0 %v2344
  %6478 = vmatprep.subr.bf16.mxu0 %v2359
  %6479 = vmatpush1.bf16.msra.mxu0 %v2358
  %6480 = vmatprep.subr.bf16.mxu0 %v2373
  %6481 = vmatpush1.bf16.msra.mxu0 %v2372
  %6482 = vmatprep.subr.bf16.mxu0 %v2387
  %6483 = vmatpush1.bf16.msra.mxu0 %v2386
  %6484 = vmatprep.subr.bf16.mxu0 %v2401
  %6485 = vmatpush1.bf16.msra.mxu0 %v2400
  %6486 = vmatprep.subr.bf16.mxu0 %v2415
  %6487 = vmatpush1.bf16.msra.mxu0 %v2414
  %6488 = vmatprep.subr.bf16.mxu0 %v2429
  %6489 = vmatpush1.bf16.msra.mxu0 %v2428
  %6490 = vmatprep.subr.bf16.mxu0 %v2443
  %6491 = vmatpush1.bf16.msra.mxu0 %v2442
  %6492 = vmatprep.subr.bf16.mxu0 %v2457
  %6493 = vmatpush1.bf16.msra.mxu0 %v2456
  %6494 = vmatprep.subr.bf16.mxu0 %v2667
  %6495 = vmatpush1.bf16.msra.mxu0 %v2664
  %6496 = vmatprep.subr.bf16.mxu0 0
  %6497 = vmatpush1.bf16.msra.mxu0 0
  %6498 = vmatprep.subr.bf16.mxu0 0
  %6499 = vmatpush1.bf16.msra.mxu0 0
  %6500 = vmatprep.subr.bf16.mxu0 0
  %6501 = vmatpush1.bf16.msra.mxu0 0
  %6502 = vmatprep.mubr.bf16.mxu0 %v6386
  %6503 = vmatmul.mubr.bf16.gmra.mrb[0].mxu0 %v6382
  %v6504 = vpop.f32.mrb[0].mxu0
  %v6505 = vadd.f32 0.0, %v6504
  %v6506 = vpop.f32.mrb[0].mxu0
  %v6507 = vadd.f32 0.0, %v6506
  %v6508 = vpop.f32.mrb[0].mxu0
  %v6509 = vpop.f32.mrb[0].mxu0
  %6510 = vdwg.mxu0
  %6511 = vmatprep.subr.bf16.mxu0 %v2305
  %6512 = vmatpush1.bf16.msra.mxu0 %v2304
  %6513 = vmatprep.subr.bf16.mxu0 %v2319
  %6514 = vmatpush1.bf16.msra.mxu0 %v2318
  %6515 = vmatprep.subr.bf16.mxu0 %v2333
  %6516 = vmatpush1.bf16.msra.mxu0 %v2332
  %6517 = vmatprep.subr.bf16.mxu0 %v2347
  %6518 = vmatpush1.bf16.msra.mxu0 %v2346
  %6519 = vmatprep.subr.bf16.mxu0 %v2361
  %6520 = vmatpush1.bf16.msra.mxu0 %v2360
  %6521 = vmatprep.subr.bf16.mxu0 %v2375
  %6522 = vmatpush1.bf16.msra.mxu0 %v2374
  %6523 = vmatprep.subr.bf16.mxu0 %v2389
  %6524 = vmatpush1.bf16.msra.mxu0 %v2388
  %6525 = vmatprep.subr.bf16.mxu0 %v2403
  %6526 = vmatpush1.bf16.msra.mxu0 %v2402
  %6527 = vmatprep.subr.bf16.mxu0 %v2417
  %6528 = vmatpush1.bf16.msra.mxu0 %v2416
  %6529 = vmatprep.subr.bf16.mxu0 %v2431
  %6530 = vmatpush1.bf16.msra.mxu0 %v2430
  %6531 = vmatprep.subr.bf16.mxu0 %v2445
  %6532 = vmatpush1.bf16.msra.mxu0 %v2444
  %6533 = vmatprep.subr.bf16.mxu0 %v2459
  %6534 = vmatpush1.bf16.msra.mxu0 %v2458
  %6535 = vmatprep.subr.bf16.mxu0 %v2673
  %6536 = vmatpush1.bf16.msra.mxu0 %v2670
  %6537 = vmatprep.subr.bf16.mxu0 0
  %6538 = vmatpush1.bf16.msra.mxu0 0
  %6539 = vmatprep.subr.bf16.mxu0 0
  %6540 = vmatpush1.bf16.msra.mxu0 0
  %6541 = vmatprep.subr.bf16.mxu0 0
  %6542 = vmatpush1.bf16.msra.mxu0 0
  %6543 = vmatprep.mubr.bf16.mxu0 %v6386
  %6544 = vmatmul.mubr.bf16.gmra.mrb[0].mxu0 %v6382
  %v6545 = vpop.f32.mrb[0].mxu0
  %v6546 = vadd.f32 0.0, %v6545
  %v6547 = vpop.f32.mrb[0].mxu0
  %v6548 = vadd.f32 0.0, %v6547
  %v6549 = vpop.f32.mrb[0].mxu0
  %v6550 = vpop.f32.mrb[0].mxu0
  %6551 = vdwg.mxu0
  %6552 = vmatprep.subr.bf16.mxu0 %v2307
  %6553 = vmatpush1.bf16.msra.mxu0 %v2306
  %6554 = vmatprep.subr.bf16.mxu0 %v2321
  %6555 = vmatpush1.bf16.msra.mxu0 %v2320
  %6556 = vmatprep.subr.bf16.mxu0 %v2335
  %6557 = vmatpush1.bf16.msra.mxu0 %v2334
  %6558 = vmatprep.subr.bf16.mxu0 %v2349
  %6559 = vmatpush1.bf16.msra.mxu0 %v2348
  %6560 = vmatprep.subr.bf16.mxu0 %v2363
  %6561 = vmatpush1.bf16.msra.mxu0 %v2362
  %6562 = vmatprep.subr.bf16.mxu0 %v2377
  %6563 = vmatpush1.bf16.msra.mxu0 %v2376
  %6564 = vmatprep.subr.bf16.mxu0 %v2391
  %6565 = vmatpush1.bf16.msra.mxu0 %v2390
  %6566 = vmatprep.subr.bf16.mxu0 %v2405
  %6567 = vmatpush1.bf16.msra.mxu0 %v2404
  %6568 = vmatprep.subr.bf16.mxu0 %v2419
  %6569 = vmatpush1.bf16.msra.mxu0 %v2418
  %6570 = vmatprep.subr.bf16.mxu0 %v2433
  %6571 = vmatpush1.bf16.msra.mxu0 %v2432
  %6572 = vmatprep.subr.bf16.mxu0 %v2447
  %6573 = vmatpush1.bf16.msra.mxu0 %v2446
  %6574 = vmatprep.subr.bf16.mxu0 %v2461
  %6575 = vmatpush1.bf16.msra.mxu0 %v2460
  %6576 = vmatprep.subr.bf16.mxu0 %v2679
  %6577 = vmatpush1.bf16.msra.mxu0 %v2676
  %6578 = vmatprep.subr.bf16.mxu0 0
  %6579 = vmatpush1.bf16.msra.mxu0 0
  %6580 = vmatprep.subr.bf16.mxu0 0
  %6581 = vmatpush1.bf16.msra.mxu0 0
  %6582 = vmatprep.subr.bf16.mxu0 0
  %6583 = vmatpush1.bf16.msra.mxu0 0
  %6584 = vmatprep.mubr.bf16.mxu0 %v6386
  %6585 = vmatmul.mubr.bf16.gmra.mrb[0].mxu0 %v6382
  %v6586 = vpop.f32.mrb[0].mxu0
  %v6587 = vadd.f32 0.0, %v6586
  %v6588 = vpop.f32.mrb[0].mxu0
  %v6589 = vadd.f32 0.0, %v6588
  %v6590 = vpop.f32.mrb[0].mxu0
  %v6591 = vpop.f32.mrb[0].mxu0
  %6592 = vdwg.mxu0
  %6593 = vmatprep.subr.bf16.mxu0 %v2309
  %6594 = vmatpush1.bf16.msra.mxu0 %v2308
  %6595 = vmatprep.subr.bf16.mxu0 %v2323
  %6596 = vmatpush1.bf16.msra.mxu0 %v2322
  %6597 = vmatprep.subr.bf16.mxu0 %v2337
  %6598 = vmatpush1.bf16.msra.mxu0 %v2336
  %6599 = vmatprep.subr.bf16.mxu0 %v2351
  %6600 = vmatpush1.bf16.msra.mxu0 %v2350
  %6601 = vmatprep.subr.bf16.mxu0 %v2365
  %6602 = vmatpush1.bf16.msra.mxu0 %v2364
  %6603 = vmatprep.subr.bf16.mxu0 %v2379
  %6604 = vmatpush1.bf16.msra.mxu0 %v2378
  %6605 = vmatprep.subr.bf16.mxu0 %v2393
  %6606 = vmatpush1.bf16.msra.mxu0 %v2392
  %6607 = vmatprep.subr.bf16.mxu0 %v2407
  %6608 = vmatpush1.bf16.msra.mxu0 %v2406
  %6609 = vmatprep.subr.bf16.mxu0 %v2421
  %6610 = vmatpush1.bf16.msra.mxu0 %v2420
  %6611 = vmatprep.subr.bf16.mxu0 %v2435
  %6612 = vmatpush1.bf16.msra.mxu0 %v2434
  %6613 = vmatprep.subr.bf16.mxu0 %v2449
  %6614 = vmatpush1.bf16.msra.mxu0 %v2448
  %6615 = vmatprep.subr.bf16.mxu0 %v2463
  %6616 = vmatpush1.bf16.msra.mxu0 %v2462
  %6617 = vmatprep.subr.bf16.mxu0 %v2685
  %6618 = vmatpush1.bf16.msra.mxu0 %v2682
  %6619 = vmatprep.subr.bf16.mxu0 0
  %6620 = vmatpush1.bf16.msra.mxu0 0
  %6621 = vmatprep.subr.bf16.mxu0 0
  %6622 = vmatpush1.bf16.msra.mxu0 0
  %6623 = vmatprep.subr.bf16.mxu0 0
  %6624 = vmatpush1.bf16.msra.mxu0 0
  %6625 = vmatprep.mubr.bf16.mxu0 %v6386
  %6626 = vmatmul.mubr.bf16.gmra.mrb[0].mxu0 %v6382
  %v6627 = vpop.f32.mrb[0].mxu0
  %v6628 = vadd.f32 0.0, %v6627
  %v6629 = vpop.f32.mrb[0].mxu0
  %v6630 = vadd.f32 0.0, %v6629
  %v6631 = vpop.f32.mrb[0].mxu0
  %v6632 = vpop.f32.mrb[0].mxu0
  %6633 = vdwg.mxu0
  %6634 = vmatprep.subr.bf16.mxu0 %v2311
  %6635 = vmatpush1.bf16.msra.mxu0 %v2310
  %6636 = vmatprep.subr.bf16.mxu0 %v2325
  %6637 = vmatpush1.bf16.msra.mxu0 %v2324
  %6638 = vmatprep.subr.bf16.mxu0 %v2339
  %6639 = vmatpush1.bf16.msra.mxu0 %v2338
  %6640 = vmatprep.subr.bf16.mxu0 %v2353
  %6641 = vmatpush1.bf16.msra.mxu0 %v2352
  %6642 = vmatprep.subr.bf16.mxu0 %v2367
  %6643 = vmatpush1.bf16.msra.mxu0 %v2366
  %6644 = vmatprep.subr.bf16.mxu0 %v2381
  %6645 = vmatpush1.bf16.msra.mxu0 %v2380
  %6646 = vmatprep.subr.bf16.mxu0 %v2395
  %6647 = vmatpush1.bf16.msra.mxu0 %v2394
  %6648 = vmatprep.subr.bf16.mxu0 %v2409
  %6649 = vmatpush1.bf16.msra.mxu0 %v2408
  %6650 = vmatprep.subr.bf16.mxu0 %v2423
  %6651 = vmatpush1.bf16.msra.mxu0 %v2422
  %6652 = vmatprep.subr.bf16.mxu0 %v2437
  %6653 = vmatpush1.bf16.msra.mxu0 %v2436
  %6654 = vmatprep.subr.bf16.mxu0 %v2451
  %6655 = vmatpush1.bf16.msra.mxu0 %v2450
  %6656 = vmatprep.subr.bf16.mxu0 %v2465
  %6657 = vmatpush1.bf16.msra.mxu0 %v2464
  %6658 = vmatprep.subr.bf16.mxu0 %v2691
  %6659 = vmatpush1.bf16.msra.mxu0 %v2688
  %6660 = vmatprep.subr.bf16.mxu0 0
  %6661 = vmatpush1.bf16.msra.mxu0 0
  %6662 = vmatprep.subr.bf16.mxu0 0
  %6663 = vmatpush1.bf16.msra.mxu0 0
  %6664 = vmatprep.subr.bf16.mxu0 0
  %6665 = vmatpush1.bf16.msra.mxu0 0
  %6666 = vmatprep.mubr.bf16.mxu0 %v6386
  %6667 = vmatmul.mubr.bf16.gmra.mrb[0].mxu0 %v6382
  %v6668 = vpop.f32.mrb[0].mxu0
  %v6669 = vadd.f32 0.0, %v6668
  %v6670 = vpop.f32.mrb[0].mxu0
  %v6671 = vadd.f32 0.0, %v6670
  %v6672 = vpop.f32.mrb[0].mxu0
  %v6673 = vpop.f32.mrb[0].mxu0
  %6674 = vdwg.mxu0
  %6676 = vrot.lane.b32.xlu0 %v1683, 46
  %v6677 = vpop.permute.xlu0 %6676
  %6678 = vrot.lane.b32.xlu0 %v1685, 46
  %v6679 = vpop.permute.xlu0 %6678
  %v6680 = vsel %vm4873, %v6677, %v6679
  %v6681 = vsel %vm4873, %v6679, %v4870
  %6684 = vrot.lane.b32.xlu0 %v1685, 116
  %v6685 = vpop.permute.xlu0 %6684
  %v6686 = vsel %vm2986, %v2985, %v6685
  %v6687 = vsel %vm2986, %v6685, %v4879
  %6691 = vrot.lane.b32.xlu0 %v1685, 58
  %v6692 = vpop.permute.xlu0 %6691
  %v6693 = vsel %vm2994, %v2993, %v6692
  %v6694 = vsel %vm2994, %v6692, %v4886
  %6697 = vrot.lane.b32.xlu0 %v1685, 70
  %v6698 = vpop.permute.xlu0 %6697
  %v6699 = vsel %vm1531, %v3002, %v6698
  %v6700 = vsel %vm1531, %v6698, %v4894
  %6703 = vrot.lane.b32.xlu0 %v1685, 12
  %v6704 = vpop.permute.xlu0 %6703
  %v6705 = vsel %vm3011, %v3010, %v6704
  %v6706 = vsel %vm3011, %v6704, %v4902
  %6710 = vrot.lane.b32.xlu0 %v1685, 82
  %v6711 = vpop.permute.xlu0 %6710
  %v6712 = vsel %vm3019, %v3018, %v6711
  %v6713 = vsel %vm3019, %v6711, %v4909
  %6716 = vrot.lane.b32.xlu0 %v1685, 24
  %v6717 = vpop.permute.xlu0 %6716
  %v6718 = vsel %vm3028, %v3027, %v6717
  %v6719 = vsel %vm3028, %v6717, %v4917
  %6723 = vrot.lane.b32.xlu0 %v1685, 94
  %v6724 = vpop.permute.xlu0 %6723
  %6725 = vrot.lane.b32.xlu0 %v1724, 94
  %v6726 = vpop.permute.xlu0 %6725
  %v6727 = vsel %vm3036, %v3035, %v6724
  %v6728 = vsel %vm3036, %v6724, %v6726
  %v6731 = vsel %vm1531, %v6681, %v6686
  %v6732 = vsel %vm3011, %v4879, %v6693
  %v6733 = vsel %vm3019, %v6694, %v1683
  %v6734 = vsel %vm3028, %v1724, %v6699
  %v6735 = vsel %vm3036, %v6700, %v3010
  %v6736 = vsel %vm3045, %v6706, %v6712
  %v6737 = vsel %vm3055, %v6713, %v3027
  %v6738 = vsel %vm3057, %v6719, %v6727
  %v6739 = vmul.f32 %v6423, %v6680
  %v6740 = vmul.f32 %v6425, %v6731
  %v6741 = vmul.f32 %v6464, %v6687
  %v6742 = vmul.f32 %v6466, %v6732
  %v6743 = vmul.f32 %v6505, %v6733
  %v6744 = vmul.f32 %v6507, %v1685
  %v6745 = vmul.f32 %v6546, %v6734
  %v6746 = vmul.f32 %v6548, %v6735
  %v6747 = vmul.f32 %v6587, %v6705
  %v6748 = vmul.f32 %v6589, %v6736
  %v6749 = vmul.f32 %v6628, %v6737
  %v6750 = vmul.f32 %v6630, %v6718
  %v6751 = vmul.f32 %v6669, %v6738
  %v6752 = vmul.f32 %v6671, %v6728
  %v6753 = vpack.c.bf16 %v6739, %v6739
  %v6754 = vpack.c.bf16 %v6740, %v6740
  %v6755 = vpack.c.bf16 %v6741, %v6741
  %v6756 = vpack.c.bf16 %v6742, %v6742
  %v6757 = vpack.c.bf16 %v6743, %v6743
  %v6758 = vpack.c.bf16 %v6744, %v6744
  %v6759 = vpack.c.bf16 %v6745, %v6745
  %v6760 = vpack.c.bf16 %v6746, %v6746
  %v6761 = vpack.c.bf16 %v6747, %v6747
  %v6762 = vpack.c.bf16 %v6748, %v6748
  %v6763 = vpack.c.bf16 %v6749, %v6749
  %v6764 = vpack.c.bf16 %v6750, %v6750
  %v6765 = vpack.c.bf16 %v6751, %v6751
  %v6766 = vpack.c.bf16 %v6752, %v6752
  %v6767 = vld [vmem:[%s9 + $0x1] sm:$0x1]
  %v6768 = vlaneseq
  %v6769 = vshrl.u32 %v6768, 7
  %v6770 = vsub.s32 0, %v6769
  %v6771 = vrot.slane %v6767, %v6770
  %v6773 = vsel %vm3761, %v6766, 0
  %6775 = vmatprep.subr.bf16.mxu0 0
  %6776 = vmatpush1.bf16.msra.mxu0 %v3538
  %6777 = vmatprep.subr.bf16.mxu0 0
  %6778 = vmatpush1.bf16.msra.mxu0 %v3539
  %6779 = vmatprep.subr.bf16.mxu0 0
  %6780 = vmatpush1.bf16.msra.mxu0 %v3540
  %6781 = vmatprep.subr.bf16.mxu0 0
  %6782 = vmatpush1.bf16.msra.mxu0 %v3541
  %6783 = vmatprep.subr.bf16.mxu0 0
  %6784 = vmatpush1.bf16.msra.mxu0 %v3542
  %6785 = vmatprep.subr.bf16.mxu0 0
  %6786 = vmatpush1.bf16.msra.mxu0 %v3543
  %6787 = vmatprep.subr.bf16.mxu0 0
  %6788 = vmatpush1.bf16.msra.mxu0 %v3544
  %6789 = vmatprep.subr.bf16.mxu0 0
  %6790 = vmatpush1.bf16.msra.mxu0 %v3545
  %6791 = vmatprep.subr.bf16.mxu0 0
  %6792 = vmatpush1.bf16.msra.mxu0 %v3546
  %6793 = vmatprep.subr.bf16.mxu0 0
  %6794 = vmatpush1.bf16.msra.mxu0 %v3547
  %6795 = vmatprep.subr.bf16.mxu0 0
  %6796 = vmatpush1.bf16.msra.mxu0 %v3548
  %6797 = vmatprep.subr.bf16.mxu0 0
  %6798 = vmatpush1.bf16.msra.mxu0 %v3549
  %6799 = vmatprep.subr.bf16.mxu0 0
  %6800 = vmatpush1.bf16.msra.mxu0 %v3550
  %6801 = vmatprep.subr.bf16.mxu0 0
  %6802 = vmatpush1.bf16.msra.mxu0 %v3551
  %6803 = vmatprep.subr.bf16.mxu0 0
  %6804 = vmatpush1.bf16.msra.mxu0 %v3552
  %6805 = vmatprep.subr.bf16.mxu0 0
  %6806 = vmatpush1.bf16.msra.mxu0 %v3553
  %6807 = vmatprep.mubr.bf16.mxu0 %v6754
  %6808 = vmatmul.mubr.bf16.gmra.mrb[0].mxu0 %v6753
  %v6809 = vpop.f32.mrb[0].mxu0
  %v6810 = vadd.f32 %v6771, %v6809
  %v6811 = vpop.f32.mrb[0].mxu0
  %v6812 = vpop.f32.mrb[0].mxu0
  %v6813 = vpop.f32.mrb[0].mxu0
  %6814 = vdwg.mxu0
  %6815 = vmatprep.subr.bf16.mxu0 0
  %6816 = vmatpush1.bf16.msra.mxu0 %v3554
  %6817 = vmatprep.subr.bf16.mxu0 0
  %6818 = vmatpush1.bf16.msra.mxu0 %v3555
  %6819 = vmatprep.subr.bf16.mxu0 0
  %6820 = vmatpush1.bf16.msra.mxu0 %v3556
  %6821 = vmatprep.subr.bf16.mxu0 0
  %6822 = vmatpush1.bf16.msra.mxu0 %v3557
  %6823 = vmatprep.subr.bf16.mxu0 0
  %6824 = vmatpush1.bf16.msra.mxu0 %v3558
  %6825 = vmatprep.subr.bf16.mxu0 0
  %6826 = vmatpush1.bf16.msra.mxu0 %v3559
  %6827 = vmatprep.subr.bf16.mxu0 0
  %6828 = vmatpush1.bf16.msra.mxu0 %v3560
  %6829 = vmatprep.subr.bf16.mxu0 0
  %6830 = vmatpush1.bf16.msra.mxu0 %v3561
  %6831 = vmatprep.subr.bf16.mxu0 0
  %6832 = vmatpush1.bf16.msra.mxu0 %v3562
  %6833 = vmatprep.subr.bf16.mxu0 0
  %6834 = vmatpush1.bf16.msra.mxu0 %v3563
  %6835 = vmatprep.subr.bf16.mxu0 0
  %6836 = vmatpush1.bf16.msra.mxu0 %v3564
  %6837 = vmatprep.subr.bf16.mxu0 0
  %6838 = vmatpush1.bf16.msra.mxu0 %v3565
  %6839 = vmatprep.subr.bf16.mxu0 0
  %6840 = vmatpush1.bf16.msra.mxu0 %v3566
  %6841 = vmatprep.subr.bf16.mxu0 0
  %6842 = vmatpush1.bf16.msra.mxu0 %v3567
  %6843 = vmatprep.subr.bf16.mxu0 0
  %6844 = vmatpush1.bf16.msra.mxu0 %v3568
  %6845 = vmatprep.subr.bf16.mxu0 0
  %6846 = vmatpush1.bf16.msra.mxu0 %v3569
  %6847 = vmatprep.mubr.bf16.mxu0 %v6756
  %6848 = vmatmul.mubr.bf16.gmra.mrb[0].mxu0 %v6755
  %v6849 = vpop.f32.mrb[0].mxu0
  %v6850 = vadd.f32 %v6810, %v6849
  %v6851 = vpop.f32.mrb[0].mxu0
  %v6852 = vpop.f32.mrb[0].mxu0
  %v6853 = vpop.f32.mrb[0].mxu0
  %6854 = vdwg.mxu0
  %6855 = vmatprep.subr.bf16.mxu0 0
  %6856 = vmatpush1.bf16.msra.mxu0 %v3570
  %6857 = vmatprep.subr.bf16.mxu0 0
  %6858 = vmatpush1.bf16.msra.mxu0 %v3571
  %6859 = vmatprep.subr.bf16.mxu0 0
  %6860 = vmatpush1.bf16.msra.mxu0 %v3572
  %6861 = vmatprep.subr.bf16.mxu0 0
  %6862 = vmatpush1.bf16.msra.mxu0 %v3573
  %6863 = vmatprep.subr.bf16.mxu0 0
  %6864 = vmatpush1.bf16.msra.mxu0 %v3574
  %6865 = vmatprep.subr.bf16.mxu0 0
  %6866 = vmatpush1.bf16.msra.mxu0 %v3575
  %6867 = vmatprep.subr.bf16.mxu0 0
  %6868 = vmatpush1.bf16.msra.mxu0 %v3576
  %6869 = vmatprep.subr.bf16.mxu0 0
  %6870 = vmatpush1.bf16.msra.mxu0 %v3577
  %6871 = vmatprep.subr.bf16.mxu0 0
  %6872 = vmatpush1.bf16.msra.mxu0 %v3578
  %6873 = vmatprep.subr.bf16.mxu0 0
  %6874 = vmatpush1.bf16.msra.mxu0 %v3579
  %6875 = vmatprep.subr.bf16.mxu0 0
  %6876 = vmatpush1.bf16.msra.mxu0 %v3580
  %6877 = vmatprep.subr.bf16.mxu0 0
  %6878 = vmatpush1.bf16.msra.mxu0 %v3581
  %6879 = vmatprep.subr.bf16.mxu0 0
  %6880 = vmatpush1.bf16.msra.mxu0 %v3582
  %6881 = vmatprep.subr.bf16.mxu0 0
  %6882 = vmatpush1.bf16.msra.mxu0 %v3583
  %6883 = vmatprep.subr.bf16.mxu0 0
  %6884 = vmatpush1.bf16.msra.mxu0 %v3584
  %6885 = vmatprep.subr.bf16.mxu0 0
  %6886 = vmatpush1.bf16.msra.mxu0 %v3585
  %6887 = vmatprep.mubr.bf16.mxu0 %v6758
  %6888 = vmatmul.mubr.bf16.gmra.mrb[0].mxu0 %v6757
  %v6889 = vpop.f32.mrb[0].mxu0
  %v6890 = vadd.f32 %v6850, %v6889
  %v6891 = vpop.f32.mrb[0].mxu0
  %v6892 = vpop.f32.mrb[0].mxu0
  %v6893 = vpop.f32.mrb[0].mxu0
  %6894 = vdwg.mxu0
  %6895 = vmatprep.subr.bf16.mxu0 0
  %6896 = vmatpush1.bf16.msra.mxu0 %v3586
  %6897 = vmatprep.subr.bf16.mxu0 0
  %6898 = vmatpush1.bf16.msra.mxu0 %v3587
  %6899 = vmatprep.subr.bf16.mxu0 0
  %6900 = vmatpush1.bf16.msra.mxu0 %v3588
  %6901 = vmatprep.subr.bf16.mxu0 0
  %6902 = vmatpush1.bf16.msra.mxu0 %v3589
  %6903 = vmatprep.subr.bf16.mxu0 0
  %6904 = vmatpush1.bf16.msra.mxu0 %v3590
  %6905 = vmatprep.subr.bf16.mxu0 0
  %6906 = vmatpush1.bf16.msra.mxu0 %v3591
  %6907 = vmatprep.subr.bf16.mxu0 0
  %6908 = vmatpush1.bf16.msra.mxu0 %v3592
  %6909 = vmatprep.subr.bf16.mxu0 0
  %6910 = vmatpush1.bf16.msra.mxu0 %v3593
  %6911 = vmatprep.subr.bf16.mxu0 0
  %6912 = vmatpush1.bf16.msra.mxu0 %v3594
  %6913 = vmatprep.subr.bf16.mxu0 0
  %6914 = vmatpush1.bf16.msra.mxu0 %v3595
  %6915 = vmatprep.subr.bf16.mxu0 0
  %6916 = vmatpush1.bf16.msra.mxu0 %v3596
  %6917 = vmatprep.subr.bf16.mxu0 0
  %6918 = vmatpush1.bf16.msra.mxu0 %v3597
  %6919 = vmatprep.subr.bf16.mxu0 0
  %6920 = vmatpush1.bf16.msra.mxu0 %v3598
  %6921 = vmatprep.subr.bf16.mxu0 0
  %6922 = vmatpush1.bf16.msra.mxu0 %v3599
  %6923 = vmatprep.subr.bf16.mxu0 0
  %6924 = vmatpush1.bf16.msra.mxu0 %v3600
  %6925 = vmatprep.subr.bf16.mxu0 0
  %6926 = vmatpush1.bf16.msra.mxu0 %v3601
  %6927 = vmatprep.mubr.bf16.mxu0 %v6760
  %6928 = vmatmul.mubr.bf16.gmra.mrb[0].mxu0 %v6759
  %v6929 = vpop.f32.mrb[0].mxu0
  %v6930 = vadd.f32 %v6890, %v6929
  %v6931 = vpop.f32.mrb[0].mxu0
  %v6932 = vpop.f32.mrb[0].mxu0
  %v6933 = vpop.f32.mrb[0].mxu0
  %6934 = vdwg.mxu0
  %6935 = vmatprep.subr.bf16.mxu0 0
  %6936 = vmatpush1.bf16.msra.mxu0 %v3602
  %6937 = vmatprep.subr.bf16.mxu0 0
  %6938 = vmatpush1.bf16.msra.mxu0 %v3603
  %6939 = vmatprep.subr.bf16.mxu0 0
  %6940 = vmatpush1.bf16.msra.mxu0 %v3604
  %6941 = vmatprep.subr.bf16.mxu0 0
  %6942 = vmatpush1.bf16.msra.mxu0 %v3605
  %6943 = vmatprep.subr.bf16.mxu0 0
  %6944 = vmatpush1.bf16.msra.mxu0 %v3606
  %6945 = vmatprep.subr.bf16.mxu0 0
  %6946 = vmatpush1.bf16.msra.mxu0 %v3607
  %6947 = vmatprep.subr.bf16.mxu0 0
  %6948 = vmatpush1.bf16.msra.mxu0 %v3608
  %6949 = vmatprep.subr.bf16.mxu0 0
  %6950 = vmatpush1.bf16.msra.mxu0 %v3609
  %6951 = vmatprep.subr.bf16.mxu0 0
  %6952 = vmatpush1.bf16.msra.mxu0 %v3610
  %6953 = vmatprep.subr.bf16.mxu0 0
  %6954 = vmatpush1.bf16.msra.mxu0 %v3611
  %6955 = vmatprep.subr.bf16.mxu0 0
  %6956 = vmatpush1.bf16.msra.mxu0 %v3612
  %6957 = vmatprep.subr.bf16.mxu0 0
  %6958 = vmatpush1.bf16.msra.mxu0 %v3613
  %6959 = vmatprep.subr.bf16.mxu0 0
  %6960 = vmatpush1.bf16.msra.mxu0 %v3614
  %6961 = vmatprep.subr.bf16.mxu0 0
  %6962 = vmatpush1.bf16.msra.mxu0 %v3615
  %6963 = vmatprep.subr.bf16.mxu0 0
  %6964 = vmatpush1.bf16.msra.mxu0 %v3616
  %6965 = vmatprep.subr.bf16.mxu0 0
  %6966 = vmatpush1.bf16.msra.mxu0 %v3617
  %6967 = vmatprep.mubr.bf16.mxu0 %v6762
  %6968 = vmatmul.mubr.bf16.gmra.mrb[0].mxu0 %v6761
  %v6969 = vpop.f32.mrb[0].mxu0
  %v6970 = vadd.f32 %v6930, %v6969
  %v6971 = vpop.f32.mrb[0].mxu0
  %v6972 = vpop.f32.mrb[0].mxu0
  %v6973 = vpop.f32.mrb[0].mxu0
  %6974 = vdwg.mxu0
  %6975 = vmatprep.subr.bf16.mxu0 0
  %6976 = vmatpush1.bf16.msra.mxu0 %v3618
  %6977 = vmatprep.subr.bf16.mxu0 0
  %6978 = vmatpush1.bf16.msra.mxu0 %v3619
  %6979 = vmatprep.subr.bf16.mxu0 0
  %6980 = vmatpush1.bf16.msra.mxu0 %v3620
  %6981 = vmatprep.subr.bf16.mxu0 0
  %6982 = vmatpush1.bf16.msra.mxu0 %v3621
  %6983 = vmatprep.subr.bf16.mxu0 0
  %6984 = vmatpush1.bf16.msra.mxu0 %v3622
  %6985 = vmatprep.subr.bf16.mxu0 0
  %6986 = vmatpush1.bf16.msra.mxu0 %v3623
  %6987 = vmatprep.subr.bf16.mxu0 0
  %6988 = vmatpush1.bf16.msra.mxu0 %v3624
  %6989 = vmatprep.subr.bf16.mxu0 0
  %6990 = vmatpush1.bf16.msra.mxu0 %v3625
  %6991 = vmatprep.subr.bf16.mxu0 0
  %6992 = vmatpush1.bf16.msra.mxu0 %v3626
  %6993 = vmatprep.subr.bf16.mxu0 0
  %6994 = vmatpush1.bf16.msra.mxu0 %v3627
  %6995 = vmatprep.subr.bf16.mxu0 0
  %6996 = vmatpush1.bf16.msra.mxu0 %v3628
  %6997 = vmatprep.subr.bf16.mxu0 0
  %6998 = vmatpush1.bf16.msra.mxu0 %v3629
  %6999 = vmatprep.subr.bf16.mxu0 0
  %7000 = vmatpush1.bf16.msra.mxu0 %v3630
  %7001 = vmatprep.subr.bf16.mxu0 0
  %7002 = vmatpush1.bf16.msra.mxu0 %v3631
  %7003 = vmatprep.subr.bf16.mxu0 0
  %7004 = vmatpush1.bf16.msra.mxu0 %v3632
  %7005 = vmatprep.subr.bf16.mxu0 0
  %7006 = vmatpush1.bf16.msra.mxu0 %v3633
  %7007 = vmatprep.mubr.bf16.mxu0 %v6764
  %7008 = vmatmul.mubr.bf16.gmra.mrb[0].mxu0 %v6763
  %v7009 = vpop.f32.mrb[0].mxu0
  %v7010 = vadd.f32 %v6970, %v7009
  %v7011 = vpop.f32.mrb[0].mxu0
  %v7012 = vpop.f32.mrb[0].mxu0
  %v7013 = vpop.f32.mrb[0].mxu0
  %7014 = vdwg.mxu0
  %7015 = vmatprep.subr.bf16.mxu0 0
  %7016 = vmatpush1.bf16.msra.mxu0 %v3634
  %7017 = vmatprep.subr.bf16.mxu0 0
  %7018 = vmatpush1.bf16.msra.mxu0 %v3635
  %7019 = vmatprep.subr.bf16.mxu0 0
  %7020 = vmatpush1.bf16.msra.mxu0 %v3636
  %7021 = vmatprep.subr.bf16.mxu0 0
  %7022 = vmatpush1.bf16.msra.mxu0 %v3637
  %7023 = vmatprep.subr.bf16.mxu0 0
  %7024 = vmatpush1.bf16.msra.mxu0 %v3638
  %7025 = vmatprep.subr.bf16.mxu0 0
  %7026 = vmatpush1.bf16.msra.mxu0 %v3639
  %7027 = vmatprep.subr.bf16.mxu0 0
  %7028 = vmatpush1.bf16.msra.mxu0 %v3640
  %7029 = vmatprep.subr.bf16.mxu0 0
  %7030 = vmatpush1.bf16.msra.mxu0 %v3641
  %7031 = vmatprep.subr.bf16.mxu0 0
  %7032 = vmatpush1.bf16.msra.mxu0 %v3642
  %7033 = vmatprep.subr.bf16.mxu0 0
  %7034 = vmatpush1.bf16.msra.mxu0 %v3643
  %7035 = vmatprep.subr.bf16.mxu0 0
  %7036 = vmatpush1.bf16.msra.mxu0 %v3644
  %7037 = vmatprep.subr.bf16.mxu0 0
  %7038 = vmatpush1.bf16.msra.mxu0 %v3645
  %7039 = vmatprep.subr.bf16.mxu0 0
  %7040 = vmatpush1.bf16.msra.mxu0 %v3646
  %7041 = vmatprep.subr.bf16.mxu0 0
  %7042 = vmatpush1.bf16.msra.mxu0 %v3647
  %7043 = vmatprep.subr.bf16.mxu0 0
  %7044 = vmatpush1.bf16.msra.mxu0 %v3648
  %7045 = vmatprep.subr.bf16.mxu0 0
  %7046 = vmatpush1.bf16.msra.mxu0 %v3766
  %7047 = vmatprep.mubr.bf16.mxu0 %v6773
  %7048 = vmatmul.mubr.bf16.gmra.mrb[0].mxu0 %v6765
  %v7049 = vpop.f32.mrb[0].mxu0
  %v7050 = vadd.f32 %v7010, %v7049
  %v7051 = vpop.f32.mrb[0].mxu0
  %v7052 = vpop.f32.mrb[0].mxu0
  %v7053 = vpop.f32.mrb[0].mxu0
  %7054 = vdwg.mxu0
  %v7055 = vsel %vm4048, %v7050, -inf
  %7056 = vmax.xlane.f32.xlu0 %v7055
  %v7057 = vpop.xlane.xlu0 %7056
  %v7058 = vsub.f32 %v7050, %v7057
  %v7059 = vmul.f32 %v7058, 1.442695
  %v7060 = vpow.pop %v7059
  %v7061 = vpack.c.bf16 %v7060, %v7060
  %v7063 = vsel %vm4048, %v7061, 0
  %7065 = vmatprep.subr.bf16.mxu0 0
  %7066 = vmatpush1.bf16.msra.mxu0 %v4078
  %7067 = vmatprep.subr.bf16.mxu0 0
  %7068 = vmatpush1.bf16.msra.mxu0 %v4079
  %7069 = vmatprep.subr.bf16.mxu0 0
  %7070 = vmatpush1.bf16.msra.mxu0 %v4080
  %7071 = vmatprep.subr.bf16.mxu0 0
  %7072 = vmatpush1.bf16.msra.mxu0 %v4081
  %7073 = vmatprep.subr.bf16.mxu0 0
  %7074 = vmatpush1.bf16.msra.mxu0 %v4082
  %7075 = vmatprep.subr.bf16.mxu0 0
  %7076 = vmatpush1.bf16.msra.mxu0 %v4096
  %7077 = vmatprep.subr.bf16.mxu0 0
  %7078 = vmatpush1.bf16.msra.mxu0 0
  %7079 = vmatprep.subr.bf16.mxu0 0
  %7080 = vmatpush1.bf16.msra.mxu0 0
  %7081 = vmatprep.subr.bf16.mxu0 0
  %7082 = vmatpush1.bf16.msra.mxu0 0
  %7083 = vmatprep.subr.bf16.mxu0 0
  %7084 = vmatpush1.bf16.msra.mxu0 0
  %7085 = vmatprep.subr.bf16.mxu0 0
  %7086 = vmatpush1.bf16.msra.mxu0 0
  %7087 = vmatprep.subr.bf16.mxu0 0
  %7088 = vmatpush1.bf16.msra.mxu0 0
  %7089 = vmatprep.subr.bf16.mxu0 0
  %7090 = vmatpush1.bf16.msra.mxu0 0
  %7091 = vmatprep.subr.bf16.mxu0 0
  %7092 = vmatpush1.bf16.msra.mxu0 0
  %7093 = vmatprep.subr.bf16.mxu0 0
  %7094 = vmatpush1.bf16.msra.mxu0 0
  %7095 = vmatprep.subr.bf16.mxu0 0
  %7096 = vmatpush1.bf16.msra.mxu0 0
  %7097 = vmatprep.mubr.bf16.mxu0 0
  %7098 = vmatmul.mubr.bf16.gmra.mrb[0].mxu0 %v7063
  %v7099 = vpop.f32.mrb[0].mxu0
  %v7100 = vadd.f32 0.0, %v7099
  %v7101 = vpop.f32.mrb[0].mxu0
  %v7102 = vpop.f32.mrb[0].mxu0
  %v7103 = vpop.f32.mrb[0].mxu0
  %7104 = vdwg.mxu0
  %v7105 = vmax.f32 %v7100, 1e-20
  %v7106 = vrcp.pop %v7105
  %v7107 = vmul.f32 %v7060, %v7106
  %v7108 = vpack.c.bf16 %v7107, %v7107
  %v7110 = vsel %vm4048, %v7108, 0
  %7112 = vmatprep.subr.bf16.mxu0 %v4374
  %7113 = vmatpush1.bf16.msra.mxu0 %v4373
  %7114 = vmatprep.subr.bf16.mxu0 %v4388
  %7115 = vmatpush1.bf16.msra.mxu0 %v4387
  %7116 = vmatprep.subr.bf16.mxu0 %v4402
  %7117 = vmatpush1.bf16.msra.mxu0 %v4401
  %7118 = vmatprep.subr.bf16.mxu0 %v4416
  %7119 = vmatpush1.bf16.msra.mxu0 %v4415
  %7120 = vmatprep.subr.bf16.mxu0 %v4430
  %7121 = vmatpush1.bf16.msra.mxu0 %v4429
  %7122 = vmatprep.subr.bf16.mxu0 %v4534
  %7123 = vmatpush1.bf16.msra.mxu0 %v4531
  %7124 = vmatprep.subr.bf16.mxu0 0
  %7125 = vmatpush1.bf16.msra.mxu0 0
  %7126 = vmatprep.subr.bf16.mxu0 0
  %7127 = vmatpush1.bf16.msra.mxu0 0
  %7128 = vmatprep.subr.bf16.mxu0 0
  %7129 = vmatpush1.bf16.msra.mxu0 0
  %7130 = vmatprep.subr.bf16.mxu0 0
  %7131 = vmatpush1.bf16.msra.mxu0 0
  %7132 = vmatprep.subr.bf16.mxu0 0
  %7133 = vmatpush1.bf16.msra.mxu0 0
  %7134 = vmatprep.subr.bf16.mxu0 0
  %7135 = vmatpush1.bf16.msra.mxu0 0
  %7136 = vmatprep.subr.bf16.mxu0 0
  %7137 = vmatpush1.bf16.msra.mxu0 0
  %7138 = vmatprep.subr.bf16.mxu0 0
  %7139 = vmatpush1.bf16.msra.mxu0 0
  %7140 = vmatprep.subr.bf16.mxu0 0
  %7141 = vmatpush1.bf16.msra.mxu0 0
  %7142 = vmatprep.subr.bf16.mxu0 0
  %7143 = vmatpush1.bf16.msra.mxu0 0
  %7144 = vmatprep.mubr.bf16.mxu0 0
  %7145 = vmatmul.mubr.bf16.gmra.mrb[0].mxu0 %v7110
  %v7146 = vpop.f32.mrb[0].mxu0
  %v7147 = vadd.f32 0.0, %v7146
  %v7148 = vpop.f32.mrb[0].mxu0
  %v7149 = vadd.f32 0.0, %v7148
  %v7150 = vpop.f32.mrb[0].mxu0
  %v7151 = vpop.f32.mrb[0].mxu0
  %7152 = vdwg.mxu0
  %7153 = vmatprep.subr.bf16.mxu0 %v4376
  %7154 = vmatpush1.bf16.msra.mxu0 %v4375
  %7155 = vmatprep.subr.bf16.mxu0 %v4390
  %7156 = vmatpush1.bf16.msra.mxu0 %v4389
  %7157 = vmatprep.subr.bf16.mxu0 %v4404
  %7158 = vmatpush1.bf16.msra.mxu0 %v4403
  %7159 = vmatprep.subr.bf16.mxu0 %v4418
  %7160 = vmatpush1.bf16.msra.mxu0 %v4417
  %7161 = vmatprep.subr.bf16.mxu0 %v4432
  %7162 = vmatpush1.bf16.msra.mxu0 %v4431
  %7163 = vmatprep.subr.bf16.mxu0 %v4540
  %7164 = vmatpush1.bf16.msra.mxu0 %v4537
  %7165 = vmatprep.subr.bf16.mxu0 0
  %7166 = vmatpush1.bf16.msra.mxu0 0
  %7167 = vmatprep.subr.bf16.mxu0 0
  %7168 = vmatpush1.bf16.msra.mxu0 0
  %7169 = vmatprep.subr.bf16.mxu0 0
  %7170 = vmatpush1.bf16.msra.mxu0 0
  %7171 = vmatprep.subr.bf16.mxu0 0
  %7172 = vmatpush1.bf16.msra.mxu0 0
  %7173 = vmatprep.subr.bf16.mxu0 0
  %7174 = vmatpush1.bf16.msra.mxu0 0
  %7175 = vmatprep.subr.bf16.mxu0 0
  %7176 = vmatpush1.bf16.msra.mxu0 0
  %7177 = vmatprep.subr.bf16.mxu0 0
  %7178 = vmatpush1.bf16.msra.mxu0 0
  %7179 = vmatprep.subr.bf16.mxu0 0
  %7180 = vmatpush1.bf16.msra.mxu0 0
  %7181 = vmatprep.subr.bf16.mxu0 0
  %7182 = vmatpush1.bf16.msra.mxu0 0
  %7183 = vmatprep.subr.bf16.mxu0 0
  %7184 = vmatpush1.bf16.msra.mxu0 0
  %7185 = vmatprep.mubr.bf16.mxu0 0
  %7186 = vmatmul.mubr.bf16.gmra.mrb[0].mxu0 %v7110
  %v7187 = vpop.f32.mrb[0].mxu0
  %v7188 = vadd.f32 0.0, %v7187
  %v7189 = vpop.f32.mrb[0].mxu0
  %v7190 = vadd.f32 0.0, %v7189
  %v7191 = vpop.f32.mrb[0].mxu0
  %v7192 = vpop.f32.mrb[0].mxu0
  %7193 = vdwg.mxu0
  %7194 = vmatprep.subr.bf16.mxu0 %v4378
  %7195 = vmatpush1.bf16.msra.mxu0 %v4377
  %7196 = vmatprep.subr.bf16.mxu0 %v4392
  %7197 = vmatpush1.bf16.msra.mxu0 %v4391
  %7198 = vmatprep.subr.bf16.mxu0 %v4406
  %7199 = vmatpush1.bf16.msra.mxu0 %v4405
  %7200 = vmatprep.subr.bf16.mxu0 %v4420
  %7201 = vmatpush1.bf16.msra.mxu0 %v4419
  %7202 = vmatprep.subr.bf16.mxu0 %v4434
  %7203 = vmatpush1.bf16.msra.mxu0 %v4433
  %7204 = vmatprep.subr.bf16.mxu0 %v4546
  %7205 = vmatpush1.bf16.msra.mxu0 %v4543
  %7206 = vmatprep.subr.bf16.mxu0 0
  %7207 = vmatpush1.bf16.msra.mxu0 0
  %7208 = vmatprep.subr.bf16.mxu0 0
  %7209 = vmatpush1.bf16.msra.mxu0 0
  %7210 = vmatprep.subr.bf16.mxu0 0
  %7211 = vmatpush1.bf16.msra.mxu0 0
  %7212 = vmatprep.subr.bf16.mxu0 0
  %7213 = vmatpush1.bf16.msra.mxu0 0
  %7214 = vmatprep.subr.bf16.mxu0 0
  %7215 = vmatpush1.bf16.msra.mxu0 0
  %7216 = vmatprep.subr.bf16.mxu0 0
  %7217 = vmatpush1.bf16.msra.mxu0 0
  %7218 = vmatprep.subr.bf16.mxu0 0
  %7219 = vmatpush1.bf16.msra.mxu0 0
  %7220 = vmatprep.subr.bf16.mxu0 0
  %7221 = vmatpush1.bf16.msra.mxu0 0
  %7222 = vmatprep.subr.bf16.mxu0 0
  %7223 = vmatpush1.bf16.msra.mxu0 0
  %7224 = vmatprep.subr.bf16.mxu0 0
  %7225 = vmatpush1.bf16.msra.mxu0 0
  %7226 = vmatprep.mubr.bf16.mxu0 0
  %7227 = vmatmul.mubr.bf16.gmra.mrb[0].mxu0 %v7110
  %v7228 = vpop.f32.mrb[0].mxu0
  %v7229 = vadd.f32 0.0, %v7228
  %v7230 = vpop.f32.mrb[0].mxu0
  %v7231 = vadd.f32 0.0, %v7230
  %v7232 = vpop.f32.mrb[0].mxu0
  %v7233 = vpop.f32.mrb[0].mxu0
  %7234 = vdwg.mxu0
  %7235 = vmatprep.subr.bf16.mxu0 %v4380
  %7236 = vmatpush1.bf16.msra.mxu0 %v4379
  %7237 = vmatprep.subr.bf16.mxu0 %v4394
  %7238 = vmatpush1.bf16.msra.mxu0 %v4393
  %7239 = vmatprep.subr.bf16.mxu0 %v4408
  %7240 = vmatpush1.bf16.msra.mxu0 %v4407
  %7241 = vmatprep.subr.bf16.mxu0 %v4422
  %7242 = vmatpush1.bf16.msra.mxu0 %v4421
  %7243 = vmatprep.subr.bf16.mxu0 %v4436
  %7244 = vmatpush1.bf16.msra.mxu0 %v4435
  %7245 = vmatprep.subr.bf16.mxu0 %v4552
  %7246 = vmatpush1.bf16.msra.mxu0 %v4549
  %7247 = vmatprep.subr.bf16.mxu0 0
  %7248 = vmatpush1.bf16.msra.mxu0 0
  %7249 = vmatprep.subr.bf16.mxu0 0
  %7250 = vmatpush1.bf16.msra.mxu0 0
  %7251 = vmatprep.subr.bf16.mxu0 0
  %7252 = vmatpush1.bf16.msra.mxu0 0
  %7253 = vmatprep.subr.bf16.mxu0 0
  %7254 = vmatpush1.bf16.msra.mxu0 0
  %7255 = vmatprep.subr.bf16.mxu0 0
  %7256 = vmatpush1.bf16.msra.mxu0 0
  %7257 = vmatprep.subr.bf16.mxu0 0
  %7258 = vmatpush1.bf16.msra.mxu0 0
  %7259 = vmatprep.subr.bf16.mxu0 0
  %7260 = vmatpush1.bf16.msra.mxu0 0
  %7261 = vmatprep.subr.bf16.mxu0 0
  %7262 = vmatpush1.bf16.msra.mxu0 0
  %7263 = vmatprep.subr.bf16.mxu0 0
  %7264 = vmatpush1.bf16.msra.mxu0 0
  %7265 = vmatprep.subr.bf16.mxu0 0
  %7266 = vmatpush1.bf16.msra.mxu0 0
  %7267 = vmatprep.mubr.bf16.mxu0 0
  %7268 = vmatmul.mubr.bf16.gmra.mrb[0].mxu0 %v7110
  %v7269 = vpop.f32.mrb[0].mxu0
  %v7270 = vadd.f32 0.0, %v7269
  %v7271 = vpop.f32.mrb[0].mxu0
  %v7272 = vadd.f32 0.0, %v7271
  %v7273 = vpop.f32.mrb[0].mxu0
  %v7274 = vpop.f32.mrb[0].mxu0
  %7275 = vdwg.mxu0
  %7276 = vmatprep.subr.bf16.mxu0 %v4382
  %7277 = vmatpush1.bf16.msra.mxu0 %v4381
  %7278 = vmatprep.subr.bf16.mxu0 %v4396
  %7279 = vmatpush1.bf16.msra.mxu0 %v4395
  %7280 = vmatprep.subr.bf16.mxu0 %v4410
  %7281 = vmatpush1.bf16.msra.mxu0 %v4409
  %7282 = vmatprep.subr.bf16.mxu0 %v4424
  %7283 = vmatpush1.bf16.msra.mxu0 %v4423
  %7284 = vmatprep.subr.bf16.mxu0 %v4438
  %7285 = vmatpush1.bf16.msra.mxu0 %v4437
  %7286 = vmatprep.subr.bf16.mxu0 %v4558
  %7287 = vmatpush1.bf16.msra.mxu0 %v4555
  %7288 = vmatprep.subr.bf16.mxu0 0
  %7289 = vmatpush1.bf16.msra.mxu0 0
  %7290 = vmatprep.subr.bf16.mxu0 0
  %7291 = vmatpush1.bf16.msra.mxu0 0
  %7292 = vmatprep.subr.bf16.mxu0 0
  %7293 = vmatpush1.bf16.msra.mxu0 0
  %7294 = vmatprep.subr.bf16.mxu0 0
  %7295 = vmatpush1.bf16.msra.mxu0 0
  %7296 = vmatprep.subr.bf16.mxu0 0
  %7297 = vmatpush1.bf16.msra.mxu0 0
  %7298 = vmatprep.subr.bf16.mxu0 0
  %7299 = vmatpush1.bf16.msra.mxu0 0
  %7300 = vmatprep.subr.bf16.mxu0 0
  %7301 = vmatpush1.bf16.msra.mxu0 0
  %7302 = vmatprep.subr.bf16.mxu0 0
  %7303 = vmatpush1.bf16.msra.mxu0 0
  %7304 = vmatprep.subr.bf16.mxu0 0
  %7305 = vmatpush1.bf16.msra.mxu0 0
  %7306 = vmatprep.subr.bf16.mxu0 0
  %7307 = vmatpush1.bf16.msra.mxu0 0
  %7308 = vmatprep.mubr.bf16.mxu0 0
  %7309 = vmatmul.mubr.bf16.gmra.mrb[0].mxu0 %v7110
  %v7310 = vpop.f32.mrb[0].mxu0
  %v7311 = vadd.f32 0.0, %v7310
  %v7312 = vpop.f32.mrb[0].mxu0
  %v7313 = vadd.f32 0.0, %v7312
  %v7314 = vpop.f32.mrb[0].mxu0
  %v7315 = vpop.f32.mrb[0].mxu0
  %7316 = vdwg.mxu0
  %7317 = vmatprep.subr.bf16.mxu0 %v4384
  %7318 = vmatpush1.bf16.msra.mxu0 %v4383
  %7319 = vmatprep.subr.bf16.mxu0 %v4398
  %7320 = vmatpush1.bf16.msra.mxu0 %v4397
  %7321 = vmatprep.subr.bf16.mxu0 %v4412
  %7322 = vmatpush1.bf16.msra.mxu0 %v4411
  %7323 = vmatprep.subr.bf16.mxu0 %v4426
  %7324 = vmatpush1.bf16.msra.mxu0 %v4425
  %7325 = vmatprep.subr.bf16.mxu0 %v4440
  %7326 = vmatpush1.bf16.msra.mxu0 %v4439
  %7327 = vmatprep.subr.bf16.mxu0 %v4564
  %7328 = vmatpush1.bf16.msra.mxu0 %v4561
  %7329 = vmatprep.subr.bf16.mxu0 0
  %7330 = vmatpush1.bf16.msra.mxu0 0
  %7331 = vmatprep.subr.bf16.mxu0 0
  %7332 = vmatpush1.bf16.msra.mxu0 0
  %7333 = vmatprep.subr.bf16.mxu0 0
  %7334 = vmatpush1.bf16.msra.mxu0 0
  %7335 = vmatprep.subr.bf16.mxu0 0
  %7336 = vmatpush1.bf16.msra.mxu0 0
  %7337 = vmatprep.subr.bf16.mxu0 0
  %7338 = vmatpush1.bf16.msra.mxu0 0
  %7339 = vmatprep.subr.bf16.mxu0 0
  %7340 = vmatpush1.bf16.msra.mxu0 0
  %7341 = vmatprep.subr.bf16.mxu0 0
  %7342 = vmatpush1.bf16.msra.mxu0 0
  %7343 = vmatprep.subr.bf16.mxu0 0
  %7344 = vmatpush1.bf16.msra.mxu0 0
  %7345 = vmatprep.subr.bf16.mxu0 0
  %7346 = vmatpush1.bf16.msra.mxu0 0
  %7347 = vmatprep.subr.bf16.mxu0 0
  %7348 = vmatpush1.bf16.msra.mxu0 0
  %7349 = vmatprep.mubr.bf16.mxu0 0
  %7350 = vmatmul.mubr.bf16.gmra.mrb[0].mxu0 %v7110
  %v7351 = vpop.f32.mrb[0].mxu0
  %v7352 = vadd.f32 0.0, %v7351
  %v7353 = vpop.f32.mrb[0].mxu0
  %v7354 = vadd.f32 0.0, %v7353
  %v7355 = vpop.f32.mrb[0].mxu0
  %v7356 = vpop.f32.mrb[0].mxu0
  %7357 = vdwg.mxu0
  %7358 = vmatprep.subr.bf16.mxu0 %v4386
  %7359 = vmatpush1.bf16.msra.mxu0 %v4385
  %7360 = vmatprep.subr.bf16.mxu0 %v4400
  %7361 = vmatpush1.bf16.msra.mxu0 %v4399
  %7362 = vmatprep.subr.bf16.mxu0 %v4414
  %7363 = vmatpush1.bf16.msra.mxu0 %v4413
  %7364 = vmatprep.subr.bf16.mxu0 %v4428
  %7365 = vmatpush1.bf16.msra.mxu0 %v4427
  %7366 = vmatprep.subr.bf16.mxu0 %v4442
  %7367 = vmatpush1.bf16.msra.mxu0 %v4441
  %7368 = vmatprep.subr.bf16.mxu0 %v4570
  %7369 = vmatpush1.bf16.msra.mxu0 %v4567
  %7370 = vmatprep.subr.bf16.mxu0 0
  %7371 = vmatpush1.bf16.msra.mxu0 0
  %7372 = vmatprep.subr.bf16.mxu0 0
  %7373 = vmatpush1.bf16.msra.mxu0 0
  %7374 = vmatprep.subr.bf16.mxu0 0
  %7375 = vmatpush1.bf16.msra.mxu0 0
  %7376 = vmatprep.subr.bf16.mxu0 0
  %7377 = vmatpush1.bf16.msra.mxu0 0
  %7378 = vmatprep.subr.bf16.mxu0 0
  %7379 = vmatpush1.bf16.msra.mxu0 0
  %7380 = vmatprep.subr.bf16.mxu0 0
  %7381 = vmatpush1.bf16.msra.mxu0 0
  %7382 = vmatprep.subr.bf16.mxu0 0
  %7383 = vmatpush1.bf16.msra.mxu0 0
  %7384 = vmatprep.subr.bf16.mxu0 0
  %7385 = vmatpush1.bf16.msra.mxu0 0
  %7386 = vmatprep.subr.bf16.mxu0 0
  %7387 = vmatpush1.bf16.msra.mxu0 0
  %7388 = vmatprep.subr.bf16.mxu0 0
  %7389 = vmatpush1.bf16.msra.mxu0 0
  %7390 = vmatprep.mubr.bf16.mxu0 0
  %7391 = vmatmul.mubr.bf16.gmra.mrb[0].mxu0 %v7110
  %v7392 = vpop.f32.mrb[0].mxu0
  %v7393 = vadd.f32 0.0, %v7392
  %v7394 = vpop.f32.mrb[0].mxu0
  %v7395 = vadd.f32 0.0, %v7394
  %v7396 = vpop.f32.mrb[0].mxu0
  %v7397 = vpop.f32.mrb[0].mxu0
  %7398 = vdwg.mxu0
  %7401 = vrot.lane.b32.xlu0 %v1726, 34
  %v7402 = vpop.permute.xlu0 %7401
  %7403 = vrot.lane.b32.xlu0 %v1765, 34
  %v7404 = vpop.permute.xlu0 %7403
  %7405 = vrot.lane.b32.xlu0 %v1767, 34
  %v7406 = vpop.permute.xlu0 %7405
  %vm7407 = vcmask 277504
  %v7408 = vsel %vm7407, %v7402, %v7404
  %v7409 = vsel %vm7407, %v7404, %v7406
  %7412 = vrot.lane.b32.xlu0 %v1765, 104
  %v7413 = vpop.permute.xlu0 %7412
  %7414 = vrot.lane.b32.xlu0 %v1767, 104
  %v7415 = vpop.permute.xlu0 %7414
  %v7416 = vsel %vm4865, %v4864, %v7413
  %v7417 = vsel %vm4865, %v7413, %v7415
  %7421 = vrot.lane.b32.xlu0 %v1765, 46
  %v7422 = vpop.permute.xlu0 %7421
  %7423 = vrot.lane.b32.xlu0 %v1767, 46
  %v7424 = vpop.permute.xlu0 %7423
  %v7425 = vsel %vm4873, %v4872, %v7422
  %v7426 = vsel %vm4873, %v7422, %v7424
  %7429 = vrot.lane.b32.xlu0 %v1765, 116
  %v7430 = vpop.permute.xlu0 %7429
  %7431 = vrot.lane.b32.xlu0 %v1767, 116
  %v7432 = vpop.permute.xlu0 %7431
  %v7433 = vsel %vm2986, %v4881, %v7430
  %v7434 = vsel %vm2986, %v7430, %v7432
  %7438 = vrot.lane.b32.xlu0 %v1765, 58
  %v7439 = vpop.permute.xlu0 %7438
  %7440 = vrot.lane.b32.xlu0 %v1767, 58
  %v7441 = vpop.permute.xlu0 %7440
  %v7442 = vsel %vm2994, %v4888, %v7439
  %v7443 = vsel %vm2994, %v7439, %v7441
  %7446 = vrot.lane.b32.xlu0 %v1765, 70
  %v7447 = vpop.permute.xlu0 %7446
  %7448 = vrot.lane.b32.xlu0 %v1767, 70
  %v7449 = vpop.permute.xlu0 %7448
  %v7450 = vsel %vm1531, %v4896, %v7447
  %v7451 = vsel %vm1531, %v7447, %v7449
  %7454 = vrot.lane.b32.xlu0 %v1765, 12
  %v7455 = vpop.permute.xlu0 %7454
  %7456 = vrot.lane.b32.xlu0 %v1767, 12
  %v7457 = vpop.permute.xlu0 %7456
  %v7458 = vsel %vm3011, %v4904, %v7455
  %v7459 = vsel %vm3011, %v7455, %v7457
  %7463 = vrot.lane.b32.xlu0 %v1765, 82
  %v7464 = vpop.permute.xlu0 %7463
  %7465 = vrot.lane.b32.xlu0 %v1767, 82
  %v7466 = vpop.permute.xlu0 %7465
  %v7467 = vsel %vm3019, %v4911, %v7464
  %v7468 = vsel %vm3019, %v7464, %v7466
  %v7471 = vsel %vm1531, %v7409, %v7416
  %v7472 = vsel %vm3011, %v7415, %v7425
  %v7473 = vsel %vm3019, %v7426, %v7433
  %v7474 = vsel %vm3028, %v7432, %v7442
  %v7475 = vsel %vm3036, %v7443, %v1726
  %v7476 = vsel %vm3045, %v1767, %v7450
  %v7477 = vsel %vm3055, %v7451, %v4904
  %v7478 = vsel %vm3057, %v7459, %v7467
  %v7479 = vmul.f32 %v7147, %v7408
  %v7480 = vmul.f32 %v7149, %v7471
  %v7481 = vmul.f32 %v7188, %v7417
  %v7482 = vmul.f32 %v7190, %v7472
  %v7483 = vmul.f32 %v7229, %v7473
  %v7484 = vmul.f32 %v7231, %v7434
  %v7485 = vmul.f32 %v7270, %v7474
  %v7486 = vmul.f32 %v7272, %v7475
  %v7487 = vmul.f32 %v7311, %v1765
  %v7488 = vmul.f32 %v7313, %v7476
  %v7489 = vmul.f32 %v7352, %v7477
  %v7490 = vmul.f32 %v7354, %v7458
  %v7491 = vmul.f32 %v7393, %v7478
  %v7492 = vmul.f32 %v7395, %v7468
  %v7493 = vpack.c.bf16 %v7479, %v7479
  %v7494 = vpack.c.bf16 %v7480, %v7480
  %v7495 = vpack.c.bf16 %v7481, %v7481
  %v7496 = vpack.c.bf16 %v7482, %v7482
  %v7497 = vpack.c.bf16 %v7483, %v7483
  %v7498 = vpack.c.bf16 %v7484, %v7484
  %v7499 = vpack.c.bf16 %v7485, %v7485
  %v7500 = vpack.c.bf16 %v7486, %v7486
  %v7501 = vpack.c.bf16 %v7487, %v7487
  %v7502 = vpack.c.bf16 %v7488, %v7488
  %v7503 = vpack.c.bf16 %v7489, %v7489
  %v7504 = vpack.c.bf16 %v7490, %v7490
  %v7505 = vpack.c.bf16 %v7491, %v7491
  %v7506 = vpack.c.bf16 %v7492, %v7492
  %v7508 = vsel %vm3761, %v7506, 0
  %7510 = vmatprep.subr.bf16.mxu0 %v5629
  %7511 = vmatpush1.bf16.msra.mxu0 %v5628
  %7512 = vmatprep.subr.bf16.mxu0 %v5631
  %7513 = vmatpush1.bf16.msra.mxu0 %v5630
  %7514 = vmatprep.subr.bf16.mxu0 %v5633
  %7515 = vmatpush1.bf16.msra.mxu0 %v5632
  %7516 = vmatprep.subr.bf16.mxu0 %v5635
  %7517 = vmatpush1.bf16.msra.mxu0 %v5634
  %7518 = vmatprep.subr.bf16.mxu0 %v5637
  %7519 = vmatpush1.bf16.msra.mxu0 %v5636
  %7520 = vmatprep.subr.bf16.mxu0 %v5639
  %7521 = vmatpush1.bf16.msra.mxu0 %v5638
  %7522 = vmatprep.subr.bf16.mxu0 %v5641
  %7523 = vmatpush1.bf16.msra.mxu0 %v5640
  %7524 = vmatprep.subr.bf16.mxu0 %v5643
  %7525 = vmatpush1.bf16.msra.mxu0 %v5642
  %7526 = vmatprep.subr.bf16.mxu0 %v5645
  %7527 = vmatpush1.bf16.msra.mxu0 %v5644
  %7528 = vmatprep.subr.bf16.mxu0 %v5647
  %7529 = vmatpush1.bf16.msra.mxu0 %v5646
  %7530 = vmatprep.subr.bf16.mxu0 %v5649
  %7531 = vmatpush1.bf16.msra.mxu0 %v5648
  %7532 = vmatprep.subr.bf16.mxu0 %v5651
  %7533 = vmatpush1.bf16.msra.mxu0 %v5650
  %7534 = vmatprep.subr.bf16.mxu0 %v5653
  %7535 = vmatpush1.bf16.msra.mxu0 %v5652
  %7536 = vmatprep.subr.bf16.mxu0 %v5655
  %7537 = vmatpush1.bf16.msra.mxu0 %v5654
  %7538 = vmatprep.subr.bf16.mxu0 %v5657
  %7539 = vmatpush1.bf16.msra.mxu0 %v5656
  %7540 = vmatprep.subr.bf16.mxu0 %v5659
  %7541 = vmatpush1.bf16.msra.mxu0 %v5658
  %7542 = vmatprep.mubr.bf16.mxu0 %v7494
  %7543 = vmatmul.mubr.bf16.gmra.mrb[0].mxu0 %v7493
  %v7544 = vpop.f32.mrb[0].mxu0
  %v7545 = vadd.f32 0.0, %v7544
  %v7546 = vpop.f32.mrb[0].mxu0
  %v7547 = vadd.f32 0.0, %v7546
  %v7548 = vpop.f32.mrb[0].mxu0
  %v7549 = vpop.f32.mrb[0].mxu0
  %7550 = vdwg.mxu0
  %7551 = vmatprep.subr.bf16.mxu0 %v5661
  %7552 = vmatpush1.bf16.msra.mxu0 %v5660
  %7553 = vmatprep.subr.bf16.mxu0 %v5663
  %7554 = vmatpush1.bf16.msra.mxu0 %v5662
  %7555 = vmatprep.subr.bf16.mxu0 %v5665
  %7556 = vmatpush1.bf16.msra.mxu0 %v5664
  %7557 = vmatprep.subr.bf16.mxu0 %v5667
  %7558 = vmatpush1.bf16.msra.mxu0 %v5666
  %7559 = vmatprep.subr.bf16.mxu0 %v5669
  %7560 = vmatpush1.bf16.msra.mxu0 %v5668
  %7561 = vmatprep.subr.bf16.mxu0 %v5671
  %7562 = vmatpush1.bf16.msra.mxu0 %v5670
  %7563 = vmatprep.subr.bf16.mxu0 %v5673
  %7564 = vmatpush1.bf16.msra.mxu0 %v5672
  %7565 = vmatprep.subr.bf16.mxu0 %v5675
  %7566 = vmatpush1.bf16.msra.mxu0 %v5674
  %7567 = vmatprep.subr.bf16.mxu0 %v5677
  %7568 = vmatpush1.bf16.msra.mxu0 %v5676
  %7569 = vmatprep.subr.bf16.mxu0 %v5679
  %7570 = vmatpush1.bf16.msra.mxu0 %v5678
  %7571 = vmatprep.subr.bf16.mxu0 %v5681
  %7572 = vmatpush1.bf16.msra.mxu0 %v5680
  %7573 = vmatprep.subr.bf16.mxu0 %v5683
  %7574 = vmatpush1.bf16.msra.mxu0 %v5682
  %7575 = vmatprep.subr.bf16.mxu0 %v5685
  %7576 = vmatpush1.bf16.msra.mxu0 %v5684
  %7577 = vmatprep.subr.bf16.mxu0 %v5687
  %7578 = vmatpush1.bf16.msra.mxu0 %v5686
  %7579 = vmatprep.subr.bf16.mxu0 %v5689
  %7580 = vmatpush1.bf16.msra.mxu0 %v5688
  %7581 = vmatprep.subr.bf16.mxu0 %v5691
  %7582 = vmatpush1.bf16.msra.mxu0 %v5690
  %7583 = vmatprep.mubr.bf16.mxu0 %v7496
  %7584 = vmatmul.mubr.bf16.gmra.mrb[0].mxu0 %v7495
  %v7585 = vpop.f32.mrb[0].mxu0
  %v7586 = vadd.f32 %v7545, %v7585
  %v7587 = vpop.f32.mrb[0].mxu0
  %v7588 = vadd.f32 %v7547, %v7587
  %v7589 = vpop.f32.mrb[0].mxu0
  %v7590 = vpop.f32.mrb[0].mxu0
  %7591 = vdwg.mxu0
  %7592 = vmatprep.subr.bf16.mxu0 %v5693
  %7593 = vmatpush1.bf16.msra.mxu0 %v5692
  %7594 = vmatprep.subr.bf16.mxu0 %v5695
  %7595 = vmatpush1.bf16.msra.mxu0 %v5694
  %7596 = vmatprep.subr.bf16.mxu0 %v5697
  %7597 = vmatpush1.bf16.msra.mxu0 %v5696
  %7598 = vmatprep.subr.bf16.mxu0 %v5699
  %7599 = vmatpush1.bf16.msra.mxu0 %v5698
  %7600 = vmatprep.subr.bf16.mxu0 %v5701
  %7601 = vmatpush1.bf16.msra.mxu0 %v5700
  %7602 = vmatprep.subr.bf16.mxu0 %v5703
  %7603 = vmatpush1.bf16.msra.mxu0 %v5702
  %7604 = vmatprep.subr.bf16.mxu0 %v5705
  %7605 = vmatpush1.bf16.msra.mxu0 %v5704
  %7606 = vmatprep.subr.bf16.mxu0 %v5707
  %7607 = vmatpush1.bf16.msra.mxu0 %v5706
  %7608 = vmatprep.subr.bf16.mxu0 %v5709
  %7609 = vmatpush1.bf16.msra.mxu0 %v5708
  %7610 = vmatprep.subr.bf16.mxu0 %v5711
  %7611 = vmatpush1.bf16.msra.mxu0 %v5710
  %7612 = vmatprep.subr.bf16.mxu0 %v5713
  %7613 = vmatpush1.bf16.msra.mxu0 %v5712
  %7614 = vmatprep.subr.bf16.mxu0 %v5715
  %7615 = vmatpush1.bf16.msra.mxu0 %v5714
  %7616 = vmatprep.subr.bf16.mxu0 %v5717
  %7617 = vmatpush1.bf16.msra.mxu0 %v5716
  %7618 = vmatprep.subr.bf16.mxu0 %v5719
  %7619 = vmatpush1.bf16.msra.mxu0 %v5718
  %7620 = vmatprep.subr.bf16.mxu0 %v5721
  %7621 = vmatpush1.bf16.msra.mxu0 %v5720
  %7622 = vmatprep.subr.bf16.mxu0 %v5723
  %7623 = vmatpush1.bf16.msra.mxu0 %v5722
  %7624 = vmatprep.mubr.bf16.mxu0 %v7498
  %7625 = vmatmul.mubr.bf16.gmra.mrb[0].mxu0 %v7497
  %v7626 = vpop.f32.mrb[0].mxu0
  %v7627 = vadd.f32 %v7586, %v7626
  %v7628 = vpop.f32.mrb[0].mxu0
  %v7629 = vadd.f32 %v7588, %v7628
  %v7630 = vpop.f32.mrb[0].mxu0
  %v7631 = vpop.f32.mrb[0].mxu0
  %7632 = vdwg.mxu0
  %7633 = vmatprep.subr.bf16.mxu0 %v5725
  %7634 = vmatpush1.bf16.msra.mxu0 %v5724
  %7635 = vmatprep.subr.bf16.mxu0 %v5727
  %7636 = vmatpush1.bf16.msra.mxu0 %v5726
  %7637 = vmatprep.subr.bf16.mxu0 %v5729
  %7638 = vmatpush1.bf16.msra.mxu0 %v5728
  %7639 = vmatprep.subr.bf16.mxu0 %v5731
  %7640 = vmatpush1.bf16.msra.mxu0 %v5730
  %7641 = vmatprep.subr.bf16.mxu0 %v5733
  %7642 = vmatpush1.bf16.msra.mxu0 %v5732
  %7643 = vmatprep.subr.bf16.mxu0 %v5735
  %7644 = vmatpush1.bf16.msra.mxu0 %v5734
  %7645 = vmatprep.subr.bf16.mxu0 %v5737
  %7646 = vmatpush1.bf16.msra.mxu0 %v5736
  %7647 = vmatprep.subr.bf16.mxu0 %v5739
  %7648 = vmatpush1.bf16.msra.mxu0 %v5738
  %7649 = vmatprep.subr.bf16.mxu0 %v5741
  %7650 = vmatpush1.bf16.msra.mxu0 %v5740
  %7651 = vmatprep.subr.bf16.mxu0 %v5743
  %7652 = vmatpush1.bf16.msra.mxu0 %v5742
  %7653 = vmatprep.subr.bf16.mxu0 %v5745
  %7654 = vmatpush1.bf16.msra.mxu0 %v5744
  %7655 = vmatprep.subr.bf16.mxu0 %v5747
  %7656 = vmatpush1.bf16.msra.mxu0 %v5746
  %7657 = vmatprep.subr.bf16.mxu0 %v5749
  %7658 = vmatpush1.bf16.msra.mxu0 %v5748
  %7659 = vmatprep.subr.bf16.mxu0 %v5751
  %7660 = vmatpush1.bf16.msra.mxu0 %v5750
  %7661 = vmatprep.subr.bf16.mxu0 %v5753
  %7662 = vmatpush1.bf16.msra.mxu0 %v5752
  %7663 = vmatprep.subr.bf16.mxu0 %v5755
  %7664 = vmatpush1.bf16.msra.mxu0 %v5754
  %7665 = vmatprep.mubr.bf16.mxu0 %v7500
  %7666 = vmatmul.mubr.bf16.gmra.mrb[0].mxu0 %v7499
  %v7667 = vpop.f32.mrb[0].mxu0
  %v7668 = vadd.f32 %v7627, %v7667
  %v7669 = vpop.f32.mrb[0].mxu0
  %v7670 = vadd.f32 %v7629, %v7669
  %v7671 = vpop.f32.mrb[0].mxu0
  %v7672 = vpop.f32.mrb[0].mxu0
  %7673 = vdwg.mxu0
  %7674 = vmatprep.subr.bf16.mxu0 %v5757
  %7675 = vmatpush1.bf16.msra.mxu0 %v5756
  %7676 = vmatprep.subr.bf16.mxu0 %v5759
  %7677 = vmatpush1.bf16.msra.mxu0 %v5758
  %7678 = vmatprep.subr.bf16.mxu0 %v5761
  %7679 = vmatpush1.bf16.msra.mxu0 %v5760
  %7680 = vmatprep.subr.bf16.mxu0 %v5763
  %7681 = vmatpush1.bf16.msra.mxu0 %v5762
  %7682 = vmatprep.subr.bf16.mxu0 %v5765
  %7683 = vmatpush1.bf16.msra.mxu0 %v5764
  %7684 = vmatprep.subr.bf16.mxu0 %v5767
  %7685 = vmatpush1.bf16.msra.mxu0 %v5766
  %7686 = vmatprep.subr.bf16.mxu0 %v5769
  %7687 = vmatpush1.bf16.msra.mxu0 %v5768
  %7688 = vmatprep.subr.bf16.mxu0 %v5771
  %7689 = vmatpush1.bf16.msra.mxu0 %v5770
  %7690 = vmatprep.subr.bf16.mxu0 %v5773
  %7691 = vmatpush1.bf16.msra.mxu0 %v5772
  %7692 = vmatprep.subr.bf16.mxu0 %v5775
  %7693 = vmatpush1.bf16.msra.mxu0 %v5774
  %7694 = vmatprep.subr.bf16.mxu0 %v5777
  %7695 = vmatpush1.bf16.msra.mxu0 %v5776
  %7696 = vmatprep.subr.bf16.mxu0 %v5779
  %7697 = vmatpush1.bf16.msra.mxu0 %v5778
  %7698 = vmatprep.subr.bf16.mxu0 %v5781
  %7699 = vmatpush1.bf16.msra.mxu0 %v5780
  %7700 = vmatprep.subr.bf16.mxu0 %v5783
  %7701 = vmatpush1.bf16.msra.mxu0 %v5782
  %7702 = vmatprep.subr.bf16.mxu0 %v5785
  %7703 = vmatpush1.bf16.msra.mxu0 %v5784
  %7704 = vmatprep.subr.bf16.mxu0 %v5787
  %7705 = vmatpush1.bf16.msra.mxu0 %v5786
  %7706 = vmatprep.mubr.bf16.mxu0 %v7502
  %7707 = vmatmul.mubr.bf16.gmra.mrb[0].mxu0 %v7501
  %v7708 = vpop.f32.mrb[0].mxu0
  %v7709 = vadd.f32 %v7668, %v7708
  %v7710 = vpop.f32.mrb[0].mxu0
  %v7711 = vadd.f32 %v7670, %v7710
  %v7712 = vpop.f32.mrb[0].mxu0
  %v7713 = vpop.f32.mrb[0].mxu0
  %7714 = vdwg.mxu0
  %7715 = vmatprep.subr.bf16.mxu0 %v5789
  %7716 = vmatpush1.bf16.msra.mxu0 %v5788
  %7717 = vmatprep.subr.bf16.mxu0 %v5791
  %7718 = vmatpush1.bf16.msra.mxu0 %v5790
  %7719 = vmatprep.subr.bf16.mxu0 %v5793
  %7720 = vmatpush1.bf16.msra.mxu0 %v5792
  %7721 = vmatprep.subr.bf16.mxu0 %v5795
  %7722 = vmatpush1.bf16.msra.mxu0 %v5794
  %7723 = vmatprep.subr.bf16.mxu0 %v5797
  %7724 = vmatpush1.bf16.msra.mxu0 %v5796
  %7725 = vmatprep.subr.bf16.mxu0 %v5799
  %7726 = vmatpush1.bf16.msra.mxu0 %v5798
  %7727 = vmatprep.subr.bf16.mxu0 %v5801
  %7728 = vmatpush1.bf16.msra.mxu0 %v5800
  %7729 = vmatprep.subr.bf16.mxu0 %v5803
  %7730 = vmatpush1.bf16.msra.mxu0 %v5802
  %7731 = vmatprep.subr.bf16.mxu0 %v5805
  %7732 = vmatpush1.bf16.msra.mxu0 %v5804
  %7733 = vmatprep.subr.bf16.mxu0 %v5807
  %7734 = vmatpush1.bf16.msra.mxu0 %v5806
  %7735 = vmatprep.subr.bf16.mxu0 %v5809
  %7736 = vmatpush1.bf16.msra.mxu0 %v5808
  %7737 = vmatprep.subr.bf16.mxu0 %v5811
  %7738 = vmatpush1.bf16.msra.mxu0 %v5810
  %7739 = vmatprep.subr.bf16.mxu0 %v5813
  %7740 = vmatpush1.bf16.msra.mxu0 %v5812
  %7741 = vmatprep.subr.bf16.mxu0 %v5815
  %7742 = vmatpush1.bf16.msra.mxu0 %v5814
  %7743 = vmatprep.subr.bf16.mxu0 %v5817
  %7744 = vmatpush1.bf16.msra.mxu0 %v5816
  %7745 = vmatprep.subr.bf16.mxu0 %v5819
  %7746 = vmatpush1.bf16.msra.mxu0 %v5818
  %7747 = vmatprep.mubr.bf16.mxu0 %v7504
  %7748 = vmatmul.mubr.bf16.gmra.mrb[0].mxu0 %v7503
  %v7749 = vpop.f32.mrb[0].mxu0
  %v7750 = vadd.f32 %v7709, %v7749
  %v7751 = vpop.f32.mrb[0].mxu0
  %v7752 = vadd.f32 %v7711, %v7751
  %v7753 = vpop.f32.mrb[0].mxu0
  %v7754 = vpop.f32.mrb[0].mxu0
  %7755 = vdwg.mxu0
  %7756 = vmatprep.subr.bf16.mxu0 %v5821
  %7757 = vmatpush1.bf16.msra.mxu0 %v5820
  %7758 = vmatprep.subr.bf16.mxu0 %v5823
  %7759 = vmatpush1.bf16.msra.mxu0 %v5822
  %7760 = vmatprep.subr.bf16.mxu0 %v5825
  %7761 = vmatpush1.bf16.msra.mxu0 %v5824
  %7762 = vmatprep.subr.bf16.mxu0 %v5827
  %7763 = vmatpush1.bf16.msra.mxu0 %v5826
  %7764 = vmatprep.subr.bf16.mxu0 %v5829
  %7765 = vmatpush1.bf16.msra.mxu0 %v5828
  %7766 = vmatprep.subr.bf16.mxu0 %v5831
  %7767 = vmatpush1.bf16.msra.mxu0 %v5830
  %7768 = vmatprep.subr.bf16.mxu0 %v5833
  %7769 = vmatpush1.bf16.msra.mxu0 %v5832
  %7770 = vmatprep.subr.bf16.mxu0 %v5835
  %7771 = vmatpush1.bf16.msra.mxu0 %v5834
  %7772 = vmatprep.subr.bf16.mxu0 %v5837
  %7773 = vmatpush1.bf16.msra.mxu0 %v5836
  %7774 = vmatprep.subr.bf16.mxu0 %v5839
  %7775 = vmatpush1.bf16.msra.mxu0 %v5838
  %7776 = vmatprep.subr.bf16.mxu0 %v5841
  %7777 = vmatpush1.bf16.msra.mxu0 %v5840
  %7778 = vmatprep.subr.bf16.mxu0 %v5843
  %7779 = vmatpush1.bf16.msra.mxu0 %v5842
  %7780 = vmatprep.subr.bf16.mxu0 %v5845
  %7781 = vmatpush1.bf16.msra.mxu0 %v5844
  %7782 = vmatprep.subr.bf16.mxu0 %v5847
  %7783 = vmatpush1.bf16.msra.mxu0 %v5846
  %7784 = vmatprep.subr.bf16.mxu0 %v5849
  %7785 = vmatpush1.bf16.msra.mxu0 %v5848
  %7786 = vmatprep.subr.bf16.mxu0 %v6081
  %7787 = vmatpush1.bf16.msra.mxu0 %v6078
  %7788 = vmatprep.mubr.bf16.mxu0 %v7508
  %7789 = vmatmul.mubr.bf16.gmra.mrb[0].mxu0 %v7505
  %v7790 = vpop.f32.mrb[0].mxu0
  %v7791 = vadd.f32 %v7750, %v7790
  %v7792 = vpop.f32.mrb[0].mxu0
  %v7793 = vadd.f32 %v7752, %v7792
  %v7794 = vpop.f32.mrb[0].mxu0
  %v7795 = vpop.f32.mrb[0].mxu0
  %7796 = vdwg.mxu0
  %7799 = vrot.lane.b32.xlu0 %v7791, 70
  %v7800 = vpop.permute.xlu0 %7799
  %7801 = vrot.lane.b32.xlu0 %v7793, 70
  %v7802 = vpop.permute.xlu0 %7801
  %v7803 = vsel %vm1531, %v7800, %v7802
  %v7807 = vsel %vm1531, %v6366, %v7800
  %v7808 = vpack.c.bf16 %v6364, %v6364
  %v7809 = vpack.c.bf16 %v7807, %v7807
  %v7810 = vpack.c.bf16 %v7803, %v7803
  %v7811 = vpack.c.bf16 %v7802, %v7802
  %v7812 = vld [vmem:[%s2] sm:$0xff]
  %v7813 = vld [vmem:[%s2 + $0x8] sm:$0xff]
  %v7814 = vld [vmem:[%s2 + $0x10] sm:$0xff]
  %v7815 = vld [vmem:[%s2 + $0x18] sm:$0xff]
  %v7816 = vld [vmem:[%s2 + $0x20] sm:$0xff]
  %v7817 = vld [vmem:[%s2 + $0x28] sm:$0xff]
  %v7818 = vld [vmem:[%s2 + $0x30] sm:$0xff]
  %v7819 = vld [vmem:[%s2 + $0x38] sm:$0xff]
  %v7820 = vld [vmem:[%s2 + $0x40] sm:$0xff]
  %v7821 = vld [vmem:[%s2 + $0x48] sm:$0xff]
  %v7822 = vld [vmem:[%s2 + $0x50] sm:$0xff]
  %v7823 = vld [vmem:[%s2 + $0x58] sm:$0xff]
  %v7824 = vld [vmem:[%s2 + $0x60] sm:$0xff]
  %v7825 = vld [vmem:[%s2 + $0x68] sm:$0xff]
  %v7826 = vld [vmem:[%s2 + $0x70] sm:$0xff]
  %v7827 = vld [vmem:[%s2 + $0x78] sm:$0xff]
  %v7828 = vld [vmem:[%s2 + $0x80] sm:$0xff]
  %v7829 = vld [vmem:[%s2 + $0x88] sm:$0xff]
  %v7830 = vld [vmem:[%s2 + $0x90] sm:$0xff]
  %v7831 = vld [vmem:[%s2 + $0x98] sm:$0xff]
  %v7832 = vld [vmem:[%s2 + $0xa0] sm:$0xff]
  %v7833 = vld [vmem:[%s2 + $0xa8] sm:$0xff]
  %v7834 = vld [vmem:[%s2 + $0xb0] sm:$0xff]
  %v7835 = vld [vmem:[%s2 + $0xb8] sm:$0xff]
  %v7836 = vld [vmem:[%s2 + $0xc0] sm:$0xff]
  %v7837 = vld [vmem:[%s2 + $0xc8] sm:$0xff]
  %v7838 = vld [vmem:[%s2 + $0xd0] sm:$0xff]
  %v7839 = vld [vmem:[%s2 + $0xd8] sm:$0xff]
  %v7840 = vld [vmem:[%s2 + $0xe0] sm:$0xff]
  %v7841 = vld [vmem:[%s2 + $0xe8] sm:$0xff]
  %v7842 = vld [vmem:[%s2 + $0xf0] sm:$0xff]
  %v7843 = vld [vmem:[%s2 + $0xf8] sm:$0xff]
  %v7844 = vld [vmem:[%s2 + $0x100] sm:$0xff]
  %v7845 = vld [vmem:[%s2 + $0x108] sm:$0xff]
  %v7846 = vld [vmem:[%s2 + $0x110] sm:$0xff]
  %v7847 = vld [vmem:[%s2 + $0x118] sm:$0xff]
  %v7848 = vld [vmem:[%s2 + $0x120] sm:$0xff]
  %v7849 = vld [vmem:[%s2 + $0x128] sm:$0xff]
  %v7850 = vld [vmem:[%s2 + $0x130] sm:$0xff]
  %v7851 = vld [vmem:[%s2 + $0x138] sm:$0xff]
  %v7852 = vld [vmem:[%s2 + $0x140] sm:$0xff]
  %v7853 = vld [vmem:[%s2 + $0x148] sm:$0xff]
  %v7854 = vld [vmem:[%s2 + $0x150] sm:$0xff]
  %v7855 = vld [vmem:[%s2 + $0x158] sm:$0xff]
  %v7856 = vld [vmem:[%s2 + $0x160] sm:$0xff]
  %v7857 = vld [vmem:[%s2 + $0x168] sm:$0xff]
  %v7858 = vld [vmem:[%s2 + $0x170] sm:$0xff]
  %v7859 = vld [vmem:[%s2 + $0x178] sm:$0xff]
  %v7860 = vld [vmem:[%s2 + $0x180] sm:$0xff]
  %v7861 = vld [vmem:[%s2 + $0x188] sm:$0x33]
  %v7912 = vunpack.c.l.b16 %v7812
  %v7913 = vunpack.c.h.b16 %v7812
  %v7914 = vunpack.c.l.b16 %v7813
  %v7915 = vunpack.c.h.b16 %v7813
  %v7916 = vunpack.c.l.b16 %v7814
  %v7917 = vunpack.c.h.b16 %v7814
  %v7918 = vunpack.c.l.b16 %v7815
  %v7919 = vunpack.c.h.b16 %v7815
  %v7920 = vunpack.c.l.b16 %v7816
  %v7921 = vunpack.c.h.b16 %v7816
  %v7922 = vunpack.c.l.b16 %v7817
  %v7923 = vunpack.c.h.b16 %v7817
  %v7924 = vunpack.c.l.b16 %v7818
  %v7925 = vunpack.c.h.b16 %v7818
  %v7926 = vunpack.c.l.b16 %v7819
  %v7927 = vunpack.c.h.b16 %v7819
  %v7928 = vunpack.c.l.b16 %v7820
  %v7929 = vunpack.c.h.b16 %v7820
  %v7930 = vunpack.c.l.b16 %v7821
  %v7931 = vunpack.c.h.b16 %v7821
  %v7932 = vunpack.c.l.b16 %v7822
  %v7933 = vunpack.c.h.b16 %v7822
  %v7934 = vunpack.c.l.b16 %v7823
  %v7935 = vunpack.c.h.b16 %v7823
  %v7936 = vunpack.c.l.b16 %v7824
  %v7937 = vunpack.c.h.b16 %v7824
  %v7938 = vunpack.c.l.b16 %v7825
  %v7939 = vunpack.c.h.b16 %v7825
  %v7940 = vunpack.c.l.b16 %v7826
  %v7941 = vunpack.c.h.b16 %v7826
  %v7942 = vunpack.c.l.b16 %v7827
  %v7943 = vunpack.c.h.b16 %v7827
  %v7944 = vunpack.c.l.b16 %v7828
  %v7945 = vunpack.c.h.b16 %v7828
  %v7946 = vunpack.c.l.b16 %v7829
  %v7947 = vunpack.c.h.b16 %v7829
  %v7948 = vunpack.c.l.b16 %v7830
  %v7949 = vunpack.c.h.b16 %v7830
  %v7950 = vunpack.c.l.b16 %v7831
  %v7951 = vunpack.c.h.b16 %v7831
  %v7952 = vunpack.c.l.b16 %v7832
  %v7953 = vunpack.c.h.b16 %v7832
  %v7954 = vunpack.c.l.b16 %v7833
  %v7955 = vunpack.c.h.b16 %v7833
  %v7956 = vunpack.c.l.b16 %v7834
  %v7957 = vunpack.c.h.b16 %v7834
  %v7958 = vunpack.c.l.b16 %v7835
  %v7959 = vunpack.c.h.b16 %v7835
  %v7960 = vunpack.c.l.b16 %v7836
  %v7961 = vunpack.c.h.b16 %v7836
  %v7962 = vunpack.c.l.b16 %v7837
  %v7963 = vunpack.c.h.b16 %v7837
  %v7964 = vunpack.c.l.b16 %v7838
  %v7965 = vunpack.c.h.b16 %v7838
  %v7966 = vunpack.c.l.b16 %v7839
  %v7967 = vunpack.c.h.b16 %v7839
  %v7968 = vunpack.c.l.b16 %v7840
  %v7969 = vunpack.c.h.b16 %v7840
  %v7970 = vunpack.c.l.b16 %v7841
  %v7971 = vunpack.c.h.b16 %v7841
  %v7972 = vunpack.c.l.b16 %v7842
  %v7973 = vunpack.c.h.b16 %v7842
  %v7974 = vunpack.c.l.b16 %v7843
  %v7975 = vunpack.c.h.b16 %v7843
  %v7976 = vunpack.c.l.b16 %v7844
  %v7977 = vunpack.c.h.b16 %v7844
  %v7978 = vunpack.c.l.b16 %v7845
  %v7979 = vunpack.c.h.b16 %v7845
  %v7980 = vunpack.c.l.b16 %v7846
  %v7981 = vunpack.c.h.b16 %v7846
  %v7982 = vunpack.c.l.b16 %v7847
  %v7983 = vunpack.c.h.b16 %v7847
  %v7984 = vunpack.c.l.b16 %v7848
  %v7985 = vunpack.c.h.b16 %v7848
  %v7986 = vunpack.c.l.b16 %v7849
  %v7987 = vunpack.c.h.b16 %v7849
  %v7988 = vunpack.c.l.b16 %v7850
  %v7989 = vunpack.c.h.b16 %v7850
  %v7990 = vunpack.c.l.b16 %v7851
  %v7991 = vunpack.c.h.b16 %v7851
  %v7992 = vunpack.c.l.b16 %v7852
  %v7993 = vunpack.c.h.b16 %v7852
  %v7994 = vunpack.c.l.b16 %v7853
  %v7995 = vunpack.c.h.b16 %v7853
  %v7996 = vunpack.c.l.b16 %v7854
  %v7997 = vunpack.c.h.b16 %v7854
  %v7998 = vunpack.c.l.b16 %v7855
  %v7999 = vunpack.c.h.b16 %v7855
  %v8000 = vunpack.c.l.b16 %v7856
  %v8001 = vunpack.c.h.b16 %v7856
  %v8002 = vunpack.c.l.b16 %v7857
  %v8003 = vunpack.c.h.b16 %v7857
  %v8004 = vunpack.c.l.b16 %v7858
  %v8005 = vunpack.c.h.b16 %v7858
  %v8006 = vunpack.c.l.b16 %v7859
  %v8007 = vunpack.c.h.b16 %v7859
  %v8008 = vunpack.c.l.b16 %v7860
  %v8009 = vunpack.c.h.b16 %v7860
  %v8010 = vunpack.c.l.b16 %v7861
  %v8011 = vunpack.c.h.b16 %v7861
  %v8012 = vpack.c.b16 %v7914, %v7912
  %v8013 = vpack.c.b16 %v7915, %v7913
  %v8014 = vpack.c.b16 %v7918, %v7916
  %v8015 = vpack.c.b16 %v7919, %v7917
  %v8016 = vpack.c.b16 %v7922, %v7920
  %v8017 = vpack.c.b16 %v7923, %v7921
  %v8018 = vpack.c.b16 %v7926, %v7924
  %v8019 = vpack.c.b16 %v7927, %v7925
  %v8020 = vpack.c.b16 %v7930, %v7928
  %v8021 = vpack.c.b16 %v7931, %v7929
  %v8022 = vpack.c.b16 %v7934, %v7932
  %v8023 = vpack.c.b16 %v7935, %v7933
  %v8024 = vpack.c.b16 %v7938, %v7936
  %v8025 = vpack.c.b16 %v7939, %v7937
  %v8026 = vpack.c.b16 %v7942, %v7940
  %v8027 = vpack.c.b16 %v7943, %v7941
  %v8028 = vpack.c.b16 %v7946, %v7944
  %v8029 = vpack.c.b16 %v7947, %v7945
  %v8030 = vpack.c.b16 %v7950, %v7948
  %v8031 = vpack.c.b16 %v7951, %v7949
  %v8032 = vpack.c.b16 %v7954, %v7952
  %v8033 = vpack.c.b16 %v7955, %v7953
  %v8034 = vpack.c.b16 %v7958, %v7956
  %v8035 = vpack.c.b16 %v7959, %v7957
  %v8036 = vpack.c.b16 %v7962, %v7960
  %v8037 = vpack.c.b16 %v7963, %v7961
  %v8038 = vpack.c.b16 %v7966, %v7964
  %v8039 = vpack.c.b16 %v7967, %v7965
  %v8040 = vpack.c.b16 %v7970, %v7968
  %v8041 = vpack.c.b16 %v7971, %v7969
  %v8042 = vpack.c.b16 %v7974, %v7972
  %v8043 = vpack.c.b16 %v7975, %v7973
  %v8044 = vpack.c.b16 %v7978, %v7976
  %v8045 = vpack.c.b16 %v7979, %v7977
  %v8046 = vpack.c.b16 %v7982, %v7980
  %v8047 = vpack.c.b16 %v7983, %v7981
  %v8048 = vpack.c.b16 %v7986, %v7984
  %v8049 = vpack.c.b16 %v7987, %v7985
  %v8050 = vpack.c.b16 %v7990, %v7988
  %v8051 = vpack.c.b16 %v7991, %v7989
  %v8052 = vpack.c.b16 %v7994, %v7992
  %v8053 = vpack.c.b16 %v7995, %v7993
  %v8054 = vpack.c.b16 %v7998, %v7996
  %v8055 = vpack.c.b16 %v7999, %v7997
  %v8056 = vpack.c.b16 %v8002, %v8000
  %v8057 = vpack.c.b16 %v8003, %v8001
  %v8058 = vpack.c.b16 %v8006, %v8004
  %v8059 = vpack.c.b16 %v8007, %v8005
  %v8060 = vpack.c.b16 %v8010, %v8008
  %v8061 = vpack.c.b16 %v8011, %v8009
  %v8111 = vsel %vm3011, %v7811, 0
  %vm8113 = vcmask 1045504
  %v8115 = vsel %vm8113, %v8060, 0
  %v8118 = vsel %vm8113, %v8061, 0
  %8120 = vmatprep.subr.bf16.mxu0 %v8013
  %8121 = vmatpush1.bf16.msra.mxu0 %v8012
  %8122 = vmatprep.subr.bf16.mxu0 %v8015
  %8123 = vmatpush1.bf16.msra.mxu0 %v8014
  %8124 = vmatprep.subr.bf16.mxu0 %v8017
  %8125 = vmatpush1.bf16.msra.mxu0 %v8016
  %8126 = vmatprep.subr.bf16.mxu0 %v8019
  %8127 = vmatpush1.bf16.msra.mxu0 %v8018
  %8128 = vmatprep.subr.bf16.mxu0 %v8021
  %8129 = vmatpush1.bf16.msra.mxu0 %v8020
  %8130 = vmatprep.subr.bf16.mxu0 %v8023
  %8131 = vmatpush1.bf16.msra.mxu0 %v8022
  %8132 = vmatprep.subr.bf16.mxu0 %v8025
  %8133 = vmatpush1.bf16.msra.mxu0 %v8024
  %8134 = vmatprep.subr.bf16.mxu0 %v8027
  %8135 = vmatpush1.bf16.msra.mxu0 %v8026
  %8136 = vmatprep.subr.bf16.mxu0 %v8029
  %8137 = vmatpush1.bf16.msra.mxu0 %v8028
  %8138 = vmatprep.subr.bf16.mxu0 %v8031
  %8139 = vmatpush1.bf16.msra.mxu0 %v8030
  %8140 = vmatprep.subr.bf16.mxu0 %v8033
  %8141 = vmatpush1.bf16.msra.mxu0 %v8032
  %8142 = vmatprep.subr.bf16.mxu0 %v8035
  %8143 = vmatpush1.bf16.msra.mxu0 %v8034
  %8144 = vmatprep.subr.bf16.mxu0 %v8037
  %8145 = vmatpush1.bf16.msra.mxu0 %v8036
  %8146 = vmatprep.subr.bf16.mxu0 %v8039
  %8147 = vmatpush1.bf16.msra.mxu0 %v8038
  %8148 = vmatprep.subr.bf16.mxu0 %v8041
  %8149 = vmatpush1.bf16.msra.mxu0 %v8040
  %8150 = vmatprep.subr.bf16.mxu0 %v8043
  %8151 = vmatpush1.bf16.msra.mxu0 %v8042
  %8152 = vmatprep.mubr.bf16.mxu0 %v7809
  %8153 = vmatmul.mubr.bf16.gmra.mrb[0].mxu0 %v7808
  %v8154 = vpop.f32.mrb[0].mxu0
  %v8155 = vadd.f32 0.0, %v8154
  %v8156 = vpop.f32.mrb[0].mxu0
  %v8157 = vadd.f32 0.0, %v8156
  %v8158 = vpop.f32.mrb[0].mxu0
  %v8159 = vpop.f32.mrb[0].mxu0
  %8160 = vdwg.mxu0
  %8161 = vmatprep.subr.bf16.mxu0 %v8045
  %8162 = vmatpush1.bf16.msra.mxu0 %v8044
  %8163 = vmatprep.subr.bf16.mxu0 %v8047
  %8164 = vmatpush1.bf16.msra.mxu0 %v8046
  %8165 = vmatprep.subr.bf16.mxu0 %v8049
  %8166 = vmatpush1.bf16.msra.mxu0 %v8048
  %8167 = vmatprep.subr.bf16.mxu0 %v8051
  %8168 = vmatpush1.bf16.msra.mxu0 %v8050
  %8169 = vmatprep.subr.bf16.mxu0 %v8053
  %8170 = vmatpush1.bf16.msra.mxu0 %v8052
  %8171 = vmatprep.subr.bf16.mxu0 %v8055
  %8172 = vmatpush1.bf16.msra.mxu0 %v8054
  %8173 = vmatprep.subr.bf16.mxu0 %v8057
  %8174 = vmatpush1.bf16.msra.mxu0 %v8056
  %8175 = vmatprep.subr.bf16.mxu0 %v8059
  %8176 = vmatpush1.bf16.msra.mxu0 %v8058
  %8177 = vmatprep.subr.bf16.mxu0 %v8118
  %8178 = vmatpush1.bf16.msra.mxu0 %v8115
  %8179 = vmatprep.subr.bf16.mxu0 0
  %8180 = vmatpush1.bf16.msra.mxu0 0
  %8181 = vmatprep.subr.bf16.mxu0 0
  %8182 = vmatpush1.bf16.msra.mxu0 0
  %8183 = vmatprep.subr.bf16.mxu0 0
  %8184 = vmatpush1.bf16.msra.mxu0 0
  %8185 = vmatprep.subr.bf16.mxu0 0
  %8186 = vmatpush1.bf16.msra.mxu0 0
  %8187 = vmatprep.subr.bf16.mxu0 0
  %8188 = vmatpush1.bf16.msra.mxu0 0
  %8189 = vmatprep.subr.bf16.mxu0 0
  %8190 = vmatpush1.bf16.msra.mxu0 0
  %8191 = vmatprep.subr.bf16.mxu0 0
  %8192 = vmatpush1.bf16.msra.mxu0 0
  %8193 = vmatprep.mubr.bf16.mxu0 %v8111
  %8194 = vmatmul.mubr.bf16.gmra.mrb[0].mxu0 %v7810
  %v8195 = vpop.f32.mrb[0].mxu0
  %v8196 = vadd.f32 %v8155, %v8195
  %v8197 = vpop.f32.mrb[0].mxu0
  %v8198 = vadd.f32 %v8157, %v8197
  %v8199 = vpop.f32.mrb[0].mxu0
  %v8200 = vpop.f32.mrb[0].mxu0
  %8201 = vdwg.mxu0
  %v8202 = vld [vmem:[%s8] sm:$0xff]
  %v8203 = vld [vmem:[%s8 + $0x8] sm:$0xff]
  %v8204 = vld [vmem:[%s8 + $0x10] sm:$0xff]
  %v8205 = vld [vmem:[%s8 + $0x18] sm:$0xff]
  %v8206 = vld [vmem:[%s8 + $0x20] sm:$0xff]
  %v8207 = vld [vmem:[%s8 + $0x28] sm:$0xff]
  %v8208 = vld [vmem:[%s8 + $0x30] sm:$0xff]
  %v8209 = vld [vmem:[%s8 + $0x38] sm:$0xff]
  %v8210 = vld [vmem:[%s8 + $0x40] sm:$0xff]
  %v8211 = vld [vmem:[%s8 + $0x48] sm:$0xff]
  %v8212 = vld [vmem:[%s8 + $0x50] sm:$0xff]
  %v8213 = vld [vmem:[%s8 + $0x58] sm:$0xff]
  %v8214 = vld [vmem:[%s8 + $0x60] sm:$0xff]
  %v8215 = vld [vmem:[%s8 + $0x68] sm:$0xff]
  %v8216 = vld [vmem:[%s8 + $0x70] sm:$0xff]
  %v8217 = vld [vmem:[%s8 + $0x78] sm:$0xff]
  %v8218 = vld [vmem:[%s8 + $0x80] sm:$0xff]
  %v8219 = vld [vmem:[%s8 + $0x88] sm:$0xff]
  %v8220 = vld [vmem:[%s8 + $0x90] sm:$0xff]
  %v8221 = vld [vmem:[%s8 + $0x98] sm:$0xff]
  %v8222 = vld [vmem:[%s8 + $0xa0] sm:$0xff]
  %v8223 = vld [vmem:[%s8 + $0xa8] sm:$0xff]
  %v8224 = vld [vmem:[%s8 + $0xb0] sm:$0xff]
  %v8225 = vld [vmem:[%s8 + $0xb8] sm:$0xff]
  %v8226 = vld [vmem:[%s8 + $0xc0] sm:$0x77]
  %v8227 = vadd.f32 %v68, %v8196
  %v8228 = vadd.f32 %v69, %v8198
  %s8229 = scalar_lea.vmem %s10, 1
  %v8230 = vld [vmem:[%s8229] ss:$8 sm:$0x3]
  %s8231 = scalar_lea.vmem %s10, 2
  %v8232 = vld [vmem:[%s8231] ss:$8 sm:$0x3]
  %v8233 = vpack.c.bf16 %v8227, %v8227
  %v8234 = vpack.c.bf16 %v8228, %v8228
  %v8260 = vunpack.c.l.b16 %v8202
  %v8261 = vunpack.c.h.b16 %v8202
  %v8262 = vunpack.c.l.b16 %v8203
  %v8263 = vunpack.c.h.b16 %v8203
  %v8264 = vunpack.c.l.b16 %v8204
  %v8265 = vunpack.c.h.b16 %v8204
  %v8266 = vunpack.c.l.b16 %v8205
  %v8267 = vunpack.c.h.b16 %v8205
  %v8268 = vunpack.c.l.b16 %v8206
  %v8269 = vunpack.c.h.b16 %v8206
  %v8270 = vunpack.c.l.b16 %v8207
  %v8271 = vunpack.c.h.b16 %v8207
  %v8272 = vunpack.c.l.b16 %v8208
  %v8273 = vunpack.c.h.b16 %v8208
  %v8274 = vunpack.c.l.b16 %v8209
  %v8275 = vunpack.c.h.b16 %v8209
  %v8276 = vunpack.c.l.b16 %v8210
  %v8277 = vunpack.c.h.b16 %v8210
  %v8278 = vunpack.c.l.b16 %v8211
  %v8279 = vunpack.c.h.b16 %v8211
  %v8280 = vunpack.c.l.b16 %v8212
  %v8281 = vunpack.c.h.b16 %v8212
  %v8282 = vunpack.c.l.b16 %v8213
  %v8283 = vunpack.c.h.b16 %v8213
  %v8284 = vunpack.c.l.b16 %v8214
  %v8285 = vunpack.c.h.b16 %v8214
  %v8286 = vunpack.c.l.b16 %v8215
  %v8287 = vunpack.c.h.b16 %v8215
  %v8288 = vunpack.c.l.b16 %v8216
  %v8289 = vunpack.c.h.b16 %v8216
  %v8290 = vunpack.c.l.b16 %v8217
  %v8291 = vunpack.c.h.b16 %v8217
  %v8292 = vunpack.c.l.b16 %v8218
  %v8293 = vunpack.c.h.b16 %v8218
  %v8294 = vunpack.c.l.b16 %v8219
  %v8295 = vunpack.c.h.b16 %v8219
  %v8296 = vunpack.c.l.b16 %v8220
  %v8297 = vunpack.c.h.b16 %v8220
  %v8298 = vunpack.c.l.b16 %v8221
  %v8299 = vunpack.c.h.b16 %v8221
  %v8300 = vunpack.c.l.b16 %v8222
  %v8301 = vunpack.c.h.b16 %v8222
  %v8302 = vunpack.c.l.b16 %v8223
  %v8303 = vunpack.c.h.b16 %v8223
  %v8304 = vunpack.c.l.b16 %v8224
  %v8305 = vunpack.c.h.b16 %v8224
  %v8306 = vunpack.c.l.b16 %v8225
  %v8307 = vunpack.c.h.b16 %v8225
  %v8308 = vunpack.c.l.b16 %v8226
  %v8309 = vunpack.c.h.b16 %v8226
  %v8310 = vpack.c.b16 %v8262, %v8260
  %v8311 = vpack.c.b16 %v8263, %v8261
  %v8312 = vpack.c.b16 %v8266, %v8264
  %v8313 = vpack.c.b16 %v8267, %v8265
  %v8314 = vpack.c.b16 %v8270, %v8268
  %v8315 = vpack.c.b16 %v8271, %v8269
  %v8316 = vpack.c.b16 %v8274, %v8272
  %v8317 = vpack.c.b16 %v8275, %v8273
  %v8318 = vpack.c.b16 %v8278, %v8276
  %v8319 = vpack.c.b16 %v8279, %v8277
  %v8320 = vpack.c.b16 %v8282, %v8280
  %v8321 = vpack.c.b16 %v8283, %v8281
  %v8322 = vpack.c.b16 %v8286, %v8284
  %v8323 = vpack.c.b16 %v8287, %v8285
  %v8324 = vpack.c.b16 %v8290, %v8288
  %v8325 = vpack.c.b16 %v8291, %v8289
  %v8326 = vpack.c.b16 %v8294, %v8292
  %v8327 = vpack.c.b16 %v8295, %v8293
  %v8328 = vpack.c.b16 %v8298, %v8296
  %v8329 = vpack.c.b16 %v8299, %v8297
  %v8330 = vpack.c.b16 %v8302, %v8300
  %v8331 = vpack.c.b16 %v8303, %v8301
  %v8332 = vpack.c.b16 %v8306, %v8304
  %v8333 = vpack.c.b16 %v8307, %v8305
  %v8334 = vpack.c.b16 %v8308, %v8308
  %v8335 = vpack.c.b16 %v8309, %v8309
  %v8361 = vsel %vm1531, %v8234, 0
  %v8364 = vsel %vm1535, %v8334, 0
  %v8367 = vsel %vm1535, %v8335, 0
  %8369 = vmatprep.subr.bf16.mxu0 %v8311
  %8370 = vmatpush1.bf16.msra.mxu0 %v8310
  %8371 = vmatprep.subr.bf16.mxu0 %v8313
  %8372 = vmatpush1.bf16.msra.mxu0 %v8312
  %8373 = vmatprep.subr.bf16.mxu0 %v8315
  %8374 = vmatpush1.bf16.msra.mxu0 %v8314
  %8375 = vmatprep.subr.bf16.mxu0 %v8317
  %8376 = vmatpush1.bf16.msra.mxu0 %v8316
  %8377 = vmatprep.subr.bf16.mxu0 %v8319
  %8378 = vmatpush1.bf16.msra.mxu0 %v8318
  %8379 = vmatprep.subr.bf16.mxu0 %v8321
  %8380 = vmatpush1.bf16.msra.mxu0 %v8320
  %8381 = vmatprep.subr.bf16.mxu0 %v8323
  %8382 = vmatpush1.bf16.msra.mxu0 %v8322
  %8383 = vmatprep.subr.bf16.mxu0 %v8325
  %8384 = vmatpush1.bf16.msra.mxu0 %v8324
  %8385 = vmatprep.subr.bf16.mxu0 %v8327
  %8386 = vmatpush1.bf16.msra.mxu0 %v8326
  %8387 = vmatprep.subr.bf16.mxu0 %v8329
  %8388 = vmatpush1.bf16.msra.mxu0 %v8328
  %8389 = vmatprep.subr.bf16.mxu0 %v8331
  %8390 = vmatpush1.bf16.msra.mxu0 %v8330
  %8391 = vmatprep.subr.bf16.mxu0 %v8333
  %8392 = vmatpush1.bf16.msra.mxu0 %v8332
  %8393 = vmatprep.subr.bf16.mxu0 %v8367
  %8394 = vmatpush1.bf16.msra.mxu0 %v8364
  %8395 = vmatprep.subr.bf16.mxu0 0
  %8396 = vmatpush1.bf16.msra.mxu0 0
  %8397 = vmatprep.subr.bf16.mxu0 0
  %8398 = vmatpush1.bf16.msra.mxu0 0
  %8399 = vmatprep.subr.bf16.mxu0 0
  %8400 = vmatpush1.bf16.msra.mxu0 0
  %8401 = vmatprep.mubr.bf16.mxu0 %v8361
  %8402 = vmatmul.mubr.bf16.gmra.mrb[0].mxu0 %v8233
  %v8403 = vpop.f32.mrb[0].mxu0
  %v8404 = vadd.f32 0.0, %v8403
  %v8405 = vpop.f32.mrb[0].mxu0
  %v8406 = vadd.f32 0.0, %v8405
  %v8407 = vpop.f32.mrb[0].mxu0
  %v8408 = vpop.f32.mrb[0].mxu0
  %8409 = vdwg.mxu0
  %v8410 = vmul.f32 %v8404, 0.045454547
  %v8411 = vmul.f32 %v8406, 0.045454547
  %v8412 = vsub.f32 %v8227, %v8410
  %v8413 = vsub.f32 %v8228, %v8411
  %v8414 = vmul.f32 %v8412, %v8412
  %v8415 = vmul.f32 %v8413, %v8413
  %v8416 = vpack.c.bf16 %v8414, %v8414
  %v8417 = vpack.c.bf16 %v8415, %v8415
  %v8419 = vsel %vm1531, %v8417, 0
  %8421 = vmatprep.subr.bf16.mxu0 %v8311
  %8422 = vmatpush1.bf16.msra.mxu0 %v8310
  %8423 = vmatprep.subr.bf16.mxu0 %v8313
  %8424 = vmatpush1.bf16.msra.mxu0 %v8312
  %8425 = vmatprep.subr.bf16.mxu0 %v8315
  %8426 = vmatpush1.bf16.msra.mxu0 %v8314
  %8427 = vmatprep.subr.bf16.mxu0 %v8317
  %8428 = vmatpush1.bf16.msra.mxu0 %v8316
  %8429 = vmatprep.subr.bf16.mxu0 %v8319
  %8430 = vmatpush1.bf16.msra.mxu0 %v8318
  %8431 = vmatprep.subr.bf16.mxu0 %v8321
  %8432 = vmatpush1.bf16.msra.mxu0 %v8320
  %8433 = vmatprep.subr.bf16.mxu0 %v8323
  %8434 = vmatpush1.bf16.msra.mxu0 %v8322
  %8435 = vmatprep.subr.bf16.mxu0 %v8325
  %8436 = vmatpush1.bf16.msra.mxu0 %v8324
  %8437 = vmatprep.subr.bf16.mxu0 %v8327
  %8438 = vmatpush1.bf16.msra.mxu0 %v8326
  %8439 = vmatprep.subr.bf16.mxu0 %v8329
  %8440 = vmatpush1.bf16.msra.mxu0 %v8328
  %8441 = vmatprep.subr.bf16.mxu0 %v8331
  %8442 = vmatpush1.bf16.msra.mxu0 %v8330
  %8443 = vmatprep.subr.bf16.mxu0 %v8333
  %8444 = vmatpush1.bf16.msra.mxu0 %v8332
  %8445 = vmatprep.subr.bf16.mxu0 %v8367
  %8446 = vmatpush1.bf16.msra.mxu0 %v8364
  %8447 = vmatprep.subr.bf16.mxu0 0
  %8448 = vmatpush1.bf16.msra.mxu0 0
  %8449 = vmatprep.subr.bf16.mxu0 0
  %8450 = vmatpush1.bf16.msra.mxu0 0
  %8451 = vmatprep.subr.bf16.mxu0 0
  %8452 = vmatpush1.bf16.msra.mxu0 0
  %8453 = vmatprep.mubr.bf16.mxu0 %v8419
  %8454 = vmatmul.mubr.bf16.gmra.mrb[0].mxu0 %v8416
  %v8455 = vpop.f32.mrb[0].mxu0
  %v8456 = vadd.f32 0.0, %v8455
  %v8457 = vpop.f32.mrb[0].mxu0
  %v8458 = vadd.f32 0.0, %v8457
  %v8459 = vpop.f32.mrb[0].mxu0
  %v8460 = vpop.f32.mrb[0].mxu0
  %8461 = vdwg.mxu0
  %v8462 = vmul.f32 %v8456, 0.045454547
  %v8463 = vmul.f32 %v8458, 0.045454547
  %v8464 = vadd.f32 %v8462, 1e-05
  %v8465 = vadd.f32 %v8463, 1e-05
  %v8466 = vrsqrt.pop %v8464
  %v8467 = vrsqrt.pop %v8465
  %v8468 = vmul.f32 %v8412, %v8466
  %v8469 = vmul.f32 %v8413, %v8467
  %v8471 = vlaneseq
  %v8472 = vshrl.u32 %v8471, 7
  %v8473 = vsub.s32 0, %v8472
  %v8474 = vrot.slane %v8230, %v8473
  %v8475 = vlaneseq
  %v8476 = vshrl.u32 %v8475, 7
  %v8477 = vsub.s32 1, %v8476
  %v8478 = vrot.slane %v8230, %v8477
  %v8481 = vmul.f32 %v8468, %v8474
  %v8482 = vmul.f32 %v8469, %v8478
  %v8484 = vlaneseq
  %v8485 = vshrl.u32 %v8484, 7
  %v8486 = vsub.s32 0, %v8485
  %v8487 = vrot.slane %v8232, %v8486
  %v8488 = vlaneseq
  %v8489 = vshrl.u32 %v8488, 7
  %v8490 = vsub.s32 1, %v8489
  %v8491 = vrot.slane %v8232, %v8490
  %v8494 = vadd.f32 %v8481, %v8487
  %v8495 = vadd.f32 %v8482, %v8491
  %v8496 = vpack.c.bf16 %v8494, %v8494
  %v8497 = vpack.c.bf16 %v8495, %v8495
  %v8498 = vld [vmem:[%s12] sm:$0xff]
  %v8499 = vld [vmem:[%s12 + $0x8] sm:$0xff]
  %v8500 = vld [vmem:[%s12 + $0x10] sm:$0xff]
  %v8501 = vld [vmem:[%s12 + $0x18] sm:$0xff]
  %v8502 = vld [vmem:[%s12 + $0x20] sm:$0xf]
  %v8503 = vld [vmem:[%s12 + $0x24] sm:$0xff]
  %v8504 = vld [vmem:[%s12 + $0x2c] sm:$0xff]
  %v8505 = vld [vmem:[%s12 + $0x34] sm:$0xff]
  %v8506 = vld [vmem:[%s12 + $0x3c] sm:$0xff]
  %v8507 = vld [vmem:[%s12 + $0x44] sm:$0xf]
  %v8508 = vld [vmem:[%s12 + $0x48] sm:$0xff]
  %v8509 = vld [vmem:[%s12 + $0x50] sm:$0xff]
  %v8510 = vld [vmem:[%s12 + $0x58] sm:$0xff]
  %v8511 = vld [vmem:[%s12 + $0x60] sm:$0xff]
  %v8512 = vld [vmem:[%s12 + $0x68] sm:$0xf]
  %v8513 = vld [vmem:[%s12 + $0x6c] sm:$0xff]
  %v8514 = vld [vmem:[%s12 + $0x74] sm:$0xff]
  %v8515 = vld [vmem:[%s12 + $0x7c] sm:$0xff]
  %v8516 = vld [vmem:[%s12 + $0x84] sm:$0xff]
  %v8517 = vld [vmem:[%s12 + $0x8c] sm:$0xf]
  %v8518 = vld [vmem:[%s12 + $0x90] sm:$0xff]
  %v8519 = vld [vmem:[%s12 + $0x98] sm:$0xff]
  %v8520 = vld [vmem:[%s12 + $0xa0] sm:$0xff]
  %v8521 = vld [vmem:[%s12 + $0xa8] sm:$0xff]
  %v8522 = vld [vmem:[%s12 + $0xb0] sm:$0xf]
  %v8523 = vld [vmem:[%s12 + $0xb4] sm:$0xff]
  %v8524 = vld [vmem:[%s12 + $0xbc] sm:$0xff]
  %v8525 = vld [vmem:[%s12 + $0xc4] sm:$0xff]
  %v8526 = vld [vmem:[%s12 + $0xcc] sm:$0xff]
  %v8527 = vld [vmem:[%s12 + $0xd4] sm:$0xf]
  %v8528 = vld [vmem:[%s12 + $0xd8] sm:$0xff]
  %v8529 = vld [vmem:[%s12 + $0xe0] sm:$0xff]
  %v8530 = vld [vmem:[%s12 + $0xe8] sm:$0xff]
  %v8531 = vld [vmem:[%s12 + $0xf0] sm:$0xff]
  %v8532 = vld [vmem:[%s12 + $0xf8] sm:$0xf]
  %v8533 = vld [vmem:[%s12 + $0xfc] sm:$0xff]
  %v8534 = vld [vmem:[%s12 + $0x104] sm:$0xff]
  %v8535 = vld [vmem:[%s12 + $0x10c] sm:$0xff]
  %v8536 = vld [vmem:[%s12 + $0x114] sm:$0xff]
  %v8537 = vld [vmem:[%s12 + $0x11c] sm:$0xf]
  %v8538 = vld [vmem:[%s12 + $0x120] sm:$0xff]
  %v8539 = vld [vmem:[%s12 + $0x128] sm:$0xff]
  %v8540 = vld [vmem:[%s12 + $0x130] sm:$0xff]
  %v8541 = vld [vmem:[%s12 + $0x138] sm:$0xff]
  %v8542 = vld [vmem:[%s12 + $0x140] sm:$0xf]
  %v8543 = vld [vmem:[%s12 + $0x144] sm:$0xff]
  %v8544 = vld [vmem:[%s12 + $0x14c] sm:$0xff]
  %v8545 = vld [vmem:[%s12 + $0x154] sm:$0xff]
  %v8546 = vld [vmem:[%s12 + $0x15c] sm:$0xff]
  %v8547 = vld [vmem:[%s12 + $0x164] sm:$0xf]
  %v8548 = vld [vmem:[%s12 + $0x168] sm:$0xff]
  %v8549 = vld [vmem:[%s12 + $0x170] sm:$0xff]
  %v8550 = vld [vmem:[%s12 + $0x178] sm:$0xff]
  %v8551 = vld [vmem:[%s12 + $0x180] sm:$0xff]
  %v8552 = vld [vmem:[%s12 + $0x188] sm:$0xf]
  %v8553 = vld [vmem:[%s12 + $0x18c] sm:$0xff]
  %v8554 = vld [vmem:[%s12 + $0x194] sm:$0xff]
  %v8555 = vld [vmem:[%s12 + $0x19c] sm:$0xff]
  %v8556 = vld [vmem:[%s12 + $0x1a4] sm:$0xff]
  %v8557 = vld [vmem:[%s12 + $0x1ac] sm:$0xf]
  %v8558 = vld [vmem:[%s12 + $0x1b0] sm:$0xff]
  %v8559 = vld [vmem:[%s12 + $0x1b8] sm:$0xff]
  %v8560 = vld [vmem:[%s12 + $0x1c0] sm:$0xff]
  %v8561 = vld [vmem:[%s12 + $0x1c8] sm:$0xff]
  %v8562 = vld [vmem:[%s12 + $0x1d0] sm:$0xf]
  %v8563 = vld [vmem:[%s12 + $0x1d4] sm:$0xff]
  %v8564 = vld [vmem:[%s12 + $0x1dc] sm:$0xff]
  %v8565 = vld [vmem:[%s12 + $0x1e4] sm:$0xff]
  %v8566 = vld [vmem:[%s12 + $0x1ec] sm:$0xff]
  %v8567 = vld [vmem:[%s12 + $0x1f4] sm:$0xf]
  %v8568 = vld [vmem:[%s12 + $0x1f8] sm:$0xff]
  %v8569 = vld [vmem:[%s12 + $0x200] sm:$0xff]
  %v8570 = vld [vmem:[%s12 + $0x208] sm:$0xff]
  %v8571 = vld [vmem:[%s12 + $0x210] sm:$0xff]
  %v8572 = vld [vmem:[%s12 + $0x218] sm:$0xf]
  %v8573 = vld [vmem:[%s12 + $0x21c] sm:$0xff]
  %v8574 = vld [vmem:[%s12 + $0x224] sm:$0xff]
  %v8575 = vld [vmem:[%s12 + $0x22c] sm:$0xff]
  %v8576 = vld [vmem:[%s12 + $0x234] sm:$0xff]
  %v8577 = vld [vmem:[%s12 + $0x23c] sm:$0xf]
  %v8578 = vld [vmem:[%s12 + $0x240] sm:$0xff]
  %v8579 = vld [vmem:[%s12 + $0x248] sm:$0xff]
  %v8580 = vld [vmem:[%s12 + $0x250] sm:$0xff]
  %v8581 = vld [vmem:[%s12 + $0x258] sm:$0xff]
  %v8582 = vld [vmem:[%s12 + $0x260] sm:$0xf]
  %v8583 = vld [vmem:[%s12 + $0x264] sm:$0xff]
  %v8584 = vld [vmem:[%s12 + $0x26c] sm:$0xff]
  %v8585 = vld [vmem:[%s12 + $0x274] sm:$0xff]
  %v8586 = vld [vmem:[%s12 + $0x27c] sm:$0xff]
  %v8587 = vld [vmem:[%s12 + $0x284] sm:$0xf]
  %v8588 = vld [vmem:[%s12 + $0x288] sm:$0xff]
  %v8589 = vld [vmem:[%s12 + $0x290] sm:$0xff]
  %v8590 = vld [vmem:[%s12 + $0x298] sm:$0xff]
  %v8591 = vld [vmem:[%s12 + $0x2a0] sm:$0xff]
  %v8592 = vld [vmem:[%s12 + $0x2a8] sm:$0xf]
  %v8593 = vld [vmem:[%s12 + $0x2ac] sm:$0xff]
  %v8594 = vld [vmem:[%s12 + $0x2b4] sm:$0xff]
  %v8595 = vld [vmem:[%s12 + $0x2bc] sm:$0xff]
  %v8596 = vld [vmem:[%s12 + $0x2c4] sm:$0xff]
  %v8597 = vld [vmem:[%s12 + $0x2cc] sm:$0xf]
  %v8598 = vld [vmem:[%s12 + $0x2d0] sm:$0xff]
  %v8599 = vld [vmem:[%s12 + $0x2d8] sm:$0xff]
  %v8600 = vld [vmem:[%s12 + $0x2e0] sm:$0xff]
  %v8601 = vld [vmem:[%s12 + $0x2e8] sm:$0xff]
  %v8602 = vld [vmem:[%s12 + $0x2f0] sm:$0xf]
  %v8603 = vld [vmem:[%s12 + $0x2f4] sm:$0xff]
  %v8604 = vld [vmem:[%s12 + $0x2fc] sm:$0xff]
  %v8605 = vld [vmem:[%s12 + $0x304] sm:$0xff]
  %v8606 = vld [vmem:[%s12 + $0x30c] sm:$0xff]
  %v8607 = vld [vmem:[%s12 + $0x314] sm:$0xf]
  %v8608 = vld [vmem:[%s12 + $0x318] sm:$0xff]
  %v8609 = vld [vmem:[%s12 + $0x320] sm:$0xff]
  %v8610 = vld [vmem:[%s12 + $0x328] sm:$0xff]
  %v8611 = vld [vmem:[%s12 + $0x330] sm:$0xff]
  %v8612 = vld [vmem:[%s12 + $0x338] sm:$0xf]
  %v8613 = vld [vmem:[%s12 + $0x33c] sm:$0xff]
  %v8614 = vld [vmem:[%s12 + $0x344] sm:$0xff]
  %v8615 = vld [vmem:[%s12 + $0x34c] sm:$0xff]
  %v8616 = vld [vmem:[%s12 + $0x354] sm:$0xff]
  %v8617 = vld [vmem:[%s12 + $0x35c] sm:$0xf]
  %v8618 = vld [vmem:[%s12 + $0x360] sm:$0x77]
  %v8619 = vld [vmem:[%s12 + $0x368] sm:$0x77]
  %v8620 = vld [vmem:[%s12 + $0x370] sm:$0x77]
  %v8621 = vld [vmem:[%s12 + $0x378] sm:$0x77]
  %v8622 = vld [vmem:[%s12 + $0x380] sm:$0x7]
  %v8623 = vld [vmem:[%s11] sm:$0xff]
  %v8624 = vld [vmem:[%s11 + $0x8] sm:$0x1]
  %v8627 = vlaneseq
  %v8628 = vshrl.u32 %v8627, 7
  %v8629 = vsub.s32 0, %v8628
  %v8630 = vrot.slane %v8623, %v8629
  %v8631 = vlaneseq
  %v8632 = vshrl.u32 %v8631, 7
  %v8633 = vsub.s32 1, %v8632
  %v8634 = vrot.slane %v8623, %v8633
  %v8635 = vlaneseq
  %v8636 = vshrl.u32 %v8635, 7
  %v8637 = vsub.s32 2, %v8636
  %v8638 = vrot.slane %v8623, %v8637
  %v8639 = vlaneseq
  %v8640 = vshrl.u32 %v8639, 7
  %v8641 = vsub.s32 3, %v8640
  %v8642 = vrot.slane %v8623, %v8641
  %v8643 = vlaneseq
  %v8644 = vshrl.u32 %v8643, 7
  %v8645 = vsub.s32 4, %v8644
  %v8646 = vrot.slane %v8623, %v8645
  %v8647 = vlaneseq
  %v8648 = vshrl.u32 %v8647, 7
  %v8649 = vsub.s32 5, %v8648
  %v8650 = vrot.slane %v8623, %v8649
  %v8651 = vlaneseq
  %v8652 = vshrl.u32 %v8651, 7
  %v8653 = vsub.s32 6, %v8652
  %v8654 = vrot.slane %v8623, %v8653
  %v8655 = vlaneseq
  %v8656 = vshrl.u32 %v8655, 7
  %v8657 = vsub.s32 7, %v8656
  %v8658 = vrot.slane %v8623, %v8657
  %v8659 = vlaneseq
  %v8660 = vshrl.u32 %v8659, 7
  %v8661 = vsub.s32 0, %v8660
  %v8662 = vrot.slane %v8624, %v8661
  %v8797 = vunpack.c.l.b16 %v8498
  %v8798 = vunpack.c.h.b16 %v8498
  %v8799 = vunpack.c.l.b16 %v8499
  %v8800 = vunpack.c.h.b16 %v8499
  %v8801 = vunpack.c.l.b16 %v8500
  %v8802 = vunpack.c.h.b16 %v8500
  %v8803 = vunpack.c.l.b16 %v8501
  %v8804 = vunpack.c.h.b16 %v8501
  %v8805 = vunpack.c.l.b16 %v8502
  %v8806 = vunpack.c.l.b16 %v8503
  %v8807 = vunpack.c.h.b16 %v8503
  %v8808 = vunpack.c.l.b16 %v8504
  %v8809 = vunpack.c.h.b16 %v8504
  %v8810 = vunpack.c.l.b16 %v8505
  %v8811 = vunpack.c.h.b16 %v8505
  %v8812 = vunpack.c.l.b16 %v8506
  %v8813 = vunpack.c.h.b16 %v8506
  %v8814 = vunpack.c.l.b16 %v8507
  %v8815 = vunpack.c.l.b16 %v8508
  %v8816 = vunpack.c.h.b16 %v8508
  %v8817 = vunpack.c.l.b16 %v8509
  %v8818 = vunpack.c.h.b16 %v8509
  %v8819 = vunpack.c.l.b16 %v8510
  %v8820 = vunpack.c.h.b16 %v8510
  %v8821 = vunpack.c.l.b16 %v8511
  %v8822 = vunpack.c.h.b16 %v8511
  %v8823 = vunpack.c.l.b16 %v8512
  %v8824 = vunpack.c.l.b16 %v8513
  %v8825 = vunpack.c.h.b16 %v8513
  %v8826 = vunpack.c.l.b16 %v8514
  %v8827 = vunpack.c.h.b16 %v8514
  %v8828 = vunpack.c.l.b16 %v8515
  %v8829 = vunpack.c.h.b16 %v8515
  %v8830 = vunpack.c.l.b16 %v8516
  %v8831 = vunpack.c.h.b16 %v8516
  %v8832 = vunpack.c.l.b16 %v8517
  %v8833 = vunpack.c.l.b16 %v8518
  %v8834 = vunpack.c.h.b16 %v8518
  %v8835 = vunpack.c.l.b16 %v8519
  %v8836 = vunpack.c.h.b16 %v8519
  %v8837 = vunpack.c.l.b16 %v8520
  %v8838 = vunpack.c.h.b16 %v8520
  %v8839 = vunpack.c.l.b16 %v8521
  %v8840 = vunpack.c.h.b16 %v8521
  %v8841 = vunpack.c.l.b16 %v8522
  %v8842 = vunpack.c.l.b16 %v8523
  %v8843 = vunpack.c.h.b16 %v8523
  %v8844 = vunpack.c.l.b16 %v8524
  %v8845 = vunpack.c.h.b16 %v8524
  %v8846 = vunpack.c.l.b16 %v8525
  %v8847 = vunpack.c.h.b16 %v8525
  %v8848 = vunpack.c.l.b16 %v8526
  %v8849 = vunpack.c.h.b16 %v8526
  %v8850 = vunpack.c.l.b16 %v8527
  %v8851 = vunpack.c.l.b16 %v8528
  %v8852 = vunpack.c.h.b16 %v8528
  %v8853 = vunpack.c.l.b16 %v8529
  %v8854 = vunpack.c.h.b16 %v8529
  %v8855 = vunpack.c.l.b16 %v8530
  %v8856 = vunpack.c.h.b16 %v8530
  %v8857 = vunpack.c.l.b16 %v8531
  %v8858 = vunpack.c.h.b16 %v8531
  %v8859 = vunpack.c.l.b16 %v8532
  %v8860 = vunpack.c.l.b16 %v8533
  %v8861 = vunpack.c.h.b16 %v8533
  %v8862 = vunpack.c.l.b16 %v8534
  %v8863 = vunpack.c.h.b16 %v8534
  %v8864 = vunpack.c.l.b16 %v8535
  %v8865 = vunpack.c.h.b16 %v8535
  %v8866 = vunpack.c.l.b16 %v8536
  %v8867 = vunpack.c.h.b16 %v8536
  %v8868 = vunpack.c.l.b16 %v8537
  %v8869 = vunpack.c.l.b16 %v8538
  %v8870 = vunpack.c.h.b16 %v8538
  %v8871 = vunpack.c.l.b16 %v8539
  %v8872 = vunpack.c.h.b16 %v8539
  %v8873 = vunpack.c.l.b16 %v8540
  %v8874 = vunpack.c.h.b16 %v8540
  %v8875 = vunpack.c.l.b16 %v8541
  %v8876 = vunpack.c.h.b16 %v8541
  %v8877 = vunpack.c.l.b16 %v8542
  %v8878 = vunpack.c.l.b16 %v8543
  %v8879 = vunpack.c.h.b16 %v8543
  %v8880 = vunpack.c.l.b16 %v8544
  %v8881 = vunpack.c.h.b16 %v8544
  %v8882 = vunpack.c.l.b16 %v8545
  %v8883 = vunpack.c.h.b16 %v8545
  %v8884 = vunpack.c.l.b16 %v8546
  %v8885 = vunpack.c.h.b16 %v8546
  %v8886 = vunpack.c.l.b16 %v8547
  %v8887 = vunpack.c.l.b16 %v8548
  %v8888 = vunpack.c.h.b16 %v8548
  %v8889 = vunpack.c.l.b16 %v8549
  %v8890 = vunpack.c.h.b16 %v8549
  %v8891 = vunpack.c.l.b16 %v8550
  %v8892 = vunpack.c.h.b16 %v8550
  %v8893 = vunpack.c.l.b16 %v8551
  %v8894 = vunpack.c.h.b16 %v8551
  %v8895 = vunpack.c.l.b16 %v8552
  %v8896 = vunpack.c.l.b16 %v8553
  %v8897 = vunpack.c.h.b16 %v8553
  %v8898 = vunpack.c.l.b16 %v8554
  %v8899 = vunpack.c.h.b16 %v8554
  %v8900 = vunpack.c.l.b16 %v8555
  %v8901 = vunpack.c.h.b16 %v8555
  %v8902 = vunpack.c.l.b16 %v8556
  %v8903 = vunpack.c.h.b16 %v8556
  %v8904 = vunpack.c.l.b16 %v8557
  %v8905 = vunpack.c.l.b16 %v8558
  %v8906 = vunpack.c.h.b16 %v8558
  %v8907 = vunpack.c.l.b16 %v8559
  %v8908 = vunpack.c.h.b16 %v8559
  %v8909 = vunpack.c.l.b16 %v8560
  %v8910 = vunpack.c.h.b16 %v8560
  %v8911 = vunpack.c.l.b16 %v8561
  %v8912 = vunpack.c.h.b16 %v8561
  %v8913 = vunpack.c.l.b16 %v8562
  %v8914 = vunpack.c.l.b16 %v8563
  %v8915 = vunpack.c.h.b16 %v8563
  %v8916 = vunpack.c.l.b16 %v8564
  %v8917 = vunpack.c.h.b16 %v8564
  %v8918 = vunpack.c.l.b16 %v8565
  %v8919 = vunpack.c.h.b16 %v8565
  %v8920 = vunpack.c.l.b16 %v8566
  %v8921 = vunpack.c.h.b16 %v8566
  %v8922 = vunpack.c.l.b16 %v8567
  %v8923 = vunpack.c.l.b16 %v8568
  %v8924 = vunpack.c.h.b16 %v8568
  %v8925 = vunpack.c.l.b16 %v8569
  %v8926 = vunpack.c.h.b16 %v8569
  %v8927 = vunpack.c.l.b16 %v8570
  %v8928 = vunpack.c.h.b16 %v8570
  %v8929 = vunpack.c.l.b16 %v8571
  %v8930 = vunpack.c.h.b16 %v8571
  %v8931 = vunpack.c.l.b16 %v8572
  %v8932 = vunpack.c.l.b16 %v8573
  %v8933 = vunpack.c.h.b16 %v8573
  %v8934 = vunpack.c.l.b16 %v8574
  %v8935 = vunpack.c.h.b16 %v8574
  %v8936 = vunpack.c.l.b16 %v8575
  %v8937 = vunpack.c.h.b16 %v8575
  %v8938 = vunpack.c.l.b16 %v8576
  %v8939 = vunpack.c.h.b16 %v8576
  %v8940 = vunpack.c.l.b16 %v8577
  %v8941 = vunpack.c.l.b16 %v8578
  %v8942 = vunpack.c.h.b16 %v8578
  %v8943 = vunpack.c.l.b16 %v8579
  %v8944 = vunpack.c.h.b16 %v8579
  %v8945 = vunpack.c.l.b16 %v8580
  %v8946 = vunpack.c.h.b16 %v8580
  %v8947 = vunpack.c.l.b16 %v8581
  %v8948 = vunpack.c.h.b16 %v8581
  %v8949 = vunpack.c.l.b16 %v8582
  %v8950 = vunpack.c.l.b16 %v8583
  %v8951 = vunpack.c.h.b16 %v8583
  %v8952 = vunpack.c.l.b16 %v8584
  %v8953 = vunpack.c.h.b16 %v8584
  %v8954 = vunpack.c.l.b16 %v8585
  %v8955 = vunpack.c.h.b16 %v8585
  %v8956 = vunpack.c.l.b16 %v8586
  %v8957 = vunpack.c.h.b16 %v8586
  %v8958 = vunpack.c.l.b16 %v8587
  %v8959 = vunpack.c.l.b16 %v8588
  %v8960 = vunpack.c.h.b16 %v8588
  %v8961 = vunpack.c.l.b16 %v8589
  %v8962 = vunpack.c.h.b16 %v8589
  %v8963 = vunpack.c.l.b16 %v8590
  %v8964 = vunpack.c.h.b16 %v8590
  %v8965 = vunpack.c.l.b16 %v8591
  %v8966 = vunpack.c.h.b16 %v8591
  %v8967 = vunpack.c.l.b16 %v8592
  %v8968 = vunpack.c.l.b16 %v8593
  %v8969 = vunpack.c.h.b16 %v8593
  %v8970 = vunpack.c.l.b16 %v8594
  %v8971 = vunpack.c.h.b16 %v8594
  %v8972 = vunpack.c.l.b16 %v8595
  %v8973 = vunpack.c.h.b16 %v8595
  %v8974 = vunpack.c.l.b16 %v8596
  %v8975 = vunpack.c.h.b16 %v8596
  %v8976 = vunpack.c.l.b16 %v8597
  %v8977 = vunpack.c.l.b16 %v8598
  %v8978 = vunpack.c.h.b16 %v8598
  %v8979 = vunpack.c.l.b16 %v8599
  %v8980 = vunpack.c.h.b16 %v8599
  %v8981 = vunpack.c.l.b16 %v8600
  %v8982 = vunpack.c.h.b16 %v8600
  %v8983 = vunpack.c.l.b16 %v8601
  %v8984 = vunpack.c.h.b16 %v8601
  %v8985 = vunpack.c.l.b16 %v8602
  %v8986 = vunpack.c.l.b16 %v8603
  %v8987 = vunpack.c.h.b16 %v8603
  %v8988 = vunpack.c.l.b16 %v8604
  %v8989 = vunpack.c.h.b16 %v8604
  %v8990 = vunpack.c.l.b16 %v8605
  %v8991 = vunpack.c.h.b16 %v8605
  %v8992 = vunpack.c.l.b16 %v8606
  %v8993 = vunpack.c.h.b16 %v8606
  %v8994 = vunpack.c.l.b16 %v8607
  %v8995 = vunpack.c.l.b16 %v8608
  %v8996 = vunpack.c.h.b16 %v8608
  %v8997 = vunpack.c.l.b16 %v8609
  %v8998 = vunpack.c.h.b16 %v8609
  %v8999 = vunpack.c.l.b16 %v8610
  %v9000 = vunpack.c.h.b16 %v8610
  %v9001 = vunpack.c.l.b16 %v8611
  %v9002 = vunpack.c.h.b16 %v8611
  %v9003 = vunpack.c.l.b16 %v8612
  %v9004 = vunpack.c.l.b16 %v8613
  %v9005 = vunpack.c.h.b16 %v8613
  %v9006 = vunpack.c.l.b16 %v8614
  %v9007 = vunpack.c.h.b16 %v8614
  %v9008 = vunpack.c.l.b16 %v8615
  %v9009 = vunpack.c.h.b16 %v8615
  %v9010 = vunpack.c.l.b16 %v8616
  %v9011 = vunpack.c.h.b16 %v8616
  %v9012 = vunpack.c.l.b16 %v8617
  %v9013 = vunpack.c.l.b16 %v8618
  %v9014 = vunpack.c.h.b16 %v8618
  %v9015 = vunpack.c.l.b16 %v8619
  %v9016 = vunpack.c.h.b16 %v8619
  %v9017 = vunpack.c.l.b16 %v8620
  %v9018 = vunpack.c.h.b16 %v8620
  %v9019 = vunpack.c.l.b16 %v8621
  %v9020 = vunpack.c.h.b16 %v8621
  %v9021 = vunpack.c.l.b16 %v8622
  %v9022 = vpack.c.b16 %v8806, %v8797
  %v9023 = vpack.c.b16 %v8807, %v8798
  %v9024 = vpack.c.b16 %v8808, %v8799
  %v9025 = vpack.c.b16 %v8809, %v8800
  %v9026 = vpack.c.b16 %v8810, %v8801
  %v9027 = vpack.c.b16 %v8811, %v8802
  %v9028 = vpack.c.b16 %v8812, %v8803
  %v9029 = vpack.c.b16 %v8813, %v8804
  %v9030 = vpack.c.b16 %v8814, %v8805
  %v9031 = vpack.c.b16 %v8824, %v8815
  %v9032 = vpack.c.b16 %v8825, %v8816
  %v9033 = vpack.c.b16 %v8826, %v8817
  %v9034 = vpack.c.b16 %v8827, %v8818
  %v9035 = vpack.c.b16 %v8828, %v8819
  %v9036 = vpack.c.b16 %v8829, %v8820
  %v9037 = vpack.c.b16 %v8830, %v8821
  %v9038 = vpack.c.b16 %v8831, %v8822
  %v9039 = vpack.c.b16 %v8832, %v8823
  %v9040 = vpack.c.b16 %v8842, %v8833
  %v9041 = vpack.c.b16 %v8843, %v8834
  %v9042 = vpack.c.b16 %v8844, %v8835
  %v9043 = vpack.c.b16 %v8845, %v8836
  %v9044 = vpack.c.b16 %v8846, %v8837
  %v9045 = vpack.c.b16 %v8847, %v8838
  %v9046 = vpack.c.b16 %v8848, %v8839
  %v9047 = vpack.c.b16 %v8849, %v8840
  %v9048 = vpack.c.b16 %v8850, %v8841
  %v9049 = vpack.c.b16 %v8860, %v8851
  %v9050 = vpack.c.b16 %v8861, %v8852
  %v9051 = vpack.c.b16 %v8862, %v8853
  %v9052 = vpack.c.b16 %v8863, %v8854
  %v9053 = vpack.c.b16 %v8864, %v8855
  %v9054 = vpack.c.b16 %v8865, %v8856
  %v9055 = vpack.c.b16 %v8866, %v8857
  %v9056 = vpack.c.b16 %v8867, %v8858
  %v9057 = vpack.c.b16 %v8868, %v8859
  %v9058 = vpack.c.b16 %v8878, %v8869
  %v9059 = vpack.c.b16 %v8879, %v8870
  %v9060 = vpack.c.b16 %v8880, %v8871
  %v9061 = vpack.c.b16 %v8881, %v8872
  %v9062 = vpack.c.b16 %v8882, %v8873
  %v9063 = vpack.c.b16 %v8883, %v8874
  %v9064 = vpack.c.b16 %v8884, %v8875
  %v9065 = vpack.c.b16 %v8885, %v8876
  %v9066 = vpack.c.b16 %v8886, %v8877
  %v9067 = vpack.c.b16 %v8896, %v8887
  %v9068 = vpack.c.b16 %v8897, %v8888
  %v9069 = vpack.c.b16 %v8898, %v8889
  %v9070 = vpack.c.b16 %v8899, %v8890
  %v9071 = vpack.c.b16 %v8900, %v8891
  %v9072 = vpack.c.b16 %v8901, %v8892
  %v9073 = vpack.c.b16 %v8902, %v8893
  %v9074 = vpack.c.b16 %v8903, %v8894
  %v9075 = vpack.c.b16 %v8904, %v8895
  %v9076 = vpack.c.b16 %v8914, %v8905
  %v9077 = vpack.c.b16 %v8915, %v8906
  %v9078 = vpack.c.b16 %v8916, %v8907
  %v9079 = vpack.c.b16 %v8917, %v8908
  %v9080 = vpack.c.b16 %v8918, %v8909
  %v9081 = vpack.c.b16 %v8919, %v8910
  %v9082 = vpack.c.b16 %v8920, %v8911
  %v9083 = vpack.c.b16 %v8921, %v8912
  %v9084 = vpack.c.b16 %v8922, %v8913
  %v9085 = vpack.c.b16 %v8932, %v8923
  %v9086 = vpack.c.b16 %v8933, %v8924
  %v9087 = vpack.c.b16 %v8934, %v8925
  %v9088 = vpack.c.b16 %v8935, %v8926
  %v9089 = vpack.c.b16 %v8936, %v8927
  %v9090 = vpack.c.b16 %v8937, %v8928
  %v9091 = vpack.c.b16 %v8938, %v8929
  %v9092 = vpack.c.b16 %v8939, %v8930
  %v9093 = vpack.c.b16 %v8940, %v8931
  %v9094 = vpack.c.b16 %v8950, %v8941
  %v9095 = vpack.c.b16 %v8951, %v8942
  %v9096 = vpack.c.b16 %v8952, %v8943
  %v9097 = vpack.c.b16 %v8953, %v8944
  %v9098 = vpack.c.b16 %v8954, %v8945
  %v9099 = vpack.c.b16 %v8955, %v8946
  %v9100 = vpack.c.b16 %v8956, %v8947
  %v9101 = vpack.c.b16 %v8957, %v8948
  %v9102 = vpack.c.b16 %v8958, %v8949
  %v9103 = vpack.c.b16 %v8968, %v8959
  %v9104 = vpack.c.b16 %v8969, %v8960
  %v9105 = vpack.c.b16 %v8970, %v8961
  %v9106 = vpack.c.b16 %v8971, %v8962
  %v9107 = vpack.c.b16 %v8972, %v8963
  %v9108 = vpack.c.b16 %v8973, %v8964
  %v9109 = vpack.c.b16 %v8974, %v8965
  %v9110 = vpack.c.b16 %v8975, %v8966
  %v9111 = vpack.c.b16 %v8976, %v8967
  %v9112 = vpack.c.b16 %v8986, %v8977
  %v9113 = vpack.c.b16 %v8987, %v8978
  %v9114 = vpack.c.b16 %v8988, %v8979
  %v9115 = vpack.c.b16 %v8989, %v8980
  %v9116 = vpack.c.b16 %v8990, %v8981
  %v9117 = vpack.c.b16 %v8991, %v8982
  %v9118 = vpack.c.b16 %v8992, %v8983
  %v9119 = vpack.c.b16 %v8993, %v8984
  %v9120 = vpack.c.b16 %v8994, %v8985
  %v9121 = vpack.c.b16 %v9004, %v8995
  %v9122 = vpack.c.b16 %v9005, %v8996
  %v9123 = vpack.c.b16 %v9006, %v8997
  %v9124 = vpack.c.b16 %v9007, %v8998
  %v9125 = vpack.c.b16 %v9008, %v8999
  %v9126 = vpack.c.b16 %v9009, %v9000
  %v9127 = vpack.c.b16 %v9010, %v9001
  %v9128 = vpack.c.b16 %v9011, %v9002
  %v9129 = vpack.c.b16 %v9012, %v9003
  %v9130 = vpack.c.b16 %v9013, %v9013
  %v9131 = vpack.c.b16 %v9014, %v9014
  %v9132 = vpack.c.b16 %v9015, %v9015
  %v9133 = vpack.c.b16 %v9016, %v9016
  %v9134 = vpack.c.b16 %v9017, %v9017
  %v9135 = vpack.c.b16 %v9018, %v9018
  %v9136 = vpack.c.b16 %v9019, %v9019
  %v9137 = vpack.c.b16 %v9020, %v9020
  %v9138 = vpack.c.b16 %v9021, %v9021
  %v9248 = vsel %vm1531, %v8497, 0
  %v9251 = vsel %vm1535, %v9130, 0
  %v9254 = vsel %vm1535, %v9131, 0
  %v9257 = vsel %vm1535, %v9132, 0
  %v9260 = vsel %vm1535, %v9133, 0
  %v9263 = vsel %vm1535, %v9134, 0
  %v9266 = vsel %vm1535, %v9135, 0
  %v9269 = vsel %vm1535, %v9136, 0
  %v9272 = vsel %vm1535, %v9137, 0
  %v9275 = vsel %vm1535, %v9138, 0
  %9277 = vmatprep.subr.bf16.mxu0 %v9023
  %9278 = vmatpush1.bf16.msra.mxu0 %v9022
  %9279 = vmatprep.subr.bf16.mxu0 %v9032
  %9280 = vmatpush1.bf16.msra.mxu0 %v9031
  %9281 = vmatprep.subr.bf16.mxu0 %v9041
  %9282 = vmatpush1.bf16.msra.mxu0 %v9040
  %9283 = vmatprep.subr.bf16.mxu0 %v9050
  %9284 = vmatpush1.bf16.msra.mxu0 %v9049
  %9285 = vmatprep.subr.bf16.mxu0 %v9059
  %9286 = vmatpush1.bf16.msra.mxu0 %v9058
  %9287 = vmatprep.subr.bf16.mxu0 %v9068
  %9288 = vmatpush1.bf16.msra.mxu0 %v9067
  %9289 = vmatprep.subr.bf16.mxu0 %v9077
  %9290 = vmatpush1.bf16.msra.mxu0 %v9076
  %9291 = vmatprep.subr.bf16.mxu0 %v9086
  %9292 = vmatpush1.bf16.msra.mxu0 %v9085
  %9293 = vmatprep.subr.bf16.mxu0 %v9095
  %9294 = vmatpush1.bf16.msra.mxu0 %v9094
  %9295 = vmatprep.subr.bf16.mxu0 %v9104
  %9296 = vmatpush1.bf16.msra.mxu0 %v9103
  %9297 = vmatprep.subr.bf16.mxu0 %v9113
  %9298 = vmatpush1.bf16.msra.mxu0 %v9112
  %9299 = vmatprep.subr.bf16.mxu0 %v9122
  %9300 = vmatpush1.bf16.msra.mxu0 %v9121
  %9301 = vmatprep.subr.bf16.mxu0 %v9254
  %9302 = vmatpush1.bf16.msra.mxu0 %v9251
  %9303 = vmatprep.subr.bf16.mxu0 0
  %9304 = vmatpush1.bf16.msra.mxu0 0
  %9305 = vmatprep.subr.bf16.mxu0 0
  %9306 = vmatpush1.bf16.msra.mxu0 0
  %9307 = vmatprep.subr.bf16.mxu0 0
  %9308 = vmatpush1.bf16.msra.mxu0 0
  %9309 = vmatprep.mubr.bf16.mxu0 %v9248
  %9310 = vmatmul.mubr.bf16.gmra.mrb[0].mxu0 %v8496
  %v9311 = vpop.f32.mrb[0].mxu0
  %v9312 = vadd.f32 %v8630, %v9311
  %v9313 = vpop.f32.mrb[0].mxu0
  %v9314 = vadd.f32 %v8634, %v9313
  %v9315 = vpop.f32.mrb[0].mxu0
  %v9316 = vpop.f32.mrb[0].mxu0
  %9317 = vdwg.mxu0
  %9318 = vmatprep.subr.bf16.mxu0 %v9025
  %9319 = vmatpush1.bf16.msra.mxu0 %v9024
  %9320 = vmatprep.subr.bf16.mxu0 %v9034
  %9321 = vmatpush1.bf16.msra.mxu0 %v9033
  %9322 = vmatprep.subr.bf16.mxu0 %v9043
  %9323 = vmatpush1.bf16.msra.mxu0 %v9042
  %9324 = vmatprep.subr.bf16.mxu0 %v9052
  %9325 = vmatpush1.bf16.msra.mxu0 %v9051
  %9326 = vmatprep.subr.bf16.mxu0 %v9061
  %9327 = vmatpush1.bf16.msra.mxu0 %v9060
  %9328 = vmatprep.subr.bf16.mxu0 %v9070
  %9329 = vmatpush1.bf16.msra.mxu0 %v9069
  %9330 = vmatprep.subr.bf16.mxu0 %v9079
  %9331 = vmatpush1.bf16.msra.mxu0 %v9078
  %9332 = vmatprep.subr.bf16.mxu0 %v9088
  %9333 = vmatpush1.bf16.msra.mxu0 %v9087
  %9334 = vmatprep.subr.bf16.mxu0 %v9097
  %9335 = vmatpush1.bf16.msra.mxu0 %v9096
  %9336 = vmatprep.subr.bf16.mxu0 %v9106
  %9337 = vmatpush1.bf16.msra.mxu0 %v9105
  %9338 = vmatprep.subr.bf16.mxu0 %v9115
  %9339 = vmatpush1.bf16.msra.mxu0 %v9114
  %9340 = vmatprep.subr.bf16.mxu0 %v9124
  %9341 = vmatpush1.bf16.msra.mxu0 %v9123
  %9342 = vmatprep.subr.bf16.mxu0 %v9260
  %9343 = vmatpush1.bf16.msra.mxu0 %v9257
  %9344 = vmatprep.subr.bf16.mxu0 0
  %9345 = vmatpush1.bf16.msra.mxu0 0
  %9346 = vmatprep.subr.bf16.mxu0 0
  %9347 = vmatpush1.bf16.msra.mxu0 0
  %9348 = vmatprep.subr.bf16.mxu0 0
  %9349 = vmatpush1.bf16.msra.mxu0 0
  %9350 = vmatprep.mubr.bf16.mxu0 %v9248
  %9351 = vmatmul.mubr.bf16.gmra.mrb[0].mxu0 %v8496
  %v9352 = vpop.f32.mrb[0].mxu0
  %v9353 = vadd.f32 %v8638, %v9352
  %v9354 = vpop.f32.mrb[0].mxu0
  %v9355 = vadd.f32 %v8642, %v9354
  %v9356 = vpop.f32.mrb[0].mxu0
  %v9357 = vpop.f32.mrb[0].mxu0
  %9358 = vdwg.mxu0
  %9359 = vmatprep.subr.bf16.mxu0 %v9027
  %9360 = vmatpush1.bf16.msra.mxu0 %v9026
  %9361 = vmatprep.subr.bf16.mxu0 %v9036
  %9362 = vmatpush1.bf16.msra.mxu0 %v9035
  %9363 = vmatprep.subr.bf16.mxu0 %v9045
  %9364 = vmatpush1.bf16.msra.mxu0 %v9044
  %9365 = vmatprep.subr.bf16.mxu0 %v9054
  %9366 = vmatpush1.bf16.msra.mxu0 %v9053
  %9367 = vmatprep.subr.bf16.mxu0 %v9063
  %9368 = vmatpush1.bf16.msra.mxu0 %v9062
  %9369 = vmatprep.subr.bf16.mxu0 %v9072
  %9370 = vmatpush1.bf16.msra.mxu0 %v9071
  %9371 = vmatprep.subr.bf16.mxu0 %v9081
  %9372 = vmatpush1.bf16.msra.mxu0 %v9080
  %9373 = vmatprep.subr.bf16.mxu0 %v9090
  %9374 = vmatpush1.bf16.msra.mxu0 %v9089
  %9375 = vmatprep.subr.bf16.mxu0 %v9099
  %9376 = vmatpush1.bf16.msra.mxu0 %v9098
  %9377 = vmatprep.subr.bf16.mxu0 %v9108
  %9378 = vmatpush1.bf16.msra.mxu0 %v9107
  %9379 = vmatprep.subr.bf16.mxu0 %v9117
  %9380 = vmatpush1.bf16.msra.mxu0 %v9116
  %9381 = vmatprep.subr.bf16.mxu0 %v9126
  %9382 = vmatpush1.bf16.msra.mxu0 %v9125
  %9383 = vmatprep.subr.bf16.mxu0 %v9266
  %9384 = vmatpush1.bf16.msra.mxu0 %v9263
  %9385 = vmatprep.subr.bf16.mxu0 0
  %9386 = vmatpush1.bf16.msra.mxu0 0
  %9387 = vmatprep.subr.bf16.mxu0 0
  %9388 = vmatpush1.bf16.msra.mxu0 0
  %9389 = vmatprep.subr.bf16.mxu0 0
  %9390 = vmatpush1.bf16.msra.mxu0 0
  %9391 = vmatprep.mubr.bf16.mxu0 %v9248
  %9392 = vmatmul.mubr.bf16.gmra.mrb[0].mxu0 %v8496
  %v9393 = vpop.f32.mrb[0].mxu0
  %v9394 = vadd.f32 %v8646, %v9393
  %v9395 = vpop.f32.mrb[0].mxu0
  %v9396 = vadd.f32 %v8650, %v9395
  %v9397 = vpop.f32.mrb[0].mxu0
  %v9398 = vpop.f32.mrb[0].mxu0
  %9399 = vdwg.mxu0
  %9400 = vmatprep.subr.bf16.mxu0 %v9029
  %9401 = vmatpush1.bf16.msra.mxu0 %v9028
  %9402 = vmatprep.subr.bf16.mxu0 %v9038
  %9403 = vmatpush1.bf16.msra.mxu0 %v9037
  %9404 = vmatprep.subr.bf16.mxu0 %v9047
  %9405 = vmatpush1.bf16.msra.mxu0 %v9046
  %9406 = vmatprep.subr.bf16.mxu0 %v9056
  %9407 = vmatpush1.bf16.msra.mxu0 %v9055
  %9408 = vmatprep.subr.bf16.mxu0 %v9065
  %9409 = vmatpush1.bf16.msra.mxu0 %v9064
  %9410 = vmatprep.subr.bf16.mxu0 %v9074
  %9411 = vmatpush1.bf16.msra.mxu0 %v9073
  %9412 = vmatprep.subr.bf16.mxu0 %v9083
  %9413 = vmatpush1.bf16.msra.mxu0 %v9082
  %9414 = vmatprep.subr.bf16.mxu0 %v9092
  %9415 = vmatpush1.bf16.msra.mxu0 %v9091
  %9416 = vmatprep.subr.bf16.mxu0 %v9101
  %9417 = vmatpush1.bf16.msra.mxu0 %v9100
  %9418 = vmatprep.subr.bf16.mxu0 %v9110
  %9419 = vmatpush1.bf16.msra.mxu0 %v9109
  %9420 = vmatprep.subr.bf16.mxu0 %v9119
  %9421 = vmatpush1.bf16.msra.mxu0 %v9118
  %9422 = vmatprep.subr.bf16.mxu0 %v9128
  %9423 = vmatpush1.bf16.msra.mxu0 %v9127
  %9424 = vmatprep.subr.bf16.mxu0 %v9272
  %9425 = vmatpush1.bf16.msra.mxu0 %v9269
  %9426 = vmatprep.subr.bf16.mxu0 0
  %9427 = vmatpush1.bf16.msra.mxu0 0
  %9428 = vmatprep.subr.bf16.mxu0 0
  %9429 = vmatpush1.bf16.msra.mxu0 0
  %9430 = vmatprep.subr.bf16.mxu0 0
  %9431 = vmatpush1.bf16.msra.mxu0 0
  %9432 = vmatprep.mubr.bf16.mxu0 %v9248
  %9433 = vmatmul.mubr.bf16.gmra.mrb[0].mxu0 %v8496
  %v9434 = vpop.f32.mrb[0].mxu0
  %v9435 = vadd.f32 %v8654, %v9434
  %v9436 = vpop.f32.mrb[0].mxu0
  %v9437 = vadd.f32 %v8658, %v9436
  %v9438 = vpop.f32.mrb[0].mxu0
  %v9439 = vpop.f32.mrb[0].mxu0
  %9440 = vdwg.mxu0
  %9441 = vmatprep.subr.bf16.mxu0 0
  %9442 = vmatpush1.bf16.msra.mxu0 %v9030
  %9443 = vmatprep.subr.bf16.mxu0 0
  %9444 = vmatpush1.bf16.msra.mxu0 %v9039
  %9445 = vmatprep.subr.bf16.mxu0 0
  %9446 = vmatpush1.bf16.msra.mxu0 %v9048
  %9447 = vmatprep.subr.bf16.mxu0 0
  %9448 = vmatpush1.bf16.msra.mxu0 %v9057
  %9449 = vmatprep.subr.bf16.mxu0 0
  %9450 = vmatpush1.bf16.msra.mxu0 %v9066
  %9451 = vmatprep.subr.bf16.mxu0 0
  %9452 = vmatpush1.bf16.msra.mxu0 %v9075
  %9453 = vmatprep.subr.bf16.mxu0 0
  %9454 = vmatpush1.bf16.msra.mxu0 %v9084
  %9455 = vmatprep.subr.bf16.mxu0 0
  %9456 = vmatpush1.bf16.msra.mxu0 %v9093
  %9457 = vmatprep.subr.bf16.mxu0 0
  %9458 = vmatpush1.bf16.msra.mxu0 %v9102
  %9459 = vmatprep.subr.bf16.mxu0 0
  %9460 = vmatpush1.bf16.msra.mxu0 %v9111
  %9461 = vmatprep.subr.bf16.mxu0 0
  %9462 = vmatpush1.bf16.msra.mxu0 %v9120
  %9463 = vmatprep.subr.bf16.mxu0 0
  %9464 = vmatpush1.bf16.msra.mxu0 %v9129
  %9465 = vmatprep.subr.bf16.mxu0 0
  %9466 = vmatpush1.bf16.msra.mxu0 %v9275
  %9467 = vmatprep.subr.bf16.mxu0 0
  %9468 = vmatpush1.bf16.msra.mxu0 0
  %9469 = vmatprep.subr.bf16.mxu0 0
  %9470 = vmatpush1.bf16.msra.mxu0 0
  %9471 = vmatprep.subr.bf16.mxu0 0
  %9472 = vmatpush1.bf16.msra.mxu0 0
  %9473 = vmatprep.mubr.bf16.mxu0 %v9248
  %9474 = vmatmul.mubr.bf16.gmra.mrb[0].mxu0 %v8496
  %v9475 = vpop.f32.mrb[0].mxu0
  %v9476 = vadd.f32 %v8662, %v9475
  %v9477 = vpop.f32.mrb[0].mxu0
  %v9478 = vpop.f32.mrb[0].mxu0
  %v9479 = vpop.f32.mrb[0].mxu0
  %9480 = vdwg.mxu0
  %v9481 = vmax.f32 %v9312, 0.0
  %v9482 = vmax.f32 %v9314, 0.0
  %v9483 = vmax.f32 %v9353, 0.0
  %v9484 = vmax.f32 %v9355, 0.0
  %v9485 = vmax.f32 %v9394, 0.0
  %v9486 = vmax.f32 %v9396, 0.0
  %v9487 = vmax.f32 %v9435, 0.0
  %v9488 = vmax.f32 %v9437, 0.0
  %v9489 = vmax.f32 %v9476, 0.0
  %v9490 = vpack.c.bf16 %v9481, %v9481
  %v9491 = vpack.c.bf16 %v9482, %v9482
  %v9492 = vpack.c.bf16 %v9483, %v9483
  %v9493 = vpack.c.bf16 %v9484, %v9484
  %v9494 = vpack.c.bf16 %v9485, %v9485
  %v9495 = vpack.c.bf16 %v9486, %v9486
  %v9496 = vpack.c.bf16 %v9487, %v9487
  %v9497 = vpack.c.bf16 %v9488, %v9488
  %v9498 = vpack.c.bf16 %v9489, %v9489
  %v9499 = vld [vmem:[%s13] sm:$0xff]
  %v9500 = vld [vmem:[%s13 + $0x8] sm:$0xff]
  %v9501 = vld [vmem:[%s13 + $0x10] sm:$0xff]
  %v9502 = vld [vmem:[%s13 + $0x18] sm:$0xff]
  %v9503 = vld [vmem:[%s13 + $0x20] sm:$0xff]
  %v9504 = vld [vmem:[%s13 + $0x28] sm:$0xff]
  %v9505 = vld [vmem:[%s13 + $0x30] sm:$0xff]
  %v9506 = vld [vmem:[%s13 + $0x38] sm:$0xff]
  %v9507 = vld [vmem:[%s13 + $0x40] sm:$0xff]
  %v9508 = vld [vmem:[%s13 + $0x48] sm:$0xff]
  %v9509 = vld [vmem:[%s13 + $0x50] sm:$0xff]
  %v9510 = vld [vmem:[%s13 + $0x58] sm:$0xff]
  %v9511 = vld [vmem:[%s13 + $0x60] sm:$0xff]
  %v9512 = vld [vmem:[%s13 + $0x68] sm:$0xff]
  %v9513 = vld [vmem:[%s13 + $0x70] sm:$0xff]
  %v9514 = vld [vmem:[%s13 + $0x78] sm:$0xff]
  %v9515 = vld [vmem:[%s13 + $0x80] sm:$0xff]
  %v9516 = vld [vmem:[%s13 + $0x88] sm:$0xff]
  %v9517 = vld [vmem:[%s13 + $0x90] sm:$0xff]
  %v9518 = vld [vmem:[%s13 + $0x98] sm:$0xff]
  %v9519 = vld [vmem:[%s13 + $0xa0] sm:$0xff]
  %v9520 = vld [vmem:[%s13 + $0xa8] sm:$0xff]
  %v9521 = vld [vmem:[%s13 + $0xb0] sm:$0xff]
  %v9522 = vld [vmem:[%s13 + $0xb8] sm:$0xff]
  %v9523 = vld [vmem:[%s13 + $0xc0] sm:$0xff]
  %v9524 = vld [vmem:[%s13 + $0xc8] sm:$0xff]
  %v9525 = vld [vmem:[%s13 + $0xd0] sm:$0xff]
  %v9526 = vld [vmem:[%s13 + $0xd8] sm:$0xff]
  %v9527 = vld [vmem:[%s13 + $0xe0] sm:$0xff]
  %v9528 = vld [vmem:[%s13 + $0xe8] sm:$0xff]
  %v9529 = vld [vmem:[%s13 + $0xf0] sm:$0xff]
  %v9530 = vld [vmem:[%s13 + $0xf8] sm:$0xff]
  %v9531 = vld [vmem:[%s13 + $0x100] sm:$0xff]
  %v9532 = vld [vmem:[%s13 + $0x108] sm:$0xff]
  %v9533 = vld [vmem:[%s13 + $0x110] sm:$0xff]
  %v9534 = vld [vmem:[%s13 + $0x118] sm:$0xff]
  %v9535 = vld [vmem:[%s13 + $0x120] sm:$0xff]
  %v9536 = vld [vmem:[%s13 + $0x128] sm:$0xff]
  %v9537 = vld [vmem:[%s13 + $0x130] sm:$0xff]
  %v9538 = vld [vmem:[%s13 + $0x138] sm:$0xff]
  %v9539 = vld [vmem:[%s13 + $0x140] sm:$0xff]
  %v9540 = vld [vmem:[%s13 + $0x148] sm:$0xff]
  %v9541 = vld [vmem:[%s13 + $0x150] sm:$0xff]
  %v9542 = vld [vmem:[%s13 + $0x158] sm:$0xff]
  %v9543 = vld [vmem:[%s13 + $0x160] sm:$0xff]
  %v9544 = vld [vmem:[%s13 + $0x168] sm:$0xff]
  %v9545 = vld [vmem:[%s13 + $0x170] sm:$0xff]
  %v9546 = vld [vmem:[%s13 + $0x178] sm:$0xff]
  %v9547 = vld [vmem:[%s13 + $0x180] sm:$0xff]
  %v9548 = vld [vmem:[%s13 + $0x188] sm:$0xff]
  %v9549 = vld [vmem:[%s13 + $0x190] sm:$0xff]
  %v9550 = vld [vmem:[%s13 + $0x198] sm:$0xff]
  %v9551 = vld [vmem:[%s13 + $0x1a0] sm:$0xff]
  %v9552 = vld [vmem:[%s13 + $0x1a8] sm:$0xff]
  %v9553 = vld [vmem:[%s13 + $0x1b0] sm:$0xff]
  %v9554 = vld [vmem:[%s13 + $0x1b8] sm:$0xff]
  %v9555 = vld [vmem:[%s13 + $0x1c0] sm:$0xff]
  %v9556 = vld [vmem:[%s13 + $0x1c8] sm:$0xff]
  %v9557 = vld [vmem:[%s13 + $0x1d0] sm:$0xff]
  %v9558 = vld [vmem:[%s13 + $0x1d8] sm:$0xff]
  %v9559 = vld [vmem:[%s13 + $0x1e0] sm:$0xff]
  %v9560 = vld [vmem:[%s13 + $0x1e8] sm:$0xff]
  %v9561 = vld [vmem:[%s13 + $0x1f0] sm:$0xff]
  %v9562 = vld [vmem:[%s13 + $0x1f8] sm:$0xff]
  %v9563 = vld [vmem:[%s13 + $0x200] sm:$0xff]
  %v9564 = vld [vmem:[%s13 + $0x208] sm:$0xff]
  %v9565 = vld [vmem:[%s13 + $0x210] sm:$0xff]
  %v9566 = vld [vmem:[%s13 + $0x218] sm:$0xff]
  %v9567 = vld [vmem:[%s13 + $0x220] sm:$0xff]
  %v9568 = vld [vmem:[%s13 + $0x228] sm:$0xff]
  %v9569 = vld [vmem:[%s13 + $0x230] sm:$0xff]
  %v9570 = vld [vmem:[%s13 + $0x238] sm:$0xff]
  %v9571 = vld [vmem:[%s13 + $0x240] sm:$0xff]
  %v9572 = vld [vmem:[%s13 + $0x248] sm:$0xff]
  %v9573 = vld [vmem:[%s13 + $0x250] sm:$0xff]
  %v9574 = vld [vmem:[%s13 + $0x258] sm:$0xff]
  %v9575 = vld [vmem:[%s13 + $0x260] sm:$0xff]
  %v9576 = vld [vmem:[%s13 + $0x268] sm:$0xff]
  %v9577 = vld [vmem:[%s13 + $0x270] sm:$0xff]
  %v9578 = vld [vmem:[%s13 + $0x278] sm:$0xff]
  %v9579 = vld [vmem:[%s13 + $0x280] sm:$0xff]
  %v9580 = vld [vmem:[%s13 + $0x288] sm:$0xff]
  %v9581 = vld [vmem:[%s13 + $0x290] sm:$0xff]
  %v9582 = vld [vmem:[%s13 + $0x298] sm:$0xff]
  %v9583 = vld [vmem:[%s13 + $0x2a0] sm:$0xff]
  %v9584 = vld [vmem:[%s13 + $0x2a8] sm:$0xff]
  %v9585 = vld [vmem:[%s13 + $0x2b0] sm:$0xff]
  %v9586 = vld [vmem:[%s13 + $0x2b8] sm:$0xff]
  %v9587 = vld [vmem:[%s13 + $0x2c0] sm:$0xff]
  %v9588 = vld [vmem:[%s13 + $0x2c8] sm:$0xff]
  %v9589 = vld [vmem:[%s13 + $0x2d0] sm:$0xff]
  %v9590 = vld [vmem:[%s13 + $0x2d8] sm:$0xff]
  %v9591 = vld [vmem:[%s13 + $0x2e0] sm:$0xff]
  %v9592 = vld [vmem:[%s13 + $0x2e8] sm:$0xff]
  %v9593 = vld [vmem:[%s13 + $0x2f0] sm:$0xff]
  %v9594 = vld [vmem:[%s13 + $0x2f8] sm:$0xff]
  %v9595 = vld [vmem:[%s13 + $0x300] sm:$0xff]
  %v9596 = vld [vmem:[%s13 + $0x308] sm:$0xff]
  %v9597 = vld [vmem:[%s13 + $0x310] sm:$0xff]
  %v9598 = vld [vmem:[%s13 + $0x318] sm:$0xff]
  %v9599 = vld [vmem:[%s13 + $0x320] sm:$0xff]
  %v9600 = vld [vmem:[%s13 + $0x328] sm:$0xff]
  %v9601 = vld [vmem:[%s13 + $0x330] sm:$0xff]
  %v9602 = vld [vmem:[%s13 + $0x338] sm:$0xff]
  %v9603 = vld [vmem:[%s13 + $0x340] sm:$0xff]
  %v9604 = vld [vmem:[%s13 + $0x348] sm:$0xff]
  %v9605 = vld [vmem:[%s13 + $0x350] sm:$0xff]
  %v9606 = vld [vmem:[%s13 + $0x358] sm:$0xff]
  %v9607 = vld [vmem:[%s13 + $0x360] sm:$0xff]
  %v9608 = vld [vmem:[%s13 + $0x368] sm:$0xff]
  %v9609 = vld [vmem:[%s13 + $0x370] sm:$0xff]
  %v9610 = vld [vmem:[%s13 + $0x378] sm:$0xff]
  %v9611 = vld [vmem:[%s13 + $0x380] sm:$0xff]
  %v9612 = vld [vmem:[%s13 + $0x388] sm:$0xff]
  %v9613 = vld [vmem:[%s13 + $0x390] sm:$0xff]
  %v9614 = vld [vmem:[%s13 + $0x398] sm:$0xff]
  %v9615 = vld [vmem:[%s13 + $0x3a0] sm:$0xff]
  %v9616 = vld [vmem:[%s13 + $0x3a8] sm:$0xff]
  %v9617 = vld [vmem:[%s13 + $0x3b0] sm:$0xff]
  %v9618 = vld [vmem:[%s13 + $0x3b8] sm:$0xff]
  %v9619 = vld [vmem:[%s13 + $0x3c0] sm:$0xff]
  %v9620 = vld [vmem:[%s13 + $0x3c8] sm:$0xff]
  %v9621 = vld [vmem:[%s13 + $0x3d0] sm:$0xff]
  %v9622 = vld [vmem:[%s13 + $0x3d8] sm:$0xff]
  %v9623 = vld [vmem:[%s13 + $0x3e0] sm:$0xff]
  %v9624 = vld [vmem:[%s13 + $0x3e8] sm:$0xff]
  %v9625 = vld [vmem:[%s13 + $0x3f0] sm:$0xff]
  %v9626 = vld [vmem:[%s13 + $0x3f8] sm:$0xff]
  %v9627 = vld [vmem:[%s13 + $0x400] sm:$0xff]
  %v9628 = vld [vmem:[%s13 + $0x408] sm:$0xff]
  %v9629 = vld [vmem:[%s13 + $0x410] sm:$0xff]
  %v9630 = vld [vmem:[%s13 + $0x418] sm:$0xff]
  %v9631 = vld [vmem:[%s13 + $0x420] sm:$0xff]
  %v9632 = vld [vmem:[%s13 + $0x428] sm:$0xff]
  %v9633 = vld [vmem:[%s13 + $0x430] sm:$0xff]
  %v9634 = vld [vmem:[%s13 + $0x438] sm:$0xff]
  %v9635 = vld [vmem:[%s13 + $0x440] sm:$0xff]
  %v9636 = vld [vmem:[%s13 + $0x448] sm:$0xff]
  %v9637 = vld [vmem:[%s13 + $0x450] sm:$0xff]
  %v9638 = vld [vmem:[%s13 + $0x458] sm:$0xff]
  %v9639 = vld [vmem:[%s13 + $0x460] sm:$0xff]
  %v9640 = vld [vmem:[%s13 + $0x468] sm:$0xff]
  %v9641 = vld [vmem:[%s13 + $0x470] sm:$0xff]
  %v9642 = vld [vmem:[%s13 + $0x478] sm:$0xff]
  %s9643 = scalar_lea.vmem %s10, 5
  %v9644 = vld [vmem:[%s9643] ss:$8 sm:$0x3]
  %v9646 = vlaneseq
  %v9647 = vshrl.u32 %v9646, 7
  %v9648 = vsub.s32 0, %v9647
  %v9649 = vrot.slane %v9644, %v9648
  %v9650 = vlaneseq
  %v9651 = vshrl.u32 %v9650, 7
  %v9652 = vsub.s32 1, %v9651
  %v9653 = vrot.slane %v9644, %v9652
  %v9800 = vunpack.c.l.b16 %v9499
  %v9801 = vunpack.c.h.b16 %v9499
  %v9802 = vunpack.c.l.b16 %v9500
  %v9803 = vunpack.c.h.b16 %v9500
  %v9804 = vunpack.c.l.b16 %v9501
  %v9805 = vunpack.c.h.b16 %v9501
  %v9806 = vunpack.c.l.b16 %v9502
  %v9807 = vunpack.c.h.b16 %v9502
  %v9808 = vunpack.c.l.b16 %v9503
  %v9809 = vunpack.c.h.b16 %v9503
  %v9810 = vunpack.c.l.b16 %v9504
  %v9811 = vunpack.c.h.b16 %v9504
  %v9812 = vunpack.c.l.b16 %v9505
  %v9813 = vunpack.c.h.b16 %v9505
  %v9814 = vunpack.c.l.b16 %v9506
  %v9815 = vunpack.c.h.b16 %v9506
  %v9816 = vunpack.c.l.b16 %v9507
  %v9817 = vunpack.c.h.b16 %v9507
  %v9818 = vunpack.c.l.b16 %v9508
  %v9819 = vunpack.c.h.b16 %v9508
  %v9820 = vunpack.c.l.b16 %v9509
  %v9821 = vunpack.c.h.b16 %v9509
  %v9822 = vunpack.c.l.b16 %v9510
  %v9823 = vunpack.c.h.b16 %v9510
  %v9824 = vunpack.c.l.b16 %v9511
  %v9825 = vunpack.c.h.b16 %v9511
  %v9826 = vunpack.c.l.b16 %v9512
  %v9827 = vunpack.c.h.b16 %v9512
  %v9828 = vunpack.c.l.b16 %v9513
  %v9829 = vunpack.c.h.b16 %v9513
  %v9830 = vunpack.c.l.b16 %v9514
  %v9831 = vunpack.c.h.b16 %v9514
  %v9832 = vunpack.c.l.b16 %v9515
  %v9833 = vunpack.c.h.b16 %v9515
  %v9834 = vunpack.c.l.b16 %v9516
  %v9835 = vunpack.c.h.b16 %v9516
  %v9836 = vunpack.c.l.b16 %v9517
  %v9837 = vunpack.c.h.b16 %v9517
  %v9838 = vunpack.c.l.b16 %v9518
  %v9839 = vunpack.c.h.b16 %v9518
  %v9840 = vunpack.c.l.b16 %v9519
  %v9841 = vunpack.c.h.b16 %v9519
  %v9842 = vunpack.c.l.b16 %v9520
  %v9843 = vunpack.c.h.b16 %v9520
  %v9844 = vunpack.c.l.b16 %v9521
  %v9845 = vunpack.c.h.b16 %v9521
  %v9846 = vunpack.c.l.b16 %v9522
  %v9847 = vunpack.c.h.b16 %v9522
  %v9848 = vunpack.c.l.b16 %v9523
  %v9849 = vunpack.c.h.b16 %v9523
  %v9850 = vunpack.c.l.b16 %v9524
  %v9851 = vunpack.c.h.b16 %v9524
  %v9852 = vunpack.c.l.b16 %v9525
  %v9853 = vunpack.c.h.b16 %v9525
  %v9854 = vunpack.c.l.b16 %v9526
  %v9855 = vunpack.c.h.b16 %v9526
  %v9856 = vunpack.c.l.b16 %v9527
  %v9857 = vunpack.c.h.b16 %v9527
  %v9858 = vunpack.c.l.b16 %v9528
  %v9859 = vunpack.c.h.b16 %v9528
  %v9860 = vunpack.c.l.b16 %v9529
  %v9861 = vunpack.c.h.b16 %v9529
  %v9862 = vunpack.c.l.b16 %v9530
  %v9863 = vunpack.c.h.b16 %v9530
  %v9864 = vunpack.c.l.b16 %v9531
  %v9865 = vunpack.c.h.b16 %v9531
  %v9866 = vunpack.c.l.b16 %v9532
  %v9867 = vunpack.c.h.b16 %v9532
  %v9868 = vunpack.c.l.b16 %v9533
  %v9869 = vunpack.c.h.b16 %v9533
  %v9870 = vunpack.c.l.b16 %v9534
  %v9871 = vunpack.c.h.b16 %v9534
  %v9872 = vunpack.c.l.b16 %v9535
  %v9873 = vunpack.c.h.b16 %v9535
  %v9874 = vunpack.c.l.b16 %v9536
  %v9875 = vunpack.c.h.b16 %v9536
  %v9876 = vunpack.c.l.b16 %v9537
  %v9877 = vunpack.c.h.b16 %v9537
  %v9878 = vunpack.c.l.b16 %v9538
  %v9879 = vunpack.c.h.b16 %v9538
  %v9880 = vunpack.c.l.b16 %v9539
  %v9881 = vunpack.c.h.b16 %v9539
  %v9882 = vunpack.c.l.b16 %v9540
  %v9883 = vunpack.c.h.b16 %v9540
  %v9884 = vunpack.c.l.b16 %v9541
  %v9885 = vunpack.c.h.b16 %v9541
  %v9886 = vunpack.c.l.b16 %v9542
  %v9887 = vunpack.c.h.b16 %v9542
  %v9888 = vunpack.c.l.b16 %v9543
  %v9889 = vunpack.c.h.b16 %v9543
  %v9890 = vunpack.c.l.b16 %v9544
  %v9891 = vunpack.c.h.b16 %v9544
  %v9892 = vunpack.c.l.b16 %v9545
  %v9893 = vunpack.c.h.b16 %v9545
  %v9894 = vunpack.c.l.b16 %v9546
  %v9895 = vunpack.c.h.b16 %v9546
  %v9896 = vunpack.c.l.b16 %v9547
  %v9897 = vunpack.c.h.b16 %v9547
  %v9898 = vunpack.c.l.b16 %v9548
  %v9899 = vunpack.c.h.b16 %v9548
  %v9900 = vunpack.c.l.b16 %v9549
  %v9901 = vunpack.c.h.b16 %v9549
  %v9902 = vunpack.c.l.b16 %v9550
  %v9903 = vunpack.c.h.b16 %v9550
  %v9904 = vunpack.c.l.b16 %v9551
  %v9905 = vunpack.c.h.b16 %v9551
  %v9906 = vunpack.c.l.b16 %v9552
  %v9907 = vunpack.c.h.b16 %v9552
  %v9908 = vunpack.c.l.b16 %v9553
  %v9909 = vunpack.c.h.b16 %v9553
  %v9910 = vunpack.c.l.b16 %v9554
  %v9911 = vunpack.c.h.b16 %v9554
  %v9912 = vunpack.c.l.b16 %v9555
  %v9913 = vunpack.c.h.b16 %v9555
  %v9914 = vunpack.c.l.b16 %v9556
  %v9915 = vunpack.c.h.b16 %v9556
  %v9916 = vunpack.c.l.b16 %v9557
  %v9917 = vunpack.c.h.b16 %v9557
  %v9918 = vunpack.c.l.b16 %v9558
  %v9919 = vunpack.c.h.b16 %v9558
  %v9920 = vunpack.c.l.b16 %v9559
  %v9921 = vunpack.c.h.b16 %v9559
  %v9922 = vunpack.c.l.b16 %v9560
  %v9923 = vunpack.c.h.b16 %v9560
  %v9924 = vunpack.c.l.b16 %v9561
  %v9925 = vunpack.c.h.b16 %v9561
  %v9926 = vunpack.c.l.b16 %v9562
  %v9927 = vunpack.c.h.b16 %v9562
  %v9928 = vunpack.c.l.b16 %v9563
  %v9929 = vunpack.c.h.b16 %v9563
  %v9930 = vunpack.c.l.b16 %v9564
  %v9931 = vunpack.c.h.b16 %v9564
  %v9932 = vunpack.c.l.b16 %v9565
  %v9933 = vunpack.c.h.b16 %v9565
  %v9934 = vunpack.c.l.b16 %v9566
  %v9935 = vunpack.c.h.b16 %v9566
  %v9936 = vunpack.c.l.b16 %v9567
  %v9937 = vunpack.c.h.b16 %v9567
  %v9938 = vunpack.c.l.b16 %v9568
  %v9939 = vunpack.c.h.b16 %v9568
  %v9940 = vunpack.c.l.b16 %v9569
  %v9941 = vunpack.c.h.b16 %v9569
  %v9942 = vunpack.c.l.b16 %v9570
  %v9943 = vunpack.c.h.b16 %v9570
  %v9944 = vunpack.c.l.b16 %v9571
  %v9945 = vunpack.c.h.b16 %v9571
  %v9946 = vunpack.c.l.b16 %v9572
  %v9947 = vunpack.c.h.b16 %v9572
  %v9948 = vunpack.c.l.b16 %v9573
  %v9949 = vunpack.c.h.b16 %v9573
  %v9950 = vunpack.c.l.b16 %v9574
  %v9951 = vunpack.c.h.b16 %v9574
  %v9952 = vunpack.c.l.b16 %v9575
  %v9953 = vunpack.c.h.b16 %v9575
  %v9954 = vunpack.c.l.b16 %v9576
  %v9955 = vunpack.c.h.b16 %v9576
  %v9956 = vunpack.c.l.b16 %v9577
  %v9957 = vunpack.c.h.b16 %v9577
  %v9958 = vunpack.c.l.b16 %v9578
  %v9959 = vunpack.c.h.b16 %v9578
  %v9960 = vunpack.c.l.b16 %v9579
  %v9961 = vunpack.c.h.b16 %v9579
  %v9962 = vunpack.c.l.b16 %v9580
  %v9963 = vunpack.c.h.b16 %v9580
  %v9964 = vunpack.c.l.b16 %v9581
  %v9965 = vunpack.c.h.b16 %v9581
  %v9966 = vunpack.c.l.b16 %v9582
  %v9967 = vunpack.c.h.b16 %v9582
  %v9968 = vunpack.c.l.b16 %v9583
  %v9969 = vunpack.c.h.b16 %v9583
  %v9970 = vunpack.c.l.b16 %v9584
  %v9971 = vunpack.c.h.b16 %v9584
  %v9972 = vunpack.c.l.b16 %v9585
  %v9973 = vunpack.c.h.b16 %v9585
  %v9974 = vunpack.c.l.b16 %v9586
  %v9975 = vunpack.c.h.b16 %v9586
  %v9976 = vunpack.c.l.b16 %v9587
  %v9977 = vunpack.c.h.b16 %v9587
  %v9978 = vunpack.c.l.b16 %v9588
  %v9979 = vunpack.c.h.b16 %v9588
  %v9980 = vunpack.c.l.b16 %v9589
  %v9981 = vunpack.c.h.b16 %v9589
  %v9982 = vunpack.c.l.b16 %v9590
  %v9983 = vunpack.c.h.b16 %v9590
  %v9984 = vunpack.c.l.b16 %v9591
  %v9985 = vunpack.c.h.b16 %v9591
  %v9986 = vunpack.c.l.b16 %v9592
  %v9987 = vunpack.c.h.b16 %v9592
  %v9988 = vunpack.c.l.b16 %v9593
  %v9989 = vunpack.c.h.b16 %v9593
  %v9990 = vunpack.c.l.b16 %v9594
  %v9991 = vunpack.c.h.b16 %v9594
  %v9992 = vunpack.c.l.b16 %v9595
  %v9993 = vunpack.c.h.b16 %v9595
  %v9994 = vunpack.c.l.b16 %v9596
  %v9995 = vunpack.c.h.b16 %v9596
  %v9996 = vunpack.c.l.b16 %v9597
  %v9997 = vunpack.c.h.b16 %v9597
  %v9998 = vunpack.c.l.b16 %v9598
  %v9999 = vunpack.c.h.b16 %v9598
  %v10000 = vunpack.c.l.b16 %v9599
  %v10001 = vunpack.c.h.b16 %v9599
  %v10002 = vunpack.c.l.b16 %v9600
  %v10003 = vunpack.c.h.b16 %v9600
  %v10004 = vunpack.c.l.b16 %v9601
  %v10005 = vunpack.c.h.b16 %v9601
  %v10006 = vunpack.c.l.b16 %v9602
  %v10007 = vunpack.c.h.b16 %v9602
  %v10008 = vunpack.c.l.b16 %v9603
  %v10009 = vunpack.c.h.b16 %v9603
  %v10010 = vunpack.c.l.b16 %v9604
  %v10011 = vunpack.c.h.b16 %v9604
  %v10012 = vunpack.c.l.b16 %v9605
  %v10013 = vunpack.c.h.b16 %v9605
  %v10014 = vunpack.c.l.b16 %v9606
  %v10015 = vunpack.c.h.b16 %v9606
  %v10016 = vunpack.c.l.b16 %v9607
  %v10017 = vunpack.c.h.b16 %v9607
  %v10018 = vunpack.c.l.b16 %v9608
  %v10019 = vunpack.c.h.b16 %v9608
  %v10020 = vunpack.c.l.b16 %v9609
  %v10021 = vunpack.c.h.b16 %v9609
  %v10022 = vunpack.c.l.b16 %v9610
  %v10023 = vunpack.c.h.b16 %v9610
  %v10024 = vunpack.c.l.b16 %v9611
  %v10025 = vunpack.c.h.b16 %v9611
  %v10026 = vunpack.c.l.b16 %v9612
  %v10027 = vunpack.c.h.b16 %v9612
  %v10028 = vunpack.c.l.b16 %v9613
  %v10029 = vunpack.c.h.b16 %v9613
  %v10030 = vunpack.c.l.b16 %v9614
  %v10031 = vunpack.c.h.b16 %v9614
  %v10032 = vunpack.c.l.b16 %v9615
  %v10033 = vunpack.c.h.b16 %v9615
  %v10034 = vunpack.c.l.b16 %v9616
  %v10035 = vunpack.c.h.b16 %v9616
  %v10036 = vunpack.c.l.b16 %v9617
  %v10037 = vunpack.c.h.b16 %v9617
  %v10038 = vunpack.c.l.b16 %v9618
  %v10039 = vunpack.c.h.b16 %v9618
  %v10040 = vunpack.c.l.b16 %v9619
  %v10041 = vunpack.c.h.b16 %v9619
  %v10042 = vunpack.c.l.b16 %v9620
  %v10043 = vunpack.c.h.b16 %v9620
  %v10044 = vunpack.c.l.b16 %v9621
  %v10045 = vunpack.c.h.b16 %v9621
  %v10046 = vunpack.c.l.b16 %v9622
  %v10047 = vunpack.c.h.b16 %v9622
  %v10048 = vunpack.c.l.b16 %v9623
  %v10049 = vunpack.c.h.b16 %v9623
  %v10050 = vunpack.c.l.b16 %v9624
  %v10051 = vunpack.c.h.b16 %v9624
  %v10052 = vunpack.c.l.b16 %v9625
  %v10053 = vunpack.c.h.b16 %v9625
  %v10054 = vunpack.c.l.b16 %v9626
  %v10055 = vunpack.c.h.b16 %v9626
  %v10056 = vunpack.c.l.b16 %v9627
  %v10057 = vunpack.c.h.b16 %v9627
  %v10058 = vunpack.c.l.b16 %v9628
  %v10059 = vunpack.c.h.b16 %v9628
  %v10060 = vunpack.c.l.b16 %v9629
  %v10061 = vunpack.c.h.b16 %v9629
  %v10062 = vunpack.c.l.b16 %v9630
  %v10063 = vunpack.c.h.b16 %v9630
  %v10064 = vunpack.c.l.b16 %v9631
  %v10065 = vunpack.c.h.b16 %v9631
  %v10066 = vunpack.c.l.b16 %v9632
  %v10067 = vunpack.c.h.b16 %v9632
  %v10068 = vunpack.c.l.b16 %v9633
  %v10069 = vunpack.c.h.b16 %v9633
  %v10070 = vunpack.c.l.b16 %v9634
  %v10071 = vunpack.c.h.b16 %v9634
  %v10072 = vunpack.c.l.b16 %v9635
  %v10073 = vunpack.c.h.b16 %v9635
  %v10074 = vunpack.c.l.b16 %v9636
  %v10075 = vunpack.c.h.b16 %v9636
  %v10076 = vunpack.c.l.b16 %v9637
  %v10077 = vunpack.c.h.b16 %v9637
  %v10078 = vunpack.c.l.b16 %v9638
  %v10079 = vunpack.c.h.b16 %v9638
  %v10080 = vunpack.c.l.b16 %v9639
  %v10081 = vunpack.c.h.b16 %v9639
  %v10082 = vunpack.c.l.b16 %v9640
  %v10083 = vunpack.c.h.b16 %v9640
  %v10084 = vunpack.c.l.b16 %v9641
  %v10085 = vunpack.c.h.b16 %v9641
  %v10086 = vunpack.c.l.b16 %v9642
  %v10087 = vunpack.c.h.b16 %v9642
  %v10088 = vpack.c.b16 %v9802, %v9800
  %v10089 = vpack.c.b16 %v9803, %v9801
  %v10090 = vpack.c.b16 %v9806, %v9804
  %v10091 = vpack.c.b16 %v9807, %v9805
  %v10092 = vpack.c.b16 %v9810, %v9808
  %v10093 = vpack.c.b16 %v9811, %v9809
  %v10094 = vpack.c.b16 %v9814, %v9812
  %v10095 = vpack.c.b16 %v9815, %v9813
  %v10096 = vpack.c.b16 %v9818, %v9816
  %v10097 = vpack.c.b16 %v9819, %v9817
  %v10098 = vpack.c.b16 %v9822, %v9820
  %v10099 = vpack.c.b16 %v9823, %v9821
  %v10100 = vpack.c.b16 %v9826, %v9824
  %v10101 = vpack.c.b16 %v9827, %v9825
  %v10102 = vpack.c.b16 %v9830, %v9828
  %v10103 = vpack.c.b16 %v9831, %v9829
  %v10104 = vpack.c.b16 %v9834, %v9832
  %v10105 = vpack.c.b16 %v9835, %v9833
  %v10106 = vpack.c.b16 %v9838, %v9836
  %v10107 = vpack.c.b16 %v9839, %v9837
  %v10108 = vpack.c.b16 %v9842, %v9840
  %v10109 = vpack.c.b16 %v9843, %v9841
  %v10110 = vpack.c.b16 %v9846, %v9844
  %v10111 = vpack.c.b16 %v9847, %v9845
  %v10112 = vpack.c.b16 %v9850, %v9848
  %v10113 = vpack.c.b16 %v9851, %v9849
  %v10114 = vpack.c.b16 %v9854, %v9852
  %v10115 = vpack.c.b16 %v9855, %v9853
  %v10116 = vpack.c.b16 %v9858, %v9856
  %v10117 = vpack.c.b16 %v9859, %v9857
  %v10118 = vpack.c.b16 %v9862, %v9860
  %v10119 = vpack.c.b16 %v9863, %v9861
  %v10120 = vpack.c.b16 %v9866, %v9864
  %v10121 = vpack.c.b16 %v9867, %v9865
  %v10122 = vpack.c.b16 %v9870, %v9868
  %v10123 = vpack.c.b16 %v9871, %v9869
  %v10124 = vpack.c.b16 %v9874, %v9872
  %v10125 = vpack.c.b16 %v9875, %v9873
  %v10126 = vpack.c.b16 %v9878, %v9876
  %v10127 = vpack.c.b16 %v9879, %v9877
  %v10128 = vpack.c.b16 %v9882, %v9880
  %v10129 = vpack.c.b16 %v9883, %v9881
  %v10130 = vpack.c.b16 %v9886, %v9884
  %v10131 = vpack.c.b16 %v9887, %v9885
  %v10132 = vpack.c.b16 %v9890, %v9888
  %v10133 = vpack.c.b16 %v9891, %v9889
  %v10134 = vpack.c.b16 %v9894, %v9892
  %v10135 = vpack.c.b16 %v9895, %v9893
  %v10136 = vpack.c.b16 %v9898, %v9896
  %v10137 = vpack.c.b16 %v9899, %v9897
  %v10138 = vpack.c.b16 %v9902, %v9900
  %v10139 = vpack.c.b16 %v9903, %v9901
  %v10140 = vpack.c.b16 %v9906, %v9904
  %v10141 = vpack.c.b16 %v9907, %v9905
  %v10142 = vpack.c.b16 %v9910, %v9908
  %v10143 = vpack.c.b16 %v9911, %v9909
  %v10144 = vpack.c.b16 %v9914, %v9912
  %v10145 = vpack.c.b16 %v9915, %v9913
  %v10146 = vpack.c.b16 %v9918, %v9916
  %v10147 = vpack.c.b16 %v9919, %v9917
  %v10148 = vpack.c.b16 %v9922, %v9920
  %v10149 = vpack.c.b16 %v9923, %v9921
  %v10150 = vpack.c.b16 %v9926, %v9924
  %v10151 = vpack.c.b16 %v9927, %v9925
  %v10152 = vpack.c.b16 %v9930, %v9928
  %v10153 = vpack.c.b16 %v9931, %v9929
  %v10154 = vpack.c.b16 %v9934, %v9932
  %v10155 = vpack.c.b16 %v9935, %v9933
  %v10156 = vpack.c.b16 %v9938, %v9936
  %v10157 = vpack.c.b16 %v9939, %v9937
  %v10158 = vpack.c.b16 %v9942, %v9940
  %v10159 = vpack.c.b16 %v9943, %v9941
  %v10160 = vpack.c.b16 %v9946, %v9944
  %v10161 = vpack.c.b16 %v9947, %v9945
  %v10162 = vpack.c.b16 %v9950, %v9948
  %v10163 = vpack.c.b16 %v9951, %v9949
  %v10164 = vpack.c.b16 %v9954, %v9952
  %v10165 = vpack.c.b16 %v9955, %v9953
  %v10166 = vpack.c.b16 %v9958, %v9956
  %v10167 = vpack.c.b16 %v9959, %v9957
  %v10168 = vpack.c.b16 %v9962, %v9960
  %v10169 = vpack.c.b16 %v9963, %v9961
  %v10170 = vpack.c.b16 %v9966, %v9964
  %v10171 = vpack.c.b16 %v9967, %v9965
  %v10172 = vpack.c.b16 %v9970, %v9968
  %v10173 = vpack.c.b16 %v9971, %v9969
  %v10174 = vpack.c.b16 %v9974, %v9972
  %v10175 = vpack.c.b16 %v9975, %v9973
  %v10176 = vpack.c.b16 %v9978, %v9976
  %v10177 = vpack.c.b16 %v9979, %v9977
  %v10178 = vpack.c.b16 %v9982, %v9980
  %v10179 = vpack.c.b16 %v9983, %v9981
  %v10180 = vpack.c.b16 %v9986, %v9984
  %v10181 = vpack.c.b16 %v9987, %v9985
  %v10182 = vpack.c.b16 %v9990, %v9988
  %v10183 = vpack.c.b16 %v9991, %v9989
  %v10184 = vpack.c.b16 %v9994, %v9992
  %v10185 = vpack.c.b16 %v9995, %v9993
  %v10186 = vpack.c.b16 %v9998, %v9996
  %v10187 = vpack.c.b16 %v9999, %v9997
  %v10188 = vpack.c.b16 %v10002, %v10000
  %v10189 = vpack.c.b16 %v10003, %v10001
  %v10190 = vpack.c.b16 %v10006, %v10004
  %v10191 = vpack.c.b16 %v10007, %v10005
  %v10192 = vpack.c.b16 %v10010, %v10008
  %v10193 = vpack.c.b16 %v10011, %v10009
  %v10194 = vpack.c.b16 %v10014, %v10012
  %v10195 = vpack.c.b16 %v10015, %v10013
  %v10196 = vpack.c.b16 %v10018, %v10016
  %v10197 = vpack.c.b16 %v10019, %v10017
  %v10198 = vpack.c.b16 %v10022, %v10020
  %v10199 = vpack.c.b16 %v10023, %v10021
  %v10200 = vpack.c.b16 %v10026, %v10024
  %v10201 = vpack.c.b16 %v10027, %v10025
  %v10202 = vpack.c.b16 %v10030, %v10028
  %v10203 = vpack.c.b16 %v10031, %v10029
  %v10204 = vpack.c.b16 %v10034, %v10032
  %v10205 = vpack.c.b16 %v10035, %v10033
  %v10206 = vpack.c.b16 %v10038, %v10036
  %v10207 = vpack.c.b16 %v10039, %v10037
  %v10208 = vpack.c.b16 %v10042, %v10040
  %v10209 = vpack.c.b16 %v10043, %v10041
  %v10210 = vpack.c.b16 %v10046, %v10044
  %v10211 = vpack.c.b16 %v10047, %v10045
  %v10212 = vpack.c.b16 %v10050, %v10048
  %v10213 = vpack.c.b16 %v10051, %v10049
  %v10214 = vpack.c.b16 %v10054, %v10052
  %v10215 = vpack.c.b16 %v10055, %v10053
  %v10216 = vpack.c.b16 %v10058, %v10056
  %v10217 = vpack.c.b16 %v10059, %v10057
  %v10218 = vpack.c.b16 %v10062, %v10060
  %v10219 = vpack.c.b16 %v10063, %v10061
  %v10220 = vpack.c.b16 %v10066, %v10064
  %v10221 = vpack.c.b16 %v10067, %v10065
  %v10222 = vpack.c.b16 %v10070, %v10068
  %v10223 = vpack.c.b16 %v10071, %v10069
  %v10224 = vpack.c.b16 %v10074, %v10072
  %v10225 = vpack.c.b16 %v10075, %v10073
  %v10226 = vpack.c.b16 %v10078, %v10076
  %v10227 = vpack.c.b16 %v10079, %v10077
  %v10228 = vpack.c.b16 %v10082, %v10080
  %v10229 = vpack.c.b16 %v10083, %v10081
  %v10230 = vpack.c.b16 %v10086, %v10084
  %v10231 = vpack.c.b16 %v10087, %v10085
  %10376 = vmatprep.subr.bf16.mxu0 %v10089
  %10377 = vmatpush1.bf16.msra.mxu0 %v10088
  %10378 = vmatprep.subr.bf16.mxu0 %v10091
  %10379 = vmatpush1.bf16.msra.mxu0 %v10090
  %10380 = vmatprep.subr.bf16.mxu0 %v10093
  %10381 = vmatpush1.bf16.msra.mxu0 %v10092
  %10382 = vmatprep.subr.bf16.mxu0 %v10095
  %10383 = vmatpush1.bf16.msra.mxu0 %v10094
  %10384 = vmatprep.subr.bf16.mxu0 %v10097
  %10385 = vmatpush1.bf16.msra.mxu0 %v10096
  %10386 = vmatprep.subr.bf16.mxu0 %v10099
  %10387 = vmatpush1.bf16.msra.mxu0 %v10098
  %10388 = vmatprep.subr.bf16.mxu0 %v10101
  %10389 = vmatpush1.bf16.msra.mxu0 %v10100
  %10390 = vmatprep.subr.bf16.mxu0 %v10103
  %10391 = vmatpush1.bf16.msra.mxu0 %v10102
  %10392 = vmatprep.subr.bf16.mxu0 %v10105
  %10393 = vmatpush1.bf16.msra.mxu0 %v10104
  %10394 = vmatprep.subr.bf16.mxu0 %v10107
  %10395 = vmatpush1.bf16.msra.mxu0 %v10106
  %10396 = vmatprep.subr.bf16.mxu0 %v10109
  %10397 = vmatpush1.bf16.msra.mxu0 %v10108
  %10398 = vmatprep.subr.bf16.mxu0 %v10111
  %10399 = vmatpush1.bf16.msra.mxu0 %v10110
  %10400 = vmatprep.subr.bf16.mxu0 %v10113
  %10401 = vmatpush1.bf16.msra.mxu0 %v10112
  %10402 = vmatprep.subr.bf16.mxu0 %v10115
  %10403 = vmatpush1.bf16.msra.mxu0 %v10114
  %10404 = vmatprep.subr.bf16.mxu0 %v10117
  %10405 = vmatpush1.bf16.msra.mxu0 %v10116
  %10406 = vmatprep.subr.bf16.mxu0 %v10119
  %10407 = vmatpush1.bf16.msra.mxu0 %v10118
  %10408 = vmatprep.mubr.bf16.mxu0 %v9491
  %10409 = vmatmul.mubr.bf16.gmra.mrb[0].mxu0 %v9490
  %v10410 = vpop.f32.mrb[0].mxu0
  %v10411 = vadd.f32 %v9649, %v10410
  %v10412 = vpop.f32.mrb[0].mxu0
  %v10413 = vadd.f32 %v9653, %v10412
  %v10414 = vpop.f32.mrb[0].mxu0
  %v10415 = vpop.f32.mrb[0].mxu0
  %10416 = vdwg.mxu0
  %10417 = vmatprep.subr.bf16.mxu0 %v10121
  %10418 = vmatpush1.bf16.msra.mxu0 %v10120
  %10419 = vmatprep.subr.bf16.mxu0 %v10123
  %10420 = vmatpush1.bf16.msra.mxu0 %v10122
  %10421 = vmatprep.subr.bf16.mxu0 %v10125
  %10422 = vmatpush1.bf16.msra.mxu0 %v10124
  %10423 = vmatprep.subr.bf16.mxu0 %v10127
  %10424 = vmatpush1.bf16.msra.mxu0 %v10126
  %10425 = vmatprep.subr.bf16.mxu0 %v10129
  %10426 = vmatpush1.bf16.msra.mxu0 %v10128
  %10427 = vmatprep.subr.bf16.mxu0 %v10131
  %10428 = vmatpush1.bf16.msra.mxu0 %v10130
  %10429 = vmatprep.subr.bf16.mxu0 %v10133
  %10430 = vmatpush1.bf16.msra.mxu0 %v10132
  %10431 = vmatprep.subr.bf16.mxu0 %v10135
  %10432 = vmatpush1.bf16.msra.mxu0 %v10134
  %10433 = vmatprep.subr.bf16.mxu0 %v10137
  %10434 = vmatpush1.bf16.msra.mxu0 %v10136
  %10435 = vmatprep.subr.bf16.mxu0 %v10139
  %10436 = vmatpush1.bf16.msra.mxu0 %v10138
  %10437 = vmatprep.subr.bf16.mxu0 %v10141
  %10438 = vmatpush1.bf16.msra.mxu0 %v10140
  %10439 = vmatprep.subr.bf16.mxu0 %v10143
  %10440 = vmatpush1.bf16.msra.mxu0 %v10142
  %10441 = vmatprep.subr.bf16.mxu0 %v10145
  %10442 = vmatpush1.bf16.msra.mxu0 %v10144
  %10443 = vmatprep.subr.bf16.mxu0 %v10147
  %10444 = vmatpush1.bf16.msra.mxu0 %v10146
  %10445 = vmatprep.subr.bf16.mxu0 %v10149
  %10446 = vmatpush1.bf16.msra.mxu0 %v10148
  %10447 = vmatprep.subr.bf16.mxu0 %v10151
  %10448 = vmatpush1.bf16.msra.mxu0 %v10150
  %10449 = vmatprep.mubr.bf16.mxu0 %v9493
  %10450 = vmatmul.mubr.bf16.gmra.mrb[0].mxu0 %v9492
  %v10451 = vpop.f32.mrb[0].mxu0
  %v10452 = vadd.f32 %v10411, %v10451
  %v10453 = vpop.f32.mrb[0].mxu0
  %v10454 = vadd.f32 %v10413, %v10453
  %v10455 = vpop.f32.mrb[0].mxu0
  %v10456 = vpop.f32.mrb[0].mxu0
  %10457 = vdwg.mxu0
  %10458 = vmatprep.subr.bf16.mxu0 %v10153
  %10459 = vmatpush1.bf16.msra.mxu0 %v10152
  %10460 = vmatprep.subr.bf16.mxu0 %v10155
  %10461 = vmatpush1.bf16.msra.mxu0 %v10154
  %10462 = vmatprep.subr.bf16.mxu0 %v10157
  %10463 = vmatpush1.bf16.msra.mxu0 %v10156
  %10464 = vmatprep.subr.bf16.mxu0 %v10159
  %10465 = vmatpush1.bf16.msra.mxu0 %v10158
  %10466 = vmatprep.subr.bf16.mxu0 %v10161
  %10467 = vmatpush1.bf16.msra.mxu0 %v10160
  %10468 = vmatprep.subr.bf16.mxu0 %v10163
  %10469 = vmatpush1.bf16.msra.mxu0 %v10162
  %10470 = vmatprep.subr.bf16.mxu0 %v10165
  %10471 = vmatpush1.bf16.msra.mxu0 %v10164
  %10472 = vmatprep.subr.bf16.mxu0 %v10167
  %10473 = vmatpush1.bf16.msra.mxu0 %v10166
  %10474 = vmatprep.subr.bf16.mxu0 %v10169
  %10475 = vmatpush1.bf16.msra.mxu0 %v10168
  %10476 = vmatprep.subr.bf16.mxu0 %v10171
  %10477 = vmatpush1.bf16.msra.mxu0 %v10170
  %10478 = vmatprep.subr.bf16.mxu0 %v10173
  %10479 = vmatpush1.bf16.msra.mxu0 %v10172
  %10480 = vmatprep.subr.bf16.mxu0 %v10175
  %10481 = vmatpush1.bf16.msra.mxu0 %v10174
  %10482 = vmatprep.subr.bf16.mxu0 %v10177
  %10483 = vmatpush1.bf16.msra.mxu0 %v10176
  %10484 = vmatprep.subr.bf16.mxu0 %v10179
  %10485 = vmatpush1.bf16.msra.mxu0 %v10178
  %10486 = vmatprep.subr.bf16.mxu0 %v10181
  %10487 = vmatpush1.bf16.msra.mxu0 %v10180
  %10488 = vmatprep.subr.bf16.mxu0 %v10183
  %10489 = vmatpush1.bf16.msra.mxu0 %v10182
  %10490 = vmatprep.mubr.bf16.mxu0 %v9495
  %10491 = vmatmul.mubr.bf16.gmra.mrb[0].mxu0 %v9494
  %v10492 = vpop.f32.mrb[0].mxu0
  %v10493 = vadd.f32 %v10452, %v10492
  %v10494 = vpop.f32.mrb[0].mxu0
  %v10495 = vadd.f32 %v10454, %v10494
  %v10496 = vpop.f32.mrb[0].mxu0
  %v10497 = vpop.f32.mrb[0].mxu0
  %10498 = vdwg.mxu0
  %10499 = vmatprep.subr.bf16.mxu0 %v10185
  %10500 = vmatpush1.bf16.msra.mxu0 %v10184
  %10501 = vmatprep.subr.bf16.mxu0 %v10187
  %10502 = vmatpush1.bf16.msra.mxu0 %v10186
  %10503 = vmatprep.subr.bf16.mxu0 %v10189
  %10504 = vmatpush1.bf16.msra.mxu0 %v10188
  %10505 = vmatprep.subr.bf16.mxu0 %v10191
  %10506 = vmatpush1.bf16.msra.mxu0 %v10190
  %10507 = vmatprep.subr.bf16.mxu0 %v10193
  %10508 = vmatpush1.bf16.msra.mxu0 %v10192
  %10509 = vmatprep.subr.bf16.mxu0 %v10195
  %10510 = vmatpush1.bf16.msra.mxu0 %v10194
  %10511 = vmatprep.subr.bf16.mxu0 %v10197
  %10512 = vmatpush1.bf16.msra.mxu0 %v10196
  %10513 = vmatprep.subr.bf16.mxu0 %v10199
  %10514 = vmatpush1.bf16.msra.mxu0 %v10198
  %10515 = vmatprep.subr.bf16.mxu0 %v10201
  %10516 = vmatpush1.bf16.msra.mxu0 %v10200
  %10517 = vmatprep.subr.bf16.mxu0 %v10203
  %10518 = vmatpush1.bf16.msra.mxu0 %v10202
  %10519 = vmatprep.subr.bf16.mxu0 %v10205
  %10520 = vmatpush1.bf16.msra.mxu0 %v10204
  %10521 = vmatprep.subr.bf16.mxu0 %v10207
  %10522 = vmatpush1.bf16.msra.mxu0 %v10206
  %10523 = vmatprep.subr.bf16.mxu0 %v10209
  %10524 = vmatpush1.bf16.msra.mxu0 %v10208
  %10525 = vmatprep.subr.bf16.mxu0 %v10211
  %10526 = vmatpush1.bf16.msra.mxu0 %v10210
  %10527 = vmatprep.subr.bf16.mxu0 %v10213
  %10528 = vmatpush1.bf16.msra.mxu0 %v10212
  %10529 = vmatprep.subr.bf16.mxu0 %v10215
  %10530 = vmatpush1.bf16.msra.mxu0 %v10214
  %10531 = vmatprep.mubr.bf16.mxu0 %v9497
  %10532 = vmatmul.mubr.bf16.gmra.mrb[0].mxu0 %v9496
  %v10533 = vpop.f32.mrb[0].mxu0
  %v10534 = vadd.f32 %v10493, %v10533
  %v10535 = vpop.f32.mrb[0].mxu0
  %v10536 = vadd.f32 %v10495, %v10535
  %v10537 = vpop.f32.mrb[0].mxu0
  %v10538 = vpop.f32.mrb[0].mxu0
  %10539 = vdwg.mxu0
  %10540 = vmatprep.subr.bf16.mxu0 %v10217
  %10541 = vmatpush1.bf16.msra.mxu0 %v10216
  %10542 = vmatprep.subr.bf16.mxu0 %v10219
  %10543 = vmatpush1.bf16.msra.mxu0 %v10218
  %10544 = vmatprep.subr.bf16.mxu0 %v10221
  %10545 = vmatpush1.bf16.msra.mxu0 %v10220
  %10546 = vmatprep.subr.bf16.mxu0 %v10223
  %10547 = vmatpush1.bf16.msra.mxu0 %v10222
  %10548 = vmatprep.subr.bf16.mxu0 %v10225
  %10549 = vmatpush1.bf16.msra.mxu0 %v10224
  %10550 = vmatprep.subr.bf16.mxu0 %v10227
  %10551 = vmatpush1.bf16.msra.mxu0 %v10226
  %10552 = vmatprep.subr.bf16.mxu0 %v10229
  %10553 = vmatpush1.bf16.msra.mxu0 %v10228
  %10554 = vmatprep.subr.bf16.mxu0 %v10231
  %10555 = vmatpush1.bf16.msra.mxu0 %v10230
  %10556 = vmatprep.subr.bf16.mxu0 0
  %10557 = vmatpush1.bf16.msra.mxu0 0
  %10558 = vmatprep.subr.bf16.mxu0 0
  %10559 = vmatpush1.bf16.msra.mxu0 0
  %10560 = vmatprep.subr.bf16.mxu0 0
  %10561 = vmatpush1.bf16.msra.mxu0 0
  %10562 = vmatprep.subr.bf16.mxu0 0
  %10563 = vmatpush1.bf16.msra.mxu0 0
  %10564 = vmatprep.subr.bf16.mxu0 0
  %10565 = vmatpush1.bf16.msra.mxu0 0
  %10566 = vmatprep.subr.bf16.mxu0 0
  %10567 = vmatpush1.bf16.msra.mxu0 0
  %10568 = vmatprep.subr.bf16.mxu0 0
  %10569 = vmatpush1.bf16.msra.mxu0 0
  %10570 = vmatprep.subr.bf16.mxu0 0
  %10571 = vmatpush1.bf16.msra.mxu0 0
  %10572 = vmatprep.mubr.bf16.mxu0 0
  %10573 = vmatmul.mubr.bf16.gmra.mrb[0].mxu0 %v9498
  %v10574 = vpop.f32.mrb[0].mxu0
  %v10575 = vadd.f32 %v10534, %v10574
  %v10576 = vpop.f32.mrb[0].mxu0
  %v10577 = vadd.f32 %v10536, %v10576
  %v10578 = vpop.f32.mrb[0].mxu0
  %v10579 = vpop.f32.mrb[0].mxu0
  %10580 = vdwg.mxu0
  %v10581 = vadd.f32 %v8494, %v10575
  %v10582 = vadd.f32 %v8495, %v10577
  %s10583 = scalar_lea.vmem %s10, 3
  %v10584 = vld [vmem:[%s10583] ss:$8 sm:$0x3]
  %s10585 = scalar_lea.vmem %s10, 4
  %v10586 = vld [vmem:[%s10585] ss:$8 sm:$0x3]
  %v10587 = vpack.c.bf16 %v10581, %v10581
  %v10588 = vpack.c.bf16 %v10582, %v10582
  %v10590 = vsel %vm1531, %v10588, 0
  %10592 = vmatprep.subr.bf16.mxu0 %v8311
  %10593 = vmatpush1.bf16.msra.mxu0 %v8310
  %10594 = vmatprep.subr.bf16.mxu0 %v8313
  %10595 = vmatpush1.bf16.msra.mxu0 %v8312
  %10596 = vmatprep.subr.bf16.mxu0 %v8315
  %10597 = vmatpush1.bf16.msra.mxu0 %v8314
  %10598 = vmatprep.subr.bf16.mxu0 %v8317
  %10599 = vmatpush1.bf16.msra.mxu0 %v8316
  %10600 = vmatprep.subr.bf16.mxu0 %v8319
  %10601 = vmatpush1.bf16.msra.mxu0 %v8318
  %10602 = vmatprep.subr.bf16.mxu0 %v8321
  %10603 = vmatpush1.bf16.msra.mxu0 %v8320
  %10604 = vmatprep.subr.bf16.mxu0 %v8323
  %10605 = vmatpush1.bf16.msra.mxu0 %v8322
  %10606 = vmatprep.subr.bf16.mxu0 %v8325
  %10607 = vmatpush1.bf16.msra.mxu0 %v8324
  %10608 = vmatprep.subr.bf16.mxu0 %v8327
  %10609 = vmatpush1.bf16.msra.mxu0 %v8326
  %10610 = vmatprep.subr.bf16.mxu0 %v8329
  %10611 = vmatpush1.bf16.msra.mxu0 %v8328
  %10612 = vmatprep.subr.bf16.mxu0 %v8331
  %10613 = vmatpush1.bf16.msra.mxu0 %v8330
  %10614 = vmatprep.subr.bf16.mxu0 %v8333
  %10615 = vmatpush1.bf16.msra.mxu0 %v8332
  %10616 = vmatprep.subr.bf16.mxu0 %v8367
  %10617 = vmatpush1.bf16.msra.mxu0 %v8364
  %10618 = vmatprep.subr.bf16.mxu0 0
  %10619 = vmatpush1.bf16.msra.mxu0 0
  %10620 = vmatprep.subr.bf16.mxu0 0
  %10621 = vmatpush1.bf16.msra.mxu0 0
  %10622 = vmatprep.subr.bf16.mxu0 0
  %10623 = vmatpush1.bf16.msra.mxu0 0
  %10624 = vmatprep.mubr.bf16.mxu0 %v10590
  %10625 = vmatmul.mubr.bf16.gmra.mrb[0].mxu0 %v10587
  %v10626 = vpop.f32.mrb[0].mxu0
  %v10627 = vadd.f32 0.0, %v10626
  %v10628 = vpop.f32.mrb[0].mxu0
  %v10629 = vadd.f32 0.0, %v10628
  %v10630 = vpop.f32.mrb[0].mxu0
  %v10631 = vpop.f32.mrb[0].mxu0
  %10632 = vdwg.mxu0
  %v10633 = vmul.f32 %v10627, 0.045454547
  %v10634 = vmul.f32 %v10629, 0.045454547
  %v10635 = vsub.f32 %v10581, %v10633
  %v10636 = vsub.f32 %v10582, %v10634
  %v10637 = vmul.f32 %v10635, %v10635
  %v10638 = vmul.f32 %v10636, %v10636
  %v10639 = vpack.c.bf16 %v10637, %v10637
  %v10640 = vpack.c.bf16 %v10638, %v10638
  %v10642 = vsel %vm1531, %v10640, 0
  %10644 = vmatprep.subr.bf16.mxu0 %v8311
  %10645 = vmatpush1.bf16.msra.mxu0 %v8310
  %10646 = vmatprep.subr.bf16.mxu0 %v8313
  %10647 = vmatpush1.bf16.msra.mxu0 %v8312
  %10648 = vmatprep.subr.bf16.mxu0 %v8315
  %10649 = vmatpush1.bf16.msra.mxu0 %v8314
  %10650 = vmatprep.subr.bf16.mxu0 %v8317
  %10651 = vmatpush1.bf16.msra.mxu0 %v8316
  %10652 = vmatprep.subr.bf16.mxu0 %v8319
  %10653 = vmatpush1.bf16.msra.mxu0 %v8318
  %10654 = vmatprep.subr.bf16.mxu0 %v8321
  %10655 = vmatpush1.bf16.msra.mxu0 %v8320
  %10656 = vmatprep.subr.bf16.mxu0 %v8323
  %10657 = vmatpush1.bf16.msra.mxu0 %v8322
  %10658 = vmatprep.subr.bf16.mxu0 %v8325
  %10659 = vmatpush1.bf16.msra.mxu0 %v8324
  %10660 = vmatprep.subr.bf16.mxu0 %v8327
  %10661 = vmatpush1.bf16.msra.mxu0 %v8326
  %10662 = vmatprep.subr.bf16.mxu0 %v8329
  %10663 = vmatpush1.bf16.msra.mxu0 %v8328
  %10664 = vmatprep.subr.bf16.mxu0 %v8331
  %10665 = vmatpush1.bf16.msra.mxu0 %v8330
  %10666 = vmatprep.subr.bf16.mxu0 %v8333
  %10667 = vmatpush1.bf16.msra.mxu0 %v8332
  %10668 = vmatprep.subr.bf16.mxu0 %v8367
  %10669 = vmatpush1.bf16.msra.mxu0 %v8364
  %10670 = vmatprep.subr.bf16.mxu0 0
  %10671 = vmatpush1.bf16.msra.mxu0 0
  %10672 = vmatprep.subr.bf16.mxu0 0
  %10673 = vmatpush1.bf16.msra.mxu0 0
  %10674 = vmatprep.subr.bf16.mxu0 0
  %10675 = vmatpush1.bf16.msra.mxu0 0
  %10676 = vmatprep.mubr.bf16.mxu0 %v10642
  %10677 = vmatmul.mubr.bf16.gmra.mrb[0].mxu0 %v10639
  %v10678 = vpop.f32.mrb[0].mxu0
  %v10679 = vadd.f32 0.0, %v10678
  %v10680 = vpop.f32.mrb[0].mxu0
  %v10681 = vadd.f32 0.0, %v10680
  %v10682 = vpop.f32.mrb[0].mxu0
  %v10683 = vpop.f32.mrb[0].mxu0
  %10684 = vdwg.mxu0
  %v10685 = vmul.f32 %v10679, 0.045454547
  %v10686 = vmul.f32 %v10681, 0.045454547
  %v10687 = vadd.f32 %v10685, 1e-05
  %v10688 = vadd.f32 %v10686, 1e-05
  %v10689 = vrsqrt.pop %v10687
  %v10690 = vrsqrt.pop %v10688
  %v10691 = vmul.f32 %v10635, %v10689
  %v10692 = vmul.f32 %v10636, %v10690
  %v10694 = vlaneseq
  %v10695 = vshrl.u32 %v10694, 7
  %v10696 = vsub.s32 0, %v10695
  %v10697 = vrot.slane %v10584, %v10696
  %v10698 = vlaneseq
  %v10699 = vshrl.u32 %v10698, 7
  %v10700 = vsub.s32 1, %v10699
  %v10701 = vrot.slane %v10584, %v10700
  %v10704 = vmul.f32 %v10691, %v10697
  %v10705 = vmul.f32 %v10692, %v10701
  %v10707 = vlaneseq
  %v10708 = vshrl.u32 %v10707, 7
  %v10709 = vsub.s32 0, %v10708
  %v10710 = vrot.slane %v10586, %v10709
  %v10711 = vlaneseq
  %v10712 = vshrl.u32 %v10711, 7
  %v10713 = vsub.s32 1, %v10712
  %v10714 = vrot.slane %v10586, %v10713
  %v10717 = vadd.f32 %v10704, %v10710
  %v10718 = vadd.f32 %v10705, %v10714
  %v10719 = vld [vmem:[%s14] sm:$0xff]
  %v10720 = vld [vmem:[%s14 + $0x8] sm:$0xff]
  %v10721 = vld [vmem:[%s14 + $0x10] sm:$0xff]
  %v10722 = vld [vmem:[%s14 + $0x18] sm:$0xff]
  %v10723 = vld [vmem:[%s14 + $0x20] sm:$0xff]
  %v10724 = vld [vmem:[%s14 + $0x28] sm:$0xff]
  %v10725 = vld [vmem:[%s14 + $0x30] sm:$0xff]
  %v10726 = vld [vmem:[%s14 + $0x38] sm:$0xff]
  %v10727 = vld [vmem:[%s14 + $0x40] sm:$0xff]
  %v10728 = vld [vmem:[%s14 + $0x48] sm:$0xff]
  %v10729 = vld [vmem:[%s14 + $0x50] sm:$0xff]
  %v10730 = vld [vmem:[%s14 + $0x58] sm:$0xff]
  %v10731 = vld [vmem:[%s14 + $0x60] sm:$0xff]
  %v10732 = vld [vmem:[%s14 + $0x68] sm:$0xff]
  %v10733 = vld [vmem:[%s14 + $0x70] sm:$0xff]
  %v10734 = vld [vmem:[%s14 + $0x78] sm:$0xff]
  %v10735 = vld [vmem:[%s14 + $0x80] sm:$0xff]
  %v10736 = vld [vmem:[%s14 + $0x88] sm:$0xff]
  %v10737 = vld [vmem:[%s14 + $0x90] sm:$0xff]
  %v10738 = vld [vmem:[%s14 + $0x98] sm:$0xff]
  %v10739 = vld [vmem:[%s14 + $0xa0] sm:$0xff]
  %v10740 = vld [vmem:[%s14 + $0xa8] sm:$0xff]
  %v10741 = vld [vmem:[%s14 + $0xb0] sm:$0xff]
  %v10742 = vld [vmem:[%s14 + $0xb8] sm:$0xff]
  %v10743 = vld [vmem:[%s14 + $0xc0] sm:$0x3f]
  %v10744 = vld [vmem:[%s15] sm:$0x1]
  %v10746 = vlaneseq
  %v10747 = vshrl.u32 %v10746, 7
  %v10748 = vsub.s32 0, %v10747
  %v10749 = vrot.slane %v10744, %v10748
  %v10752 = vsel %vm1531, %v10718, 0
  %v10755 = vsel %vm8113, %v10743, 0
  %10757 = vmatprep.subr.mxu0 0.0
  %10758 = vmatpush1.msra.mxu0 %v10719
  %10759 = vmatprep.subr.mxu0 0.0
  %10760 = vmatpush1.msra.mxu0 %v10720
  %10761 = vmatprep.subr.mxu0 0.0
  %10762 = vmatpush1.msra.mxu0 %v10721
  %10763 = vmatprep.subr.mxu0 0.0
  %10764 = vmatpush1.msra.mxu0 %v10722
  %10765 = vmatprep.subr.mxu0 0.0
  %10766 = vmatpush1.msra.mxu0 %v10723
  %10767 = vmatprep.subr.mxu0 0.0
  %10768 = vmatpush1.msra.mxu0 %v10724
  %10769 = vmatprep.subr.mxu0 0.0
  %10770 = vmatpush1.msra.mxu0 %v10725
  %10771 = vmatprep.subr.mxu0 0.0
  %10772 = vmatpush1.msra.mxu0 %v10726
  %10773 = vmatprep.subr.mxu0 0.0
  %10774 = vmatpush1.msra.mxu0 %v10727
  %10775 = vmatprep.subr.mxu0 0.0
  %10776 = vmatpush1.msra.mxu0 %v10728
  %10777 = vmatprep.subr.mxu0 0.0
  %10778 = vmatpush1.msra.mxu0 %v10729
  %10779 = vmatprep.subr.mxu0 0.0
  %10780 = vmatpush1.msra.mxu0 %v10730
  %10781 = vmatprep.subr.mxu0 0.0
  %10782 = vmatpush1.msra.mxu0 %v10731
  %10783 = vmatprep.subr.mxu0 0.0
  %10784 = vmatpush1.msra.mxu0 %v10732
  %10785 = vmatprep.subr.mxu0 0.0
  %10786 = vmatpush1.msra.mxu0 %v10733
  %10787 = vmatprep.subr.mxu0 0.0
  %10788 = vmatpush1.msra.mxu0 %v10734
  %10789 = vmatprep.subr.mxu0 0.0
  %10790 = vmatpush1.msra.mxu0 %v10735
  %10791 = vmatprep.subr.mxu0 0.0
  %10792 = vmatpush1.msra.mxu0 %v10736
  %10793 = vmatprep.subr.mxu0 0.0
  %10794 = vmatpush1.msra.mxu0 %v10737
  %10795 = vmatprep.subr.mxu0 0.0
  %10796 = vmatpush1.msra.mxu0 %v10738
  %10797 = vmatprep.subr.mxu0 0.0
  %10798 = vmatpush1.msra.mxu0 %v10739
  %10799 = vmatprep.subr.mxu0 0.0
  %10800 = vmatpush1.msra.mxu0 %v10740
  %10801 = vmatprep.subr.mxu0 0.0
  %10802 = vmatpush1.msra.mxu0 %v10741
  %10803 = vmatprep.subr.mxu0 0.0
  %10804 = vmatpush1.msra.mxu0 %v10742
  %10805 = vmatprep.subr.mxu0 0.0
  %10806 = vmatpush1.msra.mxu0 %v10755
  %10807 = vmatprep.subr.mxu0 0.0
  %10808 = vmatpush1.msra.mxu0 0.0
  %10809 = vmatprep.subr.mxu0 0.0
  %10810 = vmatpush1.msra.mxu0 0.0
  %10811 = vmatprep.subr.mxu0 0.0
  %10812 = vmatpush1.msra.mxu0 0.0
  %10813 = vmatprep.subr.mxu0 0.0
  %10814 = vmatpush1.msra.mxu0 0.0
  %10815 = vmatprep.subr.mxu0 0.0
  %10816 = vmatpush1.msra.mxu0 0.0
  %10817 = vmatprep.subr.mxu0 0.0
  %10818 = vmatpush1.msra.mxu0 0.0
  %10819 = vmatprep.subr.mxu0 0.0
  %10820 = vmatpush1.msra.mxu0 0.0
  %10821 = vmatprep.mubr.f32.mxu0 %v10752
  %10822 = vmatmul.mubr.f32.gmra.mrb[0].mxu0 %v10717
  %v10823 = vpop.f32.mrb[0].mxu0
  %v10824 = vadd.f32 %v10749, %v10823
  %v10825 = vpop.f32.mrb[0].mxu0
  %10826 = vdwg.mxu0
  %vm10827 = vcmask 15360
  %10828 = vst.msk [vmem:[%s16] sm:$0xff] %vm10827, %v10824
  // Predicated region
  $region66: #{tpu_custom_call.1} parent=0 // pred_check
    _
  $region67: #{tpu_custom_call.1} parent=0 // pred_check_branch
    %10830 = sbr.rel (0) target = $region69
  $region68: #{tpu_custom_call.1} parent=0 // pred_region
    _
  $region69: #{tpu_custom_call.1} parent=0 // pred_fallthru
    _
  // Predicated region
  $region70: #{tpu_custom_call.1} parent=0 // pred_check
    _
  $region71: #{tpu_custom_call.1} parent=0 // pred_check_branch
    %10832 = sbr.rel (0) target = $region73
  $region72: #{tpu_custom_call.1} parent=0 // pred_region
    _
  $region73: #{tpu_custom_call.1} parent=0 // pred_fallthru
    _

</llo_original>
